<compile_context>
chip_gen: v6e
topology: v6e:2x2x1
jax: 0.10.0
libtpu: 0.0.40
codegen_flags: <defaults>
</compile_context>

<pallas_src>
import jax
import jax.numpy as jnp
import numpy as np
from jax.experimental import pallas as pl
from jax.experimental.pallas import tpu as pltpu

BN_EVAL_SCALE = 1.0 / (1.0 + 1e-5) ** 0.5   # BatchNorm2d eval with default running stats
LEAKY_SLOPE = 0.01                           # nn.LeakyReLU default negative_slope


# --------------------------------------------------------------------------- specs

def _net_spec(shape):
    """BlockSpec selecting one decoder's slice along the leading 'net' axis per grid step.

    Block last-two dims equal the full array dims (trivially satisfies the (8,128) rule);
    the leading net axis is squeezed out of the kernel refs.
    """
    rest = len(shape) - 1
    return pl.BlockSpec(
        (None,) + tuple(int(d) for d in shape[1:]),
        lambda i, _r=rest: (i,) + (0,) * _r,
    )


# --------------------------------------------------------------------------- in-kernel helpers

def _lane_shift(v, shift, lanes):
    """Rotate the last (lane) dim of v by `shift` (jnp.roll semantics) via an exact 0/1
    permutation matmul (most conservative lowering path).  No-op for shift == 0, which is
    the case for every pack-(2,2) stage, so it is only exercised at lane width 128."""
    if shift % lanes == 0:
        return v
    src = jax.lax.broadcasted_iota(jnp.int32, (lanes, lanes), 0)
    dst = jax.lax.broadcasted_iota(jnp.int32, (lanes, lanes), 1)
    perm = (dst == ((src + shift) % lanes)).astype(jnp.float32)
    flat = v.reshape(-1, lanes)
    return jnp.dot(flat, perm, preferred_element_type=jnp.float32).reshape(v.shape)


def _deconv2x2_packed(a, w_ref, b_ref):
    """ConvTranspose2d(k=2, s=2) on a lane-packed activation: pointwise in logical space,
    so it is a single matmul that multiplies the packing factor (lane width) by 4."""
    n, h, w, l = a.shape
    lo = w_ref.shape[-1]
    z = jnp.dot(a.reshape(n * h * w, l), w_ref[...],
                preferred_element_type=jnp.float32) + b_ref[...]
    return z.reshape(n, h, w, lo)


def _conv3x3_packed(pad_ref, a, w_ref, b_ref, p, q, *, lrelu):
    """Reflect-padded 3x3 conv on a (p, q) lane-packed activation.

    In packed coordinates the conv is 9 shifted matmuls against block-routed weights
    (built at prep time).  The logical reflect pad folds back into the same packed cell,
    so it is edge replication combined with a static lane rotation.  The H side stays at
    the value level (batch-dim concat); only the two W-pad columns are materialized
    through the VMEM scratch (a sublane concat is not expressible as a value op).
    """
    n, h, w, l = a.shape
    ci = l // (p * q)
    sh, sw = (p - 2) * q * ci, (q - 2) * ci        # lane rotations for H / W reflection

    ah = jnp.concatenate(
        [_lane_shift(a[:, 0:1], sh, l), a, _lane_shift(a[:, h - 1:h], -sh, l)], axis=1)
    left = _lane_shift(ah[:, :, 0:1, :], sw, l)
    right = _lane_shift(ah[:, :, w - 1:w, :], -sw, l)
    pad_ref[:, 0:h + 2, 1:w + 1, :l] = ah
    pad_ref[:, 0:h + 2, 0:1, :l] = left
    pad_ref[:, 0:h + 2, w + 1:w + 2, :l] = right
    # NOTE: later (wider) stages always write at least as many lanes as they read, so the
    # scratch is never read beyond what the current conv wrote (no stale-lane hazard).

    lo = w_ref.shape[-1]
    acc = jnp.zeros((n * h * w, lo), jnp.float32)
    for i in range(3):              # packed row shift (-1, 0, +1)
        for j in range(3):          # packed col shift (-1, 0, +1)
            tap = pad_ref[:, i:i + h, j:j + w, :l].reshape(n * h * w, l)
            acc = acc + jnp.dot(tap, w_ref[i, j], preferred_element_type=jnp.float32)
    acc = acc + b_ref[...]
    if lrelu:
        acc = jnp.where(acc >= 0.0, acc, LEAKY_SLOPE * acc)
    return acc.reshape(n, h, w, lo)


def _make_decoder_kernel(n_units):
    """Whole decoder (embedding -> units -> predict -> mean) for one net per grid step."""
    def kernel(*refs):
        x_ref, emb_w, emb_b = refs[0], refs[1], refs[2]
        units = [refs[3 + 6 * u: 9 + 6 * u] for u in range(n_units)]
        p1w, p1b, p2w, p2b, p3w, p3b = refs[3 + 6 * n_units: 9 + 6 * n_units]
        o_ref = refs[9 + 6 * n_units]
        pad_ref = refs[10 + 6 * n_units]

        # embedding ConvTranspose2d(k=2, s=2): pack (1,1) -> (2,2)
        a = _deconv2x2_packed(x_ref[...], emb_w, emb_b)
        p = q = 2
        for (w1, b1, w2, b2, wd, bd) in units:
            a = _conv3x3_packed(pad_ref, a, w1, b1, p, q, lrelu=True)
            a = _conv3x3_packed(pad_ref, a, w2, b2, p, q, lrelu=True)
            a = _deconv2x2_packed(a, wd, bd)
            p, q = 2 * p, 2 * q
        # predict head (no activation), then 1x1 conv fused with the spatial mean (exact)
        a = _conv3x3_packed(pad_ref, a, p1w, p1b, p, q, lrelu=False)
        a = _conv3x3_packed(pad_ref, a, p2w, p2b, p, q, lrelu=False)
        n, h, w, l = a.shape
        am = jnp.mean(a.reshape(n, h * w, l), axis=1)                     # (N, L)
        o_ref[...] = (jnp.dot(am, p3w[...], preferred_element_type=jnp.float32)
                      + p3b[...])
    return kernel


# --------------------------------------------------------------------------- forward

@jax.jit
def synthesizer_pair_forward(packed, x1_nchw, x2_nchw):
    """Eval-mode forward of two independent Synthesizer decoders -> ((N,1), (N,1))."""
    x = jnp.stack([x1_nchw, x2_nchw], axis=0).astype(jnp.float32)         # (2, N, C, H, W)
    x = jnp.transpose(x, (0, 1, 3, 4, 2))                                 # (2, N, H, W, C)

    weights = list(packed)
    n_units = (len(weights) - 8) // 6
    g, n, h, w = x.shape[0], x.shape[1], x.shape[2], x.shape[3]
    l_max = weights[-2].shape[-2]                 # final packed lane width (tiled 1x1 w)
    arrays = [x] + weights

    out = pl.pallas_call(
        _make_decoder_kernel(n_units),
        out_shape=jax.ShapeDtypeStruct((g, n, 1), jnp.float32),
        grid_spec=pltpu.PrefetchScalarGridSpec(
            num_scalar_prefetch=0,
            grid=(g,),
            in_specs=[_net_spec(a.shape) for a in arrays],
            out_specs=_net_spec((g, n, 1)),
            scratch_shapes=[pltpu.VMEM((n, h + 2, w + 2, l_max), jnp.float32)],
        ),
        # One decoder per grid step; "parallel" is a measured no-op on v5e/v6e and lets
        # the two decoders shard across TensorCores on v7x.  (On single-TC chips the two
        # nets could be folded into one grid step to double the matmul M dim — omitted.)
        compiler_params=pltpu.CompilerParams(dimension_semantics=("parallel",)),
    )(*arrays)
    return out[0], out[1]


# --------------------------------------------------------------------------- params / packing

def init_synthesizer_params(key, depth, channels_bn, channels_net, channels_expansion=1):
    """Raw parameters for one decoder (HWIO conv layout)."""
    keys = jax.random.split(key, 3 * depth + 8)
    kit = iter(range(len(keys)))

    def xavier(k, shape, fan_in, fan_out):
        std = (2.0 / (fan_in + fan_out)) ** 0.5
        return std * jax.random.normal(k, shape, jnp.float32)

    c_top = channels_net * channels_expansion ** (depth - 1)
    params = {
        "emb_w": xavier(keys[next(kit)], (2, 2, channels_bn, c_top),
                        channels_bn * 4, c_top * 4),
        "emb_b": jnp.zeros((1, c_top), jnp.float32),
    }
    units = []
    for i in reversed(range(depth - 1)):
        cin = channels_net * channels_expansion ** (i + 1)
        cout = channels_net * channels_expansion ** i
        units.append({
            "w1": xavier(keys[next(kit)], (3, 3, cin, cout), cin * 9, cout * 9),
            "b1": jnp.zeros((1, cout), jnp.float32),
            "w2": xavier(keys[next(kit)], (3, 3, cout, cout), cout * 9, cout * 9),
            "b2": jnp.zeros((1, cout), jnp.float32),
            "wd": xavier(keys[next(kit)], (2, 2, cout, cout), cout * 4, cout * 4),
            "bd": jnp.zeros((1, cout), jnp.float32),
        })
    params["units"] = units
    cn = channels_net
    params["p1_w"] = xavier(keys[next(kit)], (3, 3, cn, cn), cn * 9, cn * 9)
    params["p1_b"] = jnp.zeros((1, cn), jnp.float32)
    params["p2_w"] = xavier(keys[next(kit)], (3, 3, cn, cn), cn * 9, cn * 9)
    params["p2_b"] = jnp.zeros((1, cn), jnp.float32)
    params["p3_w"] = xavier(keys[next(kit)], (cn, 1), cn, 1)
    params["p3_b"] = jnp.zeros((1, 1), jnp.float32)
    return params


def _pack_conv3x3(k, p, q):
    """Route a raw (3,3,Ci,Co) conv kernel into 9 packed (p*q*Ci, p*q*Co) matrices.

    Output lane block (alpha,beta) of a packed cell is logical pixel (p*h+alpha, q*w+beta);
    its (dh,dw) tap lives in packed cell (h+Dh, w+Dw), lane block (a',b') with
    Dh = (alpha+dh)//p, a' = (alpha+dh)%p (same along w).  Zero blocks elsewhere.
    """
    k = np.asarray(k, np.float32)
    ci, co = k.shape[2], k.shape[3]
    w = np.zeros((3, 3, p * q * ci, p * q * co), np.float32)
    for al in range(p):
        for be in range(q):
            for dh in (-1, 0, 1):
                for dw in (-1, 0, 1):
                    th, tw = al + dh, be + dw
                    src = (th % p) * q + (tw % q)
                    dst = al * q + be
                    w[th // p + 1, tw // q + 1,
                      src * ci:(src + 1) * ci,
                      dst * co:(dst + 1) * co] = k[dh + 1, dw + 1]
    return w


def _pack_deconv2x2(kd, p, q):
    """Route a raw (2,2,Ci,Co) ConvTranspose2d(k=2,s=2) kernel applied to a (p,q)-packed
    activation into one (p*q*Ci, 2p*2q*Co) matrix (it is pointwise in logical space)."""
    kd = np.asarray(kd, np.float32)
    ci, co = kd.shape[2], kd.shape[3]
    w = np.zeros((p * q * ci, (2 * p) * (2 * q) * co), np.float32)
    for a in range(p):
        for b in range(q):
            for kh in range(2):
                for kw in range(2):
                    src = a * q + b
                    dst = (2 * a + kh) * (2 * q) + (2 * b + kw)
                    w[src * ci:(src + 1) * ci, dst * co:(dst + 1) * co] = kd[kh, kw]
    return w


def _prepare_one(params):
    """Fold eval-mode BN into the unit convs and build the lane-packed weights/biases."""
    s = np.float32(BN_EVAL_SCALE)
    arrs = [
        _pack_deconv2x2(params["emb_w"], 1, 1),
        np.tile(np.asarray(params["emb_b"], np.float32), (1, 4)),
    ]
    p = q = 2
    for u in params["units"]:
        arrs += [
            _pack_conv3x3(np.asarray(u["w1"]) * s, p, q),
            np.tile(np.asarray(u["b1"], np.float32) * s, (1, p * q)),
            _pack_conv3x3(np.asarray(u["w2"]) * s, p, q),
            np.tile(np.asarray(u["b2"], np.float32) * s, (1, p * q)),
            _pack_deconv2x2(u["wd"], p, q),
            np.tile(np.asarray(u["bd"], np.float32), (1, 4 * p * q)),
        ]
        p, q = 2 * p, 2 * q
    arrs += [
        _pack_conv3x3(params["p1_w"], p, q),
        np.tile(np.asarray(params["p1_b"], np.float32), (1, p * q)),
        _pack_conv3x3(params["p2_w"], p, q),
        np.tile(np.asarray(params["p2_b"], np.float32), (1, p * q)),
        # 1x1 head fused with the spatial mean: tile over lane blocks and fold the
        # 1/(p*q) logical-positions-per-packed-cell factor into the weight.
        np.tile(np.asarray(params["p3_w"], np.float32), (p * q, 1)) / np.float32(p * q),
        np.asarray(params["p3_b"], np.float32),
    ]
    return arrs


def prepare_pair_params(params_1, params_2):
    """Pack both decoders' params and stack them on a leading 'net' (grid) axis."""
    a1, a2 = _prepare_one(params_1), _prepare_one(params_2)
    return tuple(jnp.stack([jnp.asarray(x), jnp.asarray(y)], axis=0)
                 for x, y in zip(a1, a2))


# --------------------------------------------------------------------------- main

if __name__ == "__main__":
    key = jax.random.PRNGKey(0)
    k_in1, k_in2, k_p1, k_p2 = jax.random.split(key, 4)

    depth, channels_bn, channels_net = 2, 4, 8
    N, H, W = 2, 4, 8   # input spatial; logical output spatial is 4x larger (two 2x upsamples)

    bn_1 = jax.random.normal(k_in1, (N, channels_bn, H, W), jnp.float32)
    bn_2 = jax.random.normal(k_in2, (N, channels_bn, H, W), jnp.float32)

    params_1 = init_synthesizer_params(k_p1, depth, channels_bn, channels_net)
    params_2 = init_synthesizer_params(k_p2, depth, channels_bn, channels_net)
    packed = prepare_pair_params(params_1, params_2)

    o_bn_1, o_bn_2 = synthesizer_pair_forward(packed, bn_1, bn_2)
    jax.block_until_ready((o_bn_1, o_bn_2))

    assert o_bn_1.shape == (N, 1) and o_bn_2.shape == (N, 1)
    assert o_bn_1.dtype == jnp.float32 and o_bn_2.dtype == jnp.float32
    assert bool(jnp.all(jnp.isfinite(o_bn_1))) and bool(jnp.all(jnp.isfinite(o_bn_2)))
    print("KERNEL_OK")
</pallas_src>

<mosaic_0001>
module attributes {stable_mosaic.version = 11 : i64} {
  func.func @kernel(%arg0: i32, %arg1: memref<1x2x4x8x4xf32, #tpu.memory_space<vmem>>, %arg2: memref<1x4x32xf32, #tpu.memory_space<vmem>>, %arg3: memref<1x1x32xf32, #tpu.memory_space<vmem>>, %arg4: memref<1x3x3x32x32xf32, #tpu.memory_space<vmem>>, %arg5: memref<1x1x32xf32, #tpu.memory_space<vmem>>, %arg6: memref<1x3x3x32x32xf32, #tpu.memory_space<vmem>>, %arg7: memref<1x1x32xf32, #tpu.memory_space<vmem>>, %arg8: memref<1x32x128xf32, #tpu.memory_space<vmem>>, %arg9: memref<1x1x128xf32, #tpu.memory_space<vmem>>, %arg10: memref<1x3x3x128x128xf32, #tpu.memory_space<vmem>>, %arg11: memref<1x1x128xf32, #tpu.memory_space<vmem>>, %arg12: memref<1x3x3x128x128xf32, #tpu.memory_space<vmem>>, %arg13: memref<1x1x128xf32, #tpu.memory_space<vmem>>, %arg14: memref<1x128x1xf32, #tpu.memory_space<vmem>>, %arg15: memref<1x1x1xf32, #tpu.memory_space<vmem>>, %arg16: memref<1x2x1xf32, #tpu.memory_space<vmem>>, %arg17: memref<2x6x10x128xf32, #tpu.memory_space<vmem>>) attributes {dimension_semantics = [#tpu.dimension_semantics<parallel>], iteration_bounds = array<i64: 2>, scalar_prefetch = 0 : i64, scratch_operands = 1 : i64, tpu.core_type = #tpu.core_type<tc>, window_params = [{transform_indices = @transform_0, window_bounds = array<i64: 1, 2, 4, 8, 4>}, {transform_indices = @transform_1, window_bounds = array<i64: 1, 4, 32>}, {transform_indices = @transform_2, window_bounds = array<i64: 1, 1, 32>}, {transform_indices = @transform_3, window_bounds = array<i64: 1, 3, 3, 32, 32>}, {transform_indices = @transform_4, window_bounds = array<i64: 1, 1, 32>}, {transform_indices = @transform_5, window_bounds = array<i64: 1, 3, 3, 32, 32>}, {transform_indices = @transform_6, window_bounds = array<i64: 1, 1, 32>}, {transform_indices = @transform_7, window_bounds = array<i64: 1, 32, 128>}, {transform_indices = @transform_8, window_bounds = array<i64: 1, 1, 128>}, {transform_indices = @transform_9, window_bounds = array<i64: 1, 3, 3, 128, 128>}, {transform_indices = @transform_10, window_bounds = array<i64: 1, 1, 128>}, {transform_indices = @transform_11, window_bounds = array<i64: 1, 3, 3, 128, 128>}, {transform_indices = @transform_12, window_bounds = array<i64: 1, 1, 128>}, {transform_indices = @transform_13, window_bounds = array<i64: 1, 128, 1>}, {transform_indices = @transform_14, window_bounds = array<i64: 1, 1, 1>}, {transform_indices = @transform_15, window_bounds = array<i64: 1, 2, 1>}]} {
    %c0 = arith.constant 0 : index
    %c0_0 = arith.constant 0 : index
    %c0_1 = arith.constant 0 : index
    %c0_2 = arith.constant 0 : index
    %c0_3 = arith.constant 0 : index
    %0 = vector.load %arg1[%c0, %c0_0, %c0_1, %c0_2, %c0_3] : memref<1x2x4x8x4xf32, #tpu.memory_space<vmem>>, vector<1x2x4x8x4xf32>
    %1 = vector.shape_cast %0 : vector<1x2x4x8x4xf32> to vector<2x4x8x4xf32>
    %2 = vector.shape_cast %1 : vector<2x4x8x4xf32> to vector<64x4xf32>
    %c0_4 = arith.constant 0 : index
    %c0_5 = arith.constant 0 : index
    %c0_6 = arith.constant 0 : index
    %3 = vector.load %arg2[%c0_4, %c0_5, %c0_6] : memref<1x4x32xf32, #tpu.memory_space<vmem>>, vector<1x4x32xf32>
    %4 = vector.shape_cast %3 : vector<1x4x32xf32> to vector<4x32xf32>
    %cst = arith.constant dense<0.000000e+00> : vector<64x32xf32>
    %5 = tpu.matmul %2, %4, %cst {dimension_numbers = #tpu.dot_dimension_numbers<[1], [0], [0], [1], [0, 0, 1, 1], [], []>} : vector<64x4xf32>, vector<4x32xf32>, vector<64x32xf32> -> vector<64x32xf32>
    %c0_7 = arith.constant 0 : index
    %c0_8 = arith.constant 0 : index
    %c0_9 = arith.constant 0 : index
    %6 = vector.load %arg3[%c0_7, %c0_8, %c0_9] : memref<1x1x32xf32, #tpu.memory_space<vmem>>, vector<1x1x32xf32>
    %7 = vector.shape_cast %6 : vector<1x1x32xf32> to vector<1x32xf32>
    %8 = vector.broadcast %7 : vector<1x32xf32> to vector<64x32xf32>
    %9 = arith.addf %5, %8 : vector<64x32xf32>
    %10 = vector.shape_cast %9 : vector<64x32xf32> to vector<2x4x8x32xf32>
    %11 = vector.extract_strided_slice %10 {offsets = [0, 0, 0, 0], sizes = [2, 1, 8, 32], strides = [1, 1, 1, 1]} : vector<2x4x8x32xf32> to vector<2x1x8x32xf32>
    %12 = vector.extract_strided_slice %10 {offsets = [0, 3, 0, 0], sizes = [2, 1, 8, 32], strides = [1, 1, 1, 1]} : vector<2x4x8x32xf32> to vector<2x1x8x32xf32>
    %13 = tpu.concatenate %11, %10, %12 in 1 : vector<2x1x8x32xf32>, vector<2x4x8x32xf32>, vector<2x1x8x32xf32> -> vector<2x6x8x32xf32>
    %14 = vector.extract_strided_slice %13 {offsets = [0, 0, 0, 0], sizes = [2, 6, 1, 32], strides = [1, 1, 1, 1]} : vector<2x6x8x32xf32> to vector<2x6x1x32xf32>
    %15 = vector.extract_strided_slice %13 {offsets = [0, 0, 7, 0], sizes = [2, 6, 1, 32], strides = [1, 1, 1, 1]} : vector<2x6x8x32xf32> to vector<2x6x1x32xf32>
    %c0_10 = arith.constant 0 : index
    %c0_11 = arith.constant 0 : index
    %c1 = arith.constant 1 : index
    %c0_12 = arith.constant 0 : index
    %16 = vector.load %arg17[%c0_10, %c0_11, %c1, %c0_12] : memref<2x6x10x128xf32, #tpu.memory_space<vmem>>, vector<2x6x8x32xf32>
    tpu.vector_store %arg17[%c0_10, %c0_11, %c1, %c0_12], %13 {strides = array<i32>} : memref<2x6x10x128xf32, #tpu.memory_space<vmem>>, vector<2x6x8x32xf32>,
    %c0_13 = arith.constant 0 : index
    %c0_14 = arith.constant 0 : index
    %c0_15 = arith.constant 0 : index
    %c0_16 = arith.constant 0 : index
    %17 = vector.load %arg17[%c0_13, %c0_14, %c0_15, %c0_16] : memref<2x6x10x128xf32, #tpu.memory_space<vmem>>, vector<2x6x1x32xf32>
    tpu.vector_store %arg17[%c0_13, %c0_14, %c0_15, %c0_16], %14 {strides = array<i32>} : memref<2x6x10x128xf32, #tpu.memory_space<vmem>>, vector<2x6x1x32xf32>,
    %c0_17 = arith.constant 0 : index
    %c0_18 = arith.constant 0 : index
    %c9 = arith.constant 9 : index
    %c0_19 = arith.constant 0 : index
    %18 = vector.load %arg17[%c0_17, %c0_18, %c9, %c0_19] : memref<2x6x10x128xf32, #tpu.memory_space<vmem>>, vector<2x6x1x32xf32>
    tpu.vector_store %arg17[%c0_17, %c0_18, %c9, %c0_19], %15 {strides = array<i32>} : memref<2x6x10x128xf32, #tpu.memory_space<vmem>>, vector<2x6x1x32xf32>,
    %cst_20 = arith.constant 0.000000e+00 : f32
    %19 = vector.broadcast %cst_20 : f32 to vector<64x32xf32>
    %c0_21 = arith.constant 0 : index
    %c0_22 = arith.constant 0 : index
    %c0_23 = arith.constant 0 : index
    %c0_24 = arith.constant 0 : index
    %20 = vector.load %arg17[%c0_21, %c0_22, %c0_23, %c0_24] : memref<2x6x10x128xf32, #tpu.memory_space<vmem>>, vector<2x4x8x32xf32>
    %21 = vector.shape_cast %20 : vector<2x4x8x32xf32> to vector<64x32xf32>
    %c0_25 = arith.constant 0 : index
    %c0_26 = arith.constant 0 : index
    %c0_27 = arith.constant 0 : index
    %c0_28 = arith.constant 0 : index
    %c0_29 = arith.constant 0 : index
    %22 = vector.load %arg4[%c0_25, %c0_26, %c0_27, %c0_28, %c0_29] : memref<1x3x3x32x32xf32, #tpu.memory_space<vmem>>, vector<1x1x1x32x32xf32>
    %23 = vector.shape_cast %22 : vector<1x1x1x32x32xf32> to vector<32x32xf32>
    %cst_30 = arith.constant dense<0.000000e+00> : vector<64x32xf32>
    %24 = tpu.matmul %21, %23, %cst_30 {dimension_numbers = #tpu.dot_dimension_numbers<[1], [0], [0], [1], [0, 0, 1, 1], [], []>} : vector<64x32xf32>, vector<32x32xf32>, vector<64x32xf32> -> vector<64x32xf32>
    %25 = arith.addf %19, %24 : vector<64x32xf32>
    %c0_31 = arith.constant 0 : index
    %c0_32 = arith.constant 0 : index
    %c1_33 = arith.constant 1 : index
    %c0_34 = arith.constant 0 : index
    %26 = vector.load %arg17[%c0_31, %c0_32, %c1_33, %c0_34] : memref<2x6x10x128xf32, #tpu.memory_space<vmem>>, vector<2x4x8x32xf32>
    %27 = vector.shape_cast %26 : vector<2x4x8x32xf32> to vector<64x32xf32>
    %c0_35 = arith.constant 0 : index
    %c0_36 = arith.constant 0 : index
    %c1_37 = arith.constant 1 : index
    %c0_38 = arith.constant 0 : index
    %c0_39 = arith.constant 0 : index
    %28 = vector.load %arg4[%c0_35, %c0_36, %c1_37, %c0_38, %c0_39] : memref<1x3x3x32x32xf32, #tpu.memory_space<vmem>>, vector<1x1x1x32x32xf32>
    %29 = vector.shape_cast %28 : vector<1x1x1x32x32xf32> to vector<32x32xf32>
    %cst_40 = arith.constant dense<0.000000e+00> : vector<64x32xf32>
    %30 = tpu.matmul %27, %29, %cst_40 {dimension_numbers = #tpu.dot_dimension_numbers<[1], [0], [0], [1], [0, 0, 1, 1], [], []>} : vector<64x32xf32>, vector<32x32xf32>, vector<64x32xf32> -> vector<64x32xf32>
    %31 = arith.addf %25, %30 : vector<64x32xf32>
    %c0_41 = arith.constant 0 : index
    %c0_42 = arith.constant 0 : index
    %c2 = arith.constant 2 : index
    %c0_43 = arith.constant 0 : index
    %32 = vector.load %arg17[%c0_41, %c0_42, %c2, %c0_43] : memref<2x6x10x128xf32, #tpu.memory_space<vmem>>, vector<2x4x8x32xf32>
    %33 = vector.shape_cast %32 : vector<2x4x8x32xf32> to vector<64x32xf32>
    %c0_44 = arith.constant 0 : index
    %c0_45 = arith.constant 0 : index
    %c2_46 = arith.constant 2 : index
    %c0_47 = arith.constant 0 : index
    %c0_48 = arith.constant 0 : index
    %34 = vector.load %arg4[%c0_44, %c0_45, %c2_46, %c0_47, %c0_48] : memref<1x3x3x32x32xf32, #tpu.memory_space<vmem>>, vector<1x1x1x32x32xf32>
    %35 = vector.shape_cast %34 : vector<1x1x1x32x32xf32> to vector<32x32xf32>
    %cst_49 = arith.constant dense<0.000000e+00> : vector<64x32xf32>
    %36 = tpu.matmul %33, %35, %cst_49 {dimension_numbers = #tpu.dot_dimension_numbers<[1], [0], [0], [1], [0, 0, 1, 1], [], []>} : vector<64x32xf32>, vector<32x32xf32>, vector<64x32xf32> -> vector<64x32xf32>
    %37 = arith.addf %31, %36 : vector<64x32xf32>
    %c0_50 = arith.constant 0 : index
    %c1_51 = arith.constant 1 : index
    %c0_52 = arith.constant 0 : index
    %c0_53 = arith.constant 0 : index
    %38 = vector.load %arg17[%c0_50, %c1_51, %c0_52, %c0_53] : memref<2x6x10x128xf32, #tpu.memory_space<vmem>>, vector<2x4x8x32xf32>
    %39 = vector.shape_cast %38 : vector<2x4x8x32xf32> to vector<64x32xf32>
    %c0_54 = arith.constant 0 : index
    %c1_55 = arith.constant 1 : index
    %c0_56 = arith.constant 0 : index
    %c0_57 = arith.constant 0 : index
    %c0_58 = arith.constant 0 : index
    %40 = vector.load %arg4[%c0_54, %c1_55, %c0_56, %c0_57, %c0_58] : memref<1x3x3x32x32xf32, #tpu.memory_space<vmem>>, vector<1x1x1x32x32xf32>
    %41 = vector.shape_cast %40 : vector<1x1x1x32x32xf32> to vector<32x32xf32>
    %cst_59 = arith.constant dense<0.000000e+00> : vector<64x32xf32>
    %42 = tpu.matmul %39, %41, %cst_59 {dimension_numbers = #tpu.dot_dimension_numbers<[1], [0], [0], [1], [0, 0, 1, 1], [], []>} : vector<64x32xf32>, vector<32x32xf32>, vector<64x32xf32> -> vector<64x32xf32>
    %43 = arith.addf %37, %42 : vector<64x32xf32>
    %c0_60 = arith.constant 0 : index
    %c1_61 = arith.constant 1 : index
    %c1_62 = arith.constant 1 : index
    %c0_63 = arith.constant 0 : index
    %44 = vector.load %arg17[%c0_60, %c1_61, %c1_62, %c0_63] : memref<2x6x10x128xf32, #tpu.memory_space<vmem>>, vector<2x4x8x32xf32>
    %45 = vector.shape_cast %44 : vector<2x4x8x32xf32> to vector<64x32xf32>
    %c0_64 = arith.constant 0 : index
    %c1_65 = arith.constant 1 : index
    %c1_66 = arith.constant 1 : index
    %c0_67 = arith.constant 0 : index
    %c0_68 = arith.constant 0 : index
    %46 = vector.load %arg4[%c0_64, %c1_65, %c1_66, %c0_67, %c0_68] : memref<1x3x3x32x32xf32, #tpu.memory_space<vmem>>, vector<1x1x1x32x32xf32>
    %47 = vector.shape_cast %46 : vector<1x1x1x32x32xf32> to vector<32x32xf32>
    %cst_69 = arith.constant dense<0.000000e+00> : vector<64x32xf32>
    %48 = tpu.matmul %45, %47, %cst_69 {dimension_numbers = #tpu.dot_dimension_numbers<[1], [0], [0], [1], [0, 0, 1, 1], [], []>} : vector<64x32xf32>, vector<32x32xf32>, vector<64x32xf32> -> vector<64x32xf32>
    %49 = arith.addf %43, %48 : vector<64x32xf32>
    %c0_70 = arith.constant 0 : index
    %c1_71 = arith.constant 1 : index
    %c2_72 = arith.constant 2 : index
    %c0_73 = arith.constant 0 : index
    %50 = vector.load %arg17[%c0_70, %c1_71, %c2_72, %c0_73] : memref<2x6x10x128xf32, #tpu.memory_space<vmem>>, vector<2x4x8x32xf32>
    %51 = vector.shape_cast %50 : vector<2x4x8x32xf32> to vector<64x32xf32>
    %c0_74 = arith.constant 0 : index
    %c1_75 = arith.constant 1 : index
    %c2_76 = arith.constant 2 : index
    %c0_77 = arith.constant 0 : index
    %c0_78 = arith.constant 0 : index
    %52 = vector.load %arg4[%c0_74, %c1_75, %c2_76, %c0_77, %c0_78] : memref<1x3x3x32x32xf32, #tpu.memory_space<vmem>>, vector<1x1x1x32x32xf32>
    %53 = vector.shape_cast %52 : vector<1x1x1x32x32xf32> to vector<32x32xf32>
    %cst_79 = arith.constant dense<0.000000e+00> : vector<64x32xf32>
    %54 = tpu.matmul %51, %53, %cst_79 {dimension_numbers = #tpu.dot_dimension_numbers<[1], [0], [0], [1], [0, 0, 1, 1], [], []>} : vector<64x32xf32>, vector<32x32xf32>, vector<64x32xf32> -> vector<64x32xf32>
    %55 = arith.addf %49, %54 : vector<64x32xf32>
    %c0_80 = arith.constant 0 : index
    %c2_81 = arith.constant 2 : index
    %c0_82 = arith.constant 0 : index
    %c0_83 = arith.constant 0 : index
    %56 = vector.load %arg17[%c0_80, %c2_81, %c0_82, %c0_83] : memref<2x6x10x128xf32, #tpu.memory_space<vmem>>, vector<2x4x8x32xf32>
    %57 = vector.shape_cast %56 : vector<2x4x8x32xf32> to vector<64x32xf32>
    %c0_84 = arith.constant 0 : index
    %c2_85 = arith.constant 2 : index
    %c0_86 = arith.constant 0 : index
    %c0_87 = arith.constant 0 : index
    %c0_88 = arith.constant 0 : index
    %58 = vector.load %arg4[%c0_84, %c2_85, %c0_86, %c0_87, %c0_88] : memref<1x3x3x32x32xf32, #tpu.memory_space<vmem>>, vector<1x1x1x32x32xf32>
    %59 = vector.shape_cast %58 : vector<1x1x1x32x32xf32> to vector<32x32xf32>
    %cst_89 = arith.constant dense<0.000000e+00> : vector<64x32xf32>
    %60 = tpu.matmul %57, %59, %cst_89 {dimension_numbers = #tpu.dot_dimension_numbers<[1], [0], [0], [1], [0, 0, 1, 1], [], []>} : vector<64x32xf32>, vector<32x32xf32>, vector<64x32xf32> -> vector<64x32xf32>
    %61 = arith.addf %55, %60 : vector<64x32xf32>
    %c0_90 = arith.constant 0 : index
    %c2_91 = arith.constant 2 : index
    %c1_92 = arith.constant 1 : index
    %c0_93 = arith.constant 0 : index
    %62 = vector.load %arg17[%c0_90, %c2_91, %c1_92, %c0_93] : memref<2x6x10x128xf32, #tpu.memory_space<vmem>>, vector<2x4x8x32xf32>
    %63 = vector.shape_cast %62 : vector<2x4x8x32xf32> to vector<64x32xf32>
    %c0_94 = arith.constant 0 : index
    %c2_95 = arith.constant 2 : index
    %c1_96 = arith.constant 1 : index
    %c0_97 = arith.constant 0 : index
    %c0_98 = arith.constant 0 : index
    %64 = vector.load %arg4[%c0_94, %c2_95, %c1_96, %c0_97, %c0_98] : memref<1x3x3x32x32xf32, #tpu.memory_space<vmem>>, vector<1x1x1x32x32xf32>
    %65 = vector.shape_cast %64 : vector<1x1x1x32x32xf32> to vector<32x32xf32>
    %cst_99 = arith.constant dense<0.000000e+00> : vector<64x32xf32>
    %66 = tpu.matmul %63, %65, %cst_99 {dimension_numbers = #tpu.dot_dimension_numbers<[1], [0], [0], [1], [0, 0, 1, 1], [], []>} : vector<64x32xf32>, vector<32x32xf32>, vector<64x32xf32> -> vector<64x32xf32>
    %67 = arith.addf %61, %66 : vector<64x32xf32>
    %c0_100 = arith.constant 0 : index
    %c2_101 = arith.constant 2 : index
    %c2_102 = arith.constant 2 : index
    %c0_103 = arith.constant 0 : index
    %68 = vector.load %arg17[%c0_100, %c2_101, %c2_102, %c0_103] : memref<2x6x10x128xf32, #tpu.memory_space<vmem>>, vector<2x4x8x32xf32>
    %69 = vector.shape_cast %68 : vector<2x4x8x32xf32> to vector<64x32xf32>
    %c0_104 = arith.constant 0 : index
    %c2_105 = arith.constant 2 : index
    %c2_106 = arith.constant 2 : index
    %c0_107 = arith.constant 0 : index
    %c0_108 = arith.constant 0 : index
    %70 = vector.load %arg4[%c0_104, %c2_105, %c2_106, %c0_107, %c0_108] : memref<1x3x3x32x32xf32, #tpu.memory_space<vmem>>, vector<1x1x1x32x32xf32>
    %71 = vector.shape_cast %70 : vector<1x1x1x32x32xf32> to vector<32x32xf32>
    %cst_109 = arith.constant dense<0.000000e+00> : vector<64x32xf32>
    %72 = tpu.matmul %69, %71, %cst_109 {dimension_numbers = #tpu.dot_dimension_numbers<[1], [0], [0], [1], [0, 0, 1, 1], [], []>} : vector<64x32xf32>, vector<32x32xf32>, vector<64x32xf32> -> vector<64x32xf32>
    %73 = arith.addf %67, %72 : vector<64x32xf32>
    %c0_110 = arith.constant 0 : index
    %c0_111 = arith.constant 0 : index
    %c0_112 = arith.constant 0 : index
    %74 = vector.load %arg5[%c0_110, %c0_111, %c0_112] : memref<1x1x32xf32, #tpu.memory_space<vmem>>, vector<1x1x32xf32>
    %75 = vector.shape_cast %74 : vector<1x1x32xf32> to vector<1x32xf32>
    %76 = vector.broadcast %75 : vector<1x32xf32> to vector<64x32xf32>
    %77 = arith.addf %73, %76 : vector<64x32xf32>
    %cst_113 = arith.constant 0.000000e+00 : f32
    %78 = vector.broadcast %cst_113 : f32 to vector<64x32xf32>
    %79 = arith.cmpf oge, %77, %78 : vector<64x32xf32>
    %cst_114 = arith.constant 0.00999999977 : f32
    %80 = vector.broadcast %cst_114 : f32 to vector<64x32xf32>
    %81 = arith.mulf %80, %77 : vector<64x32xf32>
    %82 = arith.select %79, %77, %81 : vector<64x32xi1>, vector<64x32xf32>
    %83 = vector.shape_cast %82 : vector<64x32xf32> to vector<2x4x8x32xf32>
    %84 = vector.extract_strided_slice %83 {offsets = [0, 0, 0, 0], sizes = [2, 1, 8, 32], strides = [1, 1, 1, 1]} : vector<2x4x8x32xf32> to vector<2x1x8x32xf32>
    %85 = vector.extract_strided_slice %83 {offsets = [0, 3, 0, 0], sizes = [2, 1, 8, 32], strides = [1, 1, 1, 1]} : vector<2x4x8x32xf32> to vector<2x1x8x32xf32>
    %86 = tpu.concatenate %84, %83, %85 in 1 : vector<2x1x8x32xf32>, vector<2x4x8x32xf32>, vector<2x1x8x32xf32> -> vector<2x6x8x32xf32>
    %87 = vector.extract_strided_slice %86 {offsets = [0, 0, 0, 0], sizes = [2, 6, 1, 32], strides = [1, 1, 1, 1]} : vector<2x6x8x32xf32> to vector<2x6x1x32xf32>
    %88 = vector.extract_strided_slice %86 {offsets = [0, 0, 7, 0], sizes = [2, 6, 1, 32], strides = [1, 1, 1, 1]} : vector<2x6x8x32xf32> to vector<2x6x1x32xf32>
    %c0_115 = arith.constant 0 : index
    %c0_116 = arith.constant 0 : index
    %c1_117 = arith.constant 1 : index
    %c0_118 = arith.constant 0 : index
    %89 = vector.load %arg17[%c0_115, %c0_116, %c1_117, %c0_118] : memref<2x6x10x128xf32, #tpu.memory_space<vmem>>, vector<2x6x8x32xf32>
    tpu.vector_store %arg17[%c0_115, %c0_116, %c1_117, %c0_118], %86 {strides = array<i32>} : memref<2x6x10x128xf32, #tpu.memory_space<vmem>>, vector<2x6x8x32xf32>,
    %c0_119 = arith.constant 0 : index
    %c0_120 = arith.constant 0 : index
    %c0_121 = arith.constant 0 : index
    %c0_122 = arith.constant 0 : index
    %90 = vector.load %arg17[%c0_119, %c0_120, %c0_121, %c0_122] : memref<2x6x10x128xf32, #tpu.memory_space<vmem>>, vector<2x6x1x32xf32>
    tpu.vector_store %arg17[%c0_119, %c0_120, %c0_121, %c0_122], %87 {strides = array<i32>} : memref<2x6x10x128xf32, #tpu.memory_space<vmem>>, vector<2x6x1x32xf32>,
    %c0_123 = arith.constant 0 : index
    %c0_124 = arith.constant 0 : index
    %c9_125 = arith.constant 9 : index
    %c0_126 = arith.constant 0 : index
    %91 = vector.load %arg17[%c0_123, %c0_124, %c9_125, %c0_126] : memref<2x6x10x128xf32, #tpu.memory_space<vmem>>, vector<2x6x1x32xf32>
    tpu.vector_store %arg17[%c0_123, %c0_124, %c9_125, %c0_126], %88 {strides = array<i32>} : memref<2x6x10x128xf32, #tpu.memory_space<vmem>>, vector<2x6x1x32xf32>,
    %cst_127 = arith.constant 0.000000e+00 : f32
    %92 = vector.broadcast %cst_127 : f32 to vector<64x32xf32>
    %c0_128 = arith.constant 0 : index
    %c0_129 = arith.constant 0 : index
    %c0_130 = arith.constant 0 : index
    %c0_131 = arith.constant 0 : index
    %93 = vector.load %arg17[%c0_128, %c0_129, %c0_130, %c0_131] : memref<2x6x10x128xf32, #tpu.memory_space<vmem>>, vector<2x4x8x32xf32>
    %94 = vector.shape_cast %93 : vector<2x4x8x32xf32> to vector<64x32xf32>
    %c0_132 = arith.constant 0 : index
    %c0_133 = arith.constant 0 : index
    %c0_134 = arith.constant 0 : index
    %c0_135 = arith.constant 0 : index
    %c0_136 = arith.constant 0 : index
    %95 = vector.load %arg6[%c0_132, %c0_133, %c0_134, %c0_135, %c0_136] : memref<1x3x3x32x32xf32, #tpu.memory_space<vmem>>, vector<1x1x1x32x32xf32>
    %96 = vector.shape_cast %95 : vector<1x1x1x32x32xf32> to vector<32x32xf32>
    %cst_137 = arith.constant dense<0.000000e+00> : vector<64x32xf32>
    %97 = tpu.matmul %94, %96, %cst_137 {dimension_numbers = #tpu.dot_dimension_numbers<[1], [0], [0], [1], [0, 0, 1, 1], [], []>} : vector<64x32xf32>, vector<32x32xf32>, vector<64x32xf32> -> vector<64x32xf32>
    %98 = arith.addf %92, %97 : vector<64x32xf32>
    %c0_138 = arith.constant 0 : index
    %c0_139 = arith.constant 0 : index
    %c1_140 = arith.constant 1 : index
    %c0_141 = arith.constant 0 : index
    %99 = vector.load %arg17[%c0_138, %c0_139, %c1_140, %c0_141] : memref<2x6x10x128xf32, #tpu.memory_space<vmem>>, vector<2x4x8x32xf32>
    %100 = vector.shape_cast %99 : vector<2x4x8x32xf32> to vector<64x32xf32>
    %c0_142 = arith.constant 0 : index
    %c0_143 = arith.constant 0 : index
    %c1_144 = arith.constant 1 : index
    %c0_145 = arith.constant 0 : index
    %c0_146 = arith.constant 0 : index
    %101 = vector.load %arg6[%c0_142, %c0_143, %c1_144, %c0_145, %c0_146] : memref<1x3x3x32x32xf32, #tpu.memory_space<vmem>>, vector<1x1x1x32x32xf32>
    %102 = vector.shape_cast %101 : vector<1x1x1x32x32xf32> to vector<32x32xf32>
    %cst_147 = arith.constant dense<0.000000e+00> : vector<64x32xf32>
    %103 = tpu.matmul %100, %102, %cst_147 {dimension_numbers = #tpu.dot_dimension_numbers<[1], [0], [0], [1], [0, 0, 1, 1], [], []>} : vector<64x32xf32>, vector<32x32xf32>, vector<64x32xf32> -> vector<64x32xf32>
    %104 = arith.addf %98, %103 : vector<64x32xf32>
    %c0_148 = arith.constant 0 : index
    %c0_149 = arith.constant 0 : index
    %c2_150 = arith.constant 2 : index
    %c0_151 = arith.constant 0 : index
    %105 = vector.load %arg17[%c0_148, %c0_149, %c2_150, %c0_151] : memref<2x6x10x128xf32, #tpu.memory_space<vmem>>, vector<2x4x8x32xf32>
    %106 = vector.shape_cast %105 : vector<2x4x8x32xf32> to vector<64x32xf32>
    %c0_152 = arith.constant 0 : index
    %c0_153 = arith.constant 0 : index
    %c2_154 = arith.constant 2 : index
    %c0_155 = arith.constant 0 : index
    %c0_156 = arith.constant 0 : index
    %107 = vector.load %arg6[%c0_152, %c0_153, %c2_154, %c0_155, %c0_156] : memref<1x3x3x32x32xf32, #tpu.memory_space<vmem>>, vector<1x1x1x32x32xf32>
    %108 = vector.shape_cast %107 : vector<1x1x1x32x32xf32> to vector<32x32xf32>
    %cst_157 = arith.constant dense<0.000000e+00> : vector<64x32xf32>
    %109 = tpu.matmul %106, %108, %cst_157 {dimension_numbers = #tpu.dot_dimension_numbers<[1], [0], [0], [1], [0, 0, 1, 1], [], []>} : vector<64x32xf32>, vector<32x32xf32>, vector<64x32xf32> -> vector<64x32xf32>
    %110 = arith.addf %104, %109 : vector<64x32xf32>
    %c0_158 = arith.constant 0 : index
    %c1_159 = arith.constant 1 : index
    %c0_160 = arith.constant 0 : index
    %c0_161 = arith.constant 0 : index
    %111 = vector.load %arg17[%c0_158, %c1_159, %c0_160, %c0_161] : memref<2x6x10x128xf32, #tpu.memory_space<vmem>>, vector<2x4x8x32xf32>
    %112 = vector.shape_cast %111 : vector<2x4x8x32xf32> to vector<64x32xf32>
    %c0_162 = arith.constant 0 : index
    %c1_163 = arith.constant 1 : index
    %c0_164 = arith.constant 0 : index
    %c0_165 = arith.constant 0 : index
    %c0_166 = arith.constant 0 : index
    %113 = vector.load %arg6[%c0_162, %c1_163, %c0_164, %c0_165, %c0_166] : memref<1x3x3x32x32xf32, #tpu.memory_space<vmem>>, vector<1x1x1x32x32xf32>
    %114 = vector.shape_cast %113 : vector<1x1x1x32x32xf32> to vector<32x32xf32>
    %cst_167 = arith.constant dense<0.000000e+00> : vector<64x32xf32>
    %115 = tpu.matmul %112, %114, %cst_167 {dimension_numbers = #tpu.dot_dimension_numbers<[1], [0], [0], [1], [0, 0, 1, 1], [], []>} : vector<64x32xf32>, vector<32x32xf32>, vector<64x32xf32> -> vector<64x32xf32>
    %116 = arith.addf %110, %115 : vector<64x32xf32>
    %c0_168 = arith.constant 0 : index
    %c1_169 = arith.constant 1 : index
    %c1_170 = arith.constant 1 : index
    %c0_171 = arith.constant 0 : index
    %117 = vector.load %arg17[%c0_168, %c1_169, %c1_170, %c0_171] : memref<2x6x10x128xf32, #tpu.memory_space<vmem>>, vector<2x4x8x32xf32>
    %118 = vector.shape_cast %117 : vector<2x4x8x32xf32> to vector<64x32xf32>
    %c0_172 = arith.constant 0 : index
    %c1_173 = arith.constant 1 : index
    %c1_174 = arith.constant 1 : index
    %c0_175 = arith.constant 0 : index
    %c0_176 = arith.constant 0 : index
    %119 = vector.load %arg6[%c0_172, %c1_173, %c1_174, %c0_175, %c0_176] : memref<1x3x3x32x32xf32, #tpu.memory_space<vmem>>, vector<1x1x1x32x32xf32>
    %120 = vector.shape_cast %119 : vector<1x1x1x32x32xf32> to vector<32x32xf32>
    %cst_177 = arith.constant dense<0.000000e+00> : vector<64x32xf32>
    %121 = tpu.matmul %118, %120, %cst_177 {dimension_numbers = #tpu.dot_dimension_numbers<[1], [0], [0], [1], [0, 0, 1, 1], [], []>} : vector<64x32xf32>, vector<32x32xf32>, vector<64x32xf32> -> vector<64x32xf32>
    %122 = arith.addf %116, %121 : vector<64x32xf32>
    %c0_178 = arith.constant 0 : index
    %c1_179 = arith.constant 1 : index
    %c2_180 = arith.constant 2 : index
    %c0_181 = arith.constant 0 : index
    %123 = vector.load %arg17[%c0_178, %c1_179, %c2_180, %c0_181] : memref<2x6x10x128xf32, #tpu.memory_space<vmem>>, vector<2x4x8x32xf32>
    %124 = vector.shape_cast %123 : vector<2x4x8x32xf32> to vector<64x32xf32>
    %c0_182 = arith.constant 0 : index
    %c1_183 = arith.constant 1 : index
    %c2_184 = arith.constant 2 : index
    %c0_185 = arith.constant 0 : index
    %c0_186 = arith.constant 0 : index
    %125 = vector.load %arg6[%c0_182, %c1_183, %c2_184, %c0_185, %c0_186] : memref<1x3x3x32x32xf32, #tpu.memory_space<vmem>>, vector<1x1x1x32x32xf32>
    %126 = vector.shape_cast %125 : vector<1x1x1x32x32xf32> to vector<32x32xf32>
    %cst_187 = arith.constant dense<0.000000e+00> : vector<64x32xf32>
    %127 = tpu.matmul %124, %126, %cst_187 {dimension_numbers = #tpu.dot_dimension_numbers<[1], [0], [0], [1], [0, 0, 1, 1], [], []>} : vector<64x32xf32>, vector<32x32xf32>, vector<64x32xf32> -> vector<64x32xf32>
    %128 = arith.addf %122, %127 : vector<64x32xf32>
    %c0_188 = arith.constant 0 : index
    %c2_189 = arith.constant 2 : index
    %c0_190 = arith.constant 0 : index
    %c0_191 = arith.constant 0 : index
    %129 = vector.load %arg17[%c0_188, %c2_189, %c0_190, %c0_191] : memref<2x6x10x128xf32, #tpu.memory_space<vmem>>, vector<2x4x8x32xf32>
    %130 = vector.shape_cast %129 : vector<2x4x8x32xf32> to vector<64x32xf32>
    %c0_192 = arith.constant 0 : index
    %c2_193 = arith.constant 2 : index
    %c0_194 = arith.constant 0 : index
    %c0_195 = arith.constant 0 : index
    %c0_196 = arith.constant 0 : index
    %131 = vector.load %arg6[%c0_192, %c2_193, %c0_194, %c0_195, %c0_196] : memref<1x3x3x32x32xf32, #tpu.memory_space<vmem>>, vector<1x1x1x32x32xf32>
    %132 = vector.shape_cast %131 : vector<1x1x1x32x32xf32> to vector<32x32xf32>
    %cst_197 = arith.constant dense<0.000000e+00> : vector<64x32xf32>
    %133 = tpu.matmul %130, %132, %cst_197 {dimension_numbers = #tpu.dot_dimension_numbers<[1], [0], [0], [1], [0, 0, 1, 1], [], []>} : vector<64x32xf32>, vector<32x32xf32>, vector<64x32xf32> -> vector<64x32xf32>
    %134 = arith.addf %128, %133 : vector<64x32xf32>
    %c0_198 = arith.constant 0 : index
    %c2_199 = arith.constant 2 : index
    %c1_200 = arith.constant 1 : index
    %c0_201 = arith.constant 0 : index
    %135 = vector.load %arg17[%c0_198, %c2_199, %c1_200, %c0_201] : memref<2x6x10x128xf32, #tpu.memory_space<vmem>>, vector<2x4x8x32xf32>
    %136 = vector.shape_cast %135 : vector<2x4x8x32xf32> to vector<64x32xf32>
    %c0_202 = arith.constant 0 : index
    %c2_203 = arith.constant 2 : index
    %c1_204 = arith.constant 1 : index
    %c0_205 = arith.constant 0 : index
    %c0_206 = arith.constant 0 : index
    %137 = vector.load %arg6[%c0_202, %c2_203, %c1_204, %c0_205, %c0_206] : memref<1x3x3x32x32xf32, #tpu.memory_space<vmem>>, vector<1x1x1x32x32xf32>
    %138 = vector.shape_cast %137 : vector<1x1x1x32x32xf32> to vector<32x32xf32>
    %cst_207 = arith.constant dense<0.000000e+00> : vector<64x32xf32>
    %139 = tpu.matmul %136, %138, %cst_207 {dimension_numbers = #tpu.dot_dimension_numbers<[1], [0], [0], [1], [0, 0, 1, 1], [], []>} : vector<64x32xf32>, vector<32x32xf32>, vector<64x32xf32> -> vector<64x32xf32>
    %140 = arith.addf %134, %139 : vector<64x32xf32>
    %c0_208 = arith.constant 0 : index
    %c2_209 = arith.constant 2 : index
    %c2_210 = arith.constant 2 : index
    %c0_211 = arith.constant 0 : index
    %141 = vector.load %arg17[%c0_208, %c2_209, %c2_210, %c0_211] : memref<2x6x10x128xf32, #tpu.memory_space<vmem>>, vector<2x4x8x32xf32>
    %142 = vector.shape_cast %141 : vector<2x4x8x32xf32> to vector<64x32xf32>
    %c0_212 = arith.constant 0 : index
    %c2_213 = arith.constant 2 : index
    %c2_214 = arith.constant 2 : index
    %c0_215 = arith.constant 0 : index
    %c0_216 = arith.constant 0 : index
    %143 = vector.load %arg6[%c0_212, %c2_213, %c2_214, %c0_215, %c0_216] : memref<1x3x3x32x32xf32, #tpu.memory_space<vmem>>, vector<1x1x1x32x32xf32>
    %144 = vector.shape_cast %143 : vector<1x1x1x32x32xf32> to vector<32x32xf32>
    %cst_217 = arith.constant dense<0.000000e+00> : vector<64x32xf32>
    %145 = tpu.matmul %142, %144, %cst_217 {dimension_numbers = #tpu.dot_dimension_numbers<[1], [0], [0], [1], [0, 0, 1, 1], [], []>} : vector<64x32xf32>, vector<32x32xf32>, vector<64x32xf32> -> vector<64x32xf32>
    %146 = arith.addf %140, %145 : vector<64x32xf32>
    %c0_218 = arith.constant 0 : index
    %c0_219 = arith.constant 0 : index
    %c0_220 = arith.constant 0 : index
    %147 = vector.load %arg7[%c0_218, %c0_219, %c0_220] : memref<1x1x32xf32, #tpu.memory_space<vmem>>, vector<1x1x32xf32>
    %148 = vector.shape_cast %147 : vector<1x1x32xf32> to vector<1x32xf32>
    %149 = vector.broadcast %148 : vector<1x32xf32> to vector<64x32xf32>
    %150 = arith.addf %146, %149 : vector<64x32xf32>
    %cst_221 = arith.constant 0.000000e+00 : f32
    %151 = vector.broadcast %cst_221 : f32 to vector<64x32xf32>
    %152 = arith.cmpf oge, %150, %151 : vector<64x32xf32>
    %cst_222 = arith.constant 0.00999999977 : f32
    %153 = vector.broadcast %cst_222 : f32 to vector<64x32xf32>
    %154 = arith.mulf %153, %150 : vector<64x32xf32>
    %155 = arith.select %152, %150, %154 : vector<64x32xi1>, vector<64x32xf32>
    %156 = vector.shape_cast %155 : vector<64x32xf32> to vector<2x4x8x32xf32>
    %157 = vector.shape_cast %156 : vector<2x4x8x32xf32> to vector<64x32xf32>
    %c0_223 = arith.constant 0 : index
    %c0_224 = arith.constant 0 : index
    %c0_225 = arith.constant 0 : index
    %158 = vector.load %arg8[%c0_223, %c0_224, %c0_225] : memref<1x32x128xf32, #tpu.memory_space<vmem>>, vector<1x32x128xf32>
    %159 = vector.shape_cast %158 : vector<1x32x128xf32> to vector<32x128xf32>
    %cst_226 = arith.constant dense<0.000000e+00> : vector<64x128xf32>
    %160 = tpu.matmul %157, %159, %cst_226 {dimension_numbers = #tpu.dot_dimension_numbers<[1], [0], [0], [1], [0, 0, 1, 1], [], []>} : vector<64x32xf32>, vector<32x128xf32>, vector<64x128xf32> -> vector<64x128xf32>
    %c0_227 = arith.constant 0 : index
    %c0_228 = arith.constant 0 : index
    %c0_229 = arith.constant 0 : index
    %161 = vector.load %arg9[%c0_227, %c0_228, %c0_229] : memref<1x1x128xf32, #tpu.memory_space<vmem>>, vector<1x1x128xf32>
    %162 = vector.shape_cast %161 : vector<1x1x128xf32> to vector<1x128xf32>
    %163 = vector.broadcast %162 : vector<1x128xf32> to vector<64x128xf32>
    %164 = arith.addf %160, %163 : vector<64x128xf32>
    %165 = vector.shape_cast %164 : vector<64x128xf32> to vector<2x4x8x128xf32>
    %166 = vector.extract_strided_slice %165 {offsets = [0, 0, 0, 0], sizes = [2, 1, 8, 128], strides = [1, 1, 1, 1]} : vector<2x4x8x128xf32> to vector<2x1x8x128xf32>
    %167 = tpu.iota {dimensions = array<i32: 0>} : vector<128x128xi32>
    %168 = tpu.iota {dimensions = array<i32: 1>} : vector<128x128xi32>
    %c64_i32 = arith.constant 64 : i32
    %169 = vector.broadcast %c64_i32 : i32 to vector<128x128xi32>
    %170 = arith.addi %167, %169 : vector<128x128xi32>
    %c128_i32 = arith.constant 128 : i32
    %c0_i32 = arith.constant 0 : i32
    %171 = arith.cmpi eq, %c128_i32, %c0_i32 : i32
    %c1_i32 = arith.constant 1 : i32
    %172 = arith.select %171, %c1_i32, %c128_i32 : i32
    %173 = vector.broadcast %172 : i32 to vector<128x128xi32>
    %174 = arith.remsi %170, %173 : vector<128x128xi32>
    %c0_i32_230 = arith.constant 0 : i32
    %175 = vector.broadcast %c0_i32_230 : i32 to vector<128x128xi32>
    %176 = arith.cmpi ne, %174, %175 : vector<128x128xi32>
    %c0_i32_231 = arith.constant 0 : i32
    %177 = vector.broadcast %c0_i32_231 : i32 to vector<128x128xi32>
    %178 = arith.cmpi slt, %174, %177 : vector<128x128xi32>
    %c0_i32_232 = arith.constant 0 : i32
    %179 = arith.cmpi slt, %172, %c0_i32_232 : i32
    %180 = vector.broadcast %179 : i1 to vector<128x128xi1>
    %181 = vector.broadcast %180 : vector<128x128xi1> to vector<128x128xi1>
    %182 = arith.xori %178, %181 : vector<128x128xi1>
    %183 = arith.andi %182, %176 : vector<128x128xi1>
    %184 = vector.broadcast %172 : i32 to vector<128x128xi32>
    %185 = arith.addi %174, %184 : vector<128x128xi32>
    %186 = arith.select %183, %185, %174 : vector<128x128xi1>, vector<128x128xi32>
    %187 = arith.cmpi eq, %168, %186 : vector<128x128xi32>
    %188 = arith.extui %187 : vector<128x128xi1> to vector<128x128xi32>
    %189 = arith.sitofp %188 : vector<128x128xi32> to vector<128x128xf32>
    %190 = vector.shape_cast %166 : vector<2x1x8x128xf32> to vector<16x128xf32>
    %cst_233 = arith.constant dense<0.000000e+00> : vector<16x128xf32>
    %191 = tpu.matmul %190, %189, %cst_233 {dimension_numbers = #tpu.dot_dimension_numbers<[1], [0], [0], [1], [0, 0, 1, 1], [], []>} : vector<16x128xf32>, vector<128x128xf32>, vector<16x128xf32> -> vector<16x128xf32>
    %192 = vector.shape_cast %191 : vector<16x128xf32> to vector<2x1x8x128xf32>
    %193 = vector.extract_strided_slice %165 {offsets = [0, 3, 0, 0], sizes = [2, 1, 8, 128], strides = [1, 1, 1, 1]} : vector<2x4x8x128xf32> to vector<2x1x8x128xf32>
    %194 = tpu.iota {dimensions = array<i32: 0>} : vector<128x128xi32>
    %195 = tpu.iota {dimensions = array<i32: 1>} : vector<128x128xi32>
    %c-64_i32 = arith.constant -64 : i32
    %196 = vector.broadcast %c-64_i32 : i32 to vector<128x128xi32>
    %197 = arith.addi %194, %196 : vector<128x128xi32>
    %c128_i32_234 = arith.constant 128 : i32
    %c0_i32_235 = arith.constant 0 : i32
    %198 = arith.cmpi eq, %c128_i32_234, %c0_i32_235 : i32
    %c1_i32_236 = arith.constant 1 : i32
    %199 = arith.select %198, %c1_i32_236, %c128_i32_234 : i32
    %200 = vector.broadcast %199 : i32 to vector<128x128xi32>
    %201 = arith.remsi %197, %200 : vector<128x128xi32>
    %c0_i32_237 = arith.constant 0 : i32
    %202 = vector.broadcast %c0_i32_237 : i32 to vector<128x128xi32>
    %203 = arith.cmpi ne, %201, %202 : vector<128x128xi32>
    %c0_i32_238 = arith.constant 0 : i32
    %204 = vector.broadcast %c0_i32_238 : i32 to vector<128x128xi32>
    %205 = arith.cmpi slt, %201, %204 : vector<128x128xi32>
    %c0_i32_239 = arith.constant 0 : i32
    %206 = arith.cmpi slt, %199, %c0_i32_239 : i32
    %207 = vector.broadcast %206 : i1 to vector<128x128xi1>
    %208 = vector.broadcast %207 : vector<128x128xi1> to vector<128x128xi1>
    %209 = arith.xori %205, %208 : vector<128x128xi1>
    %210 = arith.andi %209, %203 : vector<128x128xi1>
    %211 = vector.broadcast %199 : i32 to vector<128x128xi32>
    %212 = arith.addi %201, %211 : vector<128x128xi32>
    %213 = arith.select %210, %212, %201 : vector<128x128xi1>, vector<128x128xi32>
    %214 = arith.cmpi eq, %195, %213 : vector<128x128xi32>
    %215 = arith.extui %214 : vector<128x128xi1> to vector<128x128xi32>
    %216 = arith.sitofp %215 : vector<128x128xi32> to vector<128x128xf32>
    %217 = vector.shape_cast %193 : vector<2x1x8x128xf32> to vector<16x128xf32>
    %cst_240 = arith.constant dense<0.000000e+00> : vector<16x128xf32>
    %218 = tpu.matmul %217, %216, %cst_240 {dimension_numbers = #tpu.dot_dimension_numbers<[1], [0], [0], [1], [0, 0, 1, 1], [], []>} : vector<16x128xf32>, vector<128x128xf32>, vector<16x128xf32> -> vector<16x128xf32>
    %219 = vector.shape_cast %218 : vector<16x128xf32> to vector<2x1x8x128xf32>
    %220 = tpu.concatenate %192, %165, %219 in 1 : vector<2x1x8x128xf32>, vector<2x4x8x128xf32>, vector<2x1x8x128xf32> -> vector<2x6x8x128xf32>
    %221 = vector.extract_strided_slice %220 {offsets = [0, 0, 0, 0], sizes = [2, 6, 1, 128], strides = [1, 1, 1, 1]} : vector<2x6x8x128xf32> to vector<2x6x1x128xf32>
    %222 = tpu.iota {dimensions = array<i32: 0>} : vector<128x128xi32>
    %223 = tpu.iota {dimensions = array<i32: 1>} : vector<128x128xi32>
    %c16_i32 = arith.constant 16 : i32
    %224 = vector.broadcast %c16_i32 : i32 to vector<128x128xi32>
    %225 = arith.addi %222, %224 : vector<128x128xi32>
    %c128_i32_241 = arith.constant 128 : i32
    %c0_i32_242 = arith.constant 0 : i32
    %226 = arith.cmpi eq, %c128_i32_241, %c0_i32_242 : i32
    %c1_i32_243 = arith.constant 1 : i32
    %227 = arith.select %226, %c1_i32_243, %c128_i32_241 : i32
    %228 = vector.broadcast %227 : i32 to vector<128x128xi32>
    %229 = arith.remsi %225, %228 : vector<128x128xi32>
    %c0_i32_244 = arith.constant 0 : i32
    %230 = vector.broadcast %c0_i32_244 : i32 to vector<128x128xi32>
    %231 = arith.cmpi ne, %229, %230 : vector<128x128xi32>
    %c0_i32_245 = arith.constant 0 : i32
    %232 = vector.broadcast %c0_i32_245 : i32 to vector<128x128xi32>
    %233 = arith.cmpi slt, %229, %232 : vector<128x128xi32>
    %c0_i32_246 = arith.constant 0 : i32
    %234 = arith.cmpi slt, %227, %c0_i32_246 : i32
    %235 = vector.broadcast %234 : i1 to vector<128x128xi1>
    %236 = vector.broadcast %235 : vector<128x128xi1> to vector<128x128xi1>
    %237 = arith.xori %233, %236 : vector<128x128xi1>
    %238 = arith.andi %237, %231 : vector<128x128xi1>
    %239 = vector.broadcast %227 : i32 to vector<128x128xi32>
    %240 = arith.addi %229, %239 : vector<128x128xi32>
    %241 = arith.select %238, %240, %229 : vector<128x128xi1>, vector<128x128xi32>
    %242 = arith.cmpi eq, %223, %241 : vector<128x128xi32>
    %243 = arith.extui %242 : vector<128x128xi1> to vector<128x128xi32>
    %244 = arith.sitofp %243 : vector<128x128xi32> to vector<128x128xf32>
    %245 = vector.shape_cast %221 : vector<2x6x1x128xf32> to vector<12x128xf32>
    %cst_247 = arith.constant dense<0.000000e+00> : vector<12x128xf32>
    %246 = tpu.matmul %245, %244, %cst_247 {dimension_numbers = #tpu.dot_dimension_numbers<[1], [0], [0], [1], [0, 0, 1, 1], [], []>} : vector<12x128xf32>, vector<128x128xf32>, vector<12x128xf32> -> vector<12x128xf32>
    %247 = vector.shape_cast %246 : vector<12x128xf32> to vector<2x6x1x128xf32>
    %248 = vector.extract_strided_slice %220 {offsets = [0, 0, 7, 0], sizes = [2, 6, 1, 128], strides = [1, 1, 1, 1]} : vector<2x6x8x128xf32> to vector<2x6x1x128xf32>
    %249 = tpu.iota {dimensions = array<i32: 0>} : vector<128x128xi32>
    %250 = tpu.iota {dimensions = array<i32: 1>} : vector<128x128xi32>
    %c-16_i32 = arith.constant -16 : i32
    %251 = vector.broadcast %c-16_i32 : i32 to vector<128x128xi32>
    %252 = arith.addi %249, %251 : vector<128x128xi32>
    %c128_i32_248 = arith.constant 128 : i32
    %c0_i32_249 = arith.constant 0 : i32
    %253 = arith.cmpi eq, %c128_i32_248, %c0_i32_249 : i32
    %c1_i32_250 = arith.constant 1 : i32
    %254 = arith.select %253, %c1_i32_250, %c128_i32_248 : i32
    %255 = vector.broadcast %254 : i32 to vector<128x128xi32>
    %256 = arith.remsi %252, %255 : vector<128x128xi32>
    %c0_i32_251 = arith.constant 0 : i32
    %257 = vector.broadcast %c0_i32_251 : i32 to vector<128x128xi32>
    %258 = arith.cmpi ne, %256, %257 : vector<128x128xi32>
    %c0_i32_252 = arith.constant 0 : i32
    %259 = vector.broadcast %c0_i32_252 : i32 to vector<128x128xi32>
    %260 = arith.cmpi slt, %256, %259 : vector<128x128xi32>
    %c0_i32_253 = arith.constant 0 : i32
    %261 = arith.cmpi slt, %254, %c0_i32_253 : i32
    %262 = vector.broadcast %261 : i1 to vector<128x128xi1>
    %263 = vector.broadcast %262 : vector<128x128xi1> to vector<128x128xi1>
    %264 = arith.xori %260, %263 : vector<128x128xi1>
    %265 = arith.andi %264, %258 : vector<128x128xi1>
    %266 = vector.broadcast %254 : i32 to vector<128x128xi32>
    %267 = arith.addi %256, %266 : vector<128x128xi32>
    %268 = arith.select %265, %267, %256 : vector<128x128xi1>, vector<128x128xi32>
    %269 = arith.cmpi eq, %250, %268 : vector<128x128xi32>
    %270 = arith.extui %269 : vector<128x128xi1> to vector<128x128xi32>
    %271 = arith.sitofp %270 : vector<128x128xi32> to vector<128x128xf32>
    %272 = vector.shape_cast %248 : vector<2x6x1x128xf32> to vector<12x128xf32>
    %cst_254 = arith.constant dense<0.000000e+00> : vector<12x128xf32>
    %273 = tpu.matmul %272, %271, %cst_254 {dimension_numbers = #tpu.dot_dimension_numbers<[1], [0], [0], [1], [0, 0, 1, 1], [], []>} : vector<12x128xf32>, vector<128x128xf32>, vector<12x128xf32> -> vector<12x128xf32>
    %274 = vector.shape_cast %273 : vector<12x128xf32> to vector<2x6x1x128xf32>
    %c0_255 = arith.constant 0 : index
    %c0_256 = arith.constant 0 : index
    %c1_257 = arith.constant 1 : index
    %c0_258 = arith.constant 0 : index
    %275 = vector.load %arg17[%c0_255, %c0_256, %c1_257, %c0_258] : memref<2x6x10x128xf32, #tpu.memory_space<vmem>>, vector<2x6x8x128xf32>
    tpu.vector_store %arg17[%c0_255, %c0_256, %c1_257, %c0_258], %220 {strides = array<i32>} : memref<2x6x10x128xf32, #tpu.memory_space<vmem>>, vector<2x6x8x128xf32>,
    %c0_259 = arith.constant 0 : index
    %c0_260 = arith.constant 0 : index
    %c0_261 = arith.constant 0 : index
    %c0_262 = arith.constant 0 : index
    %276 = vector.load %arg17[%c0_259, %c0_260, %c0_261, %c0_262] : memref<2x6x10x128xf32, #tpu.memory_space<vmem>>, vector<2x6x1x128xf32>
    tpu.vector_store %arg17[%c0_259, %c0_260, %c0_261, %c0_262], %247 {strides = array<i32>} : memref<2x6x10x128xf32, #tpu.memory_space<vmem>>, vector<2x6x1x128xf32>,
    %c0_263 = arith.constant 0 : index
    %c0_264 = arith.constant 0 : index
    %c9_265 = arith.constant 9 : index
    %c0_266 = arith.constant 0 : index
    %277 = vector.load %arg17[%c0_263, %c0_264, %c9_265, %c0_266] : memref<2x6x10x128xf32, #tpu.memory_space<vmem>>, vector<2x6x1x128xf32>
    tpu.vector_store %arg17[%c0_263, %c0_264, %c9_265, %c0_266], %274 {strides = array<i32>} : memref<2x6x10x128xf32, #tpu.memory_space<vmem>>, vector<2x6x1x128xf32>,
    %cst_267 = arith.constant 0.000000e+00 : f32
    %278 = vector.broadcast %cst_267 : f32 to vector<64x128xf32>
    %c0_268 = arith.constant 0 : index
    %c0_269 = arith.constant 0 : index
    %c0_270 = arith.constant 0 : index
    %c0_271 = arith.constant 0 : index
    %279 = vector.load %arg17[%c0_268, %c0_269, %c0_270, %c0_271] : memref<2x6x10x128xf32, #tpu.memory_space<vmem>>, vector<2x4x8x128xf32>
    %280 = vector.shape_cast %279 : vector<2x4x8x128xf32> to vector<64x128xf32>
    %c0_272 = arith.constant 0 : index
    %c0_273 = arith.constant 0 : index
    %c0_274 = arith.constant 0 : index
    %c0_275 = arith.constant 0 : index
    %c0_276 = arith.constant 0 : index
    %281 = vector.load %arg10[%c0_272, %c0_273, %c0_274, %c0_275, %c0_276] : memref<1x3x3x128x128xf32, #tpu.memory_space<vmem>>, vector<1x1x1x128x128xf32>
    %282 = vector.shape_cast %281 : vector<1x1x1x128x128xf32> to vector<128x128xf32>
    %cst_277 = arith.constant dense<0.000000e+00> : vector<64x128xf32>
    %283 = tpu.matmul %280, %282, %cst_277 {dimension_numbers = #tpu.dot_dimension_numbers<[1], [0], [0], [1], [0, 0, 1, 1], [], []>} : vector<64x128xf32>, vector<128x128xf32>, vector<64x128xf32> -> vector<64x128xf32>
    %284 = arith.addf %278, %283 : vector<64x128xf32>
    %c0_278 = arith.constant 0 : index
    %c0_279 = arith.constant 0 : index
    %c1_280 = arith.constant 1 : index
    %c0_281 = arith.constant 0 : index
    %285 = vector.load %arg17[%c0_278, %c0_279, %c1_280, %c0_281] : memref<2x6x10x128xf32, #tpu.memory_space<vmem>>, vector<2x4x8x128xf32>
    %286 = vector.shape_cast %285 : vector<2x4x8x128xf32> to vector<64x128xf32>
    %c0_282 = arith.constant 0 : index
    %c0_283 = arith.constant 0 : index
    %c1_284 = arith.constant 1 : index
    %c0_285 = arith.constant 0 : index
    %c0_286 = arith.constant 0 : index
    %287 = vector.load %arg10[%c0_282, %c0_283, %c1_284, %c0_285, %c0_286] : memref<1x3x3x128x128xf32, #tpu.memory_space<vmem>>, vector<1x1x1x128x128xf32>
    %288 = vector.shape_cast %287 : vector<1x1x1x128x128xf32> to vector<128x128xf32>
    %cst_287 = arith.constant dense<0.000000e+00> : vector<64x128xf32>
    %289 = tpu.matmul %286, %288, %cst_287 {dimension_numbers = #tpu.dot_dimension_numbers<[1], [0], [0], [1], [0, 0, 1, 1], [], []>} : vector<64x128xf32>, vector<128x128xf32>, vector<64x128xf32> -> vector<64x128xf32>
    %290 = arith.addf %284, %289 : vector<64x128xf32>
    %c0_288 = arith.constant 0 : index
    %c0_289 = arith.constant 0 : index
    %c2_290 = arith.constant 2 : index
    %c0_291 = arith.constant 0 : index
    %291 = vector.load %arg17[%c0_288, %c0_289, %c2_290, %c0_291] : memref<2x6x10x128xf32, #tpu.memory_space<vmem>>, vector<2x4x8x128xf32>
    %292 = vector.shape_cast %291 : vector<2x4x8x128xf32> to vector<64x128xf32>
    %c0_292 = arith.constant 0 : index
    %c0_293 = arith.constant 0 : index
    %c2_294 = arith.constant 2 : index
    %c0_295 = arith.constant 0 : index
    %c0_296 = arith.constant 0 : index
    %293 = vector.load %arg10[%c0_292, %c0_293, %c2_294, %c0_295, %c0_296] : memref<1x3x3x128x128xf32, #tpu.memory_space<vmem>>, vector<1x1x1x128x128xf32>
    %294 = vector.shape_cast %293 : vector<1x1x1x128x128xf32> to vector<128x128xf32>
    %cst_297 = arith.constant dense<0.000000e+00> : vector<64x128xf32>
    %295 = tpu.matmul %292, %294, %cst_297 {dimension_numbers = #tpu.dot_dimension_numbers<[1], [0], [0], [1], [0, 0, 1, 1], [], []>} : vector<64x128xf32>, vector<128x128xf32>, vector<64x128xf32> -> vector<64x128xf32>
    %296 = arith.addf %290, %295 : vector<64x128xf32>
    %c0_298 = arith.constant 0 : index
    %c1_299 = arith.constant 1 : index
    %c0_300 = arith.constant 0 : index
    %c0_301 = arith.constant 0 : index
    %297 = vector.load %arg17[%c0_298, %c1_299, %c0_300, %c0_301] : memref<2x6x10x128xf32, #tpu.memory_space<vmem>>, vector<2x4x8x128xf32>
    %298 = vector.shape_cast %297 : vector<2x4x8x128xf32> to vector<64x128xf32>
    %c0_302 = arith.constant 0 : index
    %c1_303 = arith.constant 1 : index
    %c0_304 = arith.constant 0 : index
    %c0_305 = arith.constant 0 : index
    %c0_306 = arith.constant 0 : index
    %299 = vector.load %arg10[%c0_302, %c1_303, %c0_304, %c0_305, %c0_306] : memref<1x3x3x128x128xf32, #tpu.memory_space<vmem>>, vector<1x1x1x128x128xf32>
    %300 = vector.shape_cast %299 : vector<1x1x1x128x128xf32> to vector<128x128xf32>
    %cst_307 = arith.constant dense<0.000000e+00> : vector<64x128xf32>
    %301 = tpu.matmul %298, %300, %cst_307 {dimension_numbers = #tpu.dot_dimension_numbers<[1], [0], [0], [1], [0, 0, 1, 1], [], []>} : vector<64x128xf32>, vector<128x128xf32>, vector<64x128xf32> -> vector<64x128xf32>
    %302 = arith.addf %296, %301 : vector<64x128xf32>
    %c0_308 = arith.constant 0 : index
    %c1_309 = arith.constant 1 : index
    %c1_310 = arith.constant 1 : index
    %c0_311 = arith.constant 0 : index
    %303 = vector.load %arg17[%c0_308, %c1_309, %c1_310, %c0_311] : memref<2x6x10x128xf32, #tpu.memory_space<vmem>>, vector<2x4x8x128xf32>
    %304 = vector.shape_cast %303 : vector<2x4x8x128xf32> to vector<64x128xf32>
    %c0_312 = arith.constant 0 : index
    %c1_313 = arith.constant 1 : index
    %c1_314 = arith.constant 1 : index
    %c0_315 = arith.constant 0 : index
    %c0_316 = arith.constant 0 : index
    %305 = vector.load %arg10[%c0_312, %c1_313, %c1_314, %c0_315, %c0_316] : memref<1x3x3x128x128xf32, #tpu.memory_space<vmem>>, vector<1x1x1x128x128xf32>
    %306 = vector.shape_cast %305 : vector<1x1x1x128x128xf32> to vector<128x128xf32>
    %cst_317 = arith.constant dense<0.000000e+00> : vector<64x128xf32>
    %307 = tpu.matmul %304, %306, %cst_317 {dimension_numbers = #tpu.dot_dimension_numbers<[1], [0], [0], [1], [0, 0, 1, 1], [], []>} : vector<64x128xf32>, vector<128x128xf32>, vector<64x128xf32> -> vector<64x128xf32>
    %308 = arith.addf %302, %307 : vector<64x128xf32>
    %c0_318 = arith.constant 0 : index
    %c1_319 = arith.constant 1 : index
    %c2_320 = arith.constant 2 : index
    %c0_321 = arith.constant 0 : index
    %309 = vector.load %arg17[%c0_318, %c1_319, %c2_320, %c0_321] : memref<2x6x10x128xf32, #tpu.memory_space<vmem>>, vector<2x4x8x128xf32>
    %310 = vector.shape_cast %309 : vector<2x4x8x128xf32> to vector<64x128xf32>
    %c0_322 = arith.constant 0 : index
    %c1_323 = arith.constant 1 : index
    %c2_324 = arith.constant 2 : index
    %c0_325 = arith.constant 0 : index
    %c0_326 = arith.constant 0 : index
    %311 = vector.load %arg10[%c0_322, %c1_323, %c2_324, %c0_325, %c0_326] : memref<1x3x3x128x128xf32, #tpu.memory_space<vmem>>, vector<1x1x1x128x128xf32>
    %312 = vector.shape_cast %311 : vector<1x1x1x128x128xf32> to vector<128x128xf32>
    %cst_327 = arith.constant dense<0.000000e+00> : vector<64x128xf32>
    %313 = tpu.matmul %310, %312, %cst_327 {dimension_numbers = #tpu.dot_dimension_numbers<[1], [0], [0], [1], [0, 0, 1, 1], [], []>} : vector<64x128xf32>, vector<128x128xf32>, vector<64x128xf32> -> vector<64x128xf32>
    %314 = arith.addf %308, %313 : vector<64x128xf32>
    %c0_328 = arith.constant 0 : index
    %c2_329 = arith.constant 2 : index
    %c0_330 = arith.constant 0 : index
    %c0_331 = arith.constant 0 : index
    %315 = vector.load %arg17[%c0_328, %c2_329, %c0_330, %c0_331] : memref<2x6x10x128xf32, #tpu.memory_space<vmem>>, vector<2x4x8x128xf32>
    %316 = vector.shape_cast %315 : vector<2x4x8x128xf32> to vector<64x128xf32>
    %c0_332 = arith.constant 0 : index
    %c2_333 = arith.constant 2 : index
    %c0_334 = arith.constant 0 : index
    %c0_335 = arith.constant 0 : index
    %c0_336 = arith.constant 0 : index
    %317 = vector.load %arg10[%c0_332, %c2_333, %c0_334, %c0_335, %c0_336] : memref<1x3x3x128x128xf32, #tpu.memory_space<vmem>>, vector<1x1x1x128x128xf32>
    %318 = vector.shape_cast %317 : vector<1x1x1x128x128xf32> to vector<128x128xf32>
    %cst_337 = arith.constant dense<0.000000e+00> : vector<64x128xf32>
    %319 = tpu.matmul %316, %318, %cst_337 {dimension_numbers = #tpu.dot_dimension_numbers<[1], [0], [0], [1], [0, 0, 1, 1], [], []>} : vector<64x128xf32>, vector<128x128xf32>, vector<64x128xf32> -> vector<64x128xf32>
    %320 = arith.addf %314, %319 : vector<64x128xf32>
    %c0_338 = arith.constant 0 : index
    %c2_339 = arith.constant 2 : index
    %c1_340 = arith.constant 1 : index
    %c0_341 = arith.constant 0 : index
    %321 = vector.load %arg17[%c0_338, %c2_339, %c1_340, %c0_341] : memref<2x6x10x128xf32, #tpu.memory_space<vmem>>, vector<2x4x8x128xf32>
    %322 = vector.shape_cast %321 : vector<2x4x8x128xf32> to vector<64x128xf32>
    %c0_342 = arith.constant 0 : index
    %c2_343 = arith.constant 2 : index
    %c1_344 = arith.constant 1 : index
    %c0_345 = arith.constant 0 : index
    %c0_346 = arith.constant 0 : index
    %323 = vector.load %arg10[%c0_342, %c2_343, %c1_344, %c0_345, %c0_346] : memref<1x3x3x128x128xf32, #tpu.memory_space<vmem>>, vector<1x1x1x128x128xf32>
    %324 = vector.shape_cast %323 : vector<1x1x1x128x128xf32> to vector<128x128xf32>
    %cst_347 = arith.constant dense<0.000000e+00> : vector<64x128xf32>
    %325 = tpu.matmul %322, %324, %cst_347 {dimension_numbers = #tpu.dot_dimension_numbers<[1], [0], [0], [1], [0, 0, 1, 1], [], []>} : vector<64x128xf32>, vector<128x128xf32>, vector<64x128xf32> -> vector<64x128xf32>
    %326 = arith.addf %320, %325 : vector<64x128xf32>
    %c0_348 = arith.constant 0 : index
    %c2_349 = arith.constant 2 : index
    %c2_350 = arith.constant 2 : index
    %c0_351 = arith.constant 0 : index
    %327 = vector.load %arg17[%c0_348, %c2_349, %c2_350, %c0_351] : memref<2x6x10x128xf32, #tpu.memory_space<vmem>>, vector<2x4x8x128xf32>
    %328 = vector.shape_cast %327 : vector<2x4x8x128xf32> to vector<64x128xf32>
    %c0_352 = arith.constant 0 : index
    %c2_353 = arith.constant 2 : index
    %c2_354 = arith.constant 2 : index
    %c0_355 = arith.constant 0 : index
    %c0_356 = arith.constant 0 : index
    %329 = vector.load %arg10[%c0_352, %c2_353, %c2_354, %c0_355, %c0_356] : memref<1x3x3x128x128xf32, #tpu.memory_space<vmem>>, vector<1x1x1x128x128xf32>
    %330 = vector.shape_cast %329 : vector<1x1x1x128x128xf32> to vector<128x128xf32>
    %cst_357 = arith.constant dense<0.000000e+00> : vector<64x128xf32>
    %331 = tpu.matmul %328, %330, %cst_357 {dimension_numbers = #tpu.dot_dimension_numbers<[1], [0], [0], [1], [0, 0, 1, 1], [], []>} : vector<64x128xf32>, vector<128x128xf32>, vector<64x128xf32> -> vector<64x128xf32>
    %332 = arith.addf %326, %331 : vector<64x128xf32>
    %c0_358 = arith.constant 0 : index
    %c0_359 = arith.constant 0 : index
    %c0_360 = arith.constant 0 : index
    %333 = vector.load %arg11[%c0_358, %c0_359, %c0_360] : memref<1x1x128xf32, #tpu.memory_space<vmem>>, vector<1x1x128xf32>
    %334 = vector.shape_cast %333 : vector<1x1x128xf32> to vector<1x128xf32>
    %335 = vector.broadcast %334 : vector<1x128xf32> to vector<64x128xf32>
    %336 = arith.addf %332, %335 : vector<64x128xf32>
    %337 = vector.shape_cast %336 : vector<64x128xf32> to vector<2x4x8x128xf32>
    %338 = vector.extract_strided_slice %337 {offsets = [0, 0, 0, 0], sizes = [2, 1, 8, 128], strides = [1, 1, 1, 1]} : vector<2x4x8x128xf32> to vector<2x1x8x128xf32>
    %339 = tpu.iota {dimensions = array<i32: 0>} : vector<128x128xi32>
    %340 = tpu.iota {dimensions = array<i32: 1>} : vector<128x128xi32>
    %c64_i32_361 = arith.constant 64 : i32
    %341 = vector.broadcast %c64_i32_361 : i32 to vector<128x128xi32>
    %342 = arith.addi %339, %341 : vector<128x128xi32>
    %c128_i32_362 = arith.constant 128 : i32
    %c0_i32_363 = arith.constant 0 : i32
    %343 = arith.cmpi eq, %c128_i32_362, %c0_i32_363 : i32
    %c1_i32_364 = arith.constant 1 : i32
    %344 = arith.select %343, %c1_i32_364, %c128_i32_362 : i32
    %345 = vector.broadcast %344 : i32 to vector<128x128xi32>
    %346 = arith.remsi %342, %345 : vector<128x128xi32>
    %c0_i32_365 = arith.constant 0 : i32
    %347 = vector.broadcast %c0_i32_365 : i32 to vector<128x128xi32>
    %348 = arith.cmpi ne, %346, %347 : vector<128x128xi32>
    %c0_i32_366 = arith.constant 0 : i32
    %349 = vector.broadcast %c0_i32_366 : i32 to vector<128x128xi32>
    %350 = arith.cmpi slt, %346, %349 : vector<128x128xi32>
    %c0_i32_367 = arith.constant 0 : i32
    %351 = arith.cmpi slt, %344, %c0_i32_367 : i32
    %352 = vector.broadcast %351 : i1 to vector<128x128xi1>
    %353 = vector.broadcast %352 : vector<128x128xi1> to vector<128x128xi1>
    %354 = arith.xori %350, %353 : vector<128x128xi1>
    %355 = arith.andi %354, %348 : vector<128x128xi1>
    %356 = vector.broadcast %344 : i32 to vector<128x128xi32>
    %357 = arith.addi %346, %356 : vector<128x128xi32>
    %358 = arith.select %355, %357, %346 : vector<128x128xi1>, vector<128x128xi32>
    %359 = arith.cmpi eq, %340, %358 : vector<128x128xi32>
    %360 = arith.extui %359 : vector<128x128xi1> to vector<128x128xi32>
    %361 = arith.sitofp %360 : vector<128x128xi32> to vector<128x128xf32>
    %362 = vector.shape_cast %338 : vector<2x1x8x128xf32> to vector<16x128xf32>
    %cst_368 = arith.constant dense<0.000000e+00> : vector<16x128xf32>
    %363 = tpu.matmul %362, %361, %cst_368 {dimension_numbers = #tpu.dot_dimension_numbers<[1], [0], [0], [1], [0, 0, 1, 1], [], []>} : vector<16x128xf32>, vector<128x128xf32>, vector<16x128xf32> -> vector<16x128xf32>
    %364 = vector.shape_cast %363 : vector<16x128xf32> to vector<2x1x8x128xf32>
    %365 = vector.extract_strided_slice %337 {offsets = [0, 3, 0, 0], sizes = [2, 1, 8, 128], strides = [1, 1, 1, 1]} : vector<2x4x8x128xf32> to vector<2x1x8x128xf32>
    %366 = tpu.iota {dimensions = array<i32: 0>} : vector<128x128xi32>
    %367 = tpu.iota {dimensions = array<i32: 1>} : vector<128x128xi32>
    %c-64_i32_369 = arith.constant -64 : i32
    %368 = vector.broadcast %c-64_i32_369 : i32 to vector<128x128xi32>
    %369 = arith.addi %366, %368 : vector<128x128xi32>
    %c128_i32_370 = arith.constant 128 : i32
    %c0_i32_371 = arith.constant 0 : i32
    %370 = arith.cmpi eq, %c128_i32_370, %c0_i32_371 : i32
    %c1_i32_372 = arith.constant 1 : i32
    %371 = arith.select %370, %c1_i32_372, %c128_i32_370 : i32
    %372 = vector.broadcast %371 : i32 to vector<128x128xi32>
    %373 = arith.remsi %369, %372 : vector<128x128xi32>
    %c0_i32_373 = arith.constant 0 : i32
    %374 = vector.broadcast %c0_i32_373 : i32 to vector<128x128xi32>
    %375 = arith.cmpi ne, %373, %374 : vector<128x128xi32>
    %c0_i32_374 = arith.constant 0 : i32
    %376 = vector.broadcast %c0_i32_374 : i32 to vector<128x128xi32>
    %377 = arith.cmpi slt, %373, %376 : vector<128x128xi32>
    %c0_i32_375 = arith.constant 0 : i32
    %378 = arith.cmpi slt, %371, %c0_i32_375 : i32
    %379 = vector.broadcast %378 : i1 to vector<128x128xi1>
    %380 = vector.broadcast %379 : vector<128x128xi1> to vector<128x128xi1>
    %381 = arith.xori %377, %380 : vector<128x128xi1>
    %382 = arith.andi %381, %375 : vector<128x128xi1>
    %383 = vector.broadcast %371 : i32 to vector<128x128xi32>
    %384 = arith.addi %373, %383 : vector<128x128xi32>
    %385 = arith.select %382, %384, %373 : vector<128x128xi1>, vector<128x128xi32>
    %386 = arith.cmpi eq, %367, %385 : vector<128x128xi32>
    %387 = arith.extui %386 : vector<128x128xi1> to vector<128x128xi32>
    %388 = arith.sitofp %387 : vector<128x128xi32> to vector<128x128xf32>
    %389 = vector.shape_cast %365 : vector<2x1x8x128xf32> to vector<16x128xf32>
    %cst_376 = arith.constant dense<0.000000e+00> : vector<16x128xf32>
    %390 = tpu.matmul %389, %388, %cst_376 {dimension_numbers = #tpu.dot_dimension_numbers<[1], [0], [0], [1], [0, 0, 1, 1], [], []>} : vector<16x128xf32>, vector<128x128xf32>, vector<16x128xf32> -> vector<16x128xf32>
    %391 = vector.shape_cast %390 : vector<16x128xf32> to vector<2x1x8x128xf32>
    %392 = tpu.concatenate %364, %337, %391 in 1 : vector<2x1x8x128xf32>, vector<2x4x8x128xf32>, vector<2x1x8x128xf32> -> vector<2x6x8x128xf32>
    %393 = vector.extract_strided_slice %392 {offsets = [0, 0, 0, 0], sizes = [2, 6, 1, 128], strides = [1, 1, 1, 1]} : vector<2x6x8x128xf32> to vector<2x6x1x128xf32>
    %394 = tpu.iota {dimensions = array<i32: 0>} : vector<128x128xi32>
    %395 = tpu.iota {dimensions = array<i32: 1>} : vector<128x128xi32>
    %c16_i32_377 = arith.constant 16 : i32
    %396 = vector.broadcast %c16_i32_377 : i32 to vector<128x128xi32>
    %397 = arith.addi %394, %396 : vector<128x128xi32>
    %c128_i32_378 = arith.constant 128 : i32
    %c0_i32_379 = arith.constant 0 : i32
    %398 = arith.cmpi eq, %c128_i32_378, %c0_i32_379 : i32
    %c1_i32_380 = arith.constant 1 : i32
    %399 = arith.select %398, %c1_i32_380, %c128_i32_378 : i32
    %400 = vector.broadcast %399 : i32 to vector<128x128xi32>
    %401 = arith.remsi %397, %400 : vector<128x128xi32>
    %c0_i32_381 = arith.constant 0 : i32
    %402 = vector.broadcast %c0_i32_381 : i32 to vector<128x128xi32>
    %403 = arith.cmpi ne, %401, %402 : vector<128x128xi32>
    %c0_i32_382 = arith.constant 0 : i32
    %404 = vector.broadcast %c0_i32_382 : i32 to vector<128x128xi32>
    %405 = arith.cmpi slt, %401, %404 : vector<128x128xi32>
    %c0_i32_383 = arith.constant 0 : i32
    %406 = arith.cmpi slt, %399, %c0_i32_383 : i32
    %407 = vector.broadcast %406 : i1 to vector<128x128xi1>
    %408 = vector.broadcast %407 : vector<128x128xi1> to vector<128x128xi1>
    %409 = arith.xori %405, %408 : vector<128x128xi1>
    %410 = arith.andi %409, %403 : vector<128x128xi1>
    %411 = vector.broadcast %399 : i32 to vector<128x128xi32>
    %412 = arith.addi %401, %411 : vector<128x128xi32>
    %413 = arith.select %410, %412, %401 : vector<128x128xi1>, vector<128x128xi32>
    %414 = arith.cmpi eq, %395, %413 : vector<128x128xi32>
    %415 = arith.extui %414 : vector<128x128xi1> to vector<128x128xi32>
    %416 = arith.sitofp %415 : vector<128x128xi32> to vector<128x128xf32>
    %417 = vector.shape_cast %393 : vector<2x6x1x128xf32> to vector<12x128xf32>
    %cst_384 = arith.constant dense<0.000000e+00> : vector<12x128xf32>
    %418 = tpu.matmul %417, %416, %cst_384 {dimension_numbers = #tpu.dot_dimension_numbers<[1], [0], [0], [1], [0, 0, 1, 1], [], []>} : vector<12x128xf32>, vector<128x128xf32>, vector<12x128xf32> -> vector<12x128xf32>
    %419 = vector.shape_cast %418 : vector<12x128xf32> to vector<2x6x1x128xf32>
    %420 = vector.extract_strided_slice %392 {offsets = [0, 0, 7, 0], sizes = [2, 6, 1, 128], strides = [1, 1, 1, 1]} : vector<2x6x8x128xf32> to vector<2x6x1x128xf32>
    %421 = tpu.iota {dimensions = array<i32: 0>} : vector<128x128xi32>
    %422 = tpu.iota {dimensions = array<i32: 1>} : vector<128x128xi32>
    %c-16_i32_385 = arith.constant -16 : i32
    %423 = vector.broadcast %c-16_i32_385 : i32 to vector<128x128xi32>
    %424 = arith.addi %421, %423 : vector<128x128xi32>
    %c128_i32_386 = arith.constant 128 : i32
    %c0_i32_387 = arith.constant 0 : i32
    %425 = arith.cmpi eq, %c128_i32_386, %c0_i32_387 : i32
    %c1_i32_388 = arith.constant 1 : i32
    %426 = arith.select %425, %c1_i32_388, %c128_i32_386 : i32
    %427 = vector.broadcast %426 : i32 to vector<128x128xi32>
    %428 = arith.remsi %424, %427 : vector<128x128xi32>
    %c0_i32_389 = arith.constant 0 : i32
    %429 = vector.broadcast %c0_i32_389 : i32 to vector<128x128xi32>
    %430 = arith.cmpi ne, %428, %429 : vector<128x128xi32>
    %c0_i32_390 = arith.constant 0 : i32
    %431 = vector.broadcast %c0_i32_390 : i32 to vector<128x128xi32>
    %432 = arith.cmpi slt, %428, %431 : vector<128x128xi32>
    %c0_i32_391 = arith.constant 0 : i32
    %433 = arith.cmpi slt, %426, %c0_i32_391 : i32
    %434 = vector.broadcast %433 : i1 to vector<128x128xi1>
    %435 = vector.broadcast %434 : vector<128x128xi1> to vector<128x128xi1>
    %436 = arith.xori %432, %435 : vector<128x128xi1>
    %437 = arith.andi %436, %430 : vector<128x128xi1>
    %438 = vector.broadcast %426 : i32 to vector<128x128xi32>
    %439 = arith.addi %428, %438 : vector<128x128xi32>
    %440 = arith.select %437, %439, %428 : vector<128x128xi1>, vector<128x128xi32>
    %441 = arith.cmpi eq, %422, %440 : vector<128x128xi32>
    %442 = arith.extui %441 : vector<128x128xi1> to vector<128x128xi32>
    %443 = arith.sitofp %442 : vector<128x128xi32> to vector<128x128xf32>
    %444 = vector.shape_cast %420 : vector<2x6x1x128xf32> to vector<12x128xf32>
    %cst_392 = arith.constant dense<0.000000e+00> : vector<12x128xf32>
    %445 = tpu.matmul %444, %443, %cst_392 {dimension_numbers = #tpu.dot_dimension_numbers<[1], [0], [0], [1], [0, 0, 1, 1], [], []>} : vector<12x128xf32>, vector<128x128xf32>, vector<12x128xf32> -> vector<12x128xf32>
    %446 = vector.shape_cast %445 : vector<12x128xf32> to vector<2x6x1x128xf32>
    %c0_393 = arith.constant 0 : index
    %c0_394 = arith.constant 0 : index
    %c1_395 = arith.constant 1 : index
    %c0_396 = arith.constant 0 : index
    %447 = vector.load %arg17[%c0_393, %c0_394, %c1_395, %c0_396] : memref<2x6x10x128xf32, #tpu.memory_space<vmem>>, vector<2x6x8x128xf32>
    tpu.vector_store %arg17[%c0_393, %c0_394, %c1_395, %c0_396], %392 {strides = array<i32>} : memref<2x6x10x128xf32, #tpu.memory_space<vmem>>, vector<2x6x8x128xf32>,
    %c0_397 = arith.constant 0 : index
    %c0_398 = arith.constant 0 : index
    %c0_399 = arith.constant 0 : index
    %c0_400 = arith.constant 0 : index
    %448 = vector.load %arg17[%c0_397, %c0_398, %c0_399, %c0_400] : memref<2x6x10x128xf32, #tpu.memory_space<vmem>>, vector<2x6x1x128xf32>
    tpu.vector_store %arg17[%c0_397, %c0_398, %c0_399, %c0_400], %419 {strides = array<i32>} : memref<2x6x10x128xf32, #tpu.memory_space<vmem>>, vector<2x6x1x128xf32>,
    %c0_401 = arith.constant 0 : index
    %c0_402 = arith.constant 0 : index
    %c9_403 = arith.constant 9 : index
    %c0_404 = arith.constant 0 : index
    %449 = vector.load %arg17[%c0_401, %c0_402, %c9_403, %c0_404] : memref<2x6x10x128xf32, #tpu.memory_space<vmem>>, vector<2x6x1x128xf32>
    tpu.vector_store %arg17[%c0_401, %c0_402, %c9_403, %c0_404], %446 {strides = array<i32>} : memref<2x6x10x128xf32, #tpu.memory_space<vmem>>, vector<2x6x1x128xf32>,
    %cst_405 = arith.constant 0.000000e+00 : f32
    %450 = vector.broadcast %cst_405 : f32 to vector<64x128xf32>
    %c0_406 = arith.constant 0 : index
    %c0_407 = arith.constant 0 : index
    %c0_408 = arith.constant 0 : index
    %c0_409 = arith.constant 0 : index
    %451 = vector.load %arg17[%c0_406, %c0_407, %c0_408, %c0_409] : memref<2x6x10x128xf32, #tpu.memory_space<vmem>>, vector<2x4x8x128xf32>
    %452 = vector.shape_cast %451 : vector<2x4x8x128xf32> to vector<64x128xf32>
    %c0_410 = arith.constant 0 : index
    %c0_411 = arith.constant 0 : index
    %c0_412 = arith.constant 0 : index
    %c0_413 = arith.constant 0 : index
    %c0_414 = arith.constant 0 : index
    %453 = vector.load %arg12[%c0_410, %c0_411, %c0_412, %c0_413, %c0_414] : memref<1x3x3x128x128xf32, #tpu.memory_space<vmem>>, vector<1x1x1x128x128xf32>
    %454 = vector.shape_cast %453 : vector<1x1x1x128x128xf32> to vector<128x128xf32>
    %cst_415 = arith.constant dense<0.000000e+00> : vector<64x128xf32>
    %455 = tpu.matmul %452, %454, %cst_415 {dimension_numbers = #tpu.dot_dimension_numbers<[1], [0], [0], [1], [0, 0, 1, 1], [], []>} : vector<64x128xf32>, vector<128x128xf32>, vector<64x128xf32> -> vector<64x128xf32>
    %456 = arith.addf %450, %455 : vector<64x128xf32>
    %c0_416 = arith.constant 0 : index
    %c0_417 = arith.constant 0 : index
    %c1_418 = arith.constant 1 : index
    %c0_419 = arith.constant 0 : index
    %457 = vector.load %arg17[%c0_416, %c0_417, %c1_418, %c0_419] : memref<2x6x10x128xf32, #tpu.memory_space<vmem>>, vector<2x4x8x128xf32>
    %458 = vector.shape_cast %457 : vector<2x4x8x128xf32> to vector<64x128xf32>
    %c0_420 = arith.constant 0 : index
    %c0_421 = arith.constant 0 : index
    %c1_422 = arith.constant 1 : index
    %c0_423 = arith.constant 0 : index
    %c0_424 = arith.constant 0 : index
    %459 = vector.load %arg12[%c0_420, %c0_421, %c1_422, %c0_423, %c0_424] : memref<1x3x3x128x128xf32, #tpu.memory_space<vmem>>, vector<1x1x1x128x128xf32>
    %460 = vector.shape_cast %459 : vector<1x1x1x128x128xf32> to vector<128x128xf32>
    %cst_425 = arith.constant dense<0.000000e+00> : vector<64x128xf32>
    %461 = tpu.matmul %458, %460, %cst_425 {dimension_numbers = #tpu.dot_dimension_numbers<[1], [0], [0], [1], [0, 0, 1, 1], [], []>} : vector<64x128xf32>, vector<128x128xf32>, vector<64x128xf32> -> vector<64x128xf32>
    %462 = arith.addf %456, %461 : vector<64x128xf32>
    %c0_426 = arith.constant 0 : index
    %c0_427 = arith.constant 0 : index
    %c2_428 = arith.constant 2 : index
    %c0_429 = arith.constant 0 : index
    %463 = vector.load %arg17[%c0_426, %c0_427, %c2_428, %c0_429] : memref<2x6x10x128xf32, #tpu.memory_space<vmem>>, vector<2x4x8x128xf32>
    %464 = vector.shape_cast %463 : vector<2x4x8x128xf32> to vector<64x128xf32>
    %c0_430 = arith.constant 0 : index
    %c0_431 = arith.constant 0 : index
    %c2_432 = arith.constant 2 : index
    %c0_433 = arith.constant 0 : index
    %c0_434 = arith.constant 0 : index
    %465 = vector.load %arg12[%c0_430, %c0_431, %c2_432, %c0_433, %c0_434] : memref<1x3x3x128x128xf32, #tpu.memory_space<vmem>>, vector<1x1x1x128x128xf32>
    %466 = vector.shape_cast %465 : vector<1x1x1x128x128xf32> to vector<128x128xf32>
    %cst_435 = arith.constant dense<0.000000e+00> : vector<64x128xf32>
    %467 = tpu.matmul %464, %466, %cst_435 {dimension_numbers = #tpu.dot_dimension_numbers<[1], [0], [0], [1], [0, 0, 1, 1], [], []>} : vector<64x128xf32>, vector<128x128xf32>, vector<64x128xf32> -> vector<64x128xf32>
    %468 = arith.addf %462, %467 : vector<64x128xf32>
    %c0_436 = arith.constant 0 : index
    %c1_437 = arith.constant 1 : index
    %c0_438 = arith.constant 0 : index
    %c0_439 = arith.constant 0 : index
    %469 = vector.load %arg17[%c0_436, %c1_437, %c0_438, %c0_439] : memref<2x6x10x128xf32, #tpu.memory_space<vmem>>, vector<2x4x8x128xf32>
    %470 = vector.shape_cast %469 : vector<2x4x8x128xf32> to vector<64x128xf32>
    %c0_440 = arith.constant 0 : index
    %c1_441 = arith.constant 1 : index
    %c0_442 = arith.constant 0 : index
    %c0_443 = arith.constant 0 : index
    %c0_444 = arith.constant 0 : index
    %471 = vector.load %arg12[%c0_440, %c1_441, %c0_442, %c0_443, %c0_444] : memref<1x3x3x128x128xf32, #tpu.memory_space<vmem>>, vector<1x1x1x128x128xf32>
    %472 = vector.shape_cast %471 : vector<1x1x1x128x128xf32> to vector<128x128xf32>
    %cst_445 = arith.constant dense<0.000000e+00> : vector<64x128xf32>
    %473 = tpu.matmul %470, %472, %cst_445 {dimension_numbers = #tpu.dot_dimension_numbers<[1], [0], [0], [1], [0, 0, 1, 1], [], []>} : vector<64x128xf32>, vector<128x128xf32>, vector<64x128xf32> -> vector<64x128xf32>
    %474 = arith.addf %468, %473 : vector<64x128xf32>
    %c0_446 = arith.constant 0 : index
    %c1_447 = arith.constant 1 : index
    %c1_448 = arith.constant 1 : index
    %c0_449 = arith.constant 0 : index
    %475 = vector.load %arg17[%c0_446, %c1_447, %c1_448, %c0_449] : memref<2x6x10x128xf32, #tpu.memory_space<vmem>>, vector<2x4x8x128xf32>
    %476 = vector.shape_cast %475 : vector<2x4x8x128xf32> to vector<64x128xf32>
    %c0_450 = arith.constant 0 : index
    %c1_451 = arith.constant 1 : index
    %c1_452 = arith.constant 1 : index
    %c0_453 = arith.constant 0 : index
    %c0_454 = arith.constant 0 : index
    %477 = vector.load %arg12[%c0_450, %c1_451, %c1_452, %c0_453, %c0_454] : memref<1x3x3x128x128xf32, #tpu.memory_space<vmem>>, vector<1x1x1x128x128xf32>
    %478 = vector.shape_cast %477 : vector<1x1x1x128x128xf32> to vector<128x128xf32>
    %cst_455 = arith.constant dense<0.000000e+00> : vector<64x128xf32>
    %479 = tpu.matmul %476, %478, %cst_455 {dimension_numbers = #tpu.dot_dimension_numbers<[1], [0], [0], [1], [0, 0, 1, 1], [], []>} : vector<64x128xf32>, vector<128x128xf32>, vector<64x128xf32> -> vector<64x128xf32>
    %480 = arith.addf %474, %479 : vector<64x128xf32>
    %c0_456 = arith.constant 0 : index
    %c1_457 = arith.constant 1 : index
    %c2_458 = arith.constant 2 : index
    %c0_459 = arith.constant 0 : index
    %481 = vector.load %arg17[%c0_456, %c1_457, %c2_458, %c0_459] : memref<2x6x10x128xf32, #tpu.memory_space<vmem>>, vector<2x4x8x128xf32>
    %482 = vector.shape_cast %481 : vector<2x4x8x128xf32> to vector<64x128xf32>
    %c0_460 = arith.constant 0 : index
    %c1_461 = arith.constant 1 : index
    %c2_462 = arith.constant 2 : index
    %c0_463 = arith.constant 0 : index
    %c0_464 = arith.constant 0 : index
    %483 = vector.load %arg12[%c0_460, %c1_461, %c2_462, %c0_463, %c0_464] : memref<1x3x3x128x128xf32, #tpu.memory_space<vmem>>, vector<1x1x1x128x128xf32>
    %484 = vector.shape_cast %483 : vector<1x1x1x128x128xf32> to vector<128x128xf32>
    %cst_465 = arith.constant dense<0.000000e+00> : vector<64x128xf32>
    %485 = tpu.matmul %482, %484, %cst_465 {dimension_numbers = #tpu.dot_dimension_numbers<[1], [0], [0], [1], [0, 0, 1, 1], [], []>} : vector<64x128xf32>, vector<128x128xf32>, vector<64x128xf32> -> vector<64x128xf32>
    %486 = arith.addf %480, %485 : vector<64x128xf32>
    %c0_466 = arith.constant 0 : index
    %c2_467 = arith.constant 2 : index
    %c0_468 = arith.constant 0 : index
    %c0_469 = arith.constant 0 : index
    %487 = vector.load %arg17[%c0_466, %c2_467, %c0_468, %c0_469] : memref<2x6x10x128xf32, #tpu.memory_space<vmem>>, vector<2x4x8x128xf32>
    %488 = vector.shape_cast %487 : vector<2x4x8x128xf32> to vector<64x128xf32>
    %c0_470 = arith.constant 0 : index
    %c2_471 = arith.constant 2 : index
    %c0_472 = arith.constant 0 : index
    %c0_473 = arith.constant 0 : index
    %c0_474 = arith.constant 0 : index
    %489 = vector.load %arg12[%c0_470, %c2_471, %c0_472, %c0_473, %c0_474] : memref<1x3x3x128x128xf32, #tpu.memory_space<vmem>>, vector<1x1x1x128x128xf32>
    %490 = vector.shape_cast %489 : vector<1x1x1x128x128xf32> to vector<128x128xf32>
    %cst_475 = arith.constant dense<0.000000e+00> : vector<64x128xf32>
    %491 = tpu.matmul %488, %490, %cst_475 {dimension_numbers = #tpu.dot_dimension_numbers<[1], [0], [0], [1], [0, 0, 1, 1], [], []>} : vector<64x128xf32>, vector<128x128xf32>, vector<64x128xf32> -> vector<64x128xf32>
    %492 = arith.addf %486, %491 : vector<64x128xf32>
    %c0_476 = arith.constant 0 : index
    %c2_477 = arith.constant 2 : index
    %c1_478 = arith.constant 1 : index
    %c0_479 = arith.constant 0 : index
    %493 = vector.load %arg17[%c0_476, %c2_477, %c1_478, %c0_479] : memref<2x6x10x128xf32, #tpu.memory_space<vmem>>, vector<2x4x8x128xf32>
    %494 = vector.shape_cast %493 : vector<2x4x8x128xf32> to vector<64x128xf32>
    %c0_480 = arith.constant 0 : index
    %c2_481 = arith.constant 2 : index
    %c1_482 = arith.constant 1 : index
    %c0_483 = arith.constant 0 : index
    %c0_484 = arith.constant 0 : index
    %495 = vector.load %arg12[%c0_480, %c2_481, %c1_482, %c0_483, %c0_484] : memref<1x3x3x128x128xf32, #tpu.memory_space<vmem>>, vector<1x1x1x128x128xf32>
    %496 = vector.shape_cast %495 : vector<1x1x1x128x128xf32> to vector<128x128xf32>
    %cst_485 = arith.constant dense<0.000000e+00> : vector<64x128xf32>
    %497 = tpu.matmul %494, %496, %cst_485 {dimension_numbers = #tpu.dot_dimension_numbers<[1], [0], [0], [1], [0, 0, 1, 1], [], []>} : vector<64x128xf32>, vector<128x128xf32>, vector<64x128xf32> -> vector<64x128xf32>
    %498 = arith.addf %492, %497 : vector<64x128xf32>
    %c0_486 = arith.constant 0 : index
    %c2_487 = arith.constant 2 : index
    %c2_488 = arith.constant 2 : index
    %c0_489 = arith.constant 0 : index
    %499 = vector.load %arg17[%c0_486, %c2_487, %c2_488, %c0_489] : memref<2x6x10x128xf32, #tpu.memory_space<vmem>>, vector<2x4x8x128xf32>
    %500 = vector.shape_cast %499 : vector<2x4x8x128xf32> to vector<64x128xf32>
    %c0_490 = arith.constant 0 : index
    %c2_491 = arith.constant 2 : index
    %c2_492 = arith.constant 2 : index
    %c0_493 = arith.constant 0 : index
    %c0_494 = arith.constant 0 : index
    %501 = vector.load %arg12[%c0_490, %c2_491, %c2_492, %c0_493, %c0_494] : memref<1x3x3x128x128xf32, #tpu.memory_space<vmem>>, vector<1x1x1x128x128xf32>
    %502 = vector.shape_cast %501 : vector<1x1x1x128x128xf32> to vector<128x128xf32>
    %cst_495 = arith.constant dense<0.000000e+00> : vector<64x128xf32>
    %503 = tpu.matmul %500, %502, %cst_495 {dimension_numbers = #tpu.dot_dimension_numbers<[1], [0], [0], [1], [0, 0, 1, 1], [], []>} : vector<64x128xf32>, vector<128x128xf32>, vector<64x128xf32> -> vector<64x128xf32>
    %504 = arith.addf %498, %503 : vector<64x128xf32>
    %c0_496 = arith.constant 0 : index
    %c0_497 = arith.constant 0 : index
    %c0_498 = arith.constant 0 : index
    %505 = vector.load %arg13[%c0_496, %c0_497, %c0_498] : memref<1x1x128xf32, #tpu.memory_space<vmem>>, vector<1x1x128xf32>
    %506 = vector.shape_cast %505 : vector<1x1x128xf32> to vector<1x128xf32>
    %507 = vector.broadcast %506 : vector<1x128xf32> to vector<64x128xf32>
    %508 = arith.addf %504, %507 : vector<64x128xf32>
    %509 = vector.shape_cast %508 : vector<64x128xf32> to vector<2x4x8x128xf32>
    %510 = vector.shape_cast %509 : vector<2x4x8x128xf32> to vector<2x32x128xf32>
    %cst_499 = arith.constant dense<0.000000e+00> : vector<2x128xf32>
    %511 = vector.multi_reduction <add>, %510, %cst_499 [1] : vector<2x32x128xf32> to vector<2x128xf32>
    %cst_500 = arith.constant 3.200000e+01 : f32
    %512 = vector.broadcast %cst_500 : f32 to vector<2x128xf32>
    %513 = arith.divf %511, %512 : vector<2x128xf32>
    %c0_501 = arith.constant 0 : index
    %c0_502 = arith.constant 0 : index
    %c0_503 = arith.constant 0 : index
    %514 = vector.load %arg14[%c0_501, %c0_502, %c0_503] : memref<1x128x1xf32, #tpu.memory_space<vmem>>, vector<1x128x1xf32>
    %515 = vector.shape_cast %514 : vector<1x128x1xf32> to vector<128x1xf32>
    %cst_504 = arith.constant dense<0.000000e+00> : vector<2x1xf32>
    %516 = tpu.matmul %513, %515, %cst_504 {dimension_numbers = #tpu.dot_dimension_numbers<[1], [0], [0], [1], [0, 0, 1, 1], [], []>} : vector<2x128xf32>, vector<128x1xf32>, vector<2x1xf32> -> vector<2x1xf32>
    %c0_505 = arith.constant 0 : index
    %c0_506 = arith.constant 0 : index
    %c0_507 = arith.constant 0 : index
    %517 = vector.load %arg15[%c0_505, %c0_506, %c0_507] : memref<1x1x1xf32, #tpu.memory_space<vmem>>, vector<1x1x1xf32>
    %518 = vector.shape_cast %517 : vector<1x1x1xf32> to vector<1x1xf32>
    %519 = vector.broadcast %518 : vector<1x1xf32> to vector<2x1xf32>
    %520 = arith.addf %516, %519 : vector<2x1xf32>
    %c0_508 = arith.constant 0 : index
    %c0_509 = arith.constant 0 : index
    %c0_510 = arith.constant 0 : index
    %521 = vector.load %arg16[%c0_508, %c0_509, %c0_510] : memref<1x2x1xf32, #tpu.memory_space<vmem>>, vector<1x2x1xf32>
    %522 = vector.shape_cast %521 : vector<1x2x1xf32> to vector<2x1xf32>
    %523 = vector.shape_cast %520 : vector<2x1xf32> to vector<1x2x1xf32>
    tpu.vector_store %arg16[%c0_508, %c0_509, %c0_510], %523 {strides = array<i32>} : memref<1x2x1xf32, #tpu.memory_space<vmem>>, vector<1x2x1xf32>,
    return
  }
  func.func @transform_0(%arg0: i32) -> (i32, i32, i32, i32, i32) {
    %c0_i32 = arith.constant 0 : i32
    %c0_i32_0 = arith.constant 0 : i32
    %c0_i32_1 = arith.constant 0 : i32
    %c0_i32_2 = arith.constant 0 : i32
    %c0_i32_3 = arith.constant 0 : i32
    return %arg0, %c0_i32, %c0_i32_0, %c0_i32_1, %c0_i32_2 : i32, i32, i32, i32, i32
  }
  func.func @transform_1(%arg0: i32) -> (i32, i32, i32) {
    %c0_i32 = arith.constant 0 : i32
    %c0_i32_0 = arith.constant 0 : i32
    %c0_i32_1 = arith.constant 0 : i32
    return %arg0, %c0_i32, %c0_i32_0 : i32, i32, i32
  }
  func.func @transform_2(%arg0: i32) -> (i32, i32, i32) {
    %c0_i32 = arith.constant 0 : i32
    %c0_i32_0 = arith.constant 0 : i32
    %c0_i32_1 = arith.constant 0 : i32
    return %arg0, %c0_i32, %c0_i32_0 : i32, i32, i32
  }
  func.func @transform_3(%arg0: i32) -> (i32, i32, i32, i32, i32) {
    %c0_i32 = arith.constant 0 : i32
    %c0_i32_0 = arith.constant 0 : i32
    %c0_i32_1 = arith.constant 0 : i32
    %c0_i32_2 = arith.constant 0 : i32
    %c0_i32_3 = arith.constant 0 : i32
    return %arg0, %c0_i32, %c0_i32_0, %c0_i32_1, %c0_i32_2 : i32, i32, i32, i32, i32
  }
  func.func @transform_4(%arg0: i32) -> (i32, i32, i32) {
    %c0_i32 = arith.constant 0 : i32
    %c0_i32_0 = arith.constant 0 : i32
    %c0_i32_1 = arith.constant 0 : i32
    return %arg0, %c0_i32, %c0_i32_0 : i32, i32, i32
  }
  func.func @transform_5(%arg0: i32) -> (i32, i32, i32, i32, i32) {
    %c0_i32 = arith.constant 0 : i32
    %c0_i32_0 = arith.constant 0 : i32
    %c0_i32_1 = arith.constant 0 : i32
    %c0_i32_2 = arith.constant 0 : i32
    %c0_i32_3 = arith.constant 0 : i32
    return %arg0, %c0_i32, %c0_i32_0, %c0_i32_1, %c0_i32_2 : i32, i32, i32, i32, i32
  }
  func.func @transform_6(%arg0: i32) -> (i32, i32, i32) {
    %c0_i32 = arith.constant 0 : i32
    %c0_i32_0 = arith.constant 0 : i32
    %c0_i32_1 = arith.constant 0 : i32
    return %arg0, %c0_i32, %c0_i32_0 : i32, i32, i32
  }
  func.func @transform_7(%arg0: i32) -> (i32, i32, i32) {
    %c0_i32 = arith.constant 0 : i32
    %c0_i32_0 = arith.constant 0 : i32
    %c0_i32_1 = arith.constant 0 : i32
    return %arg0, %c0_i32, %c0_i32_0 : i32, i32, i32
  }
  func.func @transform_8(%arg0: i32) -> (i32, i32, i32) {
    %c0_i32 = arith.constant 0 : i32
    %c0_i32_0 = arith.constant 0 : i32
    %c0_i32_1 = arith.constant 0 : i32
    return %arg0, %c0_i32, %c0_i32_0 : i32, i32, i32
  }
  func.func @transform_9(%arg0: i32) -> (i32, i32, i32, i32, i32) {
    %c0_i32 = arith.constant 0 : i32
    %c0_i32_0 = arith.constant 0 : i32
    %c0_i32_1 = arith.constant 0 : i32
    %c0_i32_2 = arith.constant 0 : i32
    %c0_i32_3 = arith.constant 0 : i32
    return %arg0, %c0_i32, %c0_i32_0, %c0_i32_1, %c0_i32_2 : i32, i32, i32, i32, i32
  }
  func.func @transform_10(%arg0: i32) -> (i32, i32, i32) {
    %c0_i32 = arith.constant 0 : i32
    %c0_i32_0 = arith.constant 0 : i32
    %c0_i32_1 = arith.constant 0 : i32
    return %arg0, %c0_i32, %c0_i32_0 : i32, i32, i32
  }
  func.func @transform_11(%arg0: i32) -> (i32, i32, i32, i32, i32) {
    %c0_i32 = arith.constant 0 : i32
    %c0_i32_0 = arith.constant 0 : i32
    %c0_i32_1 = arith.constant 0 : i32
    %c0_i32_2 = arith.constant 0 : i32
    %c0_i32_3 = arith.constant 0 : i32
    return %arg0, %c0_i32, %c0_i32_0, %c0_i32_1, %c0_i32_2 : i32, i32, i32, i32, i32
  }
  func.func @transform_12(%arg0: i32) -> (i32, i32, i32) {
    %c0_i32 = arith.constant 0 : i32
    %c0_i32_0 = arith.constant 0 : i32
    %c0_i32_1 = arith.constant 0 : i32
    return %arg0, %c0_i32, %c0_i32_0 : i32, i32, i32
  }
  func.func @transform_13(%arg0: i32) -> (i32, i32, i32) {
    %c0_i32 = arith.constant 0 : i32
    %c0_i32_0 = arith.constant 0 : i32
    %c0_i32_1 = arith.constant 0 : i32
    return %arg0, %c0_i32, %c0_i32_0 : i32, i32, i32
  }
  func.func @transform_14(%arg0: i32) -> (i32, i32, i32) {
    %c0_i32 = arith.constant 0 : i32
    %c0_i32_0 = arith.constant 0 : i32
    %c0_i32_1 = arith.constant 0 : i32
    return %arg0, %c0_i32, %c0_i32_0 : i32, i32, i32
  }
  func.func @transform_15(%arg0: i32) -> (i32, i32, i32) {
    %c0_i32 = arith.constant 0 : i32
    %c0_i32_0 = arith.constant 0 : i32
    %c0_i32_1 = arith.constant 0 : i32
    return %arg0, %c0_i32, %c0_i32_0 : i32, i32, i32
  }
}

</mosaic_0001>

<llo_original>
// kernel: synthesizer_pair_forward.1
$region0: #{synthesizer_pair_forward.1}
  #allocation0 [shape = 'u32[]', space=smem, size = 0x4, offset = 0x4, fixed_abs, tag = 'smem constant byte address 0x4 - core index']
  #allocation1 [shape = 'u32[144,128]{1,0:T(1,128)}', space=vmem, size = 0x12000, scoped, tag = 'internal scratch']
  #allocation2 [shape = 'f32[2,6,10,128]{3,2,1,0:T(8,128)}', space=vmem, size = 0x18000, scoped, tag = 'scratch operand']
  %s0 = inlined_call_operand.vmem [shape: f32[2,2,4,8,4], index: 0, kind: input, shape index: {}]
  %s1 = inlined_call_operand.hbm [shape: f32[2,4,32], index: 1, kind: input, shape index: {}]
  %s2 = inlined_call_operand.hbm [shape: f32[2,1,32], index: 2, kind: input, shape index: {}]
  %s3 = inlined_call_operand.hbm [shape: f32[2,3,3,32,32], index: 3, kind: input, shape index: {}]
  %s4 = inlined_call_operand.hbm [shape: f32[2,1,32], index: 4, kind: input, shape index: {}]
  %s5 = inlined_call_operand.hbm [shape: f32[2,3,3,32,32], index: 5, kind: input, shape index: {}]
  %s6 = inlined_call_operand.hbm [shape: f32[2,1,32], index: 6, kind: input, shape index: {}]
  %s7 = inlined_call_operand.hbm [shape: f32[2,32,128], index: 7, kind: input, shape index: {}]
  %s8 = inlined_call_operand.hbm [shape: f32[2,1,128], index: 8, kind: input, shape index: {}]
  %s9 = inlined_call_operand.hbm [shape: f32[2,3,3,128,128], index: 9, kind: input, shape index: {}]
  %s10 = inlined_call_operand.hbm [shape: f32[2,1,128], index: 10, kind: input, shape index: {}]
  %s11 = inlined_call_operand.hbm [shape: f32[2,3,3,128,128], index: 11, kind: input, shape index: {}]
  %s12 = inlined_call_operand.hbm [shape: f32[2,1,128], index: 12, kind: input, shape index: {}]
  %s13 = inlined_call_operand.vmem [shape: f32[2,128,1], index: 13, kind: input, shape index: {}]
  %s14 = inlined_call_operand.vmem [shape: f32[2,1,1], index: 14, kind: input, shape index: {}]
  %s15 = inlined_call_operand.vmem [shape: f32[2,2,1], index: 15, kind: output, shape index: {}]
  %s16 = sld [smem:[#allocation0]]
  $region141: #{synthesizer_pair_forward.1} parent=0
    _
  %s18 = ssub.s32 1, %s16
  %s19 = scalar_select 0, %s18, %s16
  $region1: #{synthesizer_pair_forward.1} parent=0
    #allocation3 [shape = 'u8[4096]{0}', space=vmem, size = 0x1000, scoped, tag = 'input window, operand 1']
    #allocation4 [shape = 's32[2]{0}', space=sflag, size = 0x8, scoped, tag = 'scoped memory for synthesizer_pair_forward.1']
    #allocation5 [shape = 'u8[1024]{0}', space=vmem, size = 0x400, scoped, tag = 'input window, operand 2']
    #allocation6 [shape = 's32[2]{0}', space=sflag, size = 0x8, scoped, tag = 'scoped memory for synthesizer_pair_forward.1']
    #allocation7 [shape = 'u8[294912]{0}', space=vmem, size = 0x48000, scoped, tag = 'input window, operand 3']
    #allocation8 [shape = 'u8[1024]{0}', space=vmem, size = 0x400, scoped, tag = 'input window, operand 4']
    #allocation9 [shape = 's32[2]{0}', space=sflag, size = 0x8, scoped, tag = 'scoped memory for synthesizer_pair_forward.1']
    #allocation10 [shape = 'u8[294912]{0}', space=vmem, size = 0x48000, scoped, tag = 'input window, operand 5']
    #allocation11 [shape = 'u8[1024]{0}', space=vmem, size = 0x400, scoped, tag = 'input window, operand 6']
    #allocation12 [shape = 's32[2]{0}', space=sflag, size = 0x8, scoped, tag = 'scoped memory for synthesizer_pair_forward.1']
    #allocation13 [shape = 'u8[32768]{0}', space=vmem, size = 0x8000, scoped, tag = 'input window, operand 7']
    #allocation14 [shape = 'u8[1024]{0}', space=vmem, size = 0x400, scoped, tag = 'input window, operand 8']
    #allocation15 [shape = 's32[2]{0}', space=sflag, size = 0x8, scoped, tag = 'scoped memory for synthesizer_pair_forward.1']
    #allocation16 [shape = 'u8[1179648]{0}', space=vmem, size = 0x120000, scoped, tag = 'input window, operand 9']
    #allocation17 [shape = 'u8[1024]{0}', space=vmem, size = 0x400, scoped, tag = 'input window, operand 10']
    #allocation18 [shape = 's32[2]{0}', space=sflag, size = 0x8, scoped, tag = 'scoped memory for synthesizer_pair_forward.1']
    #allocation19 [shape = 'u8[1179648]{0}', space=vmem, size = 0x120000, scoped, tag = 'input window, operand 11']
    #allocation20 [shape = 'u8[1024]{0}', space=vmem, size = 0x400, scoped, tag = 'input window, operand 12']
    #allocation21 [shape = 's32[2]{0}', space=sflag, size = 0x8, scoped, tag = 'scoped memory for synthesizer_pair_forward.1']
    %20 = vsyncpa [#allocation4], 0
    %s21 = scalar_lea.sflag [#allocation4], 1
    %22 = vsyncpa %s21, 0
    %23 = vsyncpa [#allocation6], 0
    %s24 = scalar_lea.sflag [#allocation6], 1
    %25 = vsyncpa %s24, 0
    %26 = vsyncpa [#allocation9], 0
    %s27 = scalar_lea.sflag [#allocation9], 1
    %28 = vsyncpa %s27, 0
    %29 = vsyncpa [#allocation12], 0
    %s30 = scalar_lea.sflag [#allocation12], 1
    %31 = vsyncpa %s30, 0
    %32 = vsyncpa [#allocation15], 0
    %s33 = scalar_lea.sflag [#allocation15], 1
    %34 = vsyncpa %s33, 0
    %35 = vsyncpa [#allocation18], 0
    %s36 = scalar_lea.sflag [#allocation18], 1
    %37 = vsyncpa %s36, 0
    %38 = vsyncpa [#allocation21], 0
    %s39 = scalar_lea.sflag [#allocation21], 1
    %40 = vsyncpa %s39, 0
    loop: start=0, step=1, limit=4
    $region2: #{synthesizer_pair_forward.1} parent=1 // loop_pre_header
      _
    $region3: #{synthesizer_pair_forward.1} parent=1 // loop_header
      %s42 = sphi 0, %s46
      %p43 = scmp.ge.s32.totalorder %s42, 4
      %s52 = sphi 0, %s54
      %s55 = sphi 0, %s52
      %s56 = sphi 0, %s55
      %s72 = sphi 0, %s56
      %s78 = sphi 0, %s80
      %s81 = sphi 0, %s78
      %s82 = sphi 0, %s81
      %s98 = sphi 0, %s82
      %s104 = sphi 0, %s106
      %s107 = sphi 0, %s104
      %s108 = sphi 0, %s107
      %s124 = sphi 0, %s108
      %s130 = sphi 0, %s132
      %s133 = sphi 0, %s130
      %s134 = sphi 0, %s133
      %s150 = sphi 0, %s134
      %s156 = sphi 0, %s158
      %s159 = sphi 0, %s156
      %s160 = sphi 0, %s159
      %s176 = sphi 0, %s160
      %s182 = sphi 0, %s184
      %s185 = sphi 0, %s182
      %s186 = sphi 0, %s185
      %s202 = sphi 0, %s186
      %s208 = sphi 0, %s210
      %s211 = sphi 0, %s208
      %s212 = sphi 0, %s211
      %s228 = sphi 0, %s212
      %s234 = sphi 0, %s236
      %s237 = sphi 0, %s234
      %s238 = sphi 0, %s237
      %s254 = sphi 0, %s238
      %s260 = sphi 0, %s262
      %s263 = sphi 0, %s260
      %s264 = sphi 0, %s263
      %s280 = sphi 0, %s264
      %s286 = sphi 0, %s288
      %s289 = sphi 0, %s286
      %s290 = sphi 0, %s289
      %s306 = sphi 0, %s290
      %s312 = sphi 0, %s314
      %s315 = sphi 0, %s312
      %s316 = sphi 0, %s315
      %s332 = sphi 0, %s316
      %s338 = sphi 0, %s340
      %s341 = sphi 0, %s338
      %s342 = sphi 0, %s341
      %s358 = sphi 0, %s342
      %s364 = sphi 0, %s366
      %s367 = sphi 0, %s364
      %s368 = sphi 0, %s367
      %s384 = sphi 0, %s368
      %s390 = sphi 0, %s392
      %s393 = sphi 0, %s390
      %s394 = sphi 0, %s393
      %s410 = sphi 0, %s394
      %s416 = sphi 0, %s418
      %s419 = sphi 0, %s416
      %s420 = sphi 0, %s419
      %s436 = sphi 0, %s420
      %s442 = sphi 0, %s444
      %s445 = sphi 0, %s442
      %s446 = sphi 0, %s445
      %s462 = sphi 0, %s446
    $region4: #{synthesizer_pair_forward.1} parent=1 // loop_header_branch
      %45 = sbr.rel (%p43) target = $region8
    $region5: #{synthesizer_pair_forward.1} parent=1 // loop_body
      %s47 = ssub.s32 %s42, 1
      %s48 = ssub.s32 %s42, 2
      %s49 = sadd.s32 %s42, 1
      %s50 = ssub.s32 %s42, %s49
      %p51 = scmp.eq.s32.totalorder %s50, 0
      %s53 = sadd.s32 %s52, 1
      %s54 = scalar_select %p51, %s52, %s53
      %p57 = pneg %p51
      %p58 = scmp.eq.s32.totalorder %s42, 1
      %p59 = por %p57, %p58
      %p60 = scmp.ne.s32.totalorder %s52, %s55
      %p61 = scmp.eq.s32.totalorder %s42, 0
      %p62 = por %p60, %p61
      %p63 = scmp.ne.s32.totalorder %s52, %s55
      %p64 = scmp.eq.s32.totalorder %s47, 1
      %p65 = por %p63, %p64
      %p66 = scmp.ne.s32.totalorder %s55, %s56
      %p67 = scmp.eq.s32.totalorder %s47, 0
      %p68 = por %p66, %p67
      %p69 = scmp.ne.s32.totalorder %s55, %s56
      %p70 = scmp.eq.s32.totalorder %s48, 1
      %p71 = por %p69, %p70
      %p73 = scmp.ne.s32.totalorder %s56, %s72
      %p74 = scmp.eq.s32.totalorder %s48, 0
      %p75 = por %p73, %p74
      %s76 = ssub.s32 %s42, %s49
      %p77 = scmp.eq.s32.totalorder %s76, 0
      %s79 = sadd.s32 %s78, 1
      %s80 = scalar_select %p77, %s78, %s79
      %p83 = pneg %p77
      %p84 = scmp.eq.s32.totalorder %s42, 1
      %p85 = por %p83, %p84
      %p86 = scmp.ne.s32.totalorder %s78, %s81
      %p87 = scmp.eq.s32.totalorder %s42, 0
      %p88 = por %p86, %p87
      %p89 = scmp.ne.s32.totalorder %s78, %s81
      %p90 = scmp.eq.s32.totalorder %s47, 1
      %p91 = por %p89, %p90
      %p92 = scmp.ne.s32.totalorder %s81, %s82
      %p93 = scmp.eq.s32.totalorder %s47, 0
      %p94 = por %p92, %p93
      %p95 = scmp.ne.s32.totalorder %s81, %s82
      %p96 = scmp.eq.s32.totalorder %s48, 1
      %p97 = por %p95, %p96
      %p99 = scmp.ne.s32.totalorder %s82, %s98
      %p100 = scmp.eq.s32.totalorder %s48, 0
      %p101 = por %p99, %p100
      %s102 = ssub.s32 %s42, %s49
      %p103 = scmp.eq.s32.totalorder %s102, 0
      %s105 = sadd.s32 %s104, 1
      %s106 = scalar_select %p103, %s104, %s105
      %p109 = pneg %p103
      %p110 = scmp.eq.s32.totalorder %s42, 1
      %p111 = por %p109, %p110
      %p112 = scmp.ne.s32.totalorder %s104, %s107
      %p113 = scmp.eq.s32.totalorder %s42, 0
      %p114 = por %p112, %p113
      %p115 = scmp.ne.s32.totalorder %s104, %s107
      %p116 = scmp.eq.s32.totalorder %s47, 1
      %p117 = por %p115, %p116
      %p118 = scmp.ne.s32.totalorder %s107, %s108
      %p119 = scmp.eq.s32.totalorder %s47, 0
      %p120 = por %p118, %p119
      %p121 = scmp.ne.s32.totalorder %s107, %s108
      %p122 = scmp.eq.s32.totalorder %s48, 1
      %p123 = por %p121, %p122
      %p125 = scmp.ne.s32.totalorder %s108, %s124
      %p126 = scmp.eq.s32.totalorder %s48, 0
      %p127 = por %p125, %p126
      %s128 = ssub.s32 %s42, %s49
      %p129 = scmp.eq.s32.totalorder %s128, 0
      %s131 = sadd.s32 %s130, 1
      %s132 = scalar_select %p129, %s130, %s131
      %p135 = pneg %p129
      %p136 = scmp.eq.s32.totalorder %s42, 1
      %p137 = por %p135, %p136
      %p138 = scmp.ne.s32.totalorder %s130, %s133
      %p139 = scmp.eq.s32.totalorder %s42, 0
      %p140 = por %p138, %p139
      %p141 = scmp.ne.s32.totalorder %s130, %s133
      %p142 = scmp.eq.s32.totalorder %s47, 1
      %p143 = por %p141, %p142
      %p144 = scmp.ne.s32.totalorder %s133, %s134
      %p145 = scmp.eq.s32.totalorder %s47, 0
      %p146 = por %p144, %p145
      %p147 = scmp.ne.s32.totalorder %s133, %s134
      %p148 = scmp.eq.s32.totalorder %s48, 1
      %p149 = por %p147, %p148
      %p151 = scmp.ne.s32.totalorder %s134, %s150
      %p152 = scmp.eq.s32.totalorder %s48, 0
      %p153 = por %p151, %p152
      %s154 = ssub.s32 %s42, %s49
      %p155 = scmp.eq.s32.totalorder %s154, 0
      %s157 = sadd.s32 %s156, 1
      %s158 = scalar_select %p155, %s156, %s157
      %p161 = pneg %p155
      %p162 = scmp.eq.s32.totalorder %s42, 1
      %p163 = por %p161, %p162
      %p164 = scmp.ne.s32.totalorder %s156, %s159
      %p165 = scmp.eq.s32.totalorder %s42, 0
      %p166 = por %p164, %p165
      %p167 = scmp.ne.s32.totalorder %s156, %s159
      %p168 = scmp.eq.s32.totalorder %s47, 1
      %p169 = por %p167, %p168
      %p170 = scmp.ne.s32.totalorder %s159, %s160
      %p171 = scmp.eq.s32.totalorder %s47, 0
      %p172 = por %p170, %p171
      %p173 = scmp.ne.s32.totalorder %s159, %s160
      %p174 = scmp.eq.s32.totalorder %s48, 1
      %p175 = por %p173, %p174
      %p177 = scmp.ne.s32.totalorder %s160, %s176
      %p178 = scmp.eq.s32.totalorder %s48, 0
      %p179 = por %p177, %p178
      %s180 = ssub.s32 %s42, %s49
      %p181 = scmp.eq.s32.totalorder %s180, 0
      %s183 = sadd.s32 %s182, 1
      %s184 = scalar_select %p181, %s182, %s183
      %p187 = pneg %p181
      %p188 = scmp.eq.s32.totalorder %s42, 1
      %p189 = por %p187, %p188
      %p190 = scmp.ne.s32.totalorder %s182, %s185
      %p191 = scmp.eq.s32.totalorder %s42, 0
      %p192 = por %p190, %p191
      %p193 = scmp.ne.s32.totalorder %s182, %s185
      %p194 = scmp.eq.s32.totalorder %s47, 1
      %p195 = por %p193, %p194
      %p196 = scmp.ne.s32.totalorder %s185, %s186
      %p197 = scmp.eq.s32.totalorder %s47, 0
      %p198 = por %p196, %p197
      %p199 = scmp.ne.s32.totalorder %s185, %s186
      %p200 = scmp.eq.s32.totalorder %s48, 1
      %p201 = por %p199, %p200
      %p203 = scmp.ne.s32.totalorder %s186, %s202
      %p204 = scmp.eq.s32.totalorder %s48, 0
      %p205 = por %p203, %p204
      %s206 = ssub.s32 %s42, %s49
      %p207 = scmp.eq.s32.totalorder %s206, 0
      %s209 = sadd.s32 %s208, 1
      %s210 = scalar_select %p207, %s208, %s209
      %p213 = pneg %p207
      %p214 = scmp.eq.s32.totalorder %s42, 1
      %p215 = por %p213, %p214
      %p216 = scmp.ne.s32.totalorder %s208, %s211
      %p217 = scmp.eq.s32.totalorder %s42, 0
      %p218 = por %p216, %p217
      %p219 = scmp.ne.s32.totalorder %s208, %s211
      %p220 = scmp.eq.s32.totalorder %s47, 1
      %p221 = por %p219, %p220
      %p222 = scmp.ne.s32.totalorder %s211, %s212
      %p223 = scmp.eq.s32.totalorder %s47, 0
      %p224 = por %p222, %p223
      %p225 = scmp.ne.s32.totalorder %s211, %s212
      %p226 = scmp.eq.s32.totalorder %s48, 1
      %p227 = por %p225, %p226
      %p229 = scmp.ne.s32.totalorder %s212, %s228
      %p230 = scmp.eq.s32.totalorder %s48, 0
      %p231 = por %p229, %p230
      %s232 = ssub.s32 %s42, %s49
      %p233 = scmp.eq.s32.totalorder %s232, 0
      %s235 = sadd.s32 %s234, 1
      %s236 = scalar_select %p233, %s234, %s235
      %p239 = pneg %p233
      %p240 = scmp.eq.s32.totalorder %s42, 1
      %p241 = por %p239, %p240
      %p242 = scmp.ne.s32.totalorder %s234, %s237
      %p243 = scmp.eq.s32.totalorder %s42, 0
      %p244 = por %p242, %p243
      %p245 = scmp.ne.s32.totalorder %s234, %s237
      %p246 = scmp.eq.s32.totalorder %s47, 1
      %p247 = por %p245, %p246
      %p248 = scmp.ne.s32.totalorder %s237, %s238
      %p249 = scmp.eq.s32.totalorder %s47, 0
      %p250 = por %p248, %p249
      %p251 = scmp.ne.s32.totalorder %s237, %s238
      %p252 = scmp.eq.s32.totalorder %s48, 1
      %p253 = por %p251, %p252
      %p255 = scmp.ne.s32.totalorder %s238, %s254
      %p256 = scmp.eq.s32.totalorder %s48, 0
      %p257 = por %p255, %p256
      %s258 = ssub.s32 %s42, %s49
      %p259 = scmp.eq.s32.totalorder %s258, 0
      %s261 = sadd.s32 %s260, 1
      %s262 = scalar_select %p259, %s260, %s261
      %p265 = pneg %p259
      %p266 = scmp.eq.s32.totalorder %s42, 1
      %p267 = por %p265, %p266
      %p268 = scmp.ne.s32.totalorder %s260, %s263
      %p269 = scmp.eq.s32.totalorder %s42, 0
      %p270 = por %p268, %p269
      %p271 = scmp.ne.s32.totalorder %s260, %s263
      %p272 = scmp.eq.s32.totalorder %s47, 1
      %p273 = por %p271, %p272
      %p274 = scmp.ne.s32.totalorder %s263, %s264
      %p275 = scmp.eq.s32.totalorder %s47, 0
      %p276 = por %p274, %p275
      %p277 = scmp.ne.s32.totalorder %s263, %s264
      %p278 = scmp.eq.s32.totalorder %s48, 1
      %p279 = por %p277, %p278
      %p281 = scmp.ne.s32.totalorder %s264, %s280
      %p282 = scmp.eq.s32.totalorder %s48, 0
      %p283 = por %p281, %p282
      %s284 = ssub.s32 %s42, %s49
      %p285 = scmp.eq.s32.totalorder %s284, 0
      %s287 = sadd.s32 %s286, 1
      %s288 = scalar_select %p285, %s286, %s287
      %p291 = pneg %p285
      %p292 = scmp.eq.s32.totalorder %s42, 1
      %p293 = por %p291, %p292
      %p294 = scmp.ne.s32.totalorder %s286, %s289
      %p295 = scmp.eq.s32.totalorder %s42, 0
      %p296 = por %p294, %p295
      %p297 = scmp.ne.s32.totalorder %s286, %s289
      %p298 = scmp.eq.s32.totalorder %s47, 1
      %p299 = por %p297, %p298
      %p300 = scmp.ne.s32.totalorder %s289, %s290
      %p301 = scmp.eq.s32.totalorder %s47, 0
      %p302 = por %p300, %p301
      %p303 = scmp.ne.s32.totalorder %s289, %s290
      %p304 = scmp.eq.s32.totalorder %s48, 1
      %p305 = por %p303, %p304
      %p307 = scmp.ne.s32.totalorder %s290, %s306
      %p308 = scmp.eq.s32.totalorder %s48, 0
      %p309 = por %p307, %p308
      %s310 = ssub.s32 %s42, %s49
      %p311 = scmp.eq.s32.totalorder %s310, 0
      %s313 = sadd.s32 %s312, 1
      %s314 = scalar_select %p311, %s312, %s313
      %p317 = pneg %p311
      %p318 = scmp.eq.s32.totalorder %s42, 1
      %p319 = por %p317, %p318
      %p320 = scmp.ne.s32.totalorder %s312, %s315
      %p321 = scmp.eq.s32.totalorder %s42, 0
      %p322 = por %p320, %p321
      %p323 = scmp.ne.s32.totalorder %s312, %s315
      %p324 = scmp.eq.s32.totalorder %s47, 1
      %p325 = por %p323, %p324
      %p326 = scmp.ne.s32.totalorder %s315, %s316
      %p327 = scmp.eq.s32.totalorder %s47, 0
      %p328 = por %p326, %p327
      %p329 = scmp.ne.s32.totalorder %s315, %s316
      %p330 = scmp.eq.s32.totalorder %s48, 1
      %p331 = por %p329, %p330
      %p333 = scmp.ne.s32.totalorder %s316, %s332
      %p334 = scmp.eq.s32.totalorder %s48, 0
      %p335 = por %p333, %p334
      %s336 = ssub.s32 %s42, %s49
      %p337 = scmp.eq.s32.totalorder %s336, 0
      %s339 = sadd.s32 %s338, 1
      %s340 = scalar_select %p337, %s338, %s339
      %p343 = pneg %p337
      %p344 = scmp.eq.s32.totalorder %s42, 1
      %p345 = por %p343, %p344
      %p346 = scmp.ne.s32.totalorder %s338, %s341
      %p347 = scmp.eq.s32.totalorder %s42, 0
      %p348 = por %p346, %p347
      %p349 = scmp.ne.s32.totalorder %s338, %s341
      %p350 = scmp.eq.s32.totalorder %s47, 1
      %p351 = por %p349, %p350
      %p352 = scmp.ne.s32.totalorder %s341, %s342
      %p353 = scmp.eq.s32.totalorder %s47, 0
      %p354 = por %p352, %p353
      %p355 = scmp.ne.s32.totalorder %s341, %s342
      %p356 = scmp.eq.s32.totalorder %s48, 1
      %p357 = por %p355, %p356
      %p359 = scmp.ne.s32.totalorder %s342, %s358
      %p360 = scmp.eq.s32.totalorder %s48, 0
      %p361 = por %p359, %p360
      %s362 = ssub.s32 %s42, %s49
      %p363 = scmp.eq.s32.totalorder %s362, 0
      %s365 = sadd.s32 %s364, 1
      %s366 = scalar_select %p363, %s364, %s365
      %p369 = pneg %p363
      %p370 = scmp.eq.s32.totalorder %s42, 1
      %p371 = por %p369, %p370
      %p372 = scmp.ne.s32.totalorder %s364, %s367
      %p373 = scmp.eq.s32.totalorder %s42, 0
      %p374 = por %p372, %p373
      %p375 = scmp.ne.s32.totalorder %s364, %s367
      %p376 = scmp.eq.s32.totalorder %s47, 1
      %p377 = por %p375, %p376
      %p378 = scmp.ne.s32.totalorder %s367, %s368
      %p379 = scmp.eq.s32.totalorder %s47, 0
      %p380 = por %p378, %p379
      %p381 = scmp.ne.s32.totalorder %s367, %s368
      %p382 = scmp.eq.s32.totalorder %s48, 1
      %p383 = por %p381, %p382
      %p385 = scmp.ne.s32.totalorder %s368, %s384
      %p386 = scmp.eq.s32.totalorder %s48, 0
      %p387 = por %p385, %p386
      %s388 = ssub.s32 %s42, %s49
      %p389 = scmp.eq.s32.totalorder %s388, 0
      %s391 = sadd.s32 %s390, 1
      %s392 = scalar_select %p389, %s390, %s391
      %p395 = pneg %p389
      %p396 = scmp.eq.s32.totalorder %s42, 1
      %p397 = por %p395, %p396
      %p398 = scmp.ne.s32.totalorder %s390, %s393
      %p399 = scmp.eq.s32.totalorder %s42, 0
      %p400 = por %p398, %p399
      %p401 = scmp.ne.s32.totalorder %s390, %s393
      %p402 = scmp.eq.s32.totalorder %s47, 1
      %p403 = por %p401, %p402
      %p404 = scmp.ne.s32.totalorder %s393, %s394
      %p405 = scmp.eq.s32.totalorder %s47, 0
      %p406 = por %p404, %p405
      %p407 = scmp.ne.s32.totalorder %s393, %s394
      %p408 = scmp.eq.s32.totalorder %s48, 1
      %p409 = por %p407, %p408
      %p411 = scmp.ne.s32.totalorder %s394, %s410
      %p412 = scmp.eq.s32.totalorder %s48, 0
      %p413 = por %p411, %p412
      %s414 = ssub.s32 %s42, %s49
      %p415 = scmp.eq.s32.totalorder %s414, 0
      %s417 = sadd.s32 %s416, 1
      %s418 = scalar_select %p415, %s416, %s417
      %p421 = pneg %p415
      %p422 = scmp.eq.s32.totalorder %s42, 1
      %p423 = por %p421, %p422
      %p424 = scmp.ne.s32.totalorder %s416, %s419
      %p425 = scmp.eq.s32.totalorder %s42, 0
      %p426 = por %p424, %p425
      %p427 = scmp.ne.s32.totalorder %s416, %s419
      %p428 = scmp.eq.s32.totalorder %s47, 1
      %p429 = por %p427, %p428
      %p430 = scmp.ne.s32.totalorder %s419, %s420
      %p431 = scmp.eq.s32.totalorder %s47, 0
      %p432 = por %p430, %p431
      %p433 = scmp.ne.s32.totalorder %s419, %s420
      %p434 = scmp.eq.s32.totalorder %s48, 1
      %p435 = por %p433, %p434
      %p437 = scmp.ne.s32.totalorder %s420, %s436
      %p438 = scmp.eq.s32.totalorder %s48, 0
      %p439 = por %p437, %p438
      %s440 = ssub.s32 %s42, %s49
      %p441 = scmp.eq.s32.totalorder %s440, 0
      %s443 = sadd.s32 %s442, 1
      %s444 = scalar_select %p441, %s442, %s443
      %p447 = pneg %p441
      %p448 = scmp.eq.s32.totalorder %s42, 1
      %p449 = por %p447, %p448
      %p450 = scmp.ne.s32.totalorder %s442, %s445
      %p451 = scmp.eq.s32.totalorder %s42, 0
      %p452 = por %p450, %p451
      %p453 = scmp.ne.s32.totalorder %s442, %s445
      %p454 = scmp.eq.s32.totalorder %s47, 1
      %p455 = por %p453, %p454
      %p456 = scmp.ne.s32.totalorder %s445, %s446
      %p457 = scmp.eq.s32.totalorder %s47, 0
      %p458 = por %p456, %p457
      %p459 = scmp.ne.s32.totalorder %s445, %s446
      %p460 = scmp.eq.s32.totalorder %s48, 1
      %p461 = por %p459, %p460
      %p463 = scmp.ne.s32.totalorder %s446, %s462
      %p464 = scmp.eq.s32.totalorder %s48, 0
      %p465 = por %p463, %p464
      %p466 = scmp.le.s32.totalorder 1, %s42
      %p467 = scmp.lt.s32.totalorder %s42, 3
      %p468 = pnand %p466, %p467
      %p469 = pneg %p468
      // Predicated region
      $region9: #{synthesizer_pair_forward.1} parent=5 // pred_check
        _
      $region10: #{synthesizer_pair_forward.1} parent=5 // pred_check_branch
        %471 = sbr.rel (%p468) target = $region12
      $region11: #{synthesizer_pair_forward.1} parent=5 // pred_region
        %s472 = ssub.s32 %s42, 1
      $region12: #{synthesizer_pair_forward.1} parent=5 // pred_fallthru
        _
      %p473 = scmp.lt.s32.totalorder %s42, 2
      // Predicated region
      $region13: #{synthesizer_pair_forward.1} parent=5 // pred_check
        %p474 = pneg %p473
      $region14: #{synthesizer_pair_forward.1} parent=5 // pred_check_branch
        %476 = sbr.rel (%p474) target = $region16
      $region15: #{synthesizer_pair_forward.1} parent=5 // pred_region
        // Predicated region
        $region17: #{synthesizer_pair_forward.1} parent=15 // pred_check
          %p477 = pneg %p62
        $region18: #{synthesizer_pair_forward.1} parent=15 // pred_check_branch
          %479 = sbr.rel (%p477) target = $region20
        $region19: #{synthesizer_pair_forward.1} parent=15 // pred_region
          %p480 = scmp.lt.s32.totalorder %s42, 1
          %s481 = scalar_select %p480, %s42, 1
          %s482 = smul.addr %s481, 8
          %s483 = smul.addr %s482, 8
          %s484 = scalar_lea.vmem %s0, %s483
        $region20: #{synthesizer_pair_forward.1} parent=15 // pred_fallthru
          _
        // Predicated region
        $region21: #{synthesizer_pair_forward.1} parent=15 // pred_check
          %p485 = pneg %p88
        $region22: #{synthesizer_pair_forward.1} parent=15 // pred_check_branch
          %487 = sbr.rel (%p485) target = $region24
        $region23: #{synthesizer_pair_forward.1} parent=15 // pred_region
          %s488 = sand.u32 %s78, 1
          %s489 = scalar_lea.sflag [#allocation4], %s488
          %s490 = sand.u32 %s78, 1
          %s491 = smul.addr %s490, 4
          %s492 = scalar_lea.vmem [#allocation3], %s491
          %s494 = ssub.s32 64, 64
          %495 = vsyncadd %s489, %s494
          %s496 = smul.addr %s42, 64
          %s497 = scalar_lea.hbm %s1, %s496
          %s499 = sshll.u32 %s492, 4
          %s500 = int_to_ptr.vmem [resolvable:$true] %s499
          %502 = dma.hbm_to_vmem [thread:$0]  %s497, 64, %s500, %s489
        $region24: #{synthesizer_pair_forward.1} parent=15 // pred_fallthru
          _
        // Predicated region
        $region25: #{synthesizer_pair_forward.1} parent=15 // pred_check
          %p503 = pneg %p114
        $region26: #{synthesizer_pair_forward.1} parent=15 // pred_check_branch
          %505 = sbr.rel (%p503) target = $region28
        $region27: #{synthesizer_pair_forward.1} parent=15 // pred_region
          %s506 = sand.u32 %s42, 1
          %s507 = scalar_lea.sflag [#allocation6], %s506
          %s508 = sand.u32 %s104, 1
          %s509 = scalar_lea.vmem [#allocation5], %s508
          %s511 = ssub.s32 16, 16
          %512 = vsyncadd %s507, %s511
          %s513 = smul.addr %s42, 16
          %s514 = scalar_lea.hbm %s2, %s513
          %s516 = sshll.u32 %s509, 4
          %s517 = int_to_ptr.vmem [resolvable:$true] %s516
          %519 = dma.hbm_to_vmem [thread:$0]  %s514, 16, %s517, %s507
        $region28: #{synthesizer_pair_forward.1} parent=15 // pred_fallthru
          _
        // Predicated region
        $region29: #{synthesizer_pair_forward.1} parent=15 // pred_check
          %p520 = pneg %p140
        $region30: #{synthesizer_pair_forward.1} parent=15 // pred_check_branch
          %522 = sbr.rel (%p520) target = $region32
        $region31: #{synthesizer_pair_forward.1} parent=15 // pred_region
          %s523 = sand.u32 %s42, 1
          %s524 = scalar_lea.sflag [#allocation6], %s523
          %s525 = sand.u32 %s130, 1
          %s526 = smul.addr %s525, 288
          %s527 = scalar_lea.vmem [#allocation7], %s526
          %s529 = ssub.s32 4608, 4608
          %530 = vsyncadd %s524, %s529
          %s531 = smul.addr %s42, 36
          %s532 = smul.addr %s531, 128
          %s533 = scalar_lea.hbm %s3, %s532
          %s534 = sshll.u32 %s527, 4
          %s535 = int_to_ptr.vmem [resolvable:$true] %s534
          %540 = dma.hbm_to_vmem [thread:$0]  %s533, 4608, %s535, %s524, 128, 128, 8
        $region32: #{synthesizer_pair_forward.1} parent=15 // pred_fallthru
          _
        // Predicated region
        $region33: #{synthesizer_pair_forward.1} parent=15 // pred_check
          %p541 = pneg %p166
        $region34: #{synthesizer_pair_forward.1} parent=15 // pred_check_branch
          %543 = sbr.rel (%p541) target = $region36
        $region35: #{synthesizer_pair_forward.1} parent=15 // pred_region
          %s544 = sand.u32 %s42, 1
          %s545 = scalar_lea.sflag [#allocation9], %s544
          %s546 = sand.u32 %s156, 1
          %s547 = scalar_lea.vmem [#allocation8], %s546
          %s549 = ssub.s32 16, 16
          %550 = vsyncadd %s545, %s549
          %s551 = smul.addr %s42, 16
          %s552 = scalar_lea.hbm %s4, %s551
          %s554 = sshll.u32 %s547, 4
          %s555 = int_to_ptr.vmem [resolvable:$true] %s554
          %557 = dma.hbm_to_vmem [thread:$0]  %s552, 16, %s555, %s545
        $region36: #{synthesizer_pair_forward.1} parent=15 // pred_fallthru
          _
        // Predicated region
        $region37: #{synthesizer_pair_forward.1} parent=15 // pred_check
          %p558 = pneg %p192
        $region38: #{synthesizer_pair_forward.1} parent=15 // pred_check_branch
          %560 = sbr.rel (%p558) target = $region40
        $region39: #{synthesizer_pair_forward.1} parent=15 // pred_region
          %s561 = sand.u32 %s42, 1
          %s562 = scalar_lea.sflag [#allocation9], %s561
          %s563 = sand.u32 %s182, 1
          %s564 = smul.addr %s563, 288
          %s565 = scalar_lea.vmem [#allocation10], %s564
          %s567 = ssub.s32 4608, 4608
          %568 = vsyncadd %s562, %s567
          %s569 = smul.addr %s42, 36
          %s570 = smul.addr %s569, 128
          %s571 = scalar_lea.hbm %s5, %s570
          %s572 = sshll.u32 %s565, 4
          %s573 = int_to_ptr.vmem [resolvable:$true] %s572
          %578 = dma.hbm_to_vmem [thread:$0]  %s571, 4608, %s573, %s562, 128, 128, 8
        $region40: #{synthesizer_pair_forward.1} parent=15 // pred_fallthru
          _
        // Predicated region
        $region41: #{synthesizer_pair_forward.1} parent=15 // pred_check
          %p579 = pneg %p218
        $region42: #{synthesizer_pair_forward.1} parent=15 // pred_check_branch
          %581 = sbr.rel (%p579) target = $region44
        $region43: #{synthesizer_pair_forward.1} parent=15 // pred_region
          %s582 = sand.u32 %s42, 1
          %s583 = scalar_lea.sflag [#allocation12], %s582
          %s584 = sand.u32 %s208, 1
          %s585 = scalar_lea.vmem [#allocation11], %s584
          %s587 = ssub.s32 16, 16
          %588 = vsyncadd %s583, %s587
          %s589 = smul.addr %s42, 16
          %s590 = scalar_lea.hbm %s6, %s589
          %s592 = sshll.u32 %s585, 4
          %s593 = int_to_ptr.vmem [resolvable:$true] %s592
          %595 = dma.hbm_to_vmem [thread:$0]  %s590, 16, %s593, %s583
        $region44: #{synthesizer_pair_forward.1} parent=15 // pred_fallthru
          _
        // Predicated region
        $region45: #{synthesizer_pair_forward.1} parent=15 // pred_check
          %p596 = pneg %p244
        $region46: #{synthesizer_pair_forward.1} parent=15 // pred_check_branch
          %598 = sbr.rel (%p596) target = $region48
        $region47: #{synthesizer_pair_forward.1} parent=15 // pred_region
          %s599 = sand.u32 %s42, 1
          %s600 = scalar_lea.sflag [#allocation12], %s599
          %s601 = sand.u32 %s234, 1
          %s602 = smul.addr %s601, 32
          %s603 = scalar_lea.vmem [#allocation13], %s602
          %s605 = ssub.s32 512, 512
          %606 = vsyncadd %s600, %s605
          %s607 = smul.addr %s42, 4
          %s608 = smul.addr %s607, 128
          %s609 = scalar_lea.hbm %s7, %s608
          %s610 = sshll.u32 %s603, 4
          %s611 = int_to_ptr.vmem [resolvable:$true] %s610
          %616 = dma.hbm_to_vmem [thread:$0]  %s609, 512, %s611, %s600, 128, 128, 8
        $region48: #{synthesizer_pair_forward.1} parent=15 // pred_fallthru
          _
        // Predicated region
        $region49: #{synthesizer_pair_forward.1} parent=15 // pred_check
          %p617 = pneg %p270
        $region50: #{synthesizer_pair_forward.1} parent=15 // pred_check_branch
          %619 = sbr.rel (%p617) target = $region52
        $region51: #{synthesizer_pair_forward.1} parent=15 // pred_region
          %s620 = sand.u32 %s42, 1
          %s621 = scalar_lea.sflag [#allocation15], %s620
          %s622 = sand.u32 %s260, 1
          %s623 = scalar_lea.vmem [#allocation14], %s622
          %s625 = ssub.s32 16, 16
          %626 = vsyncadd %s621, %s625
          %s627 = smul.addr %s42, 16
          %s628 = scalar_lea.hbm %s8, %s627
          %s630 = sshll.u32 %s623, 4
          %s631 = int_to_ptr.vmem [resolvable:$true] %s630
          %633 = dma.hbm_to_vmem [thread:$0]  %s628, 16, %s631, %s621
        $region52: #{synthesizer_pair_forward.1} parent=15 // pred_fallthru
          _
        // Predicated region
        $region53: #{synthesizer_pair_forward.1} parent=15 // pred_check
          %p634 = pneg %p296
        $region54: #{synthesizer_pair_forward.1} parent=15 // pred_check_branch
          %636 = sbr.rel (%p634) target = $region56
        $region55: #{synthesizer_pair_forward.1} parent=15 // pred_region
          %s637 = sand.u32 %s42, 1
          %s638 = scalar_lea.sflag [#allocation15], %s637
          %s639 = sand.u32 %s286, 1
          %s640 = smul.addr %s639, 1152
          %s641 = scalar_lea.vmem [#allocation16], %s640
          %s643 = ssub.s32 18432, 18432
          %644 = vsyncadd %s638, %s643
          %s645 = smul.addr %s42, 144
          %s646 = smul.addr %s645, 128
          %s647 = scalar_lea.hbm %s9, %s646
          %s648 = sshll.u32 %s641, 4
          %s649 = int_to_ptr.vmem [resolvable:$true] %s648
          %654 = dma.hbm_to_vmem [thread:$0]  %s647, 18432, %s649, %s638, 128, 128, 8
        $region56: #{synthesizer_pair_forward.1} parent=15 // pred_fallthru
          _
        // Predicated region
        $region57: #{synthesizer_pair_forward.1} parent=15 // pred_check
          %p655 = pneg %p322
        $region58: #{synthesizer_pair_forward.1} parent=15 // pred_check_branch
          %657 = sbr.rel (%p655) target = $region60
        $region59: #{synthesizer_pair_forward.1} parent=15 // pred_region
          %s658 = sand.u32 %s42, 1
          %s659 = scalar_lea.sflag [#allocation18], %s658
          %s660 = sand.u32 %s312, 1
          %s661 = scalar_lea.vmem [#allocation17], %s660
          %s663 = ssub.s32 16, 16
          %664 = vsyncadd %s659, %s663
          %s665 = smul.addr %s42, 16
          %s666 = scalar_lea.hbm %s10, %s665
          %s668 = sshll.u32 %s661, 4
          %s669 = int_to_ptr.vmem [resolvable:$true] %s668
          %671 = dma.hbm_to_vmem [thread:$0]  %s666, 16, %s669, %s659
        $region60: #{synthesizer_pair_forward.1} parent=15 // pred_fallthru
          _
        // Predicated region
        $region61: #{synthesizer_pair_forward.1} parent=15 // pred_check
          %p672 = pneg %p348
        $region62: #{synthesizer_pair_forward.1} parent=15 // pred_check_branch
          %674 = sbr.rel (%p672) target = $region64
        $region63: #{synthesizer_pair_forward.1} parent=15 // pred_region
          %s675 = sand.u32 %s42, 1
          %s676 = scalar_lea.sflag [#allocation18], %s675
          %s677 = sand.u32 %s338, 1
          %s678 = smul.addr %s677, 1152
          %s679 = scalar_lea.vmem [#allocation19], %s678
          %s681 = ssub.s32 18432, 18432
          %682 = vsyncadd %s676, %s681
          %s683 = smul.addr %s42, 144
          %s684 = smul.addr %s683, 128
          %s685 = scalar_lea.hbm %s11, %s684
          %s686 = sshll.u32 %s679, 4
          %s687 = int_to_ptr.vmem [resolvable:$true] %s686
          %692 = dma.hbm_to_vmem [thread:$0]  %s685, 18432, %s687, %s676, 128, 128, 8
        $region64: #{synthesizer_pair_forward.1} parent=15 // pred_fallthru
          _
        // Predicated region
        $region65: #{synthesizer_pair_forward.1} parent=15 // pred_check
          %p693 = pneg %p374
        $region66: #{synthesizer_pair_forward.1} parent=15 // pred_check_branch
          %695 = sbr.rel (%p693) target = $region68
        $region67: #{synthesizer_pair_forward.1} parent=15 // pred_region
          %s696 = sand.u32 %s364, 1
          %s697 = scalar_lea.sflag [#allocation21], %s696
          %s698 = sand.u32 %s364, 1
          %s699 = scalar_lea.vmem [#allocation20], %s698
          %s701 = ssub.s32 16, 16
          %702 = vsyncadd %s697, %s701
          %s703 = smul.addr %s42, 16
          %s704 = scalar_lea.hbm %s12, %s703
          %s706 = sshll.u32 %s699, 4
          %s707 = int_to_ptr.vmem [resolvable:$true] %s706
          %709 = dma.hbm_to_vmem [thread:$0]  %s704, 16, %s707, %s697
        $region68: #{synthesizer_pair_forward.1} parent=15 // pred_fallthru
          _
        // Predicated region
        $region69: #{synthesizer_pair_forward.1} parent=15 // pred_check
          %p710 = pneg %p400
        $region70: #{synthesizer_pair_forward.1} parent=15 // pred_check_branch
          %712 = sbr.rel (%p710) target = $region72
        $region71: #{synthesizer_pair_forward.1} parent=15 // pred_region
          %p713 = scmp.lt.s32.totalorder %s42, 1
          %s714 = scalar_select %p713, %s42, 1
          %s715 = smul.addr %s714, 16
          %s716 = smul.addr %s715, 8
          %s717 = scalar_lea.vmem %s13, %s716
        $region72: #{synthesizer_pair_forward.1} parent=15 // pred_fallthru
          _
        // Predicated region
        $region73: #{synthesizer_pair_forward.1} parent=15 // pred_check
          %p718 = pneg %p426
        $region74: #{synthesizer_pair_forward.1} parent=15 // pred_check_branch
          %720 = sbr.rel (%p718) target = $region76
        $region75: #{synthesizer_pair_forward.1} parent=15 // pred_region
          %p721 = scmp.lt.s32.totalorder %s42, 1
          %s722 = scalar_select %p721, %s42, 1
          %s723 = scalar_lea.vmem %s14, %s722
        $region76: #{synthesizer_pair_forward.1} parent=15 // pred_fallthru
          _
      $region16: #{synthesizer_pair_forward.1} parent=5 // pred_fallthru
        _
      %p724 = scmp.le.s32.totalorder 1, %s42
      %p725 = scmp.lt.s32.totalorder %s42, 3
      %p726 = pnand %p724, %p725
      %p727 = pneg %p726
      // Predicated region
      $region77: #{synthesizer_pair_forward.1} parent=5 // pred_check
        _
      $region78: #{synthesizer_pair_forward.1} parent=5 // pred_check_branch
        %729 = sbr.rel (%p726) target = $region80
      $region79: #{synthesizer_pair_forward.1} parent=5 // pred_region
        %s730 = ssub.s32 %s42, 1
        %s731 = sand.u32 %s81, 1
        %s732 = scalar_lea.sflag [#allocation4], %s731
        %s733 = sand.u32 %s81, 1
        %s734 = smul.addr %s733, 4
        %s735 = scalar_lea.vmem [#allocation3], %s734
        // Predicated region
        $region81: #{synthesizer_pair_forward.1} parent=79 // pred_check
          %p736 = pneg %p94
        $region82: #{synthesizer_pair_forward.1} parent=79 // pred_check_branch
          %738 = sbr.rel (%p736) target = $region84
        $region83: #{synthesizer_pair_forward.1} parent=79 // pred_region
          %739 = dma.done %s732, 64
        $region84: #{synthesizer_pair_forward.1} parent=79 // pred_fallthru
          _
        %s740 = sand.u32 %s47, 1
        %s741 = scalar_lea.sflag [#allocation6], %s740
        %s742 = sand.u32 %s107, 1
        %s743 = scalar_lea.vmem [#allocation5], %s742
        // Predicated region
        $region85: #{synthesizer_pair_forward.1} parent=79 // pred_check
          %p744 = pneg %p120
        $region86: #{synthesizer_pair_forward.1} parent=79 // pred_check_branch
          %746 = sbr.rel (%p744) target = $region88
        $region87: #{synthesizer_pair_forward.1} parent=79 // pred_region
          %747 = dma.done %s741, 16
        $region88: #{synthesizer_pair_forward.1} parent=79 // pred_fallthru
          _
        %s748 = sand.u32 %s47, 1
        %s749 = scalar_lea.sflag [#allocation6], %s748
        %s750 = sand.u32 %s133, 1
        %s751 = smul.addr %s750, 288
        %s752 = scalar_lea.vmem [#allocation7], %s751
        // Predicated region
        $region89: #{synthesizer_pair_forward.1} parent=79 // pred_check
          %p753 = pneg %p146
        $region90: #{synthesizer_pair_forward.1} parent=79 // pred_check_branch
          %755 = sbr.rel (%p753) target = $region92
        $region91: #{synthesizer_pair_forward.1} parent=79 // pred_region
          %756 = dma.done %s749, 4608
        $region92: #{synthesizer_pair_forward.1} parent=79 // pred_fallthru
          _
        %s757 = sand.u32 %s47, 1
        %s758 = scalar_lea.sflag [#allocation9], %s757
        %s759 = sand.u32 %s159, 1
        %s760 = scalar_lea.vmem [#allocation8], %s759
        // Predicated region
        $region93: #{synthesizer_pair_forward.1} parent=79 // pred_check
          %p761 = pneg %p172
        $region94: #{synthesizer_pair_forward.1} parent=79 // pred_check_branch
          %763 = sbr.rel (%p761) target = $region96
        $region95: #{synthesizer_pair_forward.1} parent=79 // pred_region
          %764 = dma.done %s758, 16
        $region96: #{synthesizer_pair_forward.1} parent=79 // pred_fallthru
          _
        %s765 = sand.u32 %s47, 1
        %s766 = scalar_lea.sflag [#allocation9], %s765
        %s767 = sand.u32 %s185, 1
        %s768 = smul.addr %s767, 288
        %s769 = scalar_lea.vmem [#allocation10], %s768
        // Predicated region
        $region97: #{synthesizer_pair_forward.1} parent=79 // pred_check
          %p770 = pneg %p198
        $region98: #{synthesizer_pair_forward.1} parent=79 // pred_check_branch
          %772 = sbr.rel (%p770) target = $region100
        $region99: #{synthesizer_pair_forward.1} parent=79 // pred_region
          %773 = dma.done %s766, 4608
        $region100: #{synthesizer_pair_forward.1} parent=79 // pred_fallthru
          _
        %s774 = sand.u32 %s47, 1
        %s775 = scalar_lea.sflag [#allocation12], %s774
        %s776 = sand.u32 %s211, 1
        %s777 = scalar_lea.vmem [#allocation11], %s776
        // Predicated region
        $region101: #{synthesizer_pair_forward.1} parent=79 // pred_check
          %p778 = pneg %p224
        $region102: #{synthesizer_pair_forward.1} parent=79 // pred_check_branch
          %780 = sbr.rel (%p778) target = $region104
        $region103: #{synthesizer_pair_forward.1} parent=79 // pred_region
          %781 = dma.done %s775, 16
        $region104: #{synthesizer_pair_forward.1} parent=79 // pred_fallthru
          _
        %s782 = sand.u32 %s47, 1
        %s783 = scalar_lea.sflag [#allocation12], %s782
        %s784 = sand.u32 %s237, 1
        %s785 = smul.addr %s784, 32
        %s786 = scalar_lea.vmem [#allocation13], %s785
        // Predicated region
        $region105: #{synthesizer_pair_forward.1} parent=79 // pred_check
          %p787 = pneg %p250
        $region106: #{synthesizer_pair_forward.1} parent=79 // pred_check_branch
          %789 = sbr.rel (%p787) target = $region108
        $region107: #{synthesizer_pair_forward.1} parent=79 // pred_region
          %790 = dma.done %s783, 512
        $region108: #{synthesizer_pair_forward.1} parent=79 // pred_fallthru
          _
        %s791 = sand.u32 %s47, 1
        %s792 = scalar_lea.sflag [#allocation15], %s791
        %s793 = sand.u32 %s263, 1
        %s794 = scalar_lea.vmem [#allocation14], %s793
        // Predicated region
        $region109: #{synthesizer_pair_forward.1} parent=79 // pred_check
          %p795 = pneg %p276
        $region110: #{synthesizer_pair_forward.1} parent=79 // pred_check_branch
          %797 = sbr.rel (%p795) target = $region112
        $region111: #{synthesizer_pair_forward.1} parent=79 // pred_region
          %798 = dma.done %s792, 16
        $region112: #{synthesizer_pair_forward.1} parent=79 // pred_fallthru
          _
        %s799 = sand.u32 %s47, 1
        %s800 = scalar_lea.sflag [#allocation15], %s799
        %s801 = sand.u32 %s289, 1
        %s802 = smul.addr %s801, 1152
        %s803 = scalar_lea.vmem [#allocation16], %s802
        // Predicated region
        $region113: #{synthesizer_pair_forward.1} parent=79 // pred_check
          %p804 = pneg %p302
        $region114: #{synthesizer_pair_forward.1} parent=79 // pred_check_branch
          %806 = sbr.rel (%p804) target = $region116
        $region115: #{synthesizer_pair_forward.1} parent=79 // pred_region
          %807 = dma.done %s800, 18432
        $region116: #{synthesizer_pair_forward.1} parent=79 // pred_fallthru
          _
        %s808 = sand.u32 %s47, 1
        %s809 = scalar_lea.sflag [#allocation18], %s808
        %s810 = sand.u32 %s315, 1
        %s811 = scalar_lea.vmem [#allocation17], %s810
        // Predicated region
        $region117: #{synthesizer_pair_forward.1} parent=79 // pred_check
          %p812 = pneg %p328
        $region118: #{synthesizer_pair_forward.1} parent=79 // pred_check_branch
          %814 = sbr.rel (%p812) target = $region120
        $region119: #{synthesizer_pair_forward.1} parent=79 // pred_region
          %815 = dma.done %s809, 16
        $region120: #{synthesizer_pair_forward.1} parent=79 // pred_fallthru
          _
        %s816 = sand.u32 %s47, 1
        %s817 = scalar_lea.sflag [#allocation18], %s816
        %s818 = sand.u32 %s341, 1
        %s819 = smul.addr %s818, 1152
        %s820 = scalar_lea.vmem [#allocation19], %s819
        // Predicated region
        $region121: #{synthesizer_pair_forward.1} parent=79 // pred_check
          %p821 = pneg %p354
        $region122: #{synthesizer_pair_forward.1} parent=79 // pred_check_branch
          %823 = sbr.rel (%p821) target = $region124
        $region123: #{synthesizer_pair_forward.1} parent=79 // pred_region
          %824 = dma.done %s817, 18432
        $region124: #{synthesizer_pair_forward.1} parent=79 // pred_fallthru
          _
        %s825 = sand.u32 %s367, 1
        %s826 = scalar_lea.sflag [#allocation21], %s825
        %s827 = sand.u32 %s367, 1
        %s828 = scalar_lea.vmem [#allocation20], %s827
        // Predicated region
        $region125: #{synthesizer_pair_forward.1} parent=79 // pred_check
          %p829 = pneg %p380
        $region126: #{synthesizer_pair_forward.1} parent=79 // pred_check_branch
          %831 = sbr.rel (%p829) target = $region128
        $region127: #{synthesizer_pair_forward.1} parent=79 // pred_region
          %832 = dma.done %s826, 16
        $region128: #{synthesizer_pair_forward.1} parent=79 // pred_fallthru
          _
        %p833 = scmp.lt.s32.totalorder %s47, 1
        %s834 = scalar_select %p833, %s47, 1
        %s835 = smul.addr %s834, 8
        %s836 = smul.addr %s835, 8
        %s837 = scalar_lea.vmem %s0, %s836
        %p838 = pneg %p68
        %p839 = pneg %p65
        %s840 = sand.u32 %s81, 1
        %s841 = scalar_lea.sflag [#allocation4], %s840
        %s842 = sand.u32 %s81, 1
        %s843 = smul.addr %s842, 4
        %s844 = scalar_lea.vmem [#allocation3], %s843
        %p845 = pneg %p94
        %p846 = pneg %p91
        %s847 = sand.u32 %s47, 1
        %s848 = scalar_lea.sflag [#allocation6], %s847
        %s849 = sand.u32 %s107, 1
        %s850 = scalar_lea.vmem [#allocation5], %s849
        %p851 = pneg %p120
        %p852 = pneg %p117
        %s853 = sand.u32 %s47, 1
        %s854 = scalar_lea.sflag [#allocation6], %s853
        %s855 = sand.u32 %s133, 1
        %s856 = smul.addr %s855, 288
        %s857 = scalar_lea.vmem [#allocation7], %s856
        %p858 = pneg %p146
        %p859 = pneg %p143
        %s860 = sand.u32 %s47, 1
        %s861 = scalar_lea.sflag [#allocation9], %s860
        %s862 = sand.u32 %s159, 1
        %s863 = scalar_lea.vmem [#allocation8], %s862
        %p864 = pneg %p172
        %p865 = pneg %p169
        %s866 = sand.u32 %s47, 1
        %s867 = scalar_lea.sflag [#allocation9], %s866
        %s868 = sand.u32 %s185, 1
        %s869 = smul.addr %s868, 288
        %s870 = scalar_lea.vmem [#allocation10], %s869
        %p871 = pneg %p198
        %p872 = pneg %p195
        %s873 = sand.u32 %s47, 1
        %s874 = scalar_lea.sflag [#allocation12], %s873
        %s875 = sand.u32 %s211, 1
        %s876 = scalar_lea.vmem [#allocation11], %s875
        %p877 = pneg %p224
        %p878 = pneg %p221
        %s879 = sand.u32 %s47, 1
        %s880 = scalar_lea.sflag [#allocation12], %s879
        %s881 = sand.u32 %s237, 1
        %s882 = smul.addr %s881, 32
        %s883 = scalar_lea.vmem [#allocation13], %s882
        %p884 = pneg %p250
        %p885 = pneg %p247
        %s886 = sand.u32 %s47, 1
        %s887 = scalar_lea.sflag [#allocation15], %s886
        %s888 = sand.u32 %s263, 1
        %s889 = scalar_lea.vmem [#allocation14], %s888
        %p890 = pneg %p276
        %p891 = pneg %p273
        %s892 = sand.u32 %s47, 1
        %s893 = scalar_lea.sflag [#allocation15], %s892
        %s894 = sand.u32 %s289, 1
        %s895 = smul.addr %s894, 1152
        %s896 = scalar_lea.vmem [#allocation16], %s895
        %p897 = pneg %p302
        %p898 = pneg %p299
        %s899 = sand.u32 %s47, 1
        %s900 = scalar_lea.sflag [#allocation18], %s899
        %s901 = sand.u32 %s315, 1
        %s902 = scalar_lea.vmem [#allocation17], %s901
        %p903 = pneg %p328
        %p904 = pneg %p325
        %s905 = sand.u32 %s47, 1
        %s906 = scalar_lea.sflag [#allocation18], %s905
        %s907 = sand.u32 %s341, 1
        %s908 = smul.addr %s907, 1152
        %s909 = scalar_lea.vmem [#allocation19], %s908
        %p910 = pneg %p354
        %p911 = pneg %p351
        %s912 = sand.u32 %s367, 1
        %s913 = scalar_lea.sflag [#allocation21], %s912
        %s914 = sand.u32 %s367, 1
        %s915 = scalar_lea.vmem [#allocation20], %s914
        %p916 = pneg %p380
        %p917 = pneg %p377
        %p918 = scmp.lt.s32.totalorder %s47, 1
        %s919 = scalar_select %p918, %s47, 1
        %s920 = smul.addr %s919, 16
        %s921 = smul.addr %s920, 8
        %s922 = scalar_lea.vmem %s13, %s921
        %p923 = pneg %p406
        %p924 = pneg %p403
        %p925 = scmp.lt.s32.totalorder %s47, 1
        %s926 = scalar_select %p925, %s47, 1
        %s927 = scalar_lea.vmem %s14, %s926
        %p928 = pneg %p432
        %p929 = pneg %p429
        %p930 = pneg %p458
        %p931 = pneg %p455
        %p932 = scmp.lt.s32.totalorder %s47, 1
        %s933 = scalar_select %p932, %s47, 1
        %s934 = smul.addr %s933, 2
        %s935 = scalar_lea.vmem %s15, %s934
        %p936 = scmp.lt.s32.totalorder %s47, 1
        %s937 = scalar_select %p936, %s47, 1
        %s938 = smul.addr %s937, 8
        %s939 = smul.addr %s938, 8
        %s940 = scalar_lea.vmem %s0, %s939
        %p941 = scmp.lt.s32.totalorder %s47, 1
        %s942 = scalar_select %p941, %s47, 1
        %s943 = smul.addr %s942, 16
        %s944 = smul.addr %s943, 8
        %s945 = scalar_lea.vmem %s13, %s944
        %p946 = scmp.lt.s32.totalorder %s47, 1
        %s947 = scalar_select %p946, %s47, 1
        %s948 = scalar_lea.vmem %s14, %s947
        %p949 = scmp.lt.s32.totalorder %s47, 1
        %s950 = scalar_select %p949, %s47, 1
        %s951 = smul.addr %s950, 2
        %s952 = scalar_lea.vmem %s15, %s951
        %v953 = vld [vmem:[%s940] sm:$0xff]
        %v954 = vld [vmem:[%s940 + $0x8] sm:$0xff]
        %v955 = vld [vmem:[%s940 + $0x10] sm:$0xff]
        %v956 = vld [vmem:[%s940 + $0x18] sm:$0xff]
        %v957 = vld [vmem:[%s940 + $0x20] sm:$0xff]
        %v958 = vld [vmem:[%s940 + $0x28] sm:$0xff]
        %v959 = vld [vmem:[%s940 + $0x30] sm:$0xff]
        %v960 = vld [vmem:[%s940 + $0x38] sm:$0xff]
        %v961 = vld [vmem:[%s735] sm:$0xf]
        %v962 = vld [vmem:[%s743] sm:$0x1]
        %v964 = vlaneseq
        %v965 = vshrl.u32 %v964, 7
        %v966 = vsub.s32 0, %v965
        %v967 = vrot.slane %v962, %v966
        %vm969 = vcmask 31744
        %v971 = vsel %vm969, %v953, 0
        %v974 = vsel %vm969, %v954, 0
        %v977 = vsel %vm969, %v955, 0
        %v980 = vsel %vm969, %v956, 0
        %v983 = vsel %vm969, %v957, 0
        %v986 = vsel %vm969, %v958, 0
        %v989 = vsel %vm969, %v959, 0
        %v992 = vsel %vm969, %v960, 0
        %vm994 = vcmask 1043456
        %v996 = vsel %vm994, %v961, 0
        %998 = vmatprep.subr.mxu0 0.0
        %999 = vmatpush1.msra.mxu0 0.0
        %1000 = vmatprep.subr.mxu0 0.0
        %1001 = vmatpush1.msra.mxu0 0.0
        %1002 = vmatprep.subr.mxu0 0.0
        %1003 = vmatpush1.msra.mxu0 0.0
        %1004 = vmatprep.subr.mxu0 0.0
        %1005 = vmatpush1.msra.mxu0 0.0
        %1006 = vmatprep.subr.mxu0 0.0
        %1007 = vmatpush1.msra.mxu0 0.0
        %1008 = vmatprep.subr.mxu0 0.0
        %1009 = vmatpush1.msra.mxu0 0.0
        %1010 = vmatprep.subr.mxu0 0.0
        %1011 = vmatpush1.msra.mxu0 0.0
        %1012 = vmatprep.subr.mxu0 0.0
        %1013 = vmatpush1.msra.mxu0 0.0
        %1014 = vmatprep.subr.mxu0 0.0
        %1015 = vmatpush1.msra.mxu0 0.0
        %1016 = vmatprep.subr.mxu0 0.0
        %1017 = vmatpush1.msra.mxu0 0.0
        %1018 = vmatprep.subr.mxu0 0.0
        %1019 = vmatpush1.msra.mxu0 0.0
        %1020 = vmatprep.subr.mxu0 0.0
        %1021 = vmatpush1.msra.mxu0 0.0
        %1022 = vmatprep.subr.mxu0 0.0
        %1023 = vmatpush1.msra.mxu0 0.0
        %1024 = vmatprep.subr.mxu0 0.0
        %1025 = vmatpush1.msra.mxu0 0.0
        %1026 = vmatprep.subr.mxu0 0.0
        %1027 = vmatpush1.msra.mxu0 0.0
        %1028 = vmatprep.subr.mxu0 0.0
        %1029 = vmatpush1.msra.mxu0 %v996
        %1030 = vmatprep.subr.mxu0 0.0
        %1031 = vmatpush2.msra.mxu0 0.0
        %1032 = vmatprep.subr.mxu0 0.0
        %1033 = vmatpush2.msra.mxu0 0.0
        %1034 = vmatprep.subr.mxu0 0.0
        %1035 = vmatpush2.msra.mxu0 0.0
        %1036 = vmatprep.subr.mxu0 0.0
        %1037 = vmatpush2.msra.mxu0 0.0
        %1038 = vmatprep.subr.mxu0 0.0
        %1039 = vmatpush2.msra.mxu0 0.0
        %1040 = vmatprep.subr.mxu0 0.0
        %1041 = vmatpush2.msra.mxu0 0.0
        %1042 = vmatprep.subr.mxu0 0.0
        %1043 = vmatpush2.msra.mxu0 0.0
        %1044 = vmatprep.subr.mxu0 0.0
        %1045 = vmatpush2.msra.mxu0 0.0
        %1046 = vmatprep.subr.mxu0 0.0
        %1047 = vmatpush2.msra.mxu0 0.0
        %1048 = vmatprep.subr.mxu0 0.0
        %1049 = vmatpush2.msra.mxu0 0.0
        %1050 = vmatprep.subr.mxu0 0.0
        %1051 = vmatpush2.msra.mxu0 0.0
        %1052 = vmatprep.subr.mxu0 0.0
        %1053 = vmatpush2.msra.mxu0 0.0
        %1054 = vmatprep.subr.mxu0 0.0
        %1055 = vmatpush2.msra.mxu0 0.0
        %1056 = vmatprep.subr.mxu0 0.0
        %1057 = vmatpush2.msra.mxu0 0.0
        %1058 = vmatprep.subr.mxu0 0.0
        %1059 = vmatpush2.msra.mxu0 0.0
        %1060 = vmatprep.subr.mxu0 0.0
        %1061 = vmatpush2.msra.mxu0 0.0
        %1062 = vmatprep.mubr.f32.mxu0 0.0
        %1063 = vmatmul.mubr.f32.gmra.mxu0 %v971
        %v1064 = vpop.f32.mrf.mxu0
        %v1065 = vadd.f32 %v967, %v1064
        %v1066 = vpop.f32.mrf.mxu0
        %1067 = vmatprep.mubr.f32.mxu0 0.0
        %1068 = vmatmul.mubr.f32.gmra.mxu0 %v974
        %v1069 = vpop.f32.mrf.mxu0
        %v1070 = vadd.f32 %v967, %v1069
        %v1071 = vpop.f32.mrf.mxu0
        %1072 = vmatprep.mubr.f32.mxu0 0.0
        %1073 = vmatmul.mubr.f32.gmra.mxu0 %v977
        %v1074 = vpop.f32.mrf.mxu0
        %v1075 = vadd.f32 %v967, %v1074
        %v1076 = vpop.f32.mrf.mxu0
        %1077 = vmatprep.mubr.f32.mxu0 0.0
        %1078 = vmatmul.mubr.f32.gmra.mxu0 %v980
        %v1079 = vpop.f32.mrf.mxu0
        %v1080 = vadd.f32 %v967, %v1079
        %v1081 = vpop.f32.mrf.mxu0
        %1082 = vmatprep.mubr.f32.mxu0 0.0
        %1083 = vmatmul.mubr.f32.gmra.mxu0 %v983
        %v1084 = vpop.f32.mrf.mxu0
        %v1085 = vadd.f32 %v967, %v1084
        %v1086 = vpop.f32.mrf.mxu0
        %1087 = vmatprep.mubr.f32.mxu0 0.0
        %1088 = vmatmul.mubr.f32.gmra.mxu0 %v986
        %v1089 = vpop.f32.mrf.mxu0
        %v1090 = vadd.f32 %v967, %v1089
        %v1091 = vpop.f32.mrf.mxu0
        %1092 = vmatprep.mubr.f32.mxu0 0.0
        %1093 = vmatmul.mubr.f32.gmra.mxu0 %v989
        %v1094 = vpop.f32.mrf.mxu0
        %v1095 = vadd.f32 %v967, %v1094
        %v1096 = vpop.f32.mrf.mxu0
        %1097 = vmatprep.mubr.f32.mxu0 0.0
        %1098 = vmatmul.mubr.f32.gmra.mxu0 %v992
        %v1099 = vpop.f32.mrf.mxu0
        %v1100 = vadd.f32 %v967, %v1099
        %v1101 = vpop.f32.mrf.mxu0
        %1102 = vdwg.mxu0
        %vm1103 = vcmask 261120
        %1104 = vst.msk [vmem:[#allocation2 + $0x1] sm:$0xff] %vm1103, %v1065
        %1105 = vst.msk [vmem:[#allocation2 + $0x11] sm:$0xff] %vm1103, %v1065
        %1106 = vst.msk [vmem:[#allocation2 + $0x21] sm:$0xff] %vm1103, %v1070
        %1107 = vst.msk [vmem:[#allocation2 + $0x31] sm:$0xff] %vm1103, %v1075
        %1108 = vst.msk [vmem:[#allocation2 + $0x41] sm:$0xff] %vm1103, %v1080
        %1109 = vst.msk [vmem:[#allocation2 + $0x51] sm:$0xff] %vm1103, %v1080
        %1110 = vst.msk [vmem:[#allocation2 + $0x61] sm:$0xff] %vm1103, %v1085
        %1111 = vst.msk [vmem:[#allocation2 + $0x71] sm:$0xff] %vm1103, %v1085
        %1112 = vst.msk [vmem:[#allocation2 + $0x81] sm:$0xff] %vm1103, %v1090
        %1113 = vst.msk [vmem:[#allocation2 + $0x91] sm:$0xff] %vm1103, %v1095
        %1114 = vst.msk [vmem:[#allocation2 + $0xa1] sm:$0xff] %vm1103, %v1100
        %1115 = vst.msk [vmem:[#allocation2 + $0xb1] sm:$0xff] %vm1103, %v1100
        %vm1116 = vcmask 253952
        %1117 = vst.msk [vmem:[#allocation2] sm:$0x1] %vm1116, %v1065
        %1118 = vst.msk [vmem:[#allocation2 + $0x10] sm:$0x1] %vm1116, %v1065
        %1119 = vst.msk [vmem:[#allocation2 + $0x20] sm:$0x1] %vm1116, %v1070
        %1120 = vst.msk [vmem:[#allocation2 + $0x30] sm:$0x1] %vm1116, %v1075
        %1121 = vst.msk [vmem:[#allocation2 + $0x40] sm:$0x1] %vm1116, %v1080
        %1122 = vst.msk [vmem:[#allocation2 + $0x50] sm:$0x1] %vm1116, %v1080
        %1123 = vst.msk [vmem:[#allocation2 + $0x60] sm:$0x1] %vm1116, %v1085
        %1124 = vst.msk [vmem:[#allocation2 + $0x70] sm:$0x1] %vm1116, %v1085
        %1125 = vst.msk [vmem:[#allocation2 + $0x80] sm:$0x1] %vm1116, %v1090
        %1126 = vst.msk [vmem:[#allocation2 + $0x90] sm:$0x1] %vm1116, %v1095
        %1127 = vst.msk [vmem:[#allocation2 + $0xa0] sm:$0x1] %vm1116, %v1100
        %1128 = vst.msk [vmem:[#allocation2 + $0xb0] sm:$0x1] %vm1116, %v1100
        %vm1129 = vcmask 261127
        %1130 = vst.msk [vmem:[#allocation2 + $0x2] sm:$0x80] %vm1129, %v1065
        %1131 = vst.msk [vmem:[#allocation2 + $0x12] sm:$0x80] %vm1129, %v1065
        %1132 = vst.msk [vmem:[#allocation2 + $0x22] sm:$0x80] %vm1129, %v1070
        %1133 = vst.msk [vmem:[#allocation2 + $0x32] sm:$0x80] %vm1129, %v1075
        %1134 = vst.msk [vmem:[#allocation2 + $0x42] sm:$0x80] %vm1129, %v1080
        %1135 = vst.msk [vmem:[#allocation2 + $0x52] sm:$0x80] %vm1129, %v1080
        %1136 = vst.msk [vmem:[#allocation2 + $0x62] sm:$0x80] %vm1129, %v1085
        %1137 = vst.msk [vmem:[#allocation2 + $0x72] sm:$0x80] %vm1129, %v1085
        %1138 = vst.msk [vmem:[#allocation2 + $0x82] sm:$0x80] %vm1129, %v1090
        %1139 = vst.msk [vmem:[#allocation2 + $0x92] sm:$0x80] %vm1129, %v1095
        %1140 = vst.msk [vmem:[#allocation2 + $0xa2] sm:$0x80] %vm1129, %v1100
        %1141 = vst.msk [vmem:[#allocation2 + $0xb2] sm:$0x80] %vm1129, %v1100
        %v1142 = vld [vmem:[#allocation2] sm:$0xff]
        %v1143 = vld [vmem:[#allocation2 + $0x10] sm:$0xff]
        %v1144 = vld [vmem:[#allocation2 + $0x20] sm:$0xff]
        %v1145 = vld [vmem:[#allocation2 + $0x30] sm:$0xff]
        %v1146 = vld [vmem:[#allocation2 + $0x60] sm:$0xff]
        %v1147 = vld [vmem:[#allocation2 + $0x70] sm:$0xff]
        %v1148 = vld [vmem:[#allocation2 + $0x80] sm:$0xff]
        %v1149 = vld [vmem:[#allocation2 + $0x90] sm:$0xff]
        %v1150 = vld [vmem:[%s752] sm:$0xff]
        %v1151 = vld [vmem:[%s752 + $0x8] sm:$0xff]
        %v1152 = vld [vmem:[%s752 + $0x10] sm:$0xff]
        %v1153 = vld [vmem:[%s752 + $0x18] sm:$0xff]
        %v1154 = vld [vmem:[#allocation2 + $0x1] sm:$0xff]
        %v1155 = vld [vmem:[#allocation2 + $0x11] sm:$0xff]
        %v1156 = vld [vmem:[#allocation2 + $0x21] sm:$0xff]
        %v1157 = vld [vmem:[#allocation2 + $0x31] sm:$0xff]
        %v1158 = vld [vmem:[#allocation2 + $0x61] sm:$0xff]
        %v1159 = vld [vmem:[#allocation2 + $0x71] sm:$0xff]
        %v1160 = vld [vmem:[#allocation2 + $0x81] sm:$0xff]
        %v1161 = vld [vmem:[#allocation2 + $0x91] sm:$0xff]
        %s1162 = scalar_lea.vmem %s752, 32 [#allocation7]
        %v1163 = vld [vmem:[%s1162] sm:$0xff]
        %v1164 = vld [vmem:[%s1162 + $0x8] sm:$0xff]
        %v1165 = vld [vmem:[%s1162 + $0x10] sm:$0xff]
        %v1166 = vld [vmem:[%s1162 + $0x18] sm:$0xff]
        %v1168 = vsel %vm1103, %v1154, 0
        %v1171 = vsel %vm1103, %v1155, 0
        %v1174 = vsel %vm1103, %v1156, 0
        %v1177 = vsel %vm1103, %v1157, 0
        %v1180 = vsel %vm1103, %v1158, 0
        %v1183 = vsel %vm1103, %v1159, 0
        %v1186 = vsel %vm1103, %v1160, 0
        %v1189 = vsel %vm1103, %v1161, 0
        %1191 = vmatprep.subr.mxu0 0.0
        %1192 = vmatpush1.msra.mxu0 0.0
        %1193 = vmatprep.subr.mxu0 0.0
        %1194 = vmatpush1.msra.mxu0 0.0
        %1195 = vmatprep.subr.mxu0 0.0
        %1196 = vmatpush1.msra.mxu0 0.0
        %1197 = vmatprep.subr.mxu0 0.0
        %1198 = vmatpush1.msra.mxu0 0.0
        %1199 = vmatprep.subr.mxu0 0.0
        %1200 = vmatpush1.msra.mxu0 0.0
        %1201 = vmatprep.subr.mxu0 0.0
        %1202 = vmatpush1.msra.mxu0 0.0
        %1203 = vmatprep.subr.mxu0 0.0
        %1204 = vmatpush1.msra.mxu0 0.0
        %1205 = vmatprep.subr.mxu0 0.0
        %1206 = vmatpush1.msra.mxu0 0.0
        %1207 = vmatprep.subr.mxu0 0.0
        %1208 = vmatpush1.msra.mxu0 0.0
        %1209 = vmatprep.subr.mxu0 0.0
        %1210 = vmatpush1.msra.mxu0 0.0
        %1211 = vmatprep.subr.mxu0 0.0
        %1212 = vmatpush1.msra.mxu0 0.0
        %1213 = vmatprep.subr.mxu0 0.0
        %1214 = vmatpush1.msra.mxu0 0.0
        %1215 = vmatprep.subr.mxu0 0.0
        %1216 = vmatpush1.msra.mxu0 %v1166
        %1217 = vmatprep.subr.mxu0 0.0
        %1218 = vmatpush1.msra.mxu0 %v1165
        %1219 = vmatprep.subr.mxu0 0.0
        %1220 = vmatpush1.msra.mxu0 %v1164
        %1221 = vmatprep.subr.mxu0 0.0
        %1222 = vmatpush1.msra.mxu0 %v1163
        %1223 = vmatprep.subr.mxu0 0.0
        %1224 = vmatpush2.msra.mxu0 0.0
        %1225 = vmatprep.subr.mxu0 0.0
        %1226 = vmatpush2.msra.mxu0 0.0
        %1227 = vmatprep.subr.mxu0 0.0
        %1228 = vmatpush2.msra.mxu0 0.0
        %1229 = vmatprep.subr.mxu0 0.0
        %1230 = vmatpush2.msra.mxu0 0.0
        %1231 = vmatprep.subr.mxu0 0.0
        %1232 = vmatpush2.msra.mxu0 0.0
        %1233 = vmatprep.subr.mxu0 0.0
        %1234 = vmatpush2.msra.mxu0 0.0
        %1235 = vmatprep.subr.mxu0 0.0
        %1236 = vmatpush2.msra.mxu0 0.0
        %1237 = vmatprep.subr.mxu0 0.0
        %1238 = vmatpush2.msra.mxu0 0.0
        %1239 = vmatprep.subr.mxu0 0.0
        %1240 = vmatpush2.msra.mxu0 0.0
        %1241 = vmatprep.subr.mxu0 0.0
        %1242 = vmatpush2.msra.mxu0 0.0
        %1243 = vmatprep.subr.mxu0 0.0
        %1244 = vmatpush2.msra.mxu0 0.0
        %1245 = vmatprep.subr.mxu0 0.0
        %1246 = vmatpush2.msra.mxu0 0.0
        %1247 = vmatprep.subr.mxu0 0.0
        %1248 = vmatpush2.msra.mxu0 0.0
        %1249 = vmatprep.subr.mxu0 0.0
        %1250 = vmatpush2.msra.mxu0 0.0
        %1251 = vmatprep.subr.mxu0 0.0
        %1252 = vmatpush2.msra.mxu0 0.0
        %1253 = vmatprep.subr.mxu0 0.0
        %1254 = vmatpush2.msra.mxu0 0.0
        %1255 = vmatprep.mubr.f32.mxu0 0.0
        %1256 = vmatmul.mubr.f32.gmra.mxu0 %v1168
        %v1257 = vpop.f32.mrf.mxu0
        %v1258 = vadd.f32 0.0, %v1257
        %v1259 = vpop.f32.mrf.mxu0
        %1260 = vmatprep.mubr.f32.mxu0 0.0
        %1261 = vmatmul.mubr.f32.gmra.mxu0 %v1171
        %v1262 = vpop.f32.mrf.mxu0
        %v1263 = vadd.f32 0.0, %v1262
        %v1264 = vpop.f32.mrf.mxu0
        %1265 = vmatprep.mubr.f32.mxu0 0.0
        %1266 = vmatmul.mubr.f32.gmra.mxu0 %v1174
        %v1267 = vpop.f32.mrf.mxu0
        %v1268 = vadd.f32 0.0, %v1267
        %v1269 = vpop.f32.mrf.mxu0
        %1270 = vmatprep.mubr.f32.mxu0 0.0
        %1271 = vmatmul.mubr.f32.gmra.mxu0 %v1177
        %v1272 = vpop.f32.mrf.mxu0
        %v1273 = vadd.f32 0.0, %v1272
        %v1274 = vpop.f32.mrf.mxu0
        %1275 = vmatprep.mubr.f32.mxu0 0.0
        %1276 = vmatmul.mubr.f32.gmra.mxu0 %v1180
        %v1277 = vpop.f32.mrf.mxu0
        %v1278 = vadd.f32 0.0, %v1277
        %v1279 = vpop.f32.mrf.mxu0
        %1280 = vmatprep.mubr.f32.mxu0 0.0
        %1281 = vmatmul.mubr.f32.gmra.mxu0 %v1183
        %v1282 = vpop.f32.mrf.mxu0
        %v1283 = vadd.f32 0.0, %v1282
        %v1284 = vpop.f32.mrf.mxu0
        %1285 = vmatprep.mubr.f32.mxu0 0.0
        %1286 = vmatmul.mubr.f32.gmra.mxu0 %v1186
        %v1287 = vpop.f32.mrf.mxu0
        %v1288 = vadd.f32 0.0, %v1287
        %v1289 = vpop.f32.mrf.mxu0
        %1290 = vmatprep.mubr.f32.mxu0 0.0
        %1291 = vmatmul.mubr.f32.gmra.mxu0 %v1189
        %v1292 = vpop.f32.mrf.mxu0
        %v1293 = vadd.f32 0.0, %v1292
        %v1294 = vpop.f32.mrf.mxu0
        %1295 = vdwg.mxu0
        %v1297 = vsel %vm1103, %v1142, 0
        %v1300 = vsel %vm1103, %v1143, 0
        %v1303 = vsel %vm1103, %v1144, 0
        %v1306 = vsel %vm1103, %v1145, 0
        %v1309 = vsel %vm1103, %v1146, 0
        %v1312 = vsel %vm1103, %v1147, 0
        %v1315 = vsel %vm1103, %v1148, 0
        %v1318 = vsel %vm1103, %v1149, 0
        %1320 = vmatprep.subr.mxu0 0.0
        %1321 = vmatpush1.msra.mxu0 0.0
        %1322 = vmatprep.subr.mxu0 0.0
        %1323 = vmatpush1.msra.mxu0 0.0
        %1324 = vmatprep.subr.mxu0 0.0
        %1325 = vmatpush1.msra.mxu0 0.0
        %1326 = vmatprep.subr.mxu0 0.0
        %1327 = vmatpush1.msra.mxu0 0.0
        %1328 = vmatprep.subr.mxu0 0.0
        %1329 = vmatpush1.msra.mxu0 0.0
        %1330 = vmatprep.subr.mxu0 0.0
        %1331 = vmatpush1.msra.mxu0 0.0
        %1332 = vmatprep.subr.mxu0 0.0
        %1333 = vmatpush1.msra.mxu0 0.0
        %1334 = vmatprep.subr.mxu0 0.0
        %1335 = vmatpush1.msra.mxu0 0.0
        %1336 = vmatprep.subr.mxu0 0.0
        %1337 = vmatpush1.msra.mxu0 0.0
        %1338 = vmatprep.subr.mxu0 0.0
        %1339 = vmatpush1.msra.mxu0 0.0
        %1340 = vmatprep.subr.mxu0 0.0
        %1341 = vmatpush1.msra.mxu0 0.0
        %1342 = vmatprep.subr.mxu0 0.0
        %1343 = vmatpush1.msra.mxu0 0.0
        %1344 = vmatprep.subr.mxu0 0.0
        %1345 = vmatpush1.msra.mxu0 %v1153
        %1346 = vmatprep.subr.mxu0 0.0
        %1347 = vmatpush1.msra.mxu0 %v1152
        %1348 = vmatprep.subr.mxu0 0.0
        %1349 = vmatpush1.msra.mxu0 %v1151
        %1350 = vmatprep.subr.mxu0 0.0
        %1351 = vmatpush1.msra.mxu0 %v1150
        %1352 = vmatprep.subr.mxu0 0.0
        %1353 = vmatpush2.msra.mxu0 0.0
        %1354 = vmatprep.subr.mxu0 0.0
        %1355 = vmatpush2.msra.mxu0 0.0
        %1356 = vmatprep.subr.mxu0 0.0
        %1357 = vmatpush2.msra.mxu0 0.0
        %1358 = vmatprep.subr.mxu0 0.0
        %1359 = vmatpush2.msra.mxu0 0.0
        %1360 = vmatprep.subr.mxu0 0.0
        %1361 = vmatpush2.msra.mxu0 0.0
        %1362 = vmatprep.subr.mxu0 0.0
        %1363 = vmatpush2.msra.mxu0 0.0
        %1364 = vmatprep.subr.mxu0 0.0
        %1365 = vmatpush2.msra.mxu0 0.0
        %1366 = vmatprep.subr.mxu0 0.0
        %1367 = vmatpush2.msra.mxu0 0.0
        %1368 = vmatprep.subr.mxu0 0.0
        %1369 = vmatpush2.msra.mxu0 0.0
        %1370 = vmatprep.subr.mxu0 0.0
        %1371 = vmatpush2.msra.mxu0 0.0
        %1372 = vmatprep.subr.mxu0 0.0
        %1373 = vmatpush2.msra.mxu0 0.0
        %1374 = vmatprep.subr.mxu0 0.0
        %1375 = vmatpush2.msra.mxu0 0.0
        %1376 = vmatprep.subr.mxu0 0.0
        %1377 = vmatpush2.msra.mxu0 0.0
        %1378 = vmatprep.subr.mxu0 0.0
        %1379 = vmatpush2.msra.mxu0 0.0
        %1380 = vmatprep.subr.mxu0 0.0
        %1381 = vmatpush2.msra.mxu0 0.0
        %1382 = vmatprep.subr.mxu0 0.0
        %1383 = vmatpush2.msra.mxu0 0.0
        %1384 = vmatprep.mubr.f32.mxu0 0.0
        %1385 = vmatmul.mubr.f32.gmra.mxu0 %v1297
        %v1386 = vpop.f32.mrf.mxu0
        %v1387 = vadd.f32 %v1258, %v1386
        %v1388 = vpop.f32.mrf.mxu0
        %1389 = vmatprep.mubr.f32.mxu0 0.0
        %1390 = vmatmul.mubr.f32.gmra.mxu0 %v1300
        %v1391 = vpop.f32.mrf.mxu0
        %v1392 = vadd.f32 %v1263, %v1391
        %v1393 = vpop.f32.mrf.mxu0
        %1394 = vmatprep.mubr.f32.mxu0 0.0
        %1395 = vmatmul.mubr.f32.gmra.mxu0 %v1303
        %v1396 = vpop.f32.mrf.mxu0
        %v1397 = vadd.f32 %v1268, %v1396
        %v1398 = vpop.f32.mrf.mxu0
        %1399 = vmatprep.mubr.f32.mxu0 0.0
        %1400 = vmatmul.mubr.f32.gmra.mxu0 %v1306
        %v1401 = vpop.f32.mrf.mxu0
        %v1402 = vadd.f32 %v1273, %v1401
        %v1403 = vpop.f32.mrf.mxu0
        %1404 = vmatprep.mubr.f32.mxu0 0.0
        %1405 = vmatmul.mubr.f32.gmra.mxu0 %v1309
        %v1406 = vpop.f32.mrf.mxu0
        %v1407 = vadd.f32 %v1278, %v1406
        %v1408 = vpop.f32.mrf.mxu0
        %1409 = vmatprep.mubr.f32.mxu0 0.0
        %1410 = vmatmul.mubr.f32.gmra.mxu0 %v1312
        %v1411 = vpop.f32.mrf.mxu0
        %v1412 = vadd.f32 %v1283, %v1411
        %v1413 = vpop.f32.mrf.mxu0
        %1414 = vmatprep.mubr.f32.mxu0 0.0
        %1415 = vmatmul.mubr.f32.gmra.mxu0 %v1315
        %v1416 = vpop.f32.mrf.mxu0
        %v1417 = vadd.f32 %v1288, %v1416
        %v1418 = vpop.f32.mrf.mxu0
        %1419 = vmatprep.mubr.f32.mxu0 0.0
        %1420 = vmatmul.mubr.f32.gmra.mxu0 %v1318
        %v1421 = vpop.f32.mrf.mxu0
        %v1422 = vadd.f32 %v1293, %v1421
        %v1423 = vpop.f32.mrf.mxu0
        %1424 = vdwg.mxu0
        %v1425 = vld [vmem:[#allocation2 + $0x2] sm:$0xff]
        %v1426 = vld [vmem:[#allocation2 + $0x12] sm:$0xff]
        %v1427 = vld [vmem:[#allocation2 + $0x22] sm:$0xff]
        %v1428 = vld [vmem:[#allocation2 + $0x32] sm:$0xff]
        %v1429 = vld [vmem:[#allocation2 + $0x62] sm:$0xff]
        %v1430 = vld [vmem:[#allocation2 + $0x72] sm:$0xff]
        %v1431 = vld [vmem:[#allocation2 + $0x82] sm:$0xff]
        %v1432 = vld [vmem:[#allocation2 + $0x92] sm:$0xff]
        %s1433 = scalar_lea.vmem %s752, 64 [#allocation7]
        %v1434 = vld [vmem:[%s1433] sm:$0xff]
        %v1435 = vld [vmem:[%s1433 + $0x8] sm:$0xff]
        %v1436 = vld [vmem:[%s1433 + $0x10] sm:$0xff]
        %v1437 = vld [vmem:[%s1433 + $0x18] sm:$0xff]
        %v1439 = vsel %vm1103, %v1425, 0
        %v1442 = vsel %vm1103, %v1426, 0
        %v1445 = vsel %vm1103, %v1427, 0
        %v1448 = vsel %vm1103, %v1428, 0
        %v1451 = vsel %vm1103, %v1429, 0
        %v1454 = vsel %vm1103, %v1430, 0
        %v1457 = vsel %vm1103, %v1431, 0
        %v1460 = vsel %vm1103, %v1432, 0
        %1462 = vmatprep.subr.mxu0 0.0
        %1463 = vmatpush1.msra.mxu0 0.0
        %1464 = vmatprep.subr.mxu0 0.0
        %1465 = vmatpush1.msra.mxu0 0.0
        %1466 = vmatprep.subr.mxu0 0.0
        %1467 = vmatpush1.msra.mxu0 0.0
        %1468 = vmatprep.subr.mxu0 0.0
        %1469 = vmatpush1.msra.mxu0 0.0
        %1470 = vmatprep.subr.mxu0 0.0
        %1471 = vmatpush1.msra.mxu0 0.0
        %1472 = vmatprep.subr.mxu0 0.0
        %1473 = vmatpush1.msra.mxu0 0.0
        %1474 = vmatprep.subr.mxu0 0.0
        %1475 = vmatpush1.msra.mxu0 0.0
        %1476 = vmatprep.subr.mxu0 0.0
        %1477 = vmatpush1.msra.mxu0 0.0
        %1478 = vmatprep.subr.mxu0 0.0
        %1479 = vmatpush1.msra.mxu0 0.0
        %1480 = vmatprep.subr.mxu0 0.0
        %1481 = vmatpush1.msra.mxu0 0.0
        %1482 = vmatprep.subr.mxu0 0.0
        %1483 = vmatpush1.msra.mxu0 0.0
        %1484 = vmatprep.subr.mxu0 0.0
        %1485 = vmatpush1.msra.mxu0 0.0
        %1486 = vmatprep.subr.mxu0 0.0
        %1487 = vmatpush1.msra.mxu0 %v1437
        %1488 = vmatprep.subr.mxu0 0.0
        %1489 = vmatpush1.msra.mxu0 %v1436
        %1490 = vmatprep.subr.mxu0 0.0
        %1491 = vmatpush1.msra.mxu0 %v1435
        %1492 = vmatprep.subr.mxu0 0.0
        %1493 = vmatpush1.msra.mxu0 %v1434
        %1494 = vmatprep.subr.mxu0 0.0
        %1495 = vmatpush2.msra.mxu0 0.0
        %1496 = vmatprep.subr.mxu0 0.0
        %1497 = vmatpush2.msra.mxu0 0.0
        %1498 = vmatprep.subr.mxu0 0.0
        %1499 = vmatpush2.msra.mxu0 0.0
        %1500 = vmatprep.subr.mxu0 0.0
        %1501 = vmatpush2.msra.mxu0 0.0
        %1502 = vmatprep.subr.mxu0 0.0
        %1503 = vmatpush2.msra.mxu0 0.0
        %1504 = vmatprep.subr.mxu0 0.0
        %1505 = vmatpush2.msra.mxu0 0.0
        %1506 = vmatprep.subr.mxu0 0.0
        %1507 = vmatpush2.msra.mxu0 0.0
        %1508 = vmatprep.subr.mxu0 0.0
        %1509 = vmatpush2.msra.mxu0 0.0
        %1510 = vmatprep.subr.mxu0 0.0
        %1511 = vmatpush2.msra.mxu0 0.0
        %1512 = vmatprep.subr.mxu0 0.0
        %1513 = vmatpush2.msra.mxu0 0.0
        %1514 = vmatprep.subr.mxu0 0.0
        %1515 = vmatpush2.msra.mxu0 0.0
        %1516 = vmatprep.subr.mxu0 0.0
        %1517 = vmatpush2.msra.mxu0 0.0
        %1518 = vmatprep.subr.mxu0 0.0
        %1519 = vmatpush2.msra.mxu0 0.0
        %1520 = vmatprep.subr.mxu0 0.0
        %1521 = vmatpush2.msra.mxu0 0.0
        %1522 = vmatprep.subr.mxu0 0.0
        %1523 = vmatpush2.msra.mxu0 0.0
        %1524 = vmatprep.subr.mxu0 0.0
        %1525 = vmatpush2.msra.mxu0 0.0
        %1526 = vmatprep.mubr.f32.mxu0 0.0
        %1527 = vmatmul.mubr.f32.gmra.mxu0 %v1439
        %v1528 = vpop.f32.mrf.mxu0
        %v1529 = vadd.f32 0.0, %v1528
        %v1530 = vpop.f32.mrf.mxu0
        %1531 = vmatprep.mubr.f32.mxu0 0.0
        %1532 = vmatmul.mubr.f32.gmra.mxu0 %v1442
        %v1533 = vpop.f32.mrf.mxu0
        %v1534 = vadd.f32 0.0, %v1533
        %v1535 = vpop.f32.mrf.mxu0
        %1536 = vmatprep.mubr.f32.mxu0 0.0
        %1537 = vmatmul.mubr.f32.gmra.mxu0 %v1445
        %v1538 = vpop.f32.mrf.mxu0
        %v1539 = vadd.f32 0.0, %v1538
        %v1540 = vpop.f32.mrf.mxu0
        %1541 = vmatprep.mubr.f32.mxu0 0.0
        %1542 = vmatmul.mubr.f32.gmra.mxu0 %v1448
        %v1543 = vpop.f32.mrf.mxu0
        %v1544 = vadd.f32 0.0, %v1543
        %v1545 = vpop.f32.mrf.mxu0
        %1546 = vmatprep.mubr.f32.mxu0 0.0
        %1547 = vmatmul.mubr.f32.gmra.mxu0 %v1451
        %v1548 = vpop.f32.mrf.mxu0
        %v1549 = vadd.f32 0.0, %v1548
        %v1550 = vpop.f32.mrf.mxu0
        %1551 = vmatprep.mubr.f32.mxu0 0.0
        %1552 = vmatmul.mubr.f32.gmra.mxu0 %v1454
        %v1553 = vpop.f32.mrf.mxu0
        %v1554 = vadd.f32 0.0, %v1553
        %v1555 = vpop.f32.mrf.mxu0
        %1556 = vmatprep.mubr.f32.mxu0 0.0
        %1557 = vmatmul.mubr.f32.gmra.mxu0 %v1457
        %v1558 = vpop.f32.mrf.mxu0
        %v1559 = vadd.f32 0.0, %v1558
        %v1560 = vpop.f32.mrf.mxu0
        %1561 = vmatprep.mubr.f32.mxu0 0.0
        %1562 = vmatmul.mubr.f32.gmra.mxu0 %v1460
        %v1563 = vpop.f32.mrf.mxu0
        %v1564 = vadd.f32 0.0, %v1563
        %v1565 = vpop.f32.mrf.mxu0
        %1566 = vdwg.mxu0
        %v1567 = vadd.f32 %v1387, %v1529
        %v1568 = vadd.f32 %v1392, %v1534
        %v1569 = vadd.f32 %v1397, %v1539
        %v1570 = vadd.f32 %v1402, %v1544
        %v1571 = vadd.f32 %v1407, %v1549
        %v1572 = vadd.f32 %v1412, %v1554
        %v1573 = vadd.f32 %v1417, %v1559
        %v1574 = vadd.f32 %v1422, %v1564
        %s1575 = scalar_lea.vmem [#allocation2], 16
        %v1576 = vld [vmem:[%s1575] sm:$0xff]
        %v1577 = vld [vmem:[%s1575 + $0x10] sm:$0xff]
        %v1578 = vld [vmem:[%s1575 + $0x20] sm:$0xff]
        %v1579 = vld [vmem:[%s1575 + $0x30] sm:$0xff]
        %v1580 = vld [vmem:[%s1575 + $0x60] sm:$0xff]
        %v1581 = vld [vmem:[%s1575 + $0x70] sm:$0xff]
        %v1582 = vld [vmem:[%s1575 + $0x80] sm:$0xff]
        %v1583 = vld [vmem:[%s1575 + $0x90] sm:$0xff]
        %s1584 = scalar_lea.vmem %s752, 96 [#allocation7]
        %v1585 = vld [vmem:[%s1584] sm:$0xff]
        %v1586 = vld [vmem:[%s1584 + $0x8] sm:$0xff]
        %v1587 = vld [vmem:[%s1584 + $0x10] sm:$0xff]
        %v1588 = vld [vmem:[%s1584 + $0x18] sm:$0xff]
        %v1590 = vsel %vm1103, %v1576, 0
        %v1593 = vsel %vm1103, %v1577, 0
        %v1596 = vsel %vm1103, %v1578, 0
        %v1599 = vsel %vm1103, %v1579, 0
        %v1602 = vsel %vm1103, %v1580, 0
        %v1605 = vsel %vm1103, %v1581, 0
        %v1608 = vsel %vm1103, %v1582, 0
        %v1611 = vsel %vm1103, %v1583, 0
        %1613 = vmatprep.subr.mxu0 0.0
        %1614 = vmatpush1.msra.mxu0 0.0
        %1615 = vmatprep.subr.mxu0 0.0
        %1616 = vmatpush1.msra.mxu0 0.0
        %1617 = vmatprep.subr.mxu0 0.0
        %1618 = vmatpush1.msra.mxu0 0.0
        %1619 = vmatprep.subr.mxu0 0.0
        %1620 = vmatpush1.msra.mxu0 0.0
        %1621 = vmatprep.subr.mxu0 0.0
        %1622 = vmatpush1.msra.mxu0 0.0
        %1623 = vmatprep.subr.mxu0 0.0
        %1624 = vmatpush1.msra.mxu0 0.0
        %1625 = vmatprep.subr.mxu0 0.0
        %1626 = vmatpush1.msra.mxu0 0.0
        %1627 = vmatprep.subr.mxu0 0.0
        %1628 = vmatpush1.msra.mxu0 0.0
        %1629 = vmatprep.subr.mxu0 0.0
        %1630 = vmatpush1.msra.mxu0 0.0
        %1631 = vmatprep.subr.mxu0 0.0
        %1632 = vmatpush1.msra.mxu0 0.0
        %1633 = vmatprep.subr.mxu0 0.0
        %1634 = vmatpush1.msra.mxu0 0.0
        %1635 = vmatprep.subr.mxu0 0.0
        %1636 = vmatpush1.msra.mxu0 0.0
        %1637 = vmatprep.subr.mxu0 0.0
        %1638 = vmatpush1.msra.mxu0 %v1588
        %1639 = vmatprep.subr.mxu0 0.0
        %1640 = vmatpush1.msra.mxu0 %v1587
        %1641 = vmatprep.subr.mxu0 0.0
        %1642 = vmatpush1.msra.mxu0 %v1586
        %1643 = vmatprep.subr.mxu0 0.0
        %1644 = vmatpush1.msra.mxu0 %v1585
        %1645 = vmatprep.subr.mxu0 0.0
        %1646 = vmatpush2.msra.mxu0 0.0
        %1647 = vmatprep.subr.mxu0 0.0
        %1648 = vmatpush2.msra.mxu0 0.0
        %1649 = vmatprep.subr.mxu0 0.0
        %1650 = vmatpush2.msra.mxu0 0.0
        %1651 = vmatprep.subr.mxu0 0.0
        %1652 = vmatpush2.msra.mxu0 0.0
        %1653 = vmatprep.subr.mxu0 0.0
        %1654 = vmatpush2.msra.mxu0 0.0
        %1655 = vmatprep.subr.mxu0 0.0
        %1656 = vmatpush2.msra.mxu0 0.0
        %1657 = vmatprep.subr.mxu0 0.0
        %1658 = vmatpush2.msra.mxu0 0.0
        %1659 = vmatprep.subr.mxu0 0.0
        %1660 = vmatpush2.msra.mxu0 0.0
        %1661 = vmatprep.subr.mxu0 0.0
        %1662 = vmatpush2.msra.mxu0 0.0
        %1663 = vmatprep.subr.mxu0 0.0
        %1664 = vmatpush2.msra.mxu0 0.0
        %1665 = vmatprep.subr.mxu0 0.0
        %1666 = vmatpush2.msra.mxu0 0.0
        %1667 = vmatprep.subr.mxu0 0.0
        %1668 = vmatpush2.msra.mxu0 0.0
        %1669 = vmatprep.subr.mxu0 0.0
        %1670 = vmatpush2.msra.mxu0 0.0
        %1671 = vmatprep.subr.mxu0 0.0
        %1672 = vmatpush2.msra.mxu0 0.0
        %1673 = vmatprep.subr.mxu0 0.0
        %1674 = vmatpush2.msra.mxu0 0.0
        %1675 = vmatprep.subr.mxu0 0.0
        %1676 = vmatpush2.msra.mxu0 0.0
        %1677 = vmatprep.mubr.f32.mxu0 0.0
        %1678 = vmatmul.mubr.f32.gmra.mxu0 %v1590
        %v1679 = vpop.f32.mrf.mxu0
        %v1680 = vadd.f32 0.0, %v1679
        %v1681 = vpop.f32.mrf.mxu0
        %1682 = vmatprep.mubr.f32.mxu0 0.0
        %1683 = vmatmul.mubr.f32.gmra.mxu0 %v1593
        %v1684 = vpop.f32.mrf.mxu0
        %v1685 = vadd.f32 0.0, %v1684
        %v1686 = vpop.f32.mrf.mxu0
        %1687 = vmatprep.mubr.f32.mxu0 0.0
        %1688 = vmatmul.mubr.f32.gmra.mxu0 %v1596
        %v1689 = vpop.f32.mrf.mxu0
        %v1690 = vadd.f32 0.0, %v1689
        %v1691 = vpop.f32.mrf.mxu0
        %1692 = vmatprep.mubr.f32.mxu0 0.0
        %1693 = vmatmul.mubr.f32.gmra.mxu0 %v1599
        %v1694 = vpop.f32.mrf.mxu0
        %v1695 = vadd.f32 0.0, %v1694
        %v1696 = vpop.f32.mrf.mxu0
        %1697 = vmatprep.mubr.f32.mxu0 0.0
        %1698 = vmatmul.mubr.f32.gmra.mxu0 %v1602
        %v1699 = vpop.f32.mrf.mxu0
        %v1700 = vadd.f32 0.0, %v1699
        %v1701 = vpop.f32.mrf.mxu0
        %1702 = vmatprep.mubr.f32.mxu0 0.0
        %1703 = vmatmul.mubr.f32.gmra.mxu0 %v1605
        %v1704 = vpop.f32.mrf.mxu0
        %v1705 = vadd.f32 0.0, %v1704
        %v1706 = vpop.f32.mrf.mxu0
        %1707 = vmatprep.mubr.f32.mxu0 0.0
        %1708 = vmatmul.mubr.f32.gmra.mxu0 %v1608
        %v1709 = vpop.f32.mrf.mxu0
        %v1710 = vadd.f32 0.0, %v1709
        %v1711 = vpop.f32.mrf.mxu0
        %1712 = vmatprep.mubr.f32.mxu0 0.0
        %1713 = vmatmul.mubr.f32.gmra.mxu0 %v1611
        %v1714 = vpop.f32.mrf.mxu0
        %v1715 = vadd.f32 0.0, %v1714
        %v1716 = vpop.f32.mrf.mxu0
        %1717 = vdwg.mxu0
        %v1718 = vadd.f32 %v1567, %v1680
        %v1719 = vadd.f32 %v1568, %v1685
        %v1720 = vadd.f32 %v1569, %v1690
        %v1721 = vadd.f32 %v1570, %v1695
        %v1722 = vadd.f32 %v1571, %v1700
        %v1723 = vadd.f32 %v1572, %v1705
        %v1724 = vadd.f32 %v1573, %v1710
        %v1725 = vadd.f32 %v1574, %v1715
        %v1726 = vld [vmem:[%s1575 + $0x1] sm:$0xff]
        %v1727 = vld [vmem:[%s1575 + $0x11] sm:$0xff]
        %v1728 = vld [vmem:[%s1575 + $0x21] sm:$0xff]
        %v1729 = vld [vmem:[%s1575 + $0x31] sm:$0xff]
        %v1730 = vld [vmem:[%s1575 + $0x61] sm:$0xff]
        %v1731 = vld [vmem:[%s1575 + $0x71] sm:$0xff]
        %v1732 = vld [vmem:[%s1575 + $0x81] sm:$0xff]
        %v1733 = vld [vmem:[%s1575 + $0x91] sm:$0xff]
        %s1734 = scalar_lea.vmem %s752, 128 [#allocation7]
        %v1735 = vld [vmem:[%s1734] sm:$0xff]
        %v1736 = vld [vmem:[%s1734 + $0x8] sm:$0xff]
        %v1737 = vld [vmem:[%s1734 + $0x10] sm:$0xff]
        %v1738 = vld [vmem:[%s1734 + $0x18] sm:$0xff]
        %v1740 = vsel %vm1103, %v1726, 0
        %v1743 = vsel %vm1103, %v1727, 0
        %v1746 = vsel %vm1103, %v1728, 0
        %v1749 = vsel %vm1103, %v1729, 0
        %v1752 = vsel %vm1103, %v1730, 0
        %v1755 = vsel %vm1103, %v1731, 0
        %v1758 = vsel %vm1103, %v1732, 0
        %v1761 = vsel %vm1103, %v1733, 0
        %1763 = vmatprep.subr.mxu0 0.0
        %1764 = vmatpush1.msra.mxu0 0.0
        %1765 = vmatprep.subr.mxu0 0.0
        %1766 = vmatpush1.msra.mxu0 0.0
        %1767 = vmatprep.subr.mxu0 0.0
        %1768 = vmatpush1.msra.mxu0 0.0
        %1769 = vmatprep.subr.mxu0 0.0
        %1770 = vmatpush1.msra.mxu0 0.0
        %1771 = vmatprep.subr.mxu0 0.0
        %1772 = vmatpush1.msra.mxu0 0.0
        %1773 = vmatprep.subr.mxu0 0.0
        %1774 = vmatpush1.msra.mxu0 0.0
        %1775 = vmatprep.subr.mxu0 0.0
        %1776 = vmatpush1.msra.mxu0 0.0
        %1777 = vmatprep.subr.mxu0 0.0
        %1778 = vmatpush1.msra.mxu0 0.0
        %1779 = vmatprep.subr.mxu0 0.0
        %1780 = vmatpush1.msra.mxu0 0.0
        %1781 = vmatprep.subr.mxu0 0.0
        %1782 = vmatpush1.msra.mxu0 0.0
        %1783 = vmatprep.subr.mxu0 0.0
        %1784 = vmatpush1.msra.mxu0 0.0
        %1785 = vmatprep.subr.mxu0 0.0
        %1786 = vmatpush1.msra.mxu0 0.0
        %1787 = vmatprep.subr.mxu0 0.0
        %1788 = vmatpush1.msra.mxu0 %v1738
        %1789 = vmatprep.subr.mxu0 0.0
        %1790 = vmatpush1.msra.mxu0 %v1737
        %1791 = vmatprep.subr.mxu0 0.0
        %1792 = vmatpush1.msra.mxu0 %v1736
        %1793 = vmatprep.subr.mxu0 0.0
        %1794 = vmatpush1.msra.mxu0 %v1735
        %1795 = vmatprep.subr.mxu0 0.0
        %1796 = vmatpush2.msra.mxu0 0.0
        %1797 = vmatprep.subr.mxu0 0.0
        %1798 = vmatpush2.msra.mxu0 0.0
        %1799 = vmatprep.subr.mxu0 0.0
        %1800 = vmatpush2.msra.mxu0 0.0
        %1801 = vmatprep.subr.mxu0 0.0
        %1802 = vmatpush2.msra.mxu0 0.0
        %1803 = vmatprep.subr.mxu0 0.0
        %1804 = vmatpush2.msra.mxu0 0.0
        %1805 = vmatprep.subr.mxu0 0.0
        %1806 = vmatpush2.msra.mxu0 0.0
        %1807 = vmatprep.subr.mxu0 0.0
        %1808 = vmatpush2.msra.mxu0 0.0
        %1809 = vmatprep.subr.mxu0 0.0
        %1810 = vmatpush2.msra.mxu0 0.0
        %1811 = vmatprep.subr.mxu0 0.0
        %1812 = vmatpush2.msra.mxu0 0.0
        %1813 = vmatprep.subr.mxu0 0.0
        %1814 = vmatpush2.msra.mxu0 0.0
        %1815 = vmatprep.subr.mxu0 0.0
        %1816 = vmatpush2.msra.mxu0 0.0
        %1817 = vmatprep.subr.mxu0 0.0
        %1818 = vmatpush2.msra.mxu0 0.0
        %1819 = vmatprep.subr.mxu0 0.0
        %1820 = vmatpush2.msra.mxu0 0.0
        %1821 = vmatprep.subr.mxu0 0.0
        %1822 = vmatpush2.msra.mxu0 0.0
        %1823 = vmatprep.subr.mxu0 0.0
        %1824 = vmatpush2.msra.mxu0 0.0
        %1825 = vmatprep.subr.mxu0 0.0
        %1826 = vmatpush2.msra.mxu0 0.0
        %1827 = vmatprep.mubr.f32.mxu0 0.0
        %1828 = vmatmul.mubr.f32.gmra.mxu0 %v1740
        %v1829 = vpop.f32.mrf.mxu0
        %v1830 = vadd.f32 0.0, %v1829
        %v1831 = vpop.f32.mrf.mxu0
        %1832 = vmatprep.mubr.f32.mxu0 0.0
        %1833 = vmatmul.mubr.f32.gmra.mxu0 %v1743
        %v1834 = vpop.f32.mrf.mxu0
        %v1835 = vadd.f32 0.0, %v1834
        %v1836 = vpop.f32.mrf.mxu0
        %1837 = vmatprep.mubr.f32.mxu0 0.0
        %1838 = vmatmul.mubr.f32.gmra.mxu0 %v1746
        %v1839 = vpop.f32.mrf.mxu0
        %v1840 = vadd.f32 0.0, %v1839
        %v1841 = vpop.f32.mrf.mxu0
        %1842 = vmatprep.mubr.f32.mxu0 0.0
        %1843 = vmatmul.mubr.f32.gmra.mxu0 %v1749
        %v1844 = vpop.f32.mrf.mxu0
        %v1845 = vadd.f32 0.0, %v1844
        %v1846 = vpop.f32.mrf.mxu0
        %1847 = vmatprep.mubr.f32.mxu0 0.0
        %1848 = vmatmul.mubr.f32.gmra.mxu0 %v1752
        %v1849 = vpop.f32.mrf.mxu0
        %v1850 = vadd.f32 0.0, %v1849
        %v1851 = vpop.f32.mrf.mxu0
        %1852 = vmatprep.mubr.f32.mxu0 0.0
        %1853 = vmatmul.mubr.f32.gmra.mxu0 %v1755
        %v1854 = vpop.f32.mrf.mxu0
        %v1855 = vadd.f32 0.0, %v1854
        %v1856 = vpop.f32.mrf.mxu0
        %1857 = vmatprep.mubr.f32.mxu0 0.0
        %1858 = vmatmul.mubr.f32.gmra.mxu0 %v1758
        %v1859 = vpop.f32.mrf.mxu0
        %v1860 = vadd.f32 0.0, %v1859
        %v1861 = vpop.f32.mrf.mxu0
        %1862 = vmatprep.mubr.f32.mxu0 0.0
        %1863 = vmatmul.mubr.f32.gmra.mxu0 %v1761
        %v1864 = vpop.f32.mrf.mxu0
        %v1865 = vadd.f32 0.0, %v1864
        %v1866 = vpop.f32.mrf.mxu0
        %1867 = vdwg.mxu0
        %v1868 = vadd.f32 %v1718, %v1830
        %v1869 = vadd.f32 %v1719, %v1835
        %v1870 = vadd.f32 %v1720, %v1840
        %v1871 = vadd.f32 %v1721, %v1845
        %v1872 = vadd.f32 %v1722, %v1850
        %v1873 = vadd.f32 %v1723, %v1855
        %v1874 = vadd.f32 %v1724, %v1860
        %v1875 = vadd.f32 %v1725, %v1865
        %v1876 = vld [vmem:[%s1575 + $0x2] sm:$0xff]
        %v1877 = vld [vmem:[%s1575 + $0x12] sm:$0xff]
        %v1878 = vld [vmem:[%s1575 + $0x22] sm:$0xff]
        %v1879 = vld [vmem:[%s1575 + $0x32] sm:$0xff]
        %v1880 = vld [vmem:[%s1575 + $0x62] sm:$0xff]
        %v1881 = vld [vmem:[%s1575 + $0x72] sm:$0xff]
        %v1882 = vld [vmem:[%s1575 + $0x82] sm:$0xff]
        %v1883 = vld [vmem:[%s1575 + $0x92] sm:$0xff]
        %s1884 = scalar_lea.vmem %s752, 160 [#allocation7]
        %v1885 = vld [vmem:[%s1884] sm:$0xff]
        %v1886 = vld [vmem:[%s1884 + $0x8] sm:$0xff]
        %v1887 = vld [vmem:[%s1884 + $0x10] sm:$0xff]
        %v1888 = vld [vmem:[%s1884 + $0x18] sm:$0xff]
        %v1890 = vsel %vm1103, %v1876, 0
        %v1893 = vsel %vm1103, %v1877, 0
        %v1896 = vsel %vm1103, %v1878, 0
        %v1899 = vsel %vm1103, %v1879, 0
        %v1902 = vsel %vm1103, %v1880, 0
        %v1905 = vsel %vm1103, %v1881, 0
        %v1908 = vsel %vm1103, %v1882, 0
        %v1911 = vsel %vm1103, %v1883, 0
        %1913 = vmatprep.subr.mxu0 0.0
        %1914 = vmatpush1.msra.mxu0 0.0
        %1915 = vmatprep.subr.mxu0 0.0
        %1916 = vmatpush1.msra.mxu0 0.0
        %1917 = vmatprep.subr.mxu0 0.0
        %1918 = vmatpush1.msra.mxu0 0.0
        %1919 = vmatprep.subr.mxu0 0.0
        %1920 = vmatpush1.msra.mxu0 0.0
        %1921 = vmatprep.subr.mxu0 0.0
        %1922 = vmatpush1.msra.mxu0 0.0
        %1923 = vmatprep.subr.mxu0 0.0
        %1924 = vmatpush1.msra.mxu0 0.0
        %1925 = vmatprep.subr.mxu0 0.0
        %1926 = vmatpush1.msra.mxu0 0.0
        %1927 = vmatprep.subr.mxu0 0.0
        %1928 = vmatpush1.msra.mxu0 0.0
        %1929 = vmatprep.subr.mxu0 0.0
        %1930 = vmatpush1.msra.mxu0 0.0
        %1931 = vmatprep.subr.mxu0 0.0
        %1932 = vmatpush1.msra.mxu0 0.0
        %1933 = vmatprep.subr.mxu0 0.0
        %1934 = vmatpush1.msra.mxu0 0.0
        %1935 = vmatprep.subr.mxu0 0.0
        %1936 = vmatpush1.msra.mxu0 0.0
        %1937 = vmatprep.subr.mxu0 0.0
        %1938 = vmatpush1.msra.mxu0 %v1888
        %1939 = vmatprep.subr.mxu0 0.0
        %1940 = vmatpush1.msra.mxu0 %v1887
        %1941 = vmatprep.subr.mxu0 0.0
        %1942 = vmatpush1.msra.mxu0 %v1886
        %1943 = vmatprep.subr.mxu0 0.0
        %1944 = vmatpush1.msra.mxu0 %v1885
        %1945 = vmatprep.subr.mxu0 0.0
        %1946 = vmatpush2.msra.mxu0 0.0
        %1947 = vmatprep.subr.mxu0 0.0
        %1948 = vmatpush2.msra.mxu0 0.0
        %1949 = vmatprep.subr.mxu0 0.0
        %1950 = vmatpush2.msra.mxu0 0.0
        %1951 = vmatprep.subr.mxu0 0.0
        %1952 = vmatpush2.msra.mxu0 0.0
        %1953 = vmatprep.subr.mxu0 0.0
        %1954 = vmatpush2.msra.mxu0 0.0
        %1955 = vmatprep.subr.mxu0 0.0
        %1956 = vmatpush2.msra.mxu0 0.0
        %1957 = vmatprep.subr.mxu0 0.0
        %1958 = vmatpush2.msra.mxu0 0.0
        %1959 = vmatprep.subr.mxu0 0.0
        %1960 = vmatpush2.msra.mxu0 0.0
        %1961 = vmatprep.subr.mxu0 0.0
        %1962 = vmatpush2.msra.mxu0 0.0
        %1963 = vmatprep.subr.mxu0 0.0
        %1964 = vmatpush2.msra.mxu0 0.0
        %1965 = vmatprep.subr.mxu0 0.0
        %1966 = vmatpush2.msra.mxu0 0.0
        %1967 = vmatprep.subr.mxu0 0.0
        %1968 = vmatpush2.msra.mxu0 0.0
        %1969 = vmatprep.subr.mxu0 0.0
        %1970 = vmatpush2.msra.mxu0 0.0
        %1971 = vmatprep.subr.mxu0 0.0
        %1972 = vmatpush2.msra.mxu0 0.0
        %1973 = vmatprep.subr.mxu0 0.0
        %1974 = vmatpush2.msra.mxu0 0.0
        %1975 = vmatprep.subr.mxu0 0.0
        %1976 = vmatpush2.msra.mxu0 0.0
        %1977 = vmatprep.mubr.f32.mxu0 0.0
        %1978 = vmatmul.mubr.f32.gmra.mxu0 %v1890
        %v1979 = vpop.f32.mrf.mxu0
        %v1980 = vadd.f32 0.0, %v1979
        %v1981 = vpop.f32.mrf.mxu0
        %1982 = vmatprep.mubr.f32.mxu0 0.0
        %1983 = vmatmul.mubr.f32.gmra.mxu0 %v1893
        %v1984 = vpop.f32.mrf.mxu0
        %v1985 = vadd.f32 0.0, %v1984
        %v1986 = vpop.f32.mrf.mxu0
        %1987 = vmatprep.mubr.f32.mxu0 0.0
        %1988 = vmatmul.mubr.f32.gmra.mxu0 %v1896
        %v1989 = vpop.f32.mrf.mxu0
        %v1990 = vadd.f32 0.0, %v1989
        %v1991 = vpop.f32.mrf.mxu0
        %1992 = vmatprep.mubr.f32.mxu0 0.0
        %1993 = vmatmul.mubr.f32.gmra.mxu0 %v1899
        %v1994 = vpop.f32.mrf.mxu0
        %v1995 = vadd.f32 0.0, %v1994
        %v1996 = vpop.f32.mrf.mxu0
        %1997 = vmatprep.mubr.f32.mxu0 0.0
        %1998 = vmatmul.mubr.f32.gmra.mxu0 %v1902
        %v1999 = vpop.f32.mrf.mxu0
        %v2000 = vadd.f32 0.0, %v1999
        %v2001 = vpop.f32.mrf.mxu0
        %2002 = vmatprep.mubr.f32.mxu0 0.0
        %2003 = vmatmul.mubr.f32.gmra.mxu0 %v1905
        %v2004 = vpop.f32.mrf.mxu0
        %v2005 = vadd.f32 0.0, %v2004
        %v2006 = vpop.f32.mrf.mxu0
        %2007 = vmatprep.mubr.f32.mxu0 0.0
        %2008 = vmatmul.mubr.f32.gmra.mxu0 %v1908
        %v2009 = vpop.f32.mrf.mxu0
        %v2010 = vadd.f32 0.0, %v2009
        %v2011 = vpop.f32.mrf.mxu0
        %2012 = vmatprep.mubr.f32.mxu0 0.0
        %2013 = vmatmul.mubr.f32.gmra.mxu0 %v1911
        %v2014 = vpop.f32.mrf.mxu0
        %v2015 = vadd.f32 0.0, %v2014
        %v2016 = vpop.f32.mrf.mxu0
        %2017 = vdwg.mxu0
        %v2018 = vadd.f32 %v1868, %v1980
        %v2019 = vadd.f32 %v1869, %v1985
        %v2020 = vadd.f32 %v1870, %v1990
        %v2021 = vadd.f32 %v1871, %v1995
        %v2022 = vadd.f32 %v1872, %v2000
        %v2023 = vadd.f32 %v1873, %v2005
        %v2024 = vadd.f32 %v1874, %v2010
        %v2025 = vadd.f32 %v1875, %v2015
        %s2026 = scalar_lea.vmem [#allocation2], 32
        %v2027 = vld [vmem:[%s2026] sm:$0xff]
        %v2028 = vld [vmem:[%s2026 + $0x10] sm:$0xff]
        %v2029 = vld [vmem:[%s2026 + $0x20] sm:$0xff]
        %v2030 = vld [vmem:[%s2026 + $0x30] sm:$0xff]
        %v2031 = vld [vmem:[%s2026 + $0x60] sm:$0xff]
        %v2032 = vld [vmem:[%s2026 + $0x70] sm:$0xff]
        %v2033 = vld [vmem:[%s2026 + $0x80] sm:$0xff]
        %v2034 = vld [vmem:[%s2026 + $0x90] sm:$0xff]
        %s2035 = scalar_lea.vmem %s752, 192 [#allocation7]
        %v2036 = vld [vmem:[%s2035] sm:$0xff]
        %v2037 = vld [vmem:[%s2035 + $0x8] sm:$0xff]
        %v2038 = vld [vmem:[%s2035 + $0x10] sm:$0xff]
        %v2039 = vld [vmem:[%s2035 + $0x18] sm:$0xff]
        %v2041 = vsel %vm1103, %v2027, 0
        %v2044 = vsel %vm1103, %v2028, 0
        %v2047 = vsel %vm1103, %v2029, 0
        %v2050 = vsel %vm1103, %v2030, 0
        %v2053 = vsel %vm1103, %v2031, 0
        %v2056 = vsel %vm1103, %v2032, 0
        %v2059 = vsel %vm1103, %v2033, 0
        %v2062 = vsel %vm1103, %v2034, 0
        %2064 = vmatprep.subr.mxu0 0.0
        %2065 = vmatpush1.msra.mxu0 0.0
        %2066 = vmatprep.subr.mxu0 0.0
        %2067 = vmatpush1.msra.mxu0 0.0
        %2068 = vmatprep.subr.mxu0 0.0
        %2069 = vmatpush1.msra.mxu0 0.0
        %2070 = vmatprep.subr.mxu0 0.0
        %2071 = vmatpush1.msra.mxu0 0.0
        %2072 = vmatprep.subr.mxu0 0.0
        %2073 = vmatpush1.msra.mxu0 0.0
        %2074 = vmatprep.subr.mxu0 0.0
        %2075 = vmatpush1.msra.mxu0 0.0
        %2076 = vmatprep.subr.mxu0 0.0
        %2077 = vmatpush1.msra.mxu0 0.0
        %2078 = vmatprep.subr.mxu0 0.0
        %2079 = vmatpush1.msra.mxu0 0.0
        %2080 = vmatprep.subr.mxu0 0.0
        %2081 = vmatpush1.msra.mxu0 0.0
        %2082 = vmatprep.subr.mxu0 0.0
        %2083 = vmatpush1.msra.mxu0 0.0
        %2084 = vmatprep.subr.mxu0 0.0
        %2085 = vmatpush1.msra.mxu0 0.0
        %2086 = vmatprep.subr.mxu0 0.0
        %2087 = vmatpush1.msra.mxu0 0.0
        %2088 = vmatprep.subr.mxu0 0.0
        %2089 = vmatpush1.msra.mxu0 %v2039
        %2090 = vmatprep.subr.mxu0 0.0
        %2091 = vmatpush1.msra.mxu0 %v2038
        %2092 = vmatprep.subr.mxu0 0.0
        %2093 = vmatpush1.msra.mxu0 %v2037
        %2094 = vmatprep.subr.mxu0 0.0
        %2095 = vmatpush1.msra.mxu0 %v2036
        %2096 = vmatprep.subr.mxu0 0.0
        %2097 = vmatpush2.msra.mxu0 0.0
        %2098 = vmatprep.subr.mxu0 0.0
        %2099 = vmatpush2.msra.mxu0 0.0
        %2100 = vmatprep.subr.mxu0 0.0
        %2101 = vmatpush2.msra.mxu0 0.0
        %2102 = vmatprep.subr.mxu0 0.0
        %2103 = vmatpush2.msra.mxu0 0.0
        %2104 = vmatprep.subr.mxu0 0.0
        %2105 = vmatpush2.msra.mxu0 0.0
        %2106 = vmatprep.subr.mxu0 0.0
        %2107 = vmatpush2.msra.mxu0 0.0
        %2108 = vmatprep.subr.mxu0 0.0
        %2109 = vmatpush2.msra.mxu0 0.0
        %2110 = vmatprep.subr.mxu0 0.0
        %2111 = vmatpush2.msra.mxu0 0.0
        %2112 = vmatprep.subr.mxu0 0.0
        %2113 = vmatpush2.msra.mxu0 0.0
        %2114 = vmatprep.subr.mxu0 0.0
        %2115 = vmatpush2.msra.mxu0 0.0
        %2116 = vmatprep.subr.mxu0 0.0
        %2117 = vmatpush2.msra.mxu0 0.0
        %2118 = vmatprep.subr.mxu0 0.0
        %2119 = vmatpush2.msra.mxu0 0.0
        %2120 = vmatprep.subr.mxu0 0.0
        %2121 = vmatpush2.msra.mxu0 0.0
        %2122 = vmatprep.subr.mxu0 0.0
        %2123 = vmatpush2.msra.mxu0 0.0
        %2124 = vmatprep.subr.mxu0 0.0
        %2125 = vmatpush2.msra.mxu0 0.0
        %2126 = vmatprep.subr.mxu0 0.0
        %2127 = vmatpush2.msra.mxu0 0.0
        %2128 = vmatprep.mubr.f32.mxu0 0.0
        %2129 = vmatmul.mubr.f32.gmra.mxu0 %v2041
        %v2130 = vpop.f32.mrf.mxu0
        %v2131 = vadd.f32 0.0, %v2130
        %v2132 = vpop.f32.mrf.mxu0
        %2133 = vmatprep.mubr.f32.mxu0 0.0
        %2134 = vmatmul.mubr.f32.gmra.mxu0 %v2044
        %v2135 = vpop.f32.mrf.mxu0
        %v2136 = vadd.f32 0.0, %v2135
        %v2137 = vpop.f32.mrf.mxu0
        %2138 = vmatprep.mubr.f32.mxu0 0.0
        %2139 = vmatmul.mubr.f32.gmra.mxu0 %v2047
        %v2140 = vpop.f32.mrf.mxu0
        %v2141 = vadd.f32 0.0, %v2140
        %v2142 = vpop.f32.mrf.mxu0
        %2143 = vmatprep.mubr.f32.mxu0 0.0
        %2144 = vmatmul.mubr.f32.gmra.mxu0 %v2050
        %v2145 = vpop.f32.mrf.mxu0
        %v2146 = vadd.f32 0.0, %v2145
        %v2147 = vpop.f32.mrf.mxu0
        %2148 = vmatprep.mubr.f32.mxu0 0.0
        %2149 = vmatmul.mubr.f32.gmra.mxu0 %v2053
        %v2150 = vpop.f32.mrf.mxu0
        %v2151 = vadd.f32 0.0, %v2150
        %v2152 = vpop.f32.mrf.mxu0
        %2153 = vmatprep.mubr.f32.mxu0 0.0
        %2154 = vmatmul.mubr.f32.gmra.mxu0 %v2056
        %v2155 = vpop.f32.mrf.mxu0
        %v2156 = vadd.f32 0.0, %v2155
        %v2157 = vpop.f32.mrf.mxu0
        %2158 = vmatprep.mubr.f32.mxu0 0.0
        %2159 = vmatmul.mubr.f32.gmra.mxu0 %v2059
        %v2160 = vpop.f32.mrf.mxu0
        %v2161 = vadd.f32 0.0, %v2160
        %v2162 = vpop.f32.mrf.mxu0
        %2163 = vmatprep.mubr.f32.mxu0 0.0
        %2164 = vmatmul.mubr.f32.gmra.mxu0 %v2062
        %v2165 = vpop.f32.mrf.mxu0
        %v2166 = vadd.f32 0.0, %v2165
        %v2167 = vpop.f32.mrf.mxu0
        %2168 = vdwg.mxu0
        %v2169 = vadd.f32 %v2018, %v2131
        %v2170 = vadd.f32 %v2019, %v2136
        %v2171 = vadd.f32 %v2020, %v2141
        %v2172 = vadd.f32 %v2021, %v2146
        %v2173 = vadd.f32 %v2022, %v2151
        %v2174 = vadd.f32 %v2023, %v2156
        %v2175 = vadd.f32 %v2024, %v2161
        %v2176 = vadd.f32 %v2025, %v2166
        %v2177 = vld [vmem:[%s2026 + $0x1] sm:$0xff]
        %v2178 = vld [vmem:[%s2026 + $0x11] sm:$0xff]
        %v2179 = vld [vmem:[%s2026 + $0x21] sm:$0xff]
        %v2180 = vld [vmem:[%s2026 + $0x31] sm:$0xff]
        %v2181 = vld [vmem:[%s2026 + $0x61] sm:$0xff]
        %v2182 = vld [vmem:[%s2026 + $0x71] sm:$0xff]
        %v2183 = vld [vmem:[%s2026 + $0x81] sm:$0xff]
        %v2184 = vld [vmem:[%s2026 + $0x91] sm:$0xff]
        %s2185 = scalar_lea.vmem %s752, 224 [#allocation7]
        %v2186 = vld [vmem:[%s2185] sm:$0xff]
        %v2187 = vld [vmem:[%s2185 + $0x8] sm:$0xff]
        %v2188 = vld [vmem:[%s2185 + $0x10] sm:$0xff]
        %v2189 = vld [vmem:[%s2185 + $0x18] sm:$0xff]
        %v2191 = vsel %vm1103, %v2177, 0
        %v2194 = vsel %vm1103, %v2178, 0
        %v2197 = vsel %vm1103, %v2179, 0
        %v2200 = vsel %vm1103, %v2180, 0
        %v2203 = vsel %vm1103, %v2181, 0
        %v2206 = vsel %vm1103, %v2182, 0
        %v2209 = vsel %vm1103, %v2183, 0
        %v2212 = vsel %vm1103, %v2184, 0
        %2214 = vmatprep.subr.mxu0 0.0
        %2215 = vmatpush1.msra.mxu0 0.0
        %2216 = vmatprep.subr.mxu0 0.0
        %2217 = vmatpush1.msra.mxu0 0.0
        %2218 = vmatprep.subr.mxu0 0.0
        %2219 = vmatpush1.msra.mxu0 0.0
        %2220 = vmatprep.subr.mxu0 0.0
        %2221 = vmatpush1.msra.mxu0 0.0
        %2222 = vmatprep.subr.mxu0 0.0
        %2223 = vmatpush1.msra.mxu0 0.0
        %2224 = vmatprep.subr.mxu0 0.0
        %2225 = vmatpush1.msra.mxu0 0.0
        %2226 = vmatprep.subr.mxu0 0.0
        %2227 = vmatpush1.msra.mxu0 0.0
        %2228 = vmatprep.subr.mxu0 0.0
        %2229 = vmatpush1.msra.mxu0 0.0
        %2230 = vmatprep.subr.mxu0 0.0
        %2231 = vmatpush1.msra.mxu0 0.0
        %2232 = vmatprep.subr.mxu0 0.0
        %2233 = vmatpush1.msra.mxu0 0.0
        %2234 = vmatprep.subr.mxu0 0.0
        %2235 = vmatpush1.msra.mxu0 0.0
        %2236 = vmatprep.subr.mxu0 0.0
        %2237 = vmatpush1.msra.mxu0 0.0
        %2238 = vmatprep.subr.mxu0 0.0
        %2239 = vmatpush1.msra.mxu0 %v2189
        %2240 = vmatprep.subr.mxu0 0.0
        %2241 = vmatpush1.msra.mxu0 %v2188
        %2242 = vmatprep.subr.mxu0 0.0
        %2243 = vmatpush1.msra.mxu0 %v2187
        %2244 = vmatprep.subr.mxu0 0.0
        %2245 = vmatpush1.msra.mxu0 %v2186
        %2246 = vmatprep.subr.mxu0 0.0
        %2247 = vmatpush2.msra.mxu0 0.0
        %2248 = vmatprep.subr.mxu0 0.0
        %2249 = vmatpush2.msra.mxu0 0.0
        %2250 = vmatprep.subr.mxu0 0.0
        %2251 = vmatpush2.msra.mxu0 0.0
        %2252 = vmatprep.subr.mxu0 0.0
        %2253 = vmatpush2.msra.mxu0 0.0
        %2254 = vmatprep.subr.mxu0 0.0
        %2255 = vmatpush2.msra.mxu0 0.0
        %2256 = vmatprep.subr.mxu0 0.0
        %2257 = vmatpush2.msra.mxu0 0.0
        %2258 = vmatprep.subr.mxu0 0.0
        %2259 = vmatpush2.msra.mxu0 0.0
        %2260 = vmatprep.subr.mxu0 0.0
        %2261 = vmatpush2.msra.mxu0 0.0
        %2262 = vmatprep.subr.mxu0 0.0
        %2263 = vmatpush2.msra.mxu0 0.0
        %2264 = vmatprep.subr.mxu0 0.0
        %2265 = vmatpush2.msra.mxu0 0.0
        %2266 = vmatprep.subr.mxu0 0.0
        %2267 = vmatpush2.msra.mxu0 0.0
        %2268 = vmatprep.subr.mxu0 0.0
        %2269 = vmatpush2.msra.mxu0 0.0
        %2270 = vmatprep.subr.mxu0 0.0
        %2271 = vmatpush2.msra.mxu0 0.0
        %2272 = vmatprep.subr.mxu0 0.0
        %2273 = vmatpush2.msra.mxu0 0.0
        %2274 = vmatprep.subr.mxu0 0.0
        %2275 = vmatpush2.msra.mxu0 0.0
        %2276 = vmatprep.subr.mxu0 0.0
        %2277 = vmatpush2.msra.mxu0 0.0
        %2278 = vmatprep.mubr.f32.mxu0 0.0
        %2279 = vmatmul.mubr.f32.gmra.mxu0 %v2191
        %v2280 = vpop.f32.mrf.mxu0
        %v2281 = vadd.f32 0.0, %v2280
        %v2282 = vpop.f32.mrf.mxu0
        %2283 = vmatprep.mubr.f32.mxu0 0.0
        %2284 = vmatmul.mubr.f32.gmra.mxu0 %v2194
        %v2285 = vpop.f32.mrf.mxu0
        %v2286 = vadd.f32 0.0, %v2285
        %v2287 = vpop.f32.mrf.mxu0
        %2288 = vmatprep.mubr.f32.mxu0 0.0
        %2289 = vmatmul.mubr.f32.gmra.mxu0 %v2197
        %v2290 = vpop.f32.mrf.mxu0
        %v2291 = vadd.f32 0.0, %v2290
        %v2292 = vpop.f32.mrf.mxu0
        %2293 = vmatprep.mubr.f32.mxu0 0.0
        %2294 = vmatmul.mubr.f32.gmra.mxu0 %v2200
        %v2295 = vpop.f32.mrf.mxu0
        %v2296 = vadd.f32 0.0, %v2295
        %v2297 = vpop.f32.mrf.mxu0
        %2298 = vmatprep.mubr.f32.mxu0 0.0
        %2299 = vmatmul.mubr.f32.gmra.mxu0 %v2203
        %v2300 = vpop.f32.mrf.mxu0
        %v2301 = vadd.f32 0.0, %v2300
        %v2302 = vpop.f32.mrf.mxu0
        %2303 = vmatprep.mubr.f32.mxu0 0.0
        %2304 = vmatmul.mubr.f32.gmra.mxu0 %v2206
        %v2305 = vpop.f32.mrf.mxu0
        %v2306 = vadd.f32 0.0, %v2305
        %v2307 = vpop.f32.mrf.mxu0
        %2308 = vmatprep.mubr.f32.mxu0 0.0
        %2309 = vmatmul.mubr.f32.gmra.mxu0 %v2209
        %v2310 = vpop.f32.mrf.mxu0
        %v2311 = vadd.f32 0.0, %v2310
        %v2312 = vpop.f32.mrf.mxu0
        %2313 = vmatprep.mubr.f32.mxu0 0.0
        %2314 = vmatmul.mubr.f32.gmra.mxu0 %v2212
        %v2315 = vpop.f32.mrf.mxu0
        %v2316 = vadd.f32 0.0, %v2315
        %v2317 = vpop.f32.mrf.mxu0
        %2318 = vdwg.mxu0
        %v2319 = vadd.f32 %v2169, %v2281
        %v2320 = vadd.f32 %v2170, %v2286
        %v2321 = vadd.f32 %v2171, %v2291
        %v2322 = vadd.f32 %v2172, %v2296
        %v2323 = vadd.f32 %v2173, %v2301
        %v2324 = vadd.f32 %v2174, %v2306
        %v2325 = vadd.f32 %v2175, %v2311
        %v2326 = vadd.f32 %v2176, %v2316
        %v2327 = vld [vmem:[%s2026 + $0x2] sm:$0xff]
        %v2328 = vld [vmem:[%s2026 + $0x12] sm:$0xff]
        %v2329 = vld [vmem:[%s2026 + $0x22] sm:$0xff]
        %v2330 = vld [vmem:[%s2026 + $0x32] sm:$0xff]
        %v2331 = vld [vmem:[%s2026 + $0x62] sm:$0xff]
        %v2332 = vld [vmem:[%s2026 + $0x72] sm:$0xff]
        %v2333 = vld [vmem:[%s2026 + $0x82] sm:$0xff]
        %v2334 = vld [vmem:[%s2026 + $0x92] sm:$0xff]
        %s2335 = scalar_lea.vmem %s752, 256 [#allocation7]
        %v2336 = vld [vmem:[%s2335] sm:$0xff]
        %v2337 = vld [vmem:[%s2335 + $0x8] sm:$0xff]
        %v2338 = vld [vmem:[%s2335 + $0x10] sm:$0xff]
        %v2339 = vld [vmem:[%s2335 + $0x18] sm:$0xff]
        %v2341 = vsel %vm1103, %v2327, 0
        %v2344 = vsel %vm1103, %v2328, 0
        %v2347 = vsel %vm1103, %v2329, 0
        %v2350 = vsel %vm1103, %v2330, 0
        %v2353 = vsel %vm1103, %v2331, 0
        %v2356 = vsel %vm1103, %v2332, 0
        %v2359 = vsel %vm1103, %v2333, 0
        %v2362 = vsel %vm1103, %v2334, 0
        %2364 = vmatprep.subr.mxu0 0.0
        %2365 = vmatpush1.msra.mxu0 0.0
        %2366 = vmatprep.subr.mxu0 0.0
        %2367 = vmatpush1.msra.mxu0 0.0
        %2368 = vmatprep.subr.mxu0 0.0
        %2369 = vmatpush1.msra.mxu0 0.0
        %2370 = vmatprep.subr.mxu0 0.0
        %2371 = vmatpush1.msra.mxu0 0.0
        %2372 = vmatprep.subr.mxu0 0.0
        %2373 = vmatpush1.msra.mxu0 0.0
        %2374 = vmatprep.subr.mxu0 0.0
        %2375 = vmatpush1.msra.mxu0 0.0
        %2376 = vmatprep.subr.mxu0 0.0
        %2377 = vmatpush1.msra.mxu0 0.0
        %2378 = vmatprep.subr.mxu0 0.0
        %2379 = vmatpush1.msra.mxu0 0.0
        %2380 = vmatprep.subr.mxu0 0.0
        %2381 = vmatpush1.msra.mxu0 0.0
        %2382 = vmatprep.subr.mxu0 0.0
        %2383 = vmatpush1.msra.mxu0 0.0
        %2384 = vmatprep.subr.mxu0 0.0
        %2385 = vmatpush1.msra.mxu0 0.0
        %2386 = vmatprep.subr.mxu0 0.0
        %2387 = vmatpush1.msra.mxu0 0.0
        %2388 = vmatprep.subr.mxu0 0.0
        %2389 = vmatpush1.msra.mxu0 %v2339
        %2390 = vmatprep.subr.mxu0 0.0
        %2391 = vmatpush1.msra.mxu0 %v2338
        %2392 = vmatprep.subr.mxu0 0.0
        %2393 = vmatpush1.msra.mxu0 %v2337
        %2394 = vmatprep.subr.mxu0 0.0
        %2395 = vmatpush1.msra.mxu0 %v2336
        %2396 = vmatprep.subr.mxu0 0.0
        %2397 = vmatpush2.msra.mxu0 0.0
        %2398 = vmatprep.subr.mxu0 0.0
        %2399 = vmatpush2.msra.mxu0 0.0
        %2400 = vmatprep.subr.mxu0 0.0
        %2401 = vmatpush2.msra.mxu0 0.0
        %2402 = vmatprep.subr.mxu0 0.0
        %2403 = vmatpush2.msra.mxu0 0.0
        %2404 = vmatprep.subr.mxu0 0.0
        %2405 = vmatpush2.msra.mxu0 0.0
        %2406 = vmatprep.subr.mxu0 0.0
        %2407 = vmatpush2.msra.mxu0 0.0
        %2408 = vmatprep.subr.mxu0 0.0
        %2409 = vmatpush2.msra.mxu0 0.0
        %2410 = vmatprep.subr.mxu0 0.0
        %2411 = vmatpush2.msra.mxu0 0.0
        %2412 = vmatprep.subr.mxu0 0.0
        %2413 = vmatpush2.msra.mxu0 0.0
        %2414 = vmatprep.subr.mxu0 0.0
        %2415 = vmatpush2.msra.mxu0 0.0
        %2416 = vmatprep.subr.mxu0 0.0
        %2417 = vmatpush2.msra.mxu0 0.0
        %2418 = vmatprep.subr.mxu0 0.0
        %2419 = vmatpush2.msra.mxu0 0.0
        %2420 = vmatprep.subr.mxu0 0.0
        %2421 = vmatpush2.msra.mxu0 0.0
        %2422 = vmatprep.subr.mxu0 0.0
        %2423 = vmatpush2.msra.mxu0 0.0
        %2424 = vmatprep.subr.mxu0 0.0
        %2425 = vmatpush2.msra.mxu0 0.0
        %2426 = vmatprep.subr.mxu0 0.0
        %2427 = vmatpush2.msra.mxu0 0.0
        %2428 = vmatprep.mubr.f32.mxu0 0.0
        %2429 = vmatmul.mubr.f32.gmra.mxu0 %v2341
        %v2430 = vpop.f32.mrf.mxu0
        %v2431 = vadd.f32 0.0, %v2430
        %v2432 = vpop.f32.mrf.mxu0
        %2433 = vmatprep.mubr.f32.mxu0 0.0
        %2434 = vmatmul.mubr.f32.gmra.mxu0 %v2344
        %v2435 = vpop.f32.mrf.mxu0
        %v2436 = vadd.f32 0.0, %v2435
        %v2437 = vpop.f32.mrf.mxu0
        %2438 = vmatprep.mubr.f32.mxu0 0.0
        %2439 = vmatmul.mubr.f32.gmra.mxu0 %v2347
        %v2440 = vpop.f32.mrf.mxu0
        %v2441 = vadd.f32 0.0, %v2440
        %v2442 = vpop.f32.mrf.mxu0
        %2443 = vmatprep.mubr.f32.mxu0 0.0
        %2444 = vmatmul.mubr.f32.gmra.mxu0 %v2350
        %v2445 = vpop.f32.mrf.mxu0
        %v2446 = vadd.f32 0.0, %v2445
        %v2447 = vpop.f32.mrf.mxu0
        %2448 = vmatprep.mubr.f32.mxu0 0.0
        %2449 = vmatmul.mubr.f32.gmra.mxu0 %v2353
        %v2450 = vpop.f32.mrf.mxu0
        %v2451 = vadd.f32 0.0, %v2450
        %v2452 = vpop.f32.mrf.mxu0
        %2453 = vmatprep.mubr.f32.mxu0 0.0
        %2454 = vmatmul.mubr.f32.gmra.mxu0 %v2356
        %v2455 = vpop.f32.mrf.mxu0
        %v2456 = vadd.f32 0.0, %v2455
        %v2457 = vpop.f32.mrf.mxu0
        %2458 = vmatprep.mubr.f32.mxu0 0.0
        %2459 = vmatmul.mubr.f32.gmra.mxu0 %v2359
        %v2460 = vpop.f32.mrf.mxu0
        %v2461 = vadd.f32 0.0, %v2460
        %v2462 = vpop.f32.mrf.mxu0
        %2463 = vmatprep.mubr.f32.mxu0 0.0
        %2464 = vmatmul.mubr.f32.gmra.mxu0 %v2362
        %v2465 = vpop.f32.mrf.mxu0
        %v2466 = vadd.f32 0.0, %v2465
        %v2467 = vpop.f32.mrf.mxu0
        %2468 = vdwg.mxu0
        %v2469 = vadd.f32 %v2319, %v2431
        %v2470 = vadd.f32 %v2320, %v2436
        %v2471 = vadd.f32 %v2321, %v2441
        %v2472 = vadd.f32 %v2322, %v2446
        %v2473 = vadd.f32 %v2323, %v2451
        %v2474 = vadd.f32 %v2324, %v2456
        %v2475 = vadd.f32 %v2325, %v2461
        %v2476 = vadd.f32 %v2326, %v2466
        %v2477 = vld [vmem:[%s760] sm:$0x1]
        %v2479 = vlaneseq
        %v2480 = vshrl.u32 %v2479, 7
        %v2481 = vsub.s32 0, %v2480
        %v2482 = vrot.slane %v2477, %v2481
        %v2484 = vadd.f32 %v2469, %v2482
        %v2485 = vadd.f32 %v2470, %v2482
        %v2486 = vadd.f32 %v2471, %v2482
        %v2487 = vadd.f32 %v2472, %v2482
        %v2488 = vadd.f32 %v2473, %v2482
        %v2489 = vadd.f32 %v2474, %v2482
        %v2490 = vadd.f32 %v2475, %v2482
        %v2491 = vadd.f32 %v2476, %v2482
        %vm2492 = vcmp.ge.f32.partialorder %v2484, 0.0
        %vm2493 = vcmp.ge.f32.partialorder %v2485, 0.0
        %vm2494 = vcmp.ge.f32.partialorder %v2486, 0.0
        %vm2495 = vcmp.ge.f32.partialorder %v2487, 0.0
        %vm2496 = vcmp.ge.f32.partialorder %v2488, 0.0
        %vm2497 = vcmp.ge.f32.partialorder %v2489, 0.0
        %vm2498 = vcmp.ge.f32.partialorder %v2490, 0.0
        %vm2499 = vcmp.ge.f32.partialorder %v2491, 0.0
        %v2500 = vmul.f32 %v2484, 0.01
        %v2501 = vmul.f32 %v2485, 0.01
        %v2502 = vmul.f32 %v2486, 0.01
        %v2503 = vmul.f32 %v2487, 0.01
        %v2504 = vmul.f32 %v2488, 0.01
        %v2505 = vmul.f32 %v2489, 0.01
        %v2506 = vmul.f32 %v2490, 0.01
        %v2507 = vmul.f32 %v2491, 0.01
        %v2508 = vsel %vm2492, %v2484, %v2500
        %v2509 = vsel %vm2493, %v2485, %v2501
        %v2510 = vsel %vm2494, %v2486, %v2502
        %v2511 = vsel %vm2495, %v2487, %v2503
        %v2512 = vsel %vm2496, %v2488, %v2504
        %v2513 = vsel %vm2497, %v2489, %v2505
        %v2514 = vsel %vm2498, %v2490, %v2506
        %v2515 = vsel %vm2499, %v2491, %v2507
        %2516 = vst.msk [vmem:[#allocation2 + $0x1] sm:$0xff] %vm1103, %v2508
        %2517 = vst.msk [vmem:[#allocation2 + $0x11] sm:$0xff] %vm1103, %v2508
        %2518 = vst.msk [vmem:[#allocation2 + $0x21] sm:$0xff] %vm1103, %v2509
        %2519 = vst.msk [vmem:[#allocation2 + $0x31] sm:$0xff] %vm1103, %v2510
        %2520 = vst.msk [vmem:[#allocation2 + $0x41] sm:$0xff] %vm1103, %v2511
        %2521 = vst.msk [vmem:[#allocation2 + $0x51] sm:$0xff] %vm1103, %v2511
        %2522 = vst.msk [vmem:[#allocation2 + $0x61] sm:$0xff] %vm1103, %v2512
        %2523 = vst.msk [vmem:[#allocation2 + $0x71] sm:$0xff] %vm1103, %v2512
        %2524 = vst.msk [vmem:[#allocation2 + $0x81] sm:$0xff] %vm1103, %v2513
        %2525 = vst.msk [vmem:[#allocation2 + $0x91] sm:$0xff] %vm1103, %v2514
        %2526 = vst.msk [vmem:[#allocation2 + $0xa1] sm:$0xff] %vm1103, %v2515
        %2527 = vst.msk [vmem:[#allocation2 + $0xb1] sm:$0xff] %vm1103, %v2515
        %2528 = vst.msk [vmem:[#allocation2] sm:$0x1] %vm1116, %v2508
        %2529 = vst.msk [vmem:[#allocation2 + $0x10] sm:$0x1] %vm1116, %v2508
        %2530 = vst.msk [vmem:[#allocation2 + $0x20] sm:$0x1] %vm1116, %v2509
        %2531 = vst.msk [vmem:[#allocation2 + $0x30] sm:$0x1] %vm1116, %v2510
        %2532 = vst.msk [vmem:[#allocation2 + $0x40] sm:$0x1] %vm1116, %v2511
        %2533 = vst.msk [vmem:[#allocation2 + $0x50] sm:$0x1] %vm1116, %v2511
        %2534 = vst.msk [vmem:[#allocation2 + $0x60] sm:$0x1] %vm1116, %v2512
        %2535 = vst.msk [vmem:[#allocation2 + $0x70] sm:$0x1] %vm1116, %v2512
        %2536 = vst.msk [vmem:[#allocation2 + $0x80] sm:$0x1] %vm1116, %v2513
        %2537 = vst.msk [vmem:[#allocation2 + $0x90] sm:$0x1] %vm1116, %v2514
        %2538 = vst.msk [vmem:[#allocation2 + $0xa0] sm:$0x1] %vm1116, %v2515
        %2539 = vst.msk [vmem:[#allocation2 + $0xb0] sm:$0x1] %vm1116, %v2515
        %2540 = vst.msk [vmem:[#allocation2 + $0x2] sm:$0x80] %vm1129, %v2508
        %2541 = vst.msk [vmem:[#allocation2 + $0x12] sm:$0x80] %vm1129, %v2508
        %2542 = vst.msk [vmem:[#allocation2 + $0x22] sm:$0x80] %vm1129, %v2509
        %2543 = vst.msk [vmem:[#allocation2 + $0x32] sm:$0x80] %vm1129, %v2510
        %2544 = vst.msk [vmem:[#allocation2 + $0x42] sm:$0x80] %vm1129, %v2511
        %2545 = vst.msk [vmem:[#allocation2 + $0x52] sm:$0x80] %vm1129, %v2511
        %2546 = vst.msk [vmem:[#allocation2 + $0x62] sm:$0x80] %vm1129, %v2512
        %2547 = vst.msk [vmem:[#allocation2 + $0x72] sm:$0x80] %vm1129, %v2512
        %2548 = vst.msk [vmem:[#allocation2 + $0x82] sm:$0x80] %vm1129, %v2513
        %2549 = vst.msk [vmem:[#allocation2 + $0x92] sm:$0x80] %vm1129, %v2514
        %2550 = vst.msk [vmem:[#allocation2 + $0xa2] sm:$0x80] %vm1129, %v2515
        %2551 = vst.msk [vmem:[#allocation2 + $0xb2] sm:$0x80] %vm1129, %v2515
        %v2552 = vld [vmem:[#allocation2] sm:$0xff]
        %v2553 = vld [vmem:[#allocation2 + $0x10] sm:$0xff]
        %v2554 = vld [vmem:[#allocation2 + $0x20] sm:$0xff]
        %v2555 = vld [vmem:[#allocation2 + $0x30] sm:$0xff]
        %v2556 = vld [vmem:[#allocation2 + $0x60] sm:$0xff]
        %v2557 = vld [vmem:[#allocation2 + $0x70] sm:$0xff]
        %v2558 = vld [vmem:[#allocation2 + $0x80] sm:$0xff]
        %v2559 = vld [vmem:[#allocation2 + $0x90] sm:$0xff]
        %v2560 = vld [vmem:[%s769] sm:$0xff]
        %v2561 = vld [vmem:[%s769 + $0x8] sm:$0xff]
        %v2562 = vld [vmem:[%s769 + $0x10] sm:$0xff]
        %v2563 = vld [vmem:[%s769 + $0x18] sm:$0xff]
        %v2564 = vld [vmem:[#allocation2 + $0x1] sm:$0xff]
        %v2565 = vld [vmem:[#allocation2 + $0x11] sm:$0xff]
        %v2566 = vld [vmem:[#allocation2 + $0x21] sm:$0xff]
        %v2567 = vld [vmem:[#allocation2 + $0x31] sm:$0xff]
        %v2568 = vld [vmem:[#allocation2 + $0x61] sm:$0xff]
        %v2569 = vld [vmem:[#allocation2 + $0x71] sm:$0xff]
        %v2570 = vld [vmem:[#allocation2 + $0x81] sm:$0xff]
        %v2571 = vld [vmem:[#allocation2 + $0x91] sm:$0xff]
        %s2572 = scalar_lea.vmem %s769, 32 [#allocation10]
        %v2573 = vld [vmem:[%s2572] sm:$0xff]
        %v2574 = vld [vmem:[%s2572 + $0x8] sm:$0xff]
        %v2575 = vld [vmem:[%s2572 + $0x10] sm:$0xff]
        %v2576 = vld [vmem:[%s2572 + $0x18] sm:$0xff]
        %v2578 = vsel %vm1103, %v2564, 0
        %v2581 = vsel %vm1103, %v2565, 0
        %v2584 = vsel %vm1103, %v2566, 0
        %v2587 = vsel %vm1103, %v2567, 0
        %v2590 = vsel %vm1103, %v2568, 0
        %v2593 = vsel %vm1103, %v2569, 0
        %v2596 = vsel %vm1103, %v2570, 0
        %v2599 = vsel %vm1103, %v2571, 0
        %2601 = vmatprep.subr.mxu0 0.0
        %2602 = vmatpush1.msra.mxu0 0.0
        %2603 = vmatprep.subr.mxu0 0.0
        %2604 = vmatpush1.msra.mxu0 0.0
        %2605 = vmatprep.subr.mxu0 0.0
        %2606 = vmatpush1.msra.mxu0 0.0
        %2607 = vmatprep.subr.mxu0 0.0
        %2608 = vmatpush1.msra.mxu0 0.0
        %2609 = vmatprep.subr.mxu0 0.0
        %2610 = vmatpush1.msra.mxu0 0.0
        %2611 = vmatprep.subr.mxu0 0.0
        %2612 = vmatpush1.msra.mxu0 0.0
        %2613 = vmatprep.subr.mxu0 0.0
        %2614 = vmatpush1.msra.mxu0 0.0
        %2615 = vmatprep.subr.mxu0 0.0
        %2616 = vmatpush1.msra.mxu0 0.0
        %2617 = vmatprep.subr.mxu0 0.0
        %2618 = vmatpush1.msra.mxu0 0.0
        %2619 = vmatprep.subr.mxu0 0.0
        %2620 = vmatpush1.msra.mxu0 0.0
        %2621 = vmatprep.subr.mxu0 0.0
        %2622 = vmatpush1.msra.mxu0 0.0
        %2623 = vmatprep.subr.mxu0 0.0
        %2624 = vmatpush1.msra.mxu0 0.0
        %2625 = vmatprep.subr.mxu0 0.0
        %2626 = vmatpush1.msra.mxu0 %v2576
        %2627 = vmatprep.subr.mxu0 0.0
        %2628 = vmatpush1.msra.mxu0 %v2575
        %2629 = vmatprep.subr.mxu0 0.0
        %2630 = vmatpush1.msra.mxu0 %v2574
        %2631 = vmatprep.subr.mxu0 0.0
        %2632 = vmatpush1.msra.mxu0 %v2573
        %2633 = vmatprep.subr.mxu0 0.0
        %2634 = vmatpush2.msra.mxu0 0.0
        %2635 = vmatprep.subr.mxu0 0.0
        %2636 = vmatpush2.msra.mxu0 0.0
        %2637 = vmatprep.subr.mxu0 0.0
        %2638 = vmatpush2.msra.mxu0 0.0
        %2639 = vmatprep.subr.mxu0 0.0
        %2640 = vmatpush2.msra.mxu0 0.0
        %2641 = vmatprep.subr.mxu0 0.0
        %2642 = vmatpush2.msra.mxu0 0.0
        %2643 = vmatprep.subr.mxu0 0.0
        %2644 = vmatpush2.msra.mxu0 0.0
        %2645 = vmatprep.subr.mxu0 0.0
        %2646 = vmatpush2.msra.mxu0 0.0
        %2647 = vmatprep.subr.mxu0 0.0
        %2648 = vmatpush2.msra.mxu0 0.0
        %2649 = vmatprep.subr.mxu0 0.0
        %2650 = vmatpush2.msra.mxu0 0.0
        %2651 = vmatprep.subr.mxu0 0.0
        %2652 = vmatpush2.msra.mxu0 0.0
        %2653 = vmatprep.subr.mxu0 0.0
        %2654 = vmatpush2.msra.mxu0 0.0
        %2655 = vmatprep.subr.mxu0 0.0
        %2656 = vmatpush2.msra.mxu0 0.0
        %2657 = vmatprep.subr.mxu0 0.0
        %2658 = vmatpush2.msra.mxu0 0.0
        %2659 = vmatprep.subr.mxu0 0.0
        %2660 = vmatpush2.msra.mxu0 0.0
        %2661 = vmatprep.subr.mxu0 0.0
        %2662 = vmatpush2.msra.mxu0 0.0
        %2663 = vmatprep.subr.mxu0 0.0
        %2664 = vmatpush2.msra.mxu0 0.0
        %2665 = vmatprep.mubr.f32.mxu0 0.0
        %2666 = vmatmul.mubr.f32.gmra.mxu0 %v2578
        %v2667 = vpop.f32.mrf.mxu0
        %v2668 = vadd.f32 0.0, %v2667
        %v2669 = vpop.f32.mrf.mxu0
        %2670 = vmatprep.mubr.f32.mxu0 0.0
        %2671 = vmatmul.mubr.f32.gmra.mxu0 %v2581
        %v2672 = vpop.f32.mrf.mxu0
        %v2673 = vadd.f32 0.0, %v2672
        %v2674 = vpop.f32.mrf.mxu0
        %2675 = vmatprep.mubr.f32.mxu0 0.0
        %2676 = vmatmul.mubr.f32.gmra.mxu0 %v2584
        %v2677 = vpop.f32.mrf.mxu0
        %v2678 = vadd.f32 0.0, %v2677
        %v2679 = vpop.f32.mrf.mxu0
        %2680 = vmatprep.mubr.f32.mxu0 0.0
        %2681 = vmatmul.mubr.f32.gmra.mxu0 %v2587
        %v2682 = vpop.f32.mrf.mxu0
        %v2683 = vadd.f32 0.0, %v2682
        %v2684 = vpop.f32.mrf.mxu0
        %2685 = vmatprep.mubr.f32.mxu0 0.0
        %2686 = vmatmul.mubr.f32.gmra.mxu0 %v2590
        %v2687 = vpop.f32.mrf.mxu0
        %v2688 = vadd.f32 0.0, %v2687
        %v2689 = vpop.f32.mrf.mxu0
        %2690 = vmatprep.mubr.f32.mxu0 0.0
        %2691 = vmatmul.mubr.f32.gmra.mxu0 %v2593
        %v2692 = vpop.f32.mrf.mxu0
        %v2693 = vadd.f32 0.0, %v2692
        %v2694 = vpop.f32.mrf.mxu0
        %2695 = vmatprep.mubr.f32.mxu0 0.0
        %2696 = vmatmul.mubr.f32.gmra.mxu0 %v2596
        %v2697 = vpop.f32.mrf.mxu0
        %v2698 = vadd.f32 0.0, %v2697
        %v2699 = vpop.f32.mrf.mxu0
        %2700 = vmatprep.mubr.f32.mxu0 0.0
        %2701 = vmatmul.mubr.f32.gmra.mxu0 %v2599
        %v2702 = vpop.f32.mrf.mxu0
        %v2703 = vadd.f32 0.0, %v2702
        %v2704 = vpop.f32.mrf.mxu0
        %2705 = vdwg.mxu0
        %v2707 = vsel %vm1103, %v2552, 0
        %v2710 = vsel %vm1103, %v2553, 0
        %v2713 = vsel %vm1103, %v2554, 0
        %v2716 = vsel %vm1103, %v2555, 0
        %v2719 = vsel %vm1103, %v2556, 0
        %v2722 = vsel %vm1103, %v2557, 0
        %v2725 = vsel %vm1103, %v2558, 0
        %v2728 = vsel %vm1103, %v2559, 0
        %2730 = vmatprep.subr.mxu0 0.0
        %2731 = vmatpush1.msra.mxu0 0.0
        %2732 = vmatprep.subr.mxu0 0.0
        %2733 = vmatpush1.msra.mxu0 0.0
        %2734 = vmatprep.subr.mxu0 0.0
        %2735 = vmatpush1.msra.mxu0 0.0
        %2736 = vmatprep.subr.mxu0 0.0
        %2737 = vmatpush1.msra.mxu0 0.0
        %2738 = vmatprep.subr.mxu0 0.0
        %2739 = vmatpush1.msra.mxu0 0.0
        %2740 = vmatprep.subr.mxu0 0.0
        %2741 = vmatpush1.msra.mxu0 0.0
        %2742 = vmatprep.subr.mxu0 0.0
        %2743 = vmatpush1.msra.mxu0 0.0
        %2744 = vmatprep.subr.mxu0 0.0
        %2745 = vmatpush1.msra.mxu0 0.0
        %2746 = vmatprep.subr.mxu0 0.0
        %2747 = vmatpush1.msra.mxu0 0.0
        %2748 = vmatprep.subr.mxu0 0.0
        %2749 = vmatpush1.msra.mxu0 0.0
        %2750 = vmatprep.subr.mxu0 0.0
        %2751 = vmatpush1.msra.mxu0 0.0
        %2752 = vmatprep.subr.mxu0 0.0
        %2753 = vmatpush1.msra.mxu0 0.0
        %2754 = vmatprep.subr.mxu0 0.0
        %2755 = vmatpush1.msra.mxu0 %v2563
        %2756 = vmatprep.subr.mxu0 0.0
        %2757 = vmatpush1.msra.mxu0 %v2562
        %2758 = vmatprep.subr.mxu0 0.0
        %2759 = vmatpush1.msra.mxu0 %v2561
        %2760 = vmatprep.subr.mxu0 0.0
        %2761 = vmatpush1.msra.mxu0 %v2560
        %2762 = vmatprep.subr.mxu0 0.0
        %2763 = vmatpush2.msra.mxu0 0.0
        %2764 = vmatprep.subr.mxu0 0.0
        %2765 = vmatpush2.msra.mxu0 0.0
        %2766 = vmatprep.subr.mxu0 0.0
        %2767 = vmatpush2.msra.mxu0 0.0
        %2768 = vmatprep.subr.mxu0 0.0
        %2769 = vmatpush2.msra.mxu0 0.0
        %2770 = vmatprep.subr.mxu0 0.0
        %2771 = vmatpush2.msra.mxu0 0.0
        %2772 = vmatprep.subr.mxu0 0.0
        %2773 = vmatpush2.msra.mxu0 0.0
        %2774 = vmatprep.subr.mxu0 0.0
        %2775 = vmatpush2.msra.mxu0 0.0
        %2776 = vmatprep.subr.mxu0 0.0
        %2777 = vmatpush2.msra.mxu0 0.0
        %2778 = vmatprep.subr.mxu0 0.0
        %2779 = vmatpush2.msra.mxu0 0.0
        %2780 = vmatprep.subr.mxu0 0.0
        %2781 = vmatpush2.msra.mxu0 0.0
        %2782 = vmatprep.subr.mxu0 0.0
        %2783 = vmatpush2.msra.mxu0 0.0
        %2784 = vmatprep.subr.mxu0 0.0
        %2785 = vmatpush2.msra.mxu0 0.0
        %2786 = vmatprep.subr.mxu0 0.0
        %2787 = vmatpush2.msra.mxu0 0.0
        %2788 = vmatprep.subr.mxu0 0.0
        %2789 = vmatpush2.msra.mxu0 0.0
        %2790 = vmatprep.subr.mxu0 0.0
        %2791 = vmatpush2.msra.mxu0 0.0
        %2792 = vmatprep.subr.mxu0 0.0
        %2793 = vmatpush2.msra.mxu0 0.0
        %2794 = vmatprep.mubr.f32.mxu0 0.0
        %2795 = vmatmul.mubr.f32.gmra.mxu0 %v2707
        %v2796 = vpop.f32.mrf.mxu0
        %v2797 = vadd.f32 %v2668, %v2796
        %v2798 = vpop.f32.mrf.mxu0
        %2799 = vmatprep.mubr.f32.mxu0 0.0
        %2800 = vmatmul.mubr.f32.gmra.mxu0 %v2710
        %v2801 = vpop.f32.mrf.mxu0
        %v2802 = vadd.f32 %v2673, %v2801
        %v2803 = vpop.f32.mrf.mxu0
        %2804 = vmatprep.mubr.f32.mxu0 0.0
        %2805 = vmatmul.mubr.f32.gmra.mxu0 %v2713
        %v2806 = vpop.f32.mrf.mxu0
        %v2807 = vadd.f32 %v2678, %v2806
        %v2808 = vpop.f32.mrf.mxu0
        %2809 = vmatprep.mubr.f32.mxu0 0.0
        %2810 = vmatmul.mubr.f32.gmra.mxu0 %v2716
        %v2811 = vpop.f32.mrf.mxu0
        %v2812 = vadd.f32 %v2683, %v2811
        %v2813 = vpop.f32.mrf.mxu0
        %2814 = vmatprep.mubr.f32.mxu0 0.0
        %2815 = vmatmul.mubr.f32.gmra.mxu0 %v2719
        %v2816 = vpop.f32.mrf.mxu0
        %v2817 = vadd.f32 %v2688, %v2816
        %v2818 = vpop.f32.mrf.mxu0
        %2819 = vmatprep.mubr.f32.mxu0 0.0
        %2820 = vmatmul.mubr.f32.gmra.mxu0 %v2722
        %v2821 = vpop.f32.mrf.mxu0
        %v2822 = vadd.f32 %v2693, %v2821
        %v2823 = vpop.f32.mrf.mxu0
        %2824 = vmatprep.mubr.f32.mxu0 0.0
        %2825 = vmatmul.mubr.f32.gmra.mxu0 %v2725
        %v2826 = vpop.f32.mrf.mxu0
        %v2827 = vadd.f32 %v2698, %v2826
        %v2828 = vpop.f32.mrf.mxu0
        %2829 = vmatprep.mubr.f32.mxu0 0.0
        %2830 = vmatmul.mubr.f32.gmra.mxu0 %v2728
        %v2831 = vpop.f32.mrf.mxu0
        %v2832 = vadd.f32 %v2703, %v2831
        %v2833 = vpop.f32.mrf.mxu0
        %2834 = vdwg.mxu0
        %v2835 = vld [vmem:[#allocation2 + $0x2] sm:$0xff]
        %v2836 = vld [vmem:[#allocation2 + $0x12] sm:$0xff]
        %v2837 = vld [vmem:[#allocation2 + $0x22] sm:$0xff]
        %v2838 = vld [vmem:[#allocation2 + $0x32] sm:$0xff]
        %v2839 = vld [vmem:[#allocation2 + $0x62] sm:$0xff]
        %v2840 = vld [vmem:[#allocation2 + $0x72] sm:$0xff]
        %v2841 = vld [vmem:[#allocation2 + $0x82] sm:$0xff]
        %v2842 = vld [vmem:[#allocation2 + $0x92] sm:$0xff]
        %s2843 = scalar_lea.vmem %s769, 64 [#allocation10]
        %v2844 = vld [vmem:[%s2843] sm:$0xff]
        %v2845 = vld [vmem:[%s2843 + $0x8] sm:$0xff]
        %v2846 = vld [vmem:[%s2843 + $0x10] sm:$0xff]
        %v2847 = vld [vmem:[%s2843 + $0x18] sm:$0xff]
        %v2849 = vsel %vm1103, %v2835, 0
        %v2852 = vsel %vm1103, %v2836, 0
        %v2855 = vsel %vm1103, %v2837, 0
        %v2858 = vsel %vm1103, %v2838, 0
        %v2861 = vsel %vm1103, %v2839, 0
        %v2864 = vsel %vm1103, %v2840, 0
        %v2867 = vsel %vm1103, %v2841, 0
        %v2870 = vsel %vm1103, %v2842, 0
        %2872 = vmatprep.subr.mxu0 0.0
        %2873 = vmatpush1.msra.mxu0 0.0
        %2874 = vmatprep.subr.mxu0 0.0
        %2875 = vmatpush1.msra.mxu0 0.0
        %2876 = vmatprep.subr.mxu0 0.0
        %2877 = vmatpush1.msra.mxu0 0.0
        %2878 = vmatprep.subr.mxu0 0.0
        %2879 = vmatpush1.msra.mxu0 0.0
        %2880 = vmatprep.subr.mxu0 0.0
        %2881 = vmatpush1.msra.mxu0 0.0
        %2882 = vmatprep.subr.mxu0 0.0
        %2883 = vmatpush1.msra.mxu0 0.0
        %2884 = vmatprep.subr.mxu0 0.0
        %2885 = vmatpush1.msra.mxu0 0.0
        %2886 = vmatprep.subr.mxu0 0.0
        %2887 = vmatpush1.msra.mxu0 0.0
        %2888 = vmatprep.subr.mxu0 0.0
        %2889 = vmatpush1.msra.mxu0 0.0
        %2890 = vmatprep.subr.mxu0 0.0
        %2891 = vmatpush1.msra.mxu0 0.0
        %2892 = vmatprep.subr.mxu0 0.0
        %2893 = vmatpush1.msra.mxu0 0.0
        %2894 = vmatprep.subr.mxu0 0.0
        %2895 = vmatpush1.msra.mxu0 0.0
        %2896 = vmatprep.subr.mxu0 0.0
        %2897 = vmatpush1.msra.mxu0 %v2847
        %2898 = vmatprep.subr.mxu0 0.0
        %2899 = vmatpush1.msra.mxu0 %v2846
        %2900 = vmatprep.subr.mxu0 0.0
        %2901 = vmatpush1.msra.mxu0 %v2845
        %2902 = vmatprep.subr.mxu0 0.0
        %2903 = vmatpush1.msra.mxu0 %v2844
        %2904 = vmatprep.subr.mxu0 0.0
        %2905 = vmatpush2.msra.mxu0 0.0
        %2906 = vmatprep.subr.mxu0 0.0
        %2907 = vmatpush2.msra.mxu0 0.0
        %2908 = vmatprep.subr.mxu0 0.0
        %2909 = vmatpush2.msra.mxu0 0.0
        %2910 = vmatprep.subr.mxu0 0.0
        %2911 = vmatpush2.msra.mxu0 0.0
        %2912 = vmatprep.subr.mxu0 0.0
        %2913 = vmatpush2.msra.mxu0 0.0
        %2914 = vmatprep.subr.mxu0 0.0
        %2915 = vmatpush2.msra.mxu0 0.0
        %2916 = vmatprep.subr.mxu0 0.0
        %2917 = vmatpush2.msra.mxu0 0.0
        %2918 = vmatprep.subr.mxu0 0.0
        %2919 = vmatpush2.msra.mxu0 0.0
        %2920 = vmatprep.subr.mxu0 0.0
        %2921 = vmatpush2.msra.mxu0 0.0
        %2922 = vmatprep.subr.mxu0 0.0
        %2923 = vmatpush2.msra.mxu0 0.0
        %2924 = vmatprep.subr.mxu0 0.0
        %2925 = vmatpush2.msra.mxu0 0.0
        %2926 = vmatprep.subr.mxu0 0.0
        %2927 = vmatpush2.msra.mxu0 0.0
        %2928 = vmatprep.subr.mxu0 0.0
        %2929 = vmatpush2.msra.mxu0 0.0
        %2930 = vmatprep.subr.mxu0 0.0
        %2931 = vmatpush2.msra.mxu0 0.0
        %2932 = vmatprep.subr.mxu0 0.0
        %2933 = vmatpush2.msra.mxu0 0.0
        %2934 = vmatprep.subr.mxu0 0.0
        %2935 = vmatpush2.msra.mxu0 0.0
        %2936 = vmatprep.mubr.f32.mxu0 0.0
        %2937 = vmatmul.mubr.f32.gmra.mxu0 %v2849
        %v2938 = vpop.f32.mrf.mxu0
        %v2939 = vadd.f32 0.0, %v2938
        %v2940 = vpop.f32.mrf.mxu0
        %2941 = vmatprep.mubr.f32.mxu0 0.0
        %2942 = vmatmul.mubr.f32.gmra.mxu0 %v2852
        %v2943 = vpop.f32.mrf.mxu0
        %v2944 = vadd.f32 0.0, %v2943
        %v2945 = vpop.f32.mrf.mxu0
        %2946 = vmatprep.mubr.f32.mxu0 0.0
        %2947 = vmatmul.mubr.f32.gmra.mxu0 %v2855
        %v2948 = vpop.f32.mrf.mxu0
        %v2949 = vadd.f32 0.0, %v2948
        %v2950 = vpop.f32.mrf.mxu0
        %2951 = vmatprep.mubr.f32.mxu0 0.0
        %2952 = vmatmul.mubr.f32.gmra.mxu0 %v2858
        %v2953 = vpop.f32.mrf.mxu0
        %v2954 = vadd.f32 0.0, %v2953
        %v2955 = vpop.f32.mrf.mxu0
        %2956 = vmatprep.mubr.f32.mxu0 0.0
        %2957 = vmatmul.mubr.f32.gmra.mxu0 %v2861
        %v2958 = vpop.f32.mrf.mxu0
        %v2959 = vadd.f32 0.0, %v2958
        %v2960 = vpop.f32.mrf.mxu0
        %2961 = vmatprep.mubr.f32.mxu0 0.0
        %2962 = vmatmul.mubr.f32.gmra.mxu0 %v2864
        %v2963 = vpop.f32.mrf.mxu0
        %v2964 = vadd.f32 0.0, %v2963
        %v2965 = vpop.f32.mrf.mxu0
        %2966 = vmatprep.mubr.f32.mxu0 0.0
        %2967 = vmatmul.mubr.f32.gmra.mxu0 %v2867
        %v2968 = vpop.f32.mrf.mxu0
        %v2969 = vadd.f32 0.0, %v2968
        %v2970 = vpop.f32.mrf.mxu0
        %2971 = vmatprep.mubr.f32.mxu0 0.0
        %2972 = vmatmul.mubr.f32.gmra.mxu0 %v2870
        %v2973 = vpop.f32.mrf.mxu0
        %v2974 = vadd.f32 0.0, %v2973
        %v2975 = vpop.f32.mrf.mxu0
        %2976 = vdwg.mxu0
        %v2977 = vadd.f32 %v2797, %v2939
        %v2978 = vadd.f32 %v2802, %v2944
        %v2979 = vadd.f32 %v2807, %v2949
        %v2980 = vadd.f32 %v2812, %v2954
        %v2981 = vadd.f32 %v2817, %v2959
        %v2982 = vadd.f32 %v2822, %v2964
        %v2983 = vadd.f32 %v2827, %v2969
        %v2984 = vadd.f32 %v2832, %v2974
        %v2985 = vld [vmem:[%s1575] sm:$0xff]
        %v2986 = vld [vmem:[%s1575 + $0x10] sm:$0xff]
        %v2987 = vld [vmem:[%s1575 + $0x20] sm:$0xff]
        %v2988 = vld [vmem:[%s1575 + $0x30] sm:$0xff]
        %v2989 = vld [vmem:[%s1575 + $0x60] sm:$0xff]
        %v2990 = vld [vmem:[%s1575 + $0x70] sm:$0xff]
        %v2991 = vld [vmem:[%s1575 + $0x80] sm:$0xff]
        %v2992 = vld [vmem:[%s1575 + $0x90] sm:$0xff]
        %s2993 = scalar_lea.vmem %s769, 96 [#allocation10]
        %v2994 = vld [vmem:[%s2993] sm:$0xff]
        %v2995 = vld [vmem:[%s2993 + $0x8] sm:$0xff]
        %v2996 = vld [vmem:[%s2993 + $0x10] sm:$0xff]
        %v2997 = vld [vmem:[%s2993 + $0x18] sm:$0xff]
        %v2999 = vsel %vm1103, %v2985, 0
        %v3002 = vsel %vm1103, %v2986, 0
        %v3005 = vsel %vm1103, %v2987, 0
        %v3008 = vsel %vm1103, %v2988, 0
        %v3011 = vsel %vm1103, %v2989, 0
        %v3014 = vsel %vm1103, %v2990, 0
        %v3017 = vsel %vm1103, %v2991, 0
        %v3020 = vsel %vm1103, %v2992, 0
        %3022 = vmatprep.subr.mxu0 0.0
        %3023 = vmatpush1.msra.mxu0 0.0
        %3024 = vmatprep.subr.mxu0 0.0
        %3025 = vmatpush1.msra.mxu0 0.0
        %3026 = vmatprep.subr.mxu0 0.0
        %3027 = vmatpush1.msra.mxu0 0.0
        %3028 = vmatprep.subr.mxu0 0.0
        %3029 = vmatpush1.msra.mxu0 0.0
        %3030 = vmatprep.subr.mxu0 0.0
        %3031 = vmatpush1.msra.mxu0 0.0
        %3032 = vmatprep.subr.mxu0 0.0
        %3033 = vmatpush1.msra.mxu0 0.0
        %3034 = vmatprep.subr.mxu0 0.0
        %3035 = vmatpush1.msra.mxu0 0.0
        %3036 = vmatprep.subr.mxu0 0.0
        %3037 = vmatpush1.msra.mxu0 0.0
        %3038 = vmatprep.subr.mxu0 0.0
        %3039 = vmatpush1.msra.mxu0 0.0
        %3040 = vmatprep.subr.mxu0 0.0
        %3041 = vmatpush1.msra.mxu0 0.0
        %3042 = vmatprep.subr.mxu0 0.0
        %3043 = vmatpush1.msra.mxu0 0.0
        %3044 = vmatprep.subr.mxu0 0.0
        %3045 = vmatpush1.msra.mxu0 0.0
        %3046 = vmatprep.subr.mxu0 0.0
        %3047 = vmatpush1.msra.mxu0 %v2997
        %3048 = vmatprep.subr.mxu0 0.0
        %3049 = vmatpush1.msra.mxu0 %v2996
        %3050 = vmatprep.subr.mxu0 0.0
        %3051 = vmatpush1.msra.mxu0 %v2995
        %3052 = vmatprep.subr.mxu0 0.0
        %3053 = vmatpush1.msra.mxu0 %v2994
        %3054 = vmatprep.subr.mxu0 0.0
        %3055 = vmatpush2.msra.mxu0 0.0
        %3056 = vmatprep.subr.mxu0 0.0
        %3057 = vmatpush2.msra.mxu0 0.0
        %3058 = vmatprep.subr.mxu0 0.0
        %3059 = vmatpush2.msra.mxu0 0.0
        %3060 = vmatprep.subr.mxu0 0.0
        %3061 = vmatpush2.msra.mxu0 0.0
        %3062 = vmatprep.subr.mxu0 0.0
        %3063 = vmatpush2.msra.mxu0 0.0
        %3064 = vmatprep.subr.mxu0 0.0
        %3065 = vmatpush2.msra.mxu0 0.0
        %3066 = vmatprep.subr.mxu0 0.0
        %3067 = vmatpush2.msra.mxu0 0.0
        %3068 = vmatprep.subr.mxu0 0.0
        %3069 = vmatpush2.msra.mxu0 0.0
        %3070 = vmatprep.subr.mxu0 0.0
        %3071 = vmatpush2.msra.mxu0 0.0
        %3072 = vmatprep.subr.mxu0 0.0
        %3073 = vmatpush2.msra.mxu0 0.0
        %3074 = vmatprep.subr.mxu0 0.0
        %3075 = vmatpush2.msra.mxu0 0.0
        %3076 = vmatprep.subr.mxu0 0.0
        %3077 = vmatpush2.msra.mxu0 0.0
        %3078 = vmatprep.subr.mxu0 0.0
        %3079 = vmatpush2.msra.mxu0 0.0
        %3080 = vmatprep.subr.mxu0 0.0
        %3081 = vmatpush2.msra.mxu0 0.0
        %3082 = vmatprep.subr.mxu0 0.0
        %3083 = vmatpush2.msra.mxu0 0.0
        %3084 = vmatprep.subr.mxu0 0.0
        %3085 = vmatpush2.msra.mxu0 0.0
        %3086 = vmatprep.mubr.f32.mxu0 0.0
        %3087 = vmatmul.mubr.f32.gmra.mxu0 %v2999
        %v3088 = vpop.f32.mrf.mxu0
        %v3089 = vadd.f32 0.0, %v3088
        %v3090 = vpop.f32.mrf.mxu0
        %3091 = vmatprep.mubr.f32.mxu0 0.0
        %3092 = vmatmul.mubr.f32.gmra.mxu0 %v3002
        %v3093 = vpop.f32.mrf.mxu0
        %v3094 = vadd.f32 0.0, %v3093
        %v3095 = vpop.f32.mrf.mxu0
        %3096 = vmatprep.mubr.f32.mxu0 0.0
        %3097 = vmatmul.mubr.f32.gmra.mxu0 %v3005
        %v3098 = vpop.f32.mrf.mxu0
        %v3099 = vadd.f32 0.0, %v3098
        %v3100 = vpop.f32.mrf.mxu0
        %3101 = vmatprep.mubr.f32.mxu0 0.0
        %3102 = vmatmul.mubr.f32.gmra.mxu0 %v3008
        %v3103 = vpop.f32.mrf.mxu0
        %v3104 = vadd.f32 0.0, %v3103
        %v3105 = vpop.f32.mrf.mxu0
        %3106 = vmatprep.mubr.f32.mxu0 0.0
        %3107 = vmatmul.mubr.f32.gmra.mxu0 %v3011
        %v3108 = vpop.f32.mrf.mxu0
        %v3109 = vadd.f32 0.0, %v3108
        %v3110 = vpop.f32.mrf.mxu0
        %3111 = vmatprep.mubr.f32.mxu0 0.0
        %3112 = vmatmul.mubr.f32.gmra.mxu0 %v3014
        %v3113 = vpop.f32.mrf.mxu0
        %v3114 = vadd.f32 0.0, %v3113
        %v3115 = vpop.f32.mrf.mxu0
        %3116 = vmatprep.mubr.f32.mxu0 0.0
        %3117 = vmatmul.mubr.f32.gmra.mxu0 %v3017
        %v3118 = vpop.f32.mrf.mxu0
        %v3119 = vadd.f32 0.0, %v3118
        %v3120 = vpop.f32.mrf.mxu0
        %3121 = vmatprep.mubr.f32.mxu0 0.0
        %3122 = vmatmul.mubr.f32.gmra.mxu0 %v3020
        %v3123 = vpop.f32.mrf.mxu0
        %v3124 = vadd.f32 0.0, %v3123
        %v3125 = vpop.f32.mrf.mxu0
        %3126 = vdwg.mxu0
        %v3127 = vadd.f32 %v2977, %v3089
        %v3128 = vadd.f32 %v2978, %v3094
        %v3129 = vadd.f32 %v2979, %v3099
        %v3130 = vadd.f32 %v2980, %v3104
        %v3131 = vadd.f32 %v2981, %v3109
        %v3132 = vadd.f32 %v2982, %v3114
        %v3133 = vadd.f32 %v2983, %v3119
        %v3134 = vadd.f32 %v2984, %v3124
        %v3135 = vld [vmem:[%s1575 + $0x1] sm:$0xff]
        %v3136 = vld [vmem:[%s1575 + $0x11] sm:$0xff]
        %v3137 = vld [vmem:[%s1575 + $0x21] sm:$0xff]
        %v3138 = vld [vmem:[%s1575 + $0x31] sm:$0xff]
        %v3139 = vld [vmem:[%s1575 + $0x61] sm:$0xff]
        %v3140 = vld [vmem:[%s1575 + $0x71] sm:$0xff]
        %v3141 = vld [vmem:[%s1575 + $0x81] sm:$0xff]
        %v3142 = vld [vmem:[%s1575 + $0x91] sm:$0xff]
        %s3143 = scalar_lea.vmem %s769, 128 [#allocation10]
        %v3144 = vld [vmem:[%s3143] sm:$0xff]
        %v3145 = vld [vmem:[%s3143 + $0x8] sm:$0xff]
        %v3146 = vld [vmem:[%s3143 + $0x10] sm:$0xff]
        %v3147 = vld [vmem:[%s3143 + $0x18] sm:$0xff]
        %v3149 = vsel %vm1103, %v3135, 0
        %v3152 = vsel %vm1103, %v3136, 0
        %v3155 = vsel %vm1103, %v3137, 0
        %v3158 = vsel %vm1103, %v3138, 0
        %v3161 = vsel %vm1103, %v3139, 0
        %v3164 = vsel %vm1103, %v3140, 0
        %v3167 = vsel %vm1103, %v3141, 0
        %v3170 = vsel %vm1103, %v3142, 0
        %3172 = vmatprep.subr.mxu0 0.0
        %3173 = vmatpush1.msra.mxu0 0.0
        %3174 = vmatprep.subr.mxu0 0.0
        %3175 = vmatpush1.msra.mxu0 0.0
        %3176 = vmatprep.subr.mxu0 0.0
        %3177 = vmatpush1.msra.mxu0 0.0
        %3178 = vmatprep.subr.mxu0 0.0
        %3179 = vmatpush1.msra.mxu0 0.0
        %3180 = vmatprep.subr.mxu0 0.0
        %3181 = vmatpush1.msra.mxu0 0.0
        %3182 = vmatprep.subr.mxu0 0.0
        %3183 = vmatpush1.msra.mxu0 0.0
        %3184 = vmatprep.subr.mxu0 0.0
        %3185 = vmatpush1.msra.mxu0 0.0
        %3186 = vmatprep.subr.mxu0 0.0
        %3187 = vmatpush1.msra.mxu0 0.0
        %3188 = vmatprep.subr.mxu0 0.0
        %3189 = vmatpush1.msra.mxu0 0.0
        %3190 = vmatprep.subr.mxu0 0.0
        %3191 = vmatpush1.msra.mxu0 0.0
        %3192 = vmatprep.subr.mxu0 0.0
        %3193 = vmatpush1.msra.mxu0 0.0
        %3194 = vmatprep.subr.mxu0 0.0
        %3195 = vmatpush1.msra.mxu0 0.0
        %3196 = vmatprep.subr.mxu0 0.0
        %3197 = vmatpush1.msra.mxu0 %v3147
        %3198 = vmatprep.subr.mxu0 0.0
        %3199 = vmatpush1.msra.mxu0 %v3146
        %3200 = vmatprep.subr.mxu0 0.0
        %3201 = vmatpush1.msra.mxu0 %v3145
        %3202 = vmatprep.subr.mxu0 0.0
        %3203 = vmatpush1.msra.mxu0 %v3144
        %3204 = vmatprep.subr.mxu0 0.0
        %3205 = vmatpush2.msra.mxu0 0.0
        %3206 = vmatprep.subr.mxu0 0.0
        %3207 = vmatpush2.msra.mxu0 0.0
        %3208 = vmatprep.subr.mxu0 0.0
        %3209 = vmatpush2.msra.mxu0 0.0
        %3210 = vmatprep.subr.mxu0 0.0
        %3211 = vmatpush2.msra.mxu0 0.0
        %3212 = vmatprep.subr.mxu0 0.0
        %3213 = vmatpush2.msra.mxu0 0.0
        %3214 = vmatprep.subr.mxu0 0.0
        %3215 = vmatpush2.msra.mxu0 0.0
        %3216 = vmatprep.subr.mxu0 0.0
        %3217 = vmatpush2.msra.mxu0 0.0
        %3218 = vmatprep.subr.mxu0 0.0
        %3219 = vmatpush2.msra.mxu0 0.0
        %3220 = vmatprep.subr.mxu0 0.0
        %3221 = vmatpush2.msra.mxu0 0.0
        %3222 = vmatprep.subr.mxu0 0.0
        %3223 = vmatpush2.msra.mxu0 0.0
        %3224 = vmatprep.subr.mxu0 0.0
        %3225 = vmatpush2.msra.mxu0 0.0
        %3226 = vmatprep.subr.mxu0 0.0
        %3227 = vmatpush2.msra.mxu0 0.0
        %3228 = vmatprep.subr.mxu0 0.0
        %3229 = vmatpush2.msra.mxu0 0.0
        %3230 = vmatprep.subr.mxu0 0.0
        %3231 = vmatpush2.msra.mxu0 0.0
        %3232 = vmatprep.subr.mxu0 0.0
        %3233 = vmatpush2.msra.mxu0 0.0
        %3234 = vmatprep.subr.mxu0 0.0
        %3235 = vmatpush2.msra.mxu0 0.0
        %3236 = vmatprep.mubr.f32.mxu0 0.0
        %3237 = vmatmul.mubr.f32.gmra.mxu0 %v3149
        %v3238 = vpop.f32.mrf.mxu0
        %v3239 = vadd.f32 0.0, %v3238
        %v3240 = vpop.f32.mrf.mxu0
        %3241 = vmatprep.mubr.f32.mxu0 0.0
        %3242 = vmatmul.mubr.f32.gmra.mxu0 %v3152
        %v3243 = vpop.f32.mrf.mxu0
        %v3244 = vadd.f32 0.0, %v3243
        %v3245 = vpop.f32.mrf.mxu0
        %3246 = vmatprep.mubr.f32.mxu0 0.0
        %3247 = vmatmul.mubr.f32.gmra.mxu0 %v3155
        %v3248 = vpop.f32.mrf.mxu0
        %v3249 = vadd.f32 0.0, %v3248
        %v3250 = vpop.f32.mrf.mxu0
        %3251 = vmatprep.mubr.f32.mxu0 0.0
        %3252 = vmatmul.mubr.f32.gmra.mxu0 %v3158
        %v3253 = vpop.f32.mrf.mxu0
        %v3254 = vadd.f32 0.0, %v3253
        %v3255 = vpop.f32.mrf.mxu0
        %3256 = vmatprep.mubr.f32.mxu0 0.0
        %3257 = vmatmul.mubr.f32.gmra.mxu0 %v3161
        %v3258 = vpop.f32.mrf.mxu0
        %v3259 = vadd.f32 0.0, %v3258
        %v3260 = vpop.f32.mrf.mxu0
        %3261 = vmatprep.mubr.f32.mxu0 0.0
        %3262 = vmatmul.mubr.f32.gmra.mxu0 %v3164
        %v3263 = vpop.f32.mrf.mxu0
        %v3264 = vadd.f32 0.0, %v3263
        %v3265 = vpop.f32.mrf.mxu0
        %3266 = vmatprep.mubr.f32.mxu0 0.0
        %3267 = vmatmul.mubr.f32.gmra.mxu0 %v3167
        %v3268 = vpop.f32.mrf.mxu0
        %v3269 = vadd.f32 0.0, %v3268
        %v3270 = vpop.f32.mrf.mxu0
        %3271 = vmatprep.mubr.f32.mxu0 0.0
        %3272 = vmatmul.mubr.f32.gmra.mxu0 %v3170
        %v3273 = vpop.f32.mrf.mxu0
        %v3274 = vadd.f32 0.0, %v3273
        %v3275 = vpop.f32.mrf.mxu0
        %3276 = vdwg.mxu0
        %v3277 = vadd.f32 %v3127, %v3239
        %v3278 = vadd.f32 %v3128, %v3244
        %v3279 = vadd.f32 %v3129, %v3249
        %v3280 = vadd.f32 %v3130, %v3254
        %v3281 = vadd.f32 %v3131, %v3259
        %v3282 = vadd.f32 %v3132, %v3264
        %v3283 = vadd.f32 %v3133, %v3269
        %v3284 = vadd.f32 %v3134, %v3274
        %v3285 = vld [vmem:[%s1575 + $0x2] sm:$0xff]
        %v3286 = vld [vmem:[%s1575 + $0x12] sm:$0xff]
        %v3287 = vld [vmem:[%s1575 + $0x22] sm:$0xff]
        %v3288 = vld [vmem:[%s1575 + $0x32] sm:$0xff]
        %v3289 = vld [vmem:[%s1575 + $0x62] sm:$0xff]
        %v3290 = vld [vmem:[%s1575 + $0x72] sm:$0xff]
        %v3291 = vld [vmem:[%s1575 + $0x82] sm:$0xff]
        %v3292 = vld [vmem:[%s1575 + $0x92] sm:$0xff]
        %s3293 = scalar_lea.vmem %s769, 160 [#allocation10]
        %v3294 = vld [vmem:[%s3293] sm:$0xff]
        %v3295 = vld [vmem:[%s3293 + $0x8] sm:$0xff]
        %v3296 = vld [vmem:[%s3293 + $0x10] sm:$0xff]
        %v3297 = vld [vmem:[%s3293 + $0x18] sm:$0xff]
        %v3299 = vsel %vm1103, %v3285, 0
        %v3302 = vsel %vm1103, %v3286, 0
        %v3305 = vsel %vm1103, %v3287, 0
        %v3308 = vsel %vm1103, %v3288, 0
        %v3311 = vsel %vm1103, %v3289, 0
        %v3314 = vsel %vm1103, %v3290, 0
        %v3317 = vsel %vm1103, %v3291, 0
        %v3320 = vsel %vm1103, %v3292, 0
        %3322 = vmatprep.subr.mxu0 0.0
        %3323 = vmatpush1.msra.mxu0 0.0
        %3324 = vmatprep.subr.mxu0 0.0
        %3325 = vmatpush1.msra.mxu0 0.0
        %3326 = vmatprep.subr.mxu0 0.0
        %3327 = vmatpush1.msra.mxu0 0.0
        %3328 = vmatprep.subr.mxu0 0.0
        %3329 = vmatpush1.msra.mxu0 0.0
        %3330 = vmatprep.subr.mxu0 0.0
        %3331 = vmatpush1.msra.mxu0 0.0
        %3332 = vmatprep.subr.mxu0 0.0
        %3333 = vmatpush1.msra.mxu0 0.0
        %3334 = vmatprep.subr.mxu0 0.0
        %3335 = vmatpush1.msra.mxu0 0.0
        %3336 = vmatprep.subr.mxu0 0.0
        %3337 = vmatpush1.msra.mxu0 0.0
        %3338 = vmatprep.subr.mxu0 0.0
        %3339 = vmatpush1.msra.mxu0 0.0
        %3340 = vmatprep.subr.mxu0 0.0
        %3341 = vmatpush1.msra.mxu0 0.0
        %3342 = vmatprep.subr.mxu0 0.0
        %3343 = vmatpush1.msra.mxu0 0.0
        %3344 = vmatprep.subr.mxu0 0.0
        %3345 = vmatpush1.msra.mxu0 0.0
        %3346 = vmatprep.subr.mxu0 0.0
        %3347 = vmatpush1.msra.mxu0 %v3297
        %3348 = vmatprep.subr.mxu0 0.0
        %3349 = vmatpush1.msra.mxu0 %v3296
        %3350 = vmatprep.subr.mxu0 0.0
        %3351 = vmatpush1.msra.mxu0 %v3295
        %3352 = vmatprep.subr.mxu0 0.0
        %3353 = vmatpush1.msra.mxu0 %v3294
        %3354 = vmatprep.subr.mxu0 0.0
        %3355 = vmatpush2.msra.mxu0 0.0
        %3356 = vmatprep.subr.mxu0 0.0
        %3357 = vmatpush2.msra.mxu0 0.0
        %3358 = vmatprep.subr.mxu0 0.0
        %3359 = vmatpush2.msra.mxu0 0.0
        %3360 = vmatprep.subr.mxu0 0.0
        %3361 = vmatpush2.msra.mxu0 0.0
        %3362 = vmatprep.subr.mxu0 0.0
        %3363 = vmatpush2.msra.mxu0 0.0
        %3364 = vmatprep.subr.mxu0 0.0
        %3365 = vmatpush2.msra.mxu0 0.0
        %3366 = vmatprep.subr.mxu0 0.0
        %3367 = vmatpush2.msra.mxu0 0.0
        %3368 = vmatprep.subr.mxu0 0.0
        %3369 = vmatpush2.msra.mxu0 0.0
        %3370 = vmatprep.subr.mxu0 0.0
        %3371 = vmatpush2.msra.mxu0 0.0
        %3372 = vmatprep.subr.mxu0 0.0
        %3373 = vmatpush2.msra.mxu0 0.0
        %3374 = vmatprep.subr.mxu0 0.0
        %3375 = vmatpush2.msra.mxu0 0.0
        %3376 = vmatprep.subr.mxu0 0.0
        %3377 = vmatpush2.msra.mxu0 0.0
        %3378 = vmatprep.subr.mxu0 0.0
        %3379 = vmatpush2.msra.mxu0 0.0
        %3380 = vmatprep.subr.mxu0 0.0
        %3381 = vmatpush2.msra.mxu0 0.0
        %3382 = vmatprep.subr.mxu0 0.0
        %3383 = vmatpush2.msra.mxu0 0.0
        %3384 = vmatprep.subr.mxu0 0.0
        %3385 = vmatpush2.msra.mxu0 0.0
        %3386 = vmatprep.mubr.f32.mxu0 0.0
        %3387 = vmatmul.mubr.f32.gmra.mxu0 %v3299
        %v3388 = vpop.f32.mrf.mxu0
        %v3389 = vadd.f32 0.0, %v3388
        %v3390 = vpop.f32.mrf.mxu0
        %3391 = vmatprep.mubr.f32.mxu0 0.0
        %3392 = vmatmul.mubr.f32.gmra.mxu0 %v3302
        %v3393 = vpop.f32.mrf.mxu0
        %v3394 = vadd.f32 0.0, %v3393
        %v3395 = vpop.f32.mrf.mxu0
        %3396 = vmatprep.mubr.f32.mxu0 0.0
        %3397 = vmatmul.mubr.f32.gmra.mxu0 %v3305
        %v3398 = vpop.f32.mrf.mxu0
        %v3399 = vadd.f32 0.0, %v3398
        %v3400 = vpop.f32.mrf.mxu0
        %3401 = vmatprep.mubr.f32.mxu0 0.0
        %3402 = vmatmul.mubr.f32.gmra.mxu0 %v3308
        %v3403 = vpop.f32.mrf.mxu0
        %v3404 = vadd.f32 0.0, %v3403
        %v3405 = vpop.f32.mrf.mxu0
        %3406 = vmatprep.mubr.f32.mxu0 0.0
        %3407 = vmatmul.mubr.f32.gmra.mxu0 %v3311
        %v3408 = vpop.f32.mrf.mxu0
        %v3409 = vadd.f32 0.0, %v3408
        %v3410 = vpop.f32.mrf.mxu0
        %3411 = vmatprep.mubr.f32.mxu0 0.0
        %3412 = vmatmul.mubr.f32.gmra.mxu0 %v3314
        %v3413 = vpop.f32.mrf.mxu0
        %v3414 = vadd.f32 0.0, %v3413
        %v3415 = vpop.f32.mrf.mxu0
        %3416 = vmatprep.mubr.f32.mxu0 0.0
        %3417 = vmatmul.mubr.f32.gmra.mxu0 %v3317
        %v3418 = vpop.f32.mrf.mxu0
        %v3419 = vadd.f32 0.0, %v3418
        %v3420 = vpop.f32.mrf.mxu0
        %3421 = vmatprep.mubr.f32.mxu0 0.0
        %3422 = vmatmul.mubr.f32.gmra.mxu0 %v3320
        %v3423 = vpop.f32.mrf.mxu0
        %v3424 = vadd.f32 0.0, %v3423
        %v3425 = vpop.f32.mrf.mxu0
        %3426 = vdwg.mxu0
        %v3427 = vadd.f32 %v3277, %v3389
        %v3428 = vadd.f32 %v3278, %v3394
        %v3429 = vadd.f32 %v3279, %v3399
        %v3430 = vadd.f32 %v3280, %v3404
        %v3431 = vadd.f32 %v3281, %v3409
        %v3432 = vadd.f32 %v3282, %v3414
        %v3433 = vadd.f32 %v3283, %v3419
        %v3434 = vadd.f32 %v3284, %v3424
        %v3435 = vld [vmem:[%s2026] sm:$0xff]
        %v3436 = vld [vmem:[%s2026 + $0x10] sm:$0xff]
        %v3437 = vld [vmem:[%s2026 + $0x20] sm:$0xff]
        %v3438 = vld [vmem:[%s2026 + $0x30] sm:$0xff]
        %v3439 = vld [vmem:[%s2026 + $0x60] sm:$0xff]
        %v3440 = vld [vmem:[%s2026 + $0x70] sm:$0xff]
        %v3441 = vld [vmem:[%s2026 + $0x80] sm:$0xff]
        %v3442 = vld [vmem:[%s2026 + $0x90] sm:$0xff]
        %s3443 = scalar_lea.vmem %s769, 192 [#allocation10]
        %v3444 = vld [vmem:[%s3443] sm:$0xff]
        %v3445 = vld [vmem:[%s3443 + $0x8] sm:$0xff]
        %v3446 = vld [vmem:[%s3443 + $0x10] sm:$0xff]
        %v3447 = vld [vmem:[%s3443 + $0x18] sm:$0xff]
        %v3449 = vsel %vm1103, %v3435, 0
        %v3452 = vsel %vm1103, %v3436, 0
        %v3455 = vsel %vm1103, %v3437, 0
        %v3458 = vsel %vm1103, %v3438, 0
        %v3461 = vsel %vm1103, %v3439, 0
        %v3464 = vsel %vm1103, %v3440, 0
        %v3467 = vsel %vm1103, %v3441, 0
        %v3470 = vsel %vm1103, %v3442, 0
        %3472 = vmatprep.subr.mxu0 0.0
        %3473 = vmatpush1.msra.mxu0 0.0
        %3474 = vmatprep.subr.mxu0 0.0
        %3475 = vmatpush1.msra.mxu0 0.0
        %3476 = vmatprep.subr.mxu0 0.0
        %3477 = vmatpush1.msra.mxu0 0.0
        %3478 = vmatprep.subr.mxu0 0.0
        %3479 = vmatpush1.msra.mxu0 0.0
        %3480 = vmatprep.subr.mxu0 0.0
        %3481 = vmatpush1.msra.mxu0 0.0
        %3482 = vmatprep.subr.mxu0 0.0
        %3483 = vmatpush1.msra.mxu0 0.0
        %3484 = vmatprep.subr.mxu0 0.0
        %3485 = vmatpush1.msra.mxu0 0.0
        %3486 = vmatprep.subr.mxu0 0.0
        %3487 = vmatpush1.msra.mxu0 0.0
        %3488 = vmatprep.subr.mxu0 0.0
        %3489 = vmatpush1.msra.mxu0 0.0
        %3490 = vmatprep.subr.mxu0 0.0
        %3491 = vmatpush1.msra.mxu0 0.0
        %3492 = vmatprep.subr.mxu0 0.0
        %3493 = vmatpush1.msra.mxu0 0.0
        %3494 = vmatprep.subr.mxu0 0.0
        %3495 = vmatpush1.msra.mxu0 0.0
        %3496 = vmatprep.subr.mxu0 0.0
        %3497 = vmatpush1.msra.mxu0 %v3447
        %3498 = vmatprep.subr.mxu0 0.0
        %3499 = vmatpush1.msra.mxu0 %v3446
        %3500 = vmatprep.subr.mxu0 0.0
        %3501 = vmatpush1.msra.mxu0 %v3445
        %3502 = vmatprep.subr.mxu0 0.0
        %3503 = vmatpush1.msra.mxu0 %v3444
        %3504 = vmatprep.subr.mxu0 0.0
        %3505 = vmatpush2.msra.mxu0 0.0
        %3506 = vmatprep.subr.mxu0 0.0
        %3507 = vmatpush2.msra.mxu0 0.0
        %3508 = vmatprep.subr.mxu0 0.0
        %3509 = vmatpush2.msra.mxu0 0.0
        %3510 = vmatprep.subr.mxu0 0.0
        %3511 = vmatpush2.msra.mxu0 0.0
        %3512 = vmatprep.subr.mxu0 0.0
        %3513 = vmatpush2.msra.mxu0 0.0
        %3514 = vmatprep.subr.mxu0 0.0
        %3515 = vmatpush2.msra.mxu0 0.0
        %3516 = vmatprep.subr.mxu0 0.0
        %3517 = vmatpush2.msra.mxu0 0.0
        %3518 = vmatprep.subr.mxu0 0.0
        %3519 = vmatpush2.msra.mxu0 0.0
        %3520 = vmatprep.subr.mxu0 0.0
        %3521 = vmatpush2.msra.mxu0 0.0
        %3522 = vmatprep.subr.mxu0 0.0
        %3523 = vmatpush2.msra.mxu0 0.0
        %3524 = vmatprep.subr.mxu0 0.0
        %3525 = vmatpush2.msra.mxu0 0.0
        %3526 = vmatprep.subr.mxu0 0.0
        %3527 = vmatpush2.msra.mxu0 0.0
        %3528 = vmatprep.subr.mxu0 0.0
        %3529 = vmatpush2.msra.mxu0 0.0
        %3530 = vmatprep.subr.mxu0 0.0
        %3531 = vmatpush2.msra.mxu0 0.0
        %3532 = vmatprep.subr.mxu0 0.0
        %3533 = vmatpush2.msra.mxu0 0.0
        %3534 = vmatprep.subr.mxu0 0.0
        %3535 = vmatpush2.msra.mxu0 0.0
        %3536 = vmatprep.mubr.f32.mxu0 0.0
        %3537 = vmatmul.mubr.f32.gmra.mxu0 %v3449
        %v3538 = vpop.f32.mrf.mxu0
        %v3539 = vadd.f32 0.0, %v3538
        %v3540 = vpop.f32.mrf.mxu0
        %3541 = vmatprep.mubr.f32.mxu0 0.0
        %3542 = vmatmul.mubr.f32.gmra.mxu0 %v3452
        %v3543 = vpop.f32.mrf.mxu0
        %v3544 = vadd.f32 0.0, %v3543
        %v3545 = vpop.f32.mrf.mxu0
        %3546 = vmatprep.mubr.f32.mxu0 0.0
        %3547 = vmatmul.mubr.f32.gmra.mxu0 %v3455
        %v3548 = vpop.f32.mrf.mxu0
        %v3549 = vadd.f32 0.0, %v3548
        %v3550 = vpop.f32.mrf.mxu0
        %3551 = vmatprep.mubr.f32.mxu0 0.0
        %3552 = vmatmul.mubr.f32.gmra.mxu0 %v3458
        %v3553 = vpop.f32.mrf.mxu0
        %v3554 = vadd.f32 0.0, %v3553
        %v3555 = vpop.f32.mrf.mxu0
        %3556 = vmatprep.mubr.f32.mxu0 0.0
        %3557 = vmatmul.mubr.f32.gmra.mxu0 %v3461
        %v3558 = vpop.f32.mrf.mxu0
        %v3559 = vadd.f32 0.0, %v3558
        %v3560 = vpop.f32.mrf.mxu0
        %3561 = vmatprep.mubr.f32.mxu0 0.0
        %3562 = vmatmul.mubr.f32.gmra.mxu0 %v3464
        %v3563 = vpop.f32.mrf.mxu0
        %v3564 = vadd.f32 0.0, %v3563
        %v3565 = vpop.f32.mrf.mxu0
        %3566 = vmatprep.mubr.f32.mxu0 0.0
        %3567 = vmatmul.mubr.f32.gmra.mxu0 %v3467
        %v3568 = vpop.f32.mrf.mxu0
        %v3569 = vadd.f32 0.0, %v3568
        %v3570 = vpop.f32.mrf.mxu0
        %3571 = vmatprep.mubr.f32.mxu0 0.0
        %3572 = vmatmul.mubr.f32.gmra.mxu0 %v3470
        %v3573 = vpop.f32.mrf.mxu0
        %v3574 = vadd.f32 0.0, %v3573
        %v3575 = vpop.f32.mrf.mxu0
        %3576 = vdwg.mxu0
        %v3577 = vadd.f32 %v3427, %v3539
        %v3578 = vadd.f32 %v3428, %v3544
        %v3579 = vadd.f32 %v3429, %v3549
        %v3580 = vadd.f32 %v3430, %v3554
        %v3581 = vadd.f32 %v3431, %v3559
        %v3582 = vadd.f32 %v3432, %v3564
        %v3583 = vadd.f32 %v3433, %v3569
        %v3584 = vadd.f32 %v3434, %v3574
        %v3585 = vld [vmem:[%s2026 + $0x1] sm:$0xff]
        %v3586 = vld [vmem:[%s2026 + $0x11] sm:$0xff]
        %v3587 = vld [vmem:[%s2026 + $0x21] sm:$0xff]
        %v3588 = vld [vmem:[%s2026 + $0x31] sm:$0xff]
        %v3589 = vld [vmem:[%s2026 + $0x61] sm:$0xff]
        %v3590 = vld [vmem:[%s2026 + $0x71] sm:$0xff]
        %v3591 = vld [vmem:[%s2026 + $0x81] sm:$0xff]
        %v3592 = vld [vmem:[%s2026 + $0x91] sm:$0xff]
        %s3593 = scalar_lea.vmem %s769, 224 [#allocation10]
        %v3594 = vld [vmem:[%s3593] sm:$0xff]
        %v3595 = vld [vmem:[%s3593 + $0x8] sm:$0xff]
        %v3596 = vld [vmem:[%s3593 + $0x10] sm:$0xff]
        %v3597 = vld [vmem:[%s3593 + $0x18] sm:$0xff]
        %v3599 = vsel %vm1103, %v3585, 0
        %v3602 = vsel %vm1103, %v3586, 0
        %v3605 = vsel %vm1103, %v3587, 0
        %v3608 = vsel %vm1103, %v3588, 0
        %v3611 = vsel %vm1103, %v3589, 0
        %v3614 = vsel %vm1103, %v3590, 0
        %v3617 = vsel %vm1103, %v3591, 0
        %v3620 = vsel %vm1103, %v3592, 0
        %3622 = vmatprep.subr.mxu0 0.0
        %3623 = vmatpush1.msra.mxu0 0.0
        %3624 = vmatprep.subr.mxu0 0.0
        %3625 = vmatpush1.msra.mxu0 0.0
        %3626 = vmatprep.subr.mxu0 0.0
        %3627 = vmatpush1.msra.mxu0 0.0
        %3628 = vmatprep.subr.mxu0 0.0
        %3629 = vmatpush1.msra.mxu0 0.0
        %3630 = vmatprep.subr.mxu0 0.0
        %3631 = vmatpush1.msra.mxu0 0.0
        %3632 = vmatprep.subr.mxu0 0.0
        %3633 = vmatpush1.msra.mxu0 0.0
        %3634 = vmatprep.subr.mxu0 0.0
        %3635 = vmatpush1.msra.mxu0 0.0
        %3636 = vmatprep.subr.mxu0 0.0
        %3637 = vmatpush1.msra.mxu0 0.0
        %3638 = vmatprep.subr.mxu0 0.0
        %3639 = vmatpush1.msra.mxu0 0.0
        %3640 = vmatprep.subr.mxu0 0.0
        %3641 = vmatpush1.msra.mxu0 0.0
        %3642 = vmatprep.subr.mxu0 0.0
        %3643 = vmatpush1.msra.mxu0 0.0
        %3644 = vmatprep.subr.mxu0 0.0
        %3645 = vmatpush1.msra.mxu0 0.0
        %3646 = vmatprep.subr.mxu0 0.0
        %3647 = vmatpush1.msra.mxu0 %v3597
        %3648 = vmatprep.subr.mxu0 0.0
        %3649 = vmatpush1.msra.mxu0 %v3596
        %3650 = vmatprep.subr.mxu0 0.0
        %3651 = vmatpush1.msra.mxu0 %v3595
        %3652 = vmatprep.subr.mxu0 0.0
        %3653 = vmatpush1.msra.mxu0 %v3594
        %3654 = vmatprep.subr.mxu0 0.0
        %3655 = vmatpush2.msra.mxu0 0.0
        %3656 = vmatprep.subr.mxu0 0.0
        %3657 = vmatpush2.msra.mxu0 0.0
        %3658 = vmatprep.subr.mxu0 0.0
        %3659 = vmatpush2.msra.mxu0 0.0
        %3660 = vmatprep.subr.mxu0 0.0
        %3661 = vmatpush2.msra.mxu0 0.0
        %3662 = vmatprep.subr.mxu0 0.0
        %3663 = vmatpush2.msra.mxu0 0.0
        %3664 = vmatprep.subr.mxu0 0.0
        %3665 = vmatpush2.msra.mxu0 0.0
        %3666 = vmatprep.subr.mxu0 0.0
        %3667 = vmatpush2.msra.mxu0 0.0
        %3668 = vmatprep.subr.mxu0 0.0
        %3669 = vmatpush2.msra.mxu0 0.0
        %3670 = vmatprep.subr.mxu0 0.0
        %3671 = vmatpush2.msra.mxu0 0.0
        %3672 = vmatprep.subr.mxu0 0.0
        %3673 = vmatpush2.msra.mxu0 0.0
        %3674 = vmatprep.subr.mxu0 0.0
        %3675 = vmatpush2.msra.mxu0 0.0
        %3676 = vmatprep.subr.mxu0 0.0
        %3677 = vmatpush2.msra.mxu0 0.0
        %3678 = vmatprep.subr.mxu0 0.0
        %3679 = vmatpush2.msra.mxu0 0.0
        %3680 = vmatprep.subr.mxu0 0.0
        %3681 = vmatpush2.msra.mxu0 0.0
        %3682 = vmatprep.subr.mxu0 0.0
        %3683 = vmatpush2.msra.mxu0 0.0
        %3684 = vmatprep.subr.mxu0 0.0
        %3685 = vmatpush2.msra.mxu0 0.0
        %3686 = vmatprep.mubr.f32.mxu0 0.0
        %3687 = vmatmul.mubr.f32.gmra.mxu0 %v3599
        %v3688 = vpop.f32.mrf.mxu0
        %v3689 = vadd.f32 0.0, %v3688
        %v3690 = vpop.f32.mrf.mxu0
        %3691 = vmatprep.mubr.f32.mxu0 0.0
        %3692 = vmatmul.mubr.f32.gmra.mxu0 %v3602
        %v3693 = vpop.f32.mrf.mxu0
        %v3694 = vadd.f32 0.0, %v3693
        %v3695 = vpop.f32.mrf.mxu0
        %3696 = vmatprep.mubr.f32.mxu0 0.0
        %3697 = vmatmul.mubr.f32.gmra.mxu0 %v3605
        %v3698 = vpop.f32.mrf.mxu0
        %v3699 = vadd.f32 0.0, %v3698
        %v3700 = vpop.f32.mrf.mxu0
        %3701 = vmatprep.mubr.f32.mxu0 0.0
        %3702 = vmatmul.mubr.f32.gmra.mxu0 %v3608
        %v3703 = vpop.f32.mrf.mxu0
        %v3704 = vadd.f32 0.0, %v3703
        %v3705 = vpop.f32.mrf.mxu0
        %3706 = vmatprep.mubr.f32.mxu0 0.0
        %3707 = vmatmul.mubr.f32.gmra.mxu0 %v3611
        %v3708 = vpop.f32.mrf.mxu0
        %v3709 = vadd.f32 0.0, %v3708
        %v3710 = vpop.f32.mrf.mxu0
        %3711 = vmatprep.mubr.f32.mxu0 0.0
        %3712 = vmatmul.mubr.f32.gmra.mxu0 %v3614
        %v3713 = vpop.f32.mrf.mxu0
        %v3714 = vadd.f32 0.0, %v3713
        %v3715 = vpop.f32.mrf.mxu0
        %3716 = vmatprep.mubr.f32.mxu0 0.0
        %3717 = vmatmul.mubr.f32.gmra.mxu0 %v3617
        %v3718 = vpop.f32.mrf.mxu0
        %v3719 = vadd.f32 0.0, %v3718
        %v3720 = vpop.f32.mrf.mxu0
        %3721 = vmatprep.mubr.f32.mxu0 0.0
        %3722 = vmatmul.mubr.f32.gmra.mxu0 %v3620
        %v3723 = vpop.f32.mrf.mxu0
        %v3724 = vadd.f32 0.0, %v3723
        %v3725 = vpop.f32.mrf.mxu0
        %3726 = vdwg.mxu0
        %v3727 = vadd.f32 %v3577, %v3689
        %v3728 = vadd.f32 %v3578, %v3694
        %v3729 = vadd.f32 %v3579, %v3699
        %v3730 = vadd.f32 %v3580, %v3704
        %v3731 = vadd.f32 %v3581, %v3709
        %v3732 = vadd.f32 %v3582, %v3714
        %v3733 = vadd.f32 %v3583, %v3719
        %v3734 = vadd.f32 %v3584, %v3724
        %v3735 = vld [vmem:[%s2026 + $0x2] sm:$0xff]
        %v3736 = vld [vmem:[%s2026 + $0x12] sm:$0xff]
        %v3737 = vld [vmem:[%s2026 + $0x22] sm:$0xff]
        %v3738 = vld [vmem:[%s2026 + $0x32] sm:$0xff]
        %v3739 = vld [vmem:[%s2026 + $0x62] sm:$0xff]
        %v3740 = vld [vmem:[%s2026 + $0x72] sm:$0xff]
        %v3741 = vld [vmem:[%s2026 + $0x82] sm:$0xff]
        %v3742 = vld [vmem:[%s2026 + $0x92] sm:$0xff]
        %s3743 = scalar_lea.vmem %s769, 256 [#allocation10]
        %v3744 = vld [vmem:[%s3743] sm:$0xff]
        %v3745 = vld [vmem:[%s3743 + $0x8] sm:$0xff]
        %v3746 = vld [vmem:[%s3743 + $0x10] sm:$0xff]
        %v3747 = vld [vmem:[%s3743 + $0x18] sm:$0xff]
        %v3749 = vsel %vm1103, %v3735, 0
        %v3752 = vsel %vm1103, %v3736, 0
        %v3755 = vsel %vm1103, %v3737, 0
        %v3758 = vsel %vm1103, %v3738, 0
        %v3761 = vsel %vm1103, %v3739, 0
        %v3764 = vsel %vm1103, %v3740, 0
        %v3767 = vsel %vm1103, %v3741, 0
        %v3770 = vsel %vm1103, %v3742, 0
        %3772 = vmatprep.subr.mxu0 0.0
        %3773 = vmatpush1.msra.mxu0 0.0
        %3774 = vmatprep.subr.mxu0 0.0
        %3775 = vmatpush1.msra.mxu0 0.0
        %3776 = vmatprep.subr.mxu0 0.0
        %3777 = vmatpush1.msra.mxu0 0.0
        %3778 = vmatprep.subr.mxu0 0.0
        %3779 = vmatpush1.msra.mxu0 0.0
        %3780 = vmatprep.subr.mxu0 0.0
        %3781 = vmatpush1.msra.mxu0 0.0
        %3782 = vmatprep.subr.mxu0 0.0
        %3783 = vmatpush1.msra.mxu0 0.0
        %3784 = vmatprep.subr.mxu0 0.0
        %3785 = vmatpush1.msra.mxu0 0.0
        %3786 = vmatprep.subr.mxu0 0.0
        %3787 = vmatpush1.msra.mxu0 0.0
        %3788 = vmatprep.subr.mxu0 0.0
        %3789 = vmatpush1.msra.mxu0 0.0
        %3790 = vmatprep.subr.mxu0 0.0
        %3791 = vmatpush1.msra.mxu0 0.0
        %3792 = vmatprep.subr.mxu0 0.0
        %3793 = vmatpush1.msra.mxu0 0.0
        %3794 = vmatprep.subr.mxu0 0.0
        %3795 = vmatpush1.msra.mxu0 0.0
        %3796 = vmatprep.subr.mxu0 0.0
        %3797 = vmatpush1.msra.mxu0 %v3747
        %3798 = vmatprep.subr.mxu0 0.0
        %3799 = vmatpush1.msra.mxu0 %v3746
        %3800 = vmatprep.subr.mxu0 0.0
        %3801 = vmatpush1.msra.mxu0 %v3745
        %3802 = vmatprep.subr.mxu0 0.0
        %3803 = vmatpush1.msra.mxu0 %v3744
        %3804 = vmatprep.subr.mxu0 0.0
        %3805 = vmatpush2.msra.mxu0 0.0
        %3806 = vmatprep.subr.mxu0 0.0
        %3807 = vmatpush2.msra.mxu0 0.0
        %3808 = vmatprep.subr.mxu0 0.0
        %3809 = vmatpush2.msra.mxu0 0.0
        %3810 = vmatprep.subr.mxu0 0.0
        %3811 = vmatpush2.msra.mxu0 0.0
        %3812 = vmatprep.subr.mxu0 0.0
        %3813 = vmatpush2.msra.mxu0 0.0
        %3814 = vmatprep.subr.mxu0 0.0
        %3815 = vmatpush2.msra.mxu0 0.0
        %3816 = vmatprep.subr.mxu0 0.0
        %3817 = vmatpush2.msra.mxu0 0.0
        %3818 = vmatprep.subr.mxu0 0.0
        %3819 = vmatpush2.msra.mxu0 0.0
        %3820 = vmatprep.subr.mxu0 0.0
        %3821 = vmatpush2.msra.mxu0 0.0
        %3822 = vmatprep.subr.mxu0 0.0
        %3823 = vmatpush2.msra.mxu0 0.0
        %3824 = vmatprep.subr.mxu0 0.0
        %3825 = vmatpush2.msra.mxu0 0.0
        %3826 = vmatprep.subr.mxu0 0.0
        %3827 = vmatpush2.msra.mxu0 0.0
        %3828 = vmatprep.subr.mxu0 0.0
        %3829 = vmatpush2.msra.mxu0 0.0
        %3830 = vmatprep.subr.mxu0 0.0
        %3831 = vmatpush2.msra.mxu0 0.0
        %3832 = vmatprep.subr.mxu0 0.0
        %3833 = vmatpush2.msra.mxu0 0.0
        %3834 = vmatprep.subr.mxu0 0.0
        %3835 = vmatpush2.msra.mxu0 0.0
        %3836 = vmatprep.mubr.f32.mxu0 0.0
        %3837 = vmatmul.mubr.f32.gmra.mxu0 %v3749
        %v3838 = vpop.f32.mrf.mxu0
        %v3839 = vadd.f32 0.0, %v3838
        %v3840 = vpop.f32.mrf.mxu0
        %3841 = vmatprep.mubr.f32.mxu0 0.0
        %3842 = vmatmul.mubr.f32.gmra.mxu0 %v3752
        %v3843 = vpop.f32.mrf.mxu0
        %v3844 = vadd.f32 0.0, %v3843
        %v3845 = vpop.f32.mrf.mxu0
        %3846 = vmatprep.mubr.f32.mxu0 0.0
        %3847 = vmatmul.mubr.f32.gmra.mxu0 %v3755
        %v3848 = vpop.f32.mrf.mxu0
        %v3849 = vadd.f32 0.0, %v3848
        %v3850 = vpop.f32.mrf.mxu0
        %3851 = vmatprep.mubr.f32.mxu0 0.0
        %3852 = vmatmul.mubr.f32.gmra.mxu0 %v3758
        %v3853 = vpop.f32.mrf.mxu0
        %v3854 = vadd.f32 0.0, %v3853
        %v3855 = vpop.f32.mrf.mxu0
        %3856 = vmatprep.mubr.f32.mxu0 0.0
        %3857 = vmatmul.mubr.f32.gmra.mxu0 %v3761
        %v3858 = vpop.f32.mrf.mxu0
        %v3859 = vadd.f32 0.0, %v3858
        %v3860 = vpop.f32.mrf.mxu0
        %3861 = vmatprep.mubr.f32.mxu0 0.0
        %3862 = vmatmul.mubr.f32.gmra.mxu0 %v3764
        %v3863 = vpop.f32.mrf.mxu0
        %v3864 = vadd.f32 0.0, %v3863
        %v3865 = vpop.f32.mrf.mxu0
        %3866 = vmatprep.mubr.f32.mxu0 0.0
        %3867 = vmatmul.mubr.f32.gmra.mxu0 %v3767
        %v3868 = vpop.f32.mrf.mxu0
        %v3869 = vadd.f32 0.0, %v3868
        %v3870 = vpop.f32.mrf.mxu0
        %3871 = vmatprep.mubr.f32.mxu0 0.0
        %3872 = vmatmul.mubr.f32.gmra.mxu0 %v3770
        %v3873 = vpop.f32.mrf.mxu0
        %v3874 = vadd.f32 0.0, %v3873
        %v3875 = vpop.f32.mrf.mxu0
        %3876 = vdwg.mxu0
        %v3877 = vadd.f32 %v3727, %v3839
        %v3878 = vadd.f32 %v3728, %v3844
        %v3879 = vadd.f32 %v3729, %v3849
        %v3880 = vadd.f32 %v3730, %v3854
        %v3881 = vadd.f32 %v3731, %v3859
        %v3882 = vadd.f32 %v3732, %v3864
        %v3883 = vadd.f32 %v3733, %v3869
        %v3884 = vadd.f32 %v3734, %v3874
        %v3885 = vld [vmem:[%s777] sm:$0x1]
        %v3887 = vlaneseq
        %v3888 = vshrl.u32 %v3887, 7
        %v3889 = vsub.s32 0, %v3888
        %v3890 = vrot.slane %v3885, %v3889
        %v3892 = vadd.f32 %v3877, %v3890
        %v3893 = vadd.f32 %v3878, %v3890
        %v3894 = vadd.f32 %v3879, %v3890
        %v3895 = vadd.f32 %v3880, %v3890
        %v3896 = vadd.f32 %v3881, %v3890
        %v3897 = vadd.f32 %v3882, %v3890
        %v3898 = vadd.f32 %v3883, %v3890
        %v3899 = vadd.f32 %v3884, %v3890
        %vm3900 = vcmp.ge.f32.partialorder %v3892, 0.0
        %vm3901 = vcmp.ge.f32.partialorder %v3893, 0.0
        %vm3902 = vcmp.ge.f32.partialorder %v3894, 0.0
        %vm3903 = vcmp.ge.f32.partialorder %v3895, 0.0
        %vm3904 = vcmp.ge.f32.partialorder %v3896, 0.0
        %vm3905 = vcmp.ge.f32.partialorder %v3897, 0.0
        %vm3906 = vcmp.ge.f32.partialorder %v3898, 0.0
        %vm3907 = vcmp.ge.f32.partialorder %v3899, 0.0
        %v3908 = vmul.f32 %v3892, 0.01
        %v3909 = vmul.f32 %v3893, 0.01
        %v3910 = vmul.f32 %v3894, 0.01
        %v3911 = vmul.f32 %v3895, 0.01
        %v3912 = vmul.f32 %v3896, 0.01
        %v3913 = vmul.f32 %v3897, 0.01
        %v3914 = vmul.f32 %v3898, 0.01
        %v3915 = vmul.f32 %v3899, 0.01
        %v3916 = vsel %vm3900, %v3892, %v3908
        %v3917 = vsel %vm3901, %v3893, %v3909
        %v3918 = vsel %vm3902, %v3894, %v3910
        %v3919 = vsel %vm3903, %v3895, %v3911
        %v3920 = vsel %vm3904, %v3896, %v3912
        %v3921 = vsel %vm3905, %v3897, %v3913
        %v3922 = vsel %vm3906, %v3898, %v3914
        %v3923 = vsel %vm3907, %v3899, %v3915
        %v3924 = vld [vmem:[%s786] sm:$0xff]
        %v3925 = vld [vmem:[%s786 + $0x8] sm:$0xff]
        %v3926 = vld [vmem:[%s786 + $0x10] sm:$0xff]
        %v3927 = vld [vmem:[%s786 + $0x18] sm:$0xff]
        %v3928 = vld [vmem:[%s794] sm:$0x1]
        %v3930 = vlaneseq
        %v3931 = vshrl.u32 %v3930, 7
        %v3932 = vsub.s32 0, %v3931
        %v3933 = vrot.slane %v3928, %v3932
        %v3936 = vsel %vm1103, %v3916, 0
        %v3939 = vsel %vm1103, %v3917, 0
        %v3942 = vsel %vm1103, %v3918, 0
        %v3945 = vsel %vm1103, %v3919, 0
        %v3948 = vsel %vm1103, %v3920, 0
        %v3951 = vsel %vm1103, %v3921, 0
        %v3954 = vsel %vm1103, %v3922, 0
        %v3957 = vsel %vm1103, %v3923, 0
        %3959 = vmatprep.subr.mxu0 0.0
        %3960 = vmatpush1.msra.mxu0 0.0
        %3961 = vmatprep.subr.mxu0 0.0
        %3962 = vmatpush1.msra.mxu0 0.0
        %3963 = vmatprep.subr.mxu0 0.0
        %3964 = vmatpush1.msra.mxu0 0.0
        %3965 = vmatprep.subr.mxu0 0.0
        %3966 = vmatpush1.msra.mxu0 0.0
        %3967 = vmatprep.subr.mxu0 0.0
        %3968 = vmatpush1.msra.mxu0 0.0
        %3969 = vmatprep.subr.mxu0 0.0
        %3970 = vmatpush1.msra.mxu0 0.0
        %3971 = vmatprep.subr.mxu0 0.0
        %3972 = vmatpush1.msra.mxu0 0.0
        %3973 = vmatprep.subr.mxu0 0.0
        %3974 = vmatpush1.msra.mxu0 0.0
        %3975 = vmatprep.subr.mxu0 0.0
        %3976 = vmatpush1.msra.mxu0 0.0
        %3977 = vmatprep.subr.mxu0 0.0
        %3978 = vmatpush1.msra.mxu0 0.0
        %3979 = vmatprep.subr.mxu0 0.0
        %3980 = vmatpush1.msra.mxu0 0.0
        %3981 = vmatprep.subr.mxu0 0.0
        %3982 = vmatpush1.msra.mxu0 0.0
        %3983 = vmatprep.subr.mxu0 0.0
        %3984 = vmatpush1.msra.mxu0 %v3927
        %3985 = vmatprep.subr.mxu0 0.0
        %3986 = vmatpush1.msra.mxu0 %v3926
        %3987 = vmatprep.subr.mxu0 0.0
        %3988 = vmatpush1.msra.mxu0 %v3925
        %3989 = vmatprep.subr.mxu0 0.0
        %3990 = vmatpush1.msra.mxu0 %v3924
        %3991 = vmatprep.subr.mxu0 0.0
        %3992 = vmatpush2.msra.mxu0 0.0
        %3993 = vmatprep.subr.mxu0 0.0
        %3994 = vmatpush2.msra.mxu0 0.0
        %3995 = vmatprep.subr.mxu0 0.0
        %3996 = vmatpush2.msra.mxu0 0.0
        %3997 = vmatprep.subr.mxu0 0.0
        %3998 = vmatpush2.msra.mxu0 0.0
        %3999 = vmatprep.subr.mxu0 0.0
        %4000 = vmatpush2.msra.mxu0 0.0
        %4001 = vmatprep.subr.mxu0 0.0
        %4002 = vmatpush2.msra.mxu0 0.0
        %4003 = vmatprep.subr.mxu0 0.0
        %4004 = vmatpush2.msra.mxu0 0.0
        %4005 = vmatprep.subr.mxu0 0.0
        %4006 = vmatpush2.msra.mxu0 0.0
        %4007 = vmatprep.subr.mxu0 0.0
        %4008 = vmatpush2.msra.mxu0 0.0
        %4009 = vmatprep.subr.mxu0 0.0
        %4010 = vmatpush2.msra.mxu0 0.0
        %4011 = vmatprep.subr.mxu0 0.0
        %4012 = vmatpush2.msra.mxu0 0.0
        %4013 = vmatprep.subr.mxu0 0.0
        %4014 = vmatpush2.msra.mxu0 0.0
        %4015 = vmatprep.subr.mxu0 0.0
        %4016 = vmatpush2.msra.mxu0 0.0
        %4017 = vmatprep.subr.mxu0 0.0
        %4018 = vmatpush2.msra.mxu0 0.0
        %4019 = vmatprep.subr.mxu0 0.0
        %4020 = vmatpush2.msra.mxu0 0.0
        %4021 = vmatprep.subr.mxu0 0.0
        %4022 = vmatpush2.msra.mxu0 0.0
        %4023 = vmatprep.mubr.f32.mxu0 0.0
        %4024 = vmatmul.mubr.f32.gmra.mxu0 %v3936
        %v4025 = vpop.f32.mrf.mxu0
        %v4026 = vadd.f32 %v3933, %v4025
        %v4027 = vpop.f32.mrf.mxu0
        %4028 = vmatprep.mubr.f32.mxu0 0.0
        %4029 = vmatmul.mubr.f32.gmra.mxu0 %v3939
        %v4030 = vpop.f32.mrf.mxu0
        %v4031 = vadd.f32 %v3933, %v4030
        %v4032 = vpop.f32.mrf.mxu0
        %4033 = vmatprep.mubr.f32.mxu0 0.0
        %4034 = vmatmul.mubr.f32.gmra.mxu0 %v3942
        %v4035 = vpop.f32.mrf.mxu0
        %v4036 = vadd.f32 %v3933, %v4035
        %v4037 = vpop.f32.mrf.mxu0
        %4038 = vmatprep.mubr.f32.mxu0 0.0
        %4039 = vmatmul.mubr.f32.gmra.mxu0 %v3945
        %v4040 = vpop.f32.mrf.mxu0
        %v4041 = vadd.f32 %v3933, %v4040
        %v4042 = vpop.f32.mrf.mxu0
        %4043 = vmatprep.mubr.f32.mxu0 0.0
        %4044 = vmatmul.mubr.f32.gmra.mxu0 %v3948
        %v4045 = vpop.f32.mrf.mxu0
        %v4046 = vadd.f32 %v3933, %v4045
        %v4047 = vpop.f32.mrf.mxu0
        %4048 = vmatprep.mubr.f32.mxu0 0.0
        %4049 = vmatmul.mubr.f32.gmra.mxu0 %v3951
        %v4050 = vpop.f32.mrf.mxu0
        %v4051 = vadd.f32 %v3933, %v4050
        %v4052 = vpop.f32.mrf.mxu0
        %4053 = vmatprep.mubr.f32.mxu0 0.0
        %4054 = vmatmul.mubr.f32.gmra.mxu0 %v3954
        %v4055 = vpop.f32.mrf.mxu0
        %v4056 = vadd.f32 %v3933, %v4055
        %v4057 = vpop.f32.mrf.mxu0
        %4058 = vmatprep.mubr.f32.mxu0 0.0
        %4059 = vmatmul.mubr.f32.gmra.mxu0 %v3957
        %v4060 = vpop.f32.mrf.mxu0
        %v4061 = vadd.f32 %v3933, %v4060
        %v4062 = vpop.f32.mrf.mxu0
        %4063 = vdwg.mxu0
        %v4064 = vlaneseq
        %v4065 = vshrl.u32 %v4064, 7
        %v4066 = vadd.s32 %v4065, 8
        %v4067 = vadd.s32 %v4065, 16
        %v4068 = vadd.s32 %v4065, 24
        %v4069 = vadd.s32 %v4065, 32
        %v4070 = vadd.s32 %v4065, 40
        %v4071 = vadd.s32 %v4065, 48
        %v4072 = vadd.s32 %v4065, 56
        %v4073 = vadd.s32 %v4065, 64
        %v4074 = vadd.s32 %v4065, 72
        %v4075 = vadd.s32 %v4065, 80
        %v4076 = vadd.s32 %v4065, 88
        %v4077 = vadd.s32 %v4065, 96
        %v4078 = vadd.s32 %v4065, 104
        %v4079 = vadd.s32 %v4065, 112
        %v4080 = vadd.s32 %v4065, 120
        %v4081 = vlaneseq
        %v4082 = vand.u32 %v4081, 127
        %v4083 = vadd.s32 %v4066, 64
        %v4084 = vadd.s32 %v4067, 64
        %v4085 = vadd.s32 %v4068, 64
        %v4086 = vadd.s32 %v4069, 64
        %v4087 = vadd.s32 %v4070, 64
        %v4088 = vadd.s32 %v4071, 64
        %v4089 = vadd.s32 %v4072, 64
        %v4090 = vadd.s32 %v4073, 64
        %v4091 = vadd.s32 %v4074, 64
        %v4092 = vadd.s32 %v4075, 64
        %v4093 = vadd.s32 %v4076, 64
        %v4094 = vadd.s32 %v4077, 64
        %v4095 = vadd.s32 %v4078, 64
        %v4096 = vadd.s32 %v4079, 64
        %v4097 = vadd.s32 %v4080, 64
        %vm4098 = vcmp.lt.s32.totalorder %v4073, 0
        %v4099 = vsub.s32 0, %v4073
        %v4100 = vsel %vm4098, %v4099, %v4073
        %v4101 = vshrl.u32 %v4100, 7
        %v4102 = vand.u32 %v4100, 127
        %v4103 = vsub.s32 0, %v4102
        %v4104 = vsel %vm4098, %v4103, %v4102
        %vm4105 = vcmp.lt.s32.totalorder %v4083, 0
        %v4106 = vsub.s32 0, %v4083
        %v4107 = vsel %vm4105, %v4106, %v4083
        %v4108 = vshrl.u32 %v4107, 7
        %v4109 = vand.u32 %v4107, 127
        %v4110 = vsub.s32 0, %v4109
        %v4111 = vsel %vm4105, %v4110, %v4109
        %vm4112 = vcmp.lt.s32.totalorder %v4084, 0
        %v4113 = vsub.s32 0, %v4084
        %v4114 = vsel %vm4112, %v4113, %v4084
        %v4115 = vshrl.u32 %v4114, 7
        %v4116 = vand.u32 %v4114, 127
        %v4117 = vsub.s32 0, %v4116
        %v4118 = vsel %vm4112, %v4117, %v4116
        %vm4119 = vcmp.lt.s32.totalorder %v4085, 0
        %v4120 = vsub.s32 0, %v4085
        %v4121 = vsel %vm4119, %v4120, %v4085
        %v4122 = vshrl.u32 %v4121, 7
        %v4123 = vand.u32 %v4121, 127
        %v4124 = vsub.s32 0, %v4123
        %v4125 = vsel %vm4119, %v4124, %v4123
        %vm4126 = vcmp.lt.s32.totalorder %v4086, 0
        %v4127 = vsub.s32 0, %v4086
        %v4128 = vsel %vm4126, %v4127, %v4086
        %v4129 = vshrl.u32 %v4128, 7
        %v4130 = vand.u32 %v4128, 127
        %v4131 = vsub.s32 0, %v4130
        %v4132 = vsel %vm4126, %v4131, %v4130
        %vm4133 = vcmp.lt.s32.totalorder %v4087, 0
        %v4134 = vsub.s32 0, %v4087
        %v4135 = vsel %vm4133, %v4134, %v4087
        %v4136 = vshrl.u32 %v4135, 7
        %v4137 = vand.u32 %v4135, 127
        %v4138 = vsub.s32 0, %v4137
        %v4139 = vsel %vm4133, %v4138, %v4137
        %vm4140 = vcmp.lt.s32.totalorder %v4088, 0
        %v4141 = vsub.s32 0, %v4088
        %v4142 = vsel %vm4140, %v4141, %v4088
        %v4143 = vshrl.u32 %v4142, 7
        %v4144 = vand.u32 %v4142, 127
        %v4145 = vsub.s32 0, %v4144
        %v4146 = vsel %vm4140, %v4145, %v4144
        %vm4147 = vcmp.lt.s32.totalorder %v4089, 0
        %v4148 = vsub.s32 0, %v4089
        %v4149 = vsel %vm4147, %v4148, %v4089
        %v4150 = vshrl.u32 %v4149, 7
        %v4151 = vand.u32 %v4149, 127
        %v4152 = vsub.s32 0, %v4151
        %v4153 = vsel %vm4147, %v4152, %v4151
        %vm4154 = vcmp.lt.s32.totalorder %v4090, 0
        %v4155 = vsub.s32 0, %v4090
        %v4156 = vsel %vm4154, %v4155, %v4090
        %v4157 = vshrl.u32 %v4156, 7
        %v4158 = vand.u32 %v4156, 127
        %v4159 = vsub.s32 0, %v4158
        %v4160 = vsel %vm4154, %v4159, %v4158
        %vm4161 = vcmp.lt.s32.totalorder %v4091, 0
        %v4162 = vsub.s32 0, %v4091
        %v4163 = vsel %vm4161, %v4162, %v4091
        %v4164 = vshrl.u32 %v4163, 7
        %v4165 = vand.u32 %v4163, 127
        %v4166 = vsub.s32 0, %v4165
        %v4167 = vsel %vm4161, %v4166, %v4165
        %vm4168 = vcmp.lt.s32.totalorder %v4092, 0
        %v4169 = vsub.s32 0, %v4092
        %v4170 = vsel %vm4168, %v4169, %v4092
        %v4171 = vshrl.u32 %v4170, 7
        %v4172 = vand.u32 %v4170, 127
        %v4173 = vsub.s32 0, %v4172
        %v4174 = vsel %vm4168, %v4173, %v4172
        %vm4175 = vcmp.lt.s32.totalorder %v4093, 0
        %v4176 = vsub.s32 0, %v4093
        %v4177 = vsel %vm4175, %v4176, %v4093
        %v4178 = vshrl.u32 %v4177, 7
        %v4179 = vand.u32 %v4177, 127
        %v4180 = vsub.s32 0, %v4179
        %v4181 = vsel %vm4175, %v4180, %v4179
        %vm4182 = vcmp.lt.s32.totalorder %v4094, 0
        %v4183 = vsub.s32 0, %v4094
        %v4184 = vsel %vm4182, %v4183, %v4094
        %v4185 = vshrl.u32 %v4184, 7
        %v4186 = vand.u32 %v4184, 127
        %v4187 = vsub.s32 0, %v4186
        %v4188 = vsel %vm4182, %v4187, %v4186
        %vm4189 = vcmp.lt.s32.totalorder %v4095, 0
        %v4190 = vsub.s32 0, %v4095
        %v4191 = vsel %vm4189, %v4190, %v4095
        %v4192 = vshrl.u32 %v4191, 7
        %v4193 = vand.u32 %v4191, 127
        %v4194 = vsub.s32 0, %v4193
        %v4195 = vsel %vm4189, %v4194, %v4193
        %vm4196 = vcmp.lt.s32.totalorder %v4096, 0
        %v4197 = vsub.s32 0, %v4096
        %v4198 = vsel %vm4196, %v4197, %v4096
        %v4199 = vshrl.u32 %v4198, 7
        %v4200 = vand.u32 %v4198, 127
        %v4201 = vsub.s32 0, %v4200
        %v4202 = vsel %vm4196, %v4201, %v4200
        %vm4203 = vcmp.lt.s32.totalorder %v4097, 0
        %v4204 = vsub.s32 0, %v4097
        %v4205 = vsel %vm4203, %v4204, %v4097
        %v4206 = vshrl.u32 %v4205, 7
        %v4207 = vand.u32 %v4205, 127
        %v4208 = vsub.s32 0, %v4207
        %v4209 = vsel %vm4203, %v4208, %v4207
        %vm4210 = vcmp.ne.s32.totalorder %v4104, 0
        %vm4211 = vcmp.ne.s32.totalorder %v4111, 0
        %vm4212 = vcmp.ne.s32.totalorder %v4118, 0
        %vm4213 = vcmp.ne.s32.totalorder %v4125, 0
        %vm4214 = vcmp.ne.s32.totalorder %v4132, 0
        %vm4215 = vcmp.ne.s32.totalorder %v4139, 0
        %vm4216 = vcmp.ne.s32.totalorder %v4146, 0
        %vm4217 = vcmp.ne.s32.totalorder %v4153, 0
        %vm4218 = vcmp.ne.s32.totalorder %v4160, 0
        %vm4219 = vcmp.ne.s32.totalorder %v4167, 0
        %vm4220 = vcmp.ne.s32.totalorder %v4174, 0
        %vm4221 = vcmp.ne.s32.totalorder %v4181, 0
        %vm4222 = vcmp.ne.s32.totalorder %v4188, 0
        %vm4223 = vcmp.ne.s32.totalorder %v4195, 0
        %vm4224 = vcmp.ne.s32.totalorder %v4202, 0
        %vm4225 = vcmp.ne.s32.totalorder %v4209, 0
        %vm4226 = vcmp.lt.s32.totalorder %v4104, 0
        %vm4227 = vcmp.lt.s32.totalorder %v4111, 0
        %vm4228 = vcmp.lt.s32.totalorder %v4118, 0
        %vm4229 = vcmp.lt.s32.totalorder %v4125, 0
        %vm4230 = vcmp.lt.s32.totalorder %v4132, 0
        %vm4231 = vcmp.lt.s32.totalorder %v4139, 0
        %vm4232 = vcmp.lt.s32.totalorder %v4146, 0
        %vm4233 = vcmp.lt.s32.totalorder %v4153, 0
        %vm4234 = vcmp.lt.s32.totalorder %v4160, 0
        %vm4235 = vcmp.lt.s32.totalorder %v4167, 0
        %vm4236 = vcmp.lt.s32.totalorder %v4174, 0
        %vm4237 = vcmp.lt.s32.totalorder %v4181, 0
        %vm4238 = vcmp.lt.s32.totalorder %v4188, 0
        %vm4239 = vcmp.lt.s32.totalorder %v4195, 0
        %vm4240 = vcmp.lt.s32.totalorder %v4202, 0
        %vm4241 = vcmp.lt.s32.totalorder %v4209, 0
        %vm4242 = vmand %vm4226, %vm4210
        %vm4243 = vmand %vm4227, %vm4211
        %vm4244 = vmand %vm4228, %vm4212
        %vm4245 = vmand %vm4229, %vm4213
        %vm4246 = vmand %vm4230, %vm4214
        %vm4247 = vmand %vm4231, %vm4215
        %vm4248 = vmand %vm4232, %vm4216
        %vm4249 = vmand %vm4233, %vm4217
        %vm4250 = vmand %vm4234, %vm4218
        %vm4251 = vmand %vm4235, %vm4219
        %vm4252 = vmand %vm4236, %vm4220
        %vm4253 = vmand %vm4237, %vm4221
        %vm4254 = vmand %vm4238, %vm4222
        %vm4255 = vmand %vm4239, %vm4223
        %vm4256 = vmand %vm4240, %vm4224
        %vm4257 = vmand %vm4241, %vm4225
        %v4258 = vadd.s32 %v4104, 128
        %v4259 = vadd.s32 %v4111, 128
        %v4260 = vadd.s32 %v4118, 128
        %v4261 = vadd.s32 %v4125, 128
        %v4262 = vadd.s32 %v4132, 128
        %v4263 = vadd.s32 %v4139, 128
        %v4264 = vadd.s32 %v4146, 128
        %v4265 = vadd.s32 %v4153, 128
        %v4266 = vadd.s32 %v4160, 128
        %v4267 = vadd.s32 %v4167, 128
        %v4268 = vadd.s32 %v4174, 128
        %v4269 = vadd.s32 %v4181, 128
        %v4270 = vadd.s32 %v4188, 128
        %v4271 = vadd.s32 %v4195, 128
        %v4272 = vadd.s32 %v4202, 128
        %v4273 = vadd.s32 %v4209, 128
        %v4274 = vsel %vm4242, %v4258, %v4104
        %v4275 = vsel %vm4243, %v4259, %v4111
        %v4276 = vsel %vm4244, %v4260, %v4118
        %v4277 = vsel %vm4245, %v4261, %v4125
        %v4278 = vsel %vm4246, %v4262, %v4132
        %v4279 = vsel %vm4247, %v4263, %v4139
        %v4280 = vsel %vm4248, %v4264, %v4146
        %v4281 = vsel %vm4249, %v4265, %v4153
        %v4282 = vsel %vm4250, %v4266, %v4160
        %v4283 = vsel %vm4251, %v4267, %v4167
        %v4284 = vsel %vm4252, %v4268, %v4174
        %v4285 = vsel %vm4253, %v4269, %v4181
        %v4286 = vsel %vm4254, %v4270, %v4188
        %v4287 = vsel %vm4255, %v4271, %v4195
        %v4288 = vsel %vm4256, %v4272, %v4202
        %v4289 = vsel %vm4257, %v4273, %v4209
        %vm4290 = vcmp.eq.s32.totalorder %v4082, %v4274
        %vm4291 = vcmp.eq.s32.totalorder %v4082, %v4275
        %vm4292 = vcmp.eq.s32.totalorder %v4082, %v4276
        %vm4293 = vcmp.eq.s32.totalorder %v4082, %v4277
        %vm4294 = vcmp.eq.s32.totalorder %v4082, %v4278
        %vm4295 = vcmp.eq.s32.totalorder %v4082, %v4279
        %vm4296 = vcmp.eq.s32.totalorder %v4082, %v4280
        %vm4297 = vcmp.eq.s32.totalorder %v4082, %v4281
        %vm4298 = vcmp.eq.s32.totalorder %v4082, %v4282
        %vm4299 = vcmp.eq.s32.totalorder %v4082, %v4283
        %vm4300 = vcmp.eq.s32.totalorder %v4082, %v4284
        %vm4301 = vcmp.eq.s32.totalorder %v4082, %v4285
        %vm4302 = vcmp.eq.s32.totalorder %v4082, %v4286
        %vm4303 = vcmp.eq.s32.totalorder %v4082, %v4287
        %vm4304 = vcmp.eq.s32.totalorder %v4082, %v4288
        %vm4305 = vcmp.eq.s32.totalorder %v4082, %v4289
        %v4306 = vsel %vm4290, 1, 0
        %v4307 = vsel %vm4291, 1, 0
        %v4308 = vsel %vm4292, 1, 0
        %v4309 = vsel %vm4293, 1, 0
        %v4310 = vsel %vm4294, 1, 0
        %v4311 = vsel %vm4295, 1, 0
        %v4312 = vsel %vm4296, 1, 0
        %v4313 = vsel %vm4297, 1, 0
        %v4314 = vsel %vm4298, 1, 0
        %v4315 = vsel %vm4299, 1, 0
        %v4316 = vsel %vm4300, 1, 0
        %v4317 = vsel %vm4301, 1, 0
        %v4318 = vsel %vm4302, 1, 0
        %v4319 = vsel %vm4303, 1, 0
        %v4320 = vsel %vm4304, 1, 0
        %v4321 = vsel %vm4305, 1, 0
        %v4322 = vcvt.s32.f32 %v4306
        %v4323 = vcvt.s32.f32 %v4307
        %v4324 = vcvt.s32.f32 %v4308
        %v4325 = vcvt.s32.f32 %v4309
        %v4326 = vcvt.s32.f32 %v4310
        %v4327 = vcvt.s32.f32 %v4311
        %v4328 = vcvt.s32.f32 %v4312
        %v4329 = vcvt.s32.f32 %v4313
        %v4330 = vcvt.s32.f32 %v4314
        %v4331 = vcvt.s32.f32 %v4315
        %v4332 = vcvt.s32.f32 %v4316
        %v4333 = vcvt.s32.f32 %v4317
        %v4334 = vcvt.s32.f32 %v4318
        %v4335 = vcvt.s32.f32 %v4319
        %v4336 = vcvt.s32.f32 %v4320
        %v4337 = vcvt.s32.f32 %v4321
        %4338 = vmatprep.subr.mxu0 0.0
        %4339 = vmatpush1.msra.mxu0 %v4337
        %4340 = vmatprep.subr.mxu0 0.0
        %4341 = vmatpush1.msra.mxu0 %v4336
        %4342 = vmatprep.subr.mxu0 0.0
        %4343 = vmatpush1.msra.mxu0 %v4335
        %4344 = vmatprep.subr.mxu0 0.0
        %4345 = vmatpush1.msra.mxu0 %v4334
        %4346 = vmatprep.subr.mxu0 0.0
        %4347 = vmatpush1.msra.mxu0 %v4333
        %4348 = vmatprep.subr.mxu0 0.0
        %4349 = vmatpush1.msra.mxu0 %v4332
        %4350 = vmatprep.subr.mxu0 0.0
        %4351 = vmatpush1.msra.mxu0 %v4331
        %4352 = vmatprep.subr.mxu0 0.0
        %4353 = vmatpush1.msra.mxu0 %v4330
        %4354 = vmatprep.subr.mxu0 0.0
        %4355 = vmatpush1.msra.mxu0 %v4329
        %4356 = vmatprep.subr.mxu0 0.0
        %4357 = vmatpush1.msra.mxu0 %v4328
        %4358 = vmatprep.subr.mxu0 0.0
        %4359 = vmatpush1.msra.mxu0 %v4327
        %4360 = vmatprep.subr.mxu0 0.0
        %4361 = vmatpush1.msra.mxu0 %v4326
        %4362 = vmatprep.subr.mxu0 0.0
        %4363 = vmatpush1.msra.mxu0 %v4325
        %4364 = vmatprep.subr.mxu0 0.0
        %4365 = vmatpush1.msra.mxu0 %v4324
        %4366 = vmatprep.subr.mxu0 0.0
        %4367 = vmatpush1.msra.mxu0 %v4323
        %4368 = vmatprep.subr.mxu0 0.0
        %4369 = vmatpush1.msra.mxu0 %v4322
        %4370 = vmatprep.subr.mxu0 0.0
        %4371 = vmatpush2.msra.mxu0 0.0
        %4372 = vmatprep.subr.mxu0 0.0
        %4373 = vmatpush2.msra.mxu0 0.0
        %4374 = vmatprep.subr.mxu0 0.0
        %4375 = vmatpush2.msra.mxu0 0.0
        %4376 = vmatprep.subr.mxu0 0.0
        %4377 = vmatpush2.msra.mxu0 0.0
        %4378 = vmatprep.subr.mxu0 0.0
        %4379 = vmatpush2.msra.mxu0 0.0
        %4380 = vmatprep.subr.mxu0 0.0
        %4381 = vmatpush2.msra.mxu0 0.0
        %4382 = vmatprep.subr.mxu0 0.0
        %4383 = vmatpush2.msra.mxu0 0.0
        %4384 = vmatprep.subr.mxu0 0.0
        %4385 = vmatpush2.msra.mxu0 0.0
        %4386 = vmatprep.subr.mxu0 0.0
        %4387 = vmatpush2.msra.mxu0 0.0
        %4388 = vmatprep.subr.mxu0 0.0
        %4389 = vmatpush2.msra.mxu0 0.0
        %4390 = vmatprep.subr.mxu0 0.0
        %4391 = vmatpush2.msra.mxu0 0.0
        %4392 = vmatprep.subr.mxu0 0.0
        %4393 = vmatpush2.msra.mxu0 0.0
        %4394 = vmatprep.subr.mxu0 0.0
        %4395 = vmatpush2.msra.mxu0 0.0
        %4396 = vmatprep.subr.mxu0 0.0
        %4397 = vmatpush2.msra.mxu0 0.0
        %4398 = vmatprep.subr.mxu0 0.0
        %4399 = vmatpush2.msra.mxu0 0.0
        %4400 = vmatprep.subr.mxu0 0.0
        %4401 = vmatpush2.msra.mxu0 0.0
        %4402 = vmatprep.mubr.f32.mxu0 0.0
        %4403 = vmatmul.mubr.f32.gmra.mxu0 %v4026
        %v4404 = vpop.f32.mrf.mxu0
        %v4405 = vadd.f32 0.0, %v4404
        %v4406 = vpop.f32.mrf.mxu0
        %4407 = vmatprep.mubr.f32.mxu0 0.0
        %4408 = vmatmul.mubr.f32.gmra.mxu0 %v4046
        %v4409 = vpop.f32.mrf.mxu0
        %v4410 = vadd.f32 0.0, %v4409
        %v4411 = vpop.f32.mrf.mxu0
        %4412 = vdwg.mxu0
        %v4413 = vadd.s32 %v4065, 4294967232
        %v4414 = vadd.s32 %v4066, 4294967232
        %v4415 = vadd.s32 %v4067, 4294967232
        %v4416 = vadd.s32 %v4068, 4294967232
        %v4417 = vadd.s32 %v4069, 4294967232
        %v4418 = vadd.s32 %v4070, 4294967232
        %v4419 = vadd.s32 %v4071, 4294967232
        %v4420 = vadd.s32 %v4072, 4294967232
        %v4421 = vadd.s32 %v4073, 4294967232
        %v4422 = vadd.s32 %v4074, 4294967232
        %v4423 = vadd.s32 %v4075, 4294967232
        %v4424 = vadd.s32 %v4076, 4294967232
        %v4425 = vadd.s32 %v4077, 4294967232
        %v4426 = vadd.s32 %v4078, 4294967232
        %v4427 = vadd.s32 %v4079, 4294967232
        %v4428 = vadd.s32 %v4080, 4294967232
        %vm4429 = vcmp.lt.s32.totalorder %v4413, 0
        %v4430 = vsub.s32 0, %v4413
        %v4431 = vsel %vm4429, %v4430, %v4413
        %v4432 = vshrl.u32 %v4431, 7
        %v4433 = vand.u32 %v4431, 127
        %v4434 = vsub.s32 0, %v4433
        %v4435 = vsel %vm4429, %v4434, %v4433
        %vm4436 = vcmp.lt.s32.totalorder %v4414, 0
        %v4437 = vsub.s32 0, %v4414
        %v4438 = vsel %vm4436, %v4437, %v4414
        %v4439 = vshrl.u32 %v4438, 7
        %v4440 = vand.u32 %v4438, 127
        %v4441 = vsub.s32 0, %v4440
        %v4442 = vsel %vm4436, %v4441, %v4440
        %vm4443 = vcmp.lt.s32.totalorder %v4415, 0
        %v4444 = vsub.s32 0, %v4415
        %v4445 = vsel %vm4443, %v4444, %v4415
        %v4446 = vshrl.u32 %v4445, 7
        %v4447 = vand.u32 %v4445, 127
        %v4448 = vsub.s32 0, %v4447
        %v4449 = vsel %vm4443, %v4448, %v4447
        %vm4450 = vcmp.lt.s32.totalorder %v4416, 0
        %v4451 = vsub.s32 0, %v4416
        %v4452 = vsel %vm4450, %v4451, %v4416
        %v4453 = vshrl.u32 %v4452, 7
        %v4454 = vand.u32 %v4452, 127
        %v4455 = vsub.s32 0, %v4454
        %v4456 = vsel %vm4450, %v4455, %v4454
        %vm4457 = vcmp.lt.s32.totalorder %v4417, 0
        %v4458 = vsub.s32 0, %v4417
        %v4459 = vsel %vm4457, %v4458, %v4417
        %v4460 = vshrl.u32 %v4459, 7
        %v4461 = vand.u32 %v4459, 127
        %v4462 = vsub.s32 0, %v4461
        %v4463 = vsel %vm4457, %v4462, %v4461
        %vm4464 = vcmp.lt.s32.totalorder %v4418, 0
        %v4465 = vsub.s32 0, %v4418
        %v4466 = vsel %vm4464, %v4465, %v4418
        %v4467 = vshrl.u32 %v4466, 7
        %v4468 = vand.u32 %v4466, 127
        %v4469 = vsub.s32 0, %v4468
        %v4470 = vsel %vm4464, %v4469, %v4468
        %vm4471 = vcmp.lt.s32.totalorder %v4419, 0
        %v4472 = vsub.s32 0, %v4419
        %v4473 = vsel %vm4471, %v4472, %v4419
        %v4474 = vshrl.u32 %v4473, 7
        %v4475 = vand.u32 %v4473, 127
        %v4476 = vsub.s32 0, %v4475
        %v4477 = vsel %vm4471, %v4476, %v4475
        %vm4478 = vcmp.lt.s32.totalorder %v4420, 0
        %v4479 = vsub.s32 0, %v4420
        %v4480 = vsel %vm4478, %v4479, %v4420
        %v4481 = vshrl.u32 %v4480, 7
        %v4482 = vand.u32 %v4480, 127
        %v4483 = vsub.s32 0, %v4482
        %v4484 = vsel %vm4478, %v4483, %v4482
        %vm4485 = vcmp.lt.s32.totalorder %v4421, 0
        %v4486 = vsub.s32 0, %v4421
        %v4487 = vsel %vm4485, %v4486, %v4421
        %v4488 = vshrl.u32 %v4487, 7
        %v4489 = vand.u32 %v4487, 127
        %v4490 = vsub.s32 0, %v4489
        %v4491 = vsel %vm4485, %v4490, %v4489
        %vm4492 = vcmp.lt.s32.totalorder %v4422, 0
        %v4493 = vsub.s32 0, %v4422
        %v4494 = vsel %vm4492, %v4493, %v4422
        %v4495 = vshrl.u32 %v4494, 7
        %v4496 = vand.u32 %v4494, 127
        %v4497 = vsub.s32 0, %v4496
        %v4498 = vsel %vm4492, %v4497, %v4496
        %vm4499 = vcmp.lt.s32.totalorder %v4423, 0
        %v4500 = vsub.s32 0, %v4423
        %v4501 = vsel %vm4499, %v4500, %v4423
        %v4502 = vshrl.u32 %v4501, 7
        %v4503 = vand.u32 %v4501, 127
        %v4504 = vsub.s32 0, %v4503
        %v4505 = vsel %vm4499, %v4504, %v4503
        %vm4506 = vcmp.lt.s32.totalorder %v4424, 0
        %v4507 = vsub.s32 0, %v4424
        %v4508 = vsel %vm4506, %v4507, %v4424
        %v4509 = vshrl.u32 %v4508, 7
        %v4510 = vand.u32 %v4508, 127
        %v4511 = vsub.s32 0, %v4510
        %v4512 = vsel %vm4506, %v4511, %v4510
        %vm4513 = vcmp.lt.s32.totalorder %v4425, 0
        %v4514 = vsub.s32 0, %v4425
        %v4515 = vsel %vm4513, %v4514, %v4425
        %v4516 = vshrl.u32 %v4515, 7
        %v4517 = vand.u32 %v4515, 127
        %v4518 = vsub.s32 0, %v4517
        %v4519 = vsel %vm4513, %v4518, %v4517
        %vm4520 = vcmp.lt.s32.totalorder %v4426, 0
        %v4521 = vsub.s32 0, %v4426
        %v4522 = vsel %vm4520, %v4521, %v4426
        %v4523 = vshrl.u32 %v4522, 7
        %v4524 = vand.u32 %v4522, 127
        %v4525 = vsub.s32 0, %v4524
        %v4526 = vsel %vm4520, %v4525, %v4524
        %vm4527 = vcmp.lt.s32.totalorder %v4427, 0
        %v4528 = vsub.s32 0, %v4427
        %v4529 = vsel %vm4527, %v4528, %v4427
        %v4530 = vshrl.u32 %v4529, 7
        %v4531 = vand.u32 %v4529, 127
        %v4532 = vsub.s32 0, %v4531
        %v4533 = vsel %vm4527, %v4532, %v4531
        %vm4534 = vcmp.lt.s32.totalorder %v4428, 0
        %v4535 = vsub.s32 0, %v4428
        %v4536 = vsel %vm4534, %v4535, %v4428
        %v4537 = vshrl.u32 %v4536, 7
        %v4538 = vand.u32 %v4536, 127
        %v4539 = vsub.s32 0, %v4538
        %v4540 = vsel %vm4534, %v4539, %v4538
        %vm4541 = vcmp.ne.s32.totalorder %v4435, 0
        %vm4542 = vcmp.ne.s32.totalorder %v4442, 0
        %vm4543 = vcmp.ne.s32.totalorder %v4449, 0
        %vm4544 = vcmp.ne.s32.totalorder %v4456, 0
        %vm4545 = vcmp.ne.s32.totalorder %v4463, 0
        %vm4546 = vcmp.ne.s32.totalorder %v4470, 0
        %vm4547 = vcmp.ne.s32.totalorder %v4477, 0
        %vm4548 = vcmp.ne.s32.totalorder %v4484, 0
        %vm4549 = vcmp.ne.s32.totalorder %v4491, 0
        %vm4550 = vcmp.ne.s32.totalorder %v4498, 0
        %vm4551 = vcmp.ne.s32.totalorder %v4505, 0
        %vm4552 = vcmp.ne.s32.totalorder %v4512, 0
        %vm4553 = vcmp.ne.s32.totalorder %v4519, 0
        %vm4554 = vcmp.ne.s32.totalorder %v4526, 0
        %vm4555 = vcmp.ne.s32.totalorder %v4533, 0
        %vm4556 = vcmp.ne.s32.totalorder %v4540, 0
        %vm4557 = vcmp.lt.s32.totalorder %v4435, 0
        %vm4558 = vcmp.lt.s32.totalorder %v4442, 0
        %vm4559 = vcmp.lt.s32.totalorder %v4449, 0
        %vm4560 = vcmp.lt.s32.totalorder %v4456, 0
        %vm4561 = vcmp.lt.s32.totalorder %v4463, 0
        %vm4562 = vcmp.lt.s32.totalorder %v4470, 0
        %vm4563 = vcmp.lt.s32.totalorder %v4477, 0
        %vm4564 = vcmp.lt.s32.totalorder %v4484, 0
        %vm4565 = vcmp.lt.s32.totalorder %v4491, 0
        %vm4566 = vcmp.lt.s32.totalorder %v4498, 0
        %vm4567 = vcmp.lt.s32.totalorder %v4505, 0
        %vm4568 = vcmp.lt.s32.totalorder %v4512, 0
        %vm4569 = vcmp.lt.s32.totalorder %v4519, 0
        %vm4570 = vcmp.lt.s32.totalorder %v4526, 0
        %vm4571 = vcmp.lt.s32.totalorder %v4533, 0
        %vm4572 = vcmp.lt.s32.totalorder %v4540, 0
        %vm4573 = vmand %vm4557, %vm4541
        %vm4574 = vmand %vm4558, %vm4542
        %vm4575 = vmand %vm4559, %vm4543
        %vm4576 = vmand %vm4560, %vm4544
        %vm4577 = vmand %vm4561, %vm4545
        %vm4578 = vmand %vm4562, %vm4546
        %vm4579 = vmand %vm4563, %vm4547
        %vm4580 = vmand %vm4564, %vm4548
        %vm4581 = vmand %vm4565, %vm4549
        %vm4582 = vmand %vm4566, %vm4550
        %vm4583 = vmand %vm4567, %vm4551
        %vm4584 = vmand %vm4568, %vm4552
        %vm4585 = vmand %vm4569, %vm4553
        %vm4586 = vmand %vm4570, %vm4554
        %vm4587 = vmand %vm4571, %vm4555
        %vm4588 = vmand %vm4572, %vm4556
        %v4589 = vadd.s32 %v4435, 128
        %v4590 = vadd.s32 %v4442, 128
        %v4591 = vadd.s32 %v4449, 128
        %v4592 = vadd.s32 %v4456, 128
        %v4593 = vadd.s32 %v4463, 128
        %v4594 = vadd.s32 %v4470, 128
        %v4595 = vadd.s32 %v4477, 128
        %v4596 = vadd.s32 %v4484, 128
        %v4597 = vadd.s32 %v4491, 128
        %v4598 = vadd.s32 %v4498, 128
        %v4599 = vadd.s32 %v4505, 128
        %v4600 = vadd.s32 %v4512, 128
        %v4601 = vadd.s32 %v4519, 128
        %v4602 = vadd.s32 %v4526, 128
        %v4603 = vadd.s32 %v4533, 128
        %v4604 = vadd.s32 %v4540, 128
        %v4605 = vsel %vm4573, %v4589, %v4435
        %v4606 = vsel %vm4574, %v4590, %v4442
        %v4607 = vsel %vm4575, %v4591, %v4449
        %v4608 = vsel %vm4576, %v4592, %v4456
        %v4609 = vsel %vm4577, %v4593, %v4463
        %v4610 = vsel %vm4578, %v4594, %v4470
        %v4611 = vsel %vm4579, %v4595, %v4477
        %v4612 = vsel %vm4580, %v4596, %v4484
        %v4613 = vsel %vm4581, %v4597, %v4491
        %v4614 = vsel %vm4582, %v4598, %v4498
        %v4615 = vsel %vm4583, %v4599, %v4505
        %v4616 = vsel %vm4584, %v4600, %v4512
        %v4617 = vsel %vm4585, %v4601, %v4519
        %v4618 = vsel %vm4586, %v4602, %v4526
        %v4619 = vsel %vm4587, %v4603, %v4533
        %v4620 = vsel %vm4588, %v4604, %v4540
        %vm4621 = vcmp.eq.s32.totalorder %v4082, %v4605
        %vm4622 = vcmp.eq.s32.totalorder %v4082, %v4606
        %vm4623 = vcmp.eq.s32.totalorder %v4082, %v4607
        %vm4624 = vcmp.eq.s32.totalorder %v4082, %v4608
        %vm4625 = vcmp.eq.s32.totalorder %v4082, %v4609
        %vm4626 = vcmp.eq.s32.totalorder %v4082, %v4610
        %vm4627 = vcmp.eq.s32.totalorder %v4082, %v4611
        %vm4628 = vcmp.eq.s32.totalorder %v4082, %v4612
        %vm4629 = vcmp.eq.s32.totalorder %v4082, %v4613
        %vm4630 = vcmp.eq.s32.totalorder %v4082, %v4614
        %vm4631 = vcmp.eq.s32.totalorder %v4082, %v4615
        %vm4632 = vcmp.eq.s32.totalorder %v4082, %v4616
        %vm4633 = vcmp.eq.s32.totalorder %v4082, %v4617
        %vm4634 = vcmp.eq.s32.totalorder %v4082, %v4618
        %vm4635 = vcmp.eq.s32.totalorder %v4082, %v4619
        %vm4636 = vcmp.eq.s32.totalorder %v4082, %v4620
        %v4637 = vsel %vm4621, 1, 0
        %v4638 = vsel %vm4622, 1, 0
        %v4639 = vsel %vm4623, 1, 0
        %v4640 = vsel %vm4624, 1, 0
        %v4641 = vsel %vm4625, 1, 0
        %v4642 = vsel %vm4626, 1, 0
        %v4643 = vsel %vm4627, 1, 0
        %v4644 = vsel %vm4628, 1, 0
        %v4645 = vsel %vm4629, 1, 0
        %v4646 = vsel %vm4630, 1, 0
        %v4647 = vsel %vm4631, 1, 0
        %v4648 = vsel %vm4632, 1, 0
        %v4649 = vsel %vm4633, 1, 0
        %v4650 = vsel %vm4634, 1, 0
        %v4651 = vsel %vm4635, 1, 0
        %v4652 = vsel %vm4636, 1, 0
        %v4653 = vcvt.s32.f32 %v4637
        %v4654 = vcvt.s32.f32 %v4638
        %v4655 = vcvt.s32.f32 %v4639
        %v4656 = vcvt.s32.f32 %v4640
        %v4657 = vcvt.s32.f32 %v4641
        %v4658 = vcvt.s32.f32 %v4642
        %v4659 = vcvt.s32.f32 %v4643
        %v4660 = vcvt.s32.f32 %v4644
        %v4661 = vcvt.s32.f32 %v4645
        %v4662 = vcvt.s32.f32 %v4646
        %v4663 = vcvt.s32.f32 %v4647
        %v4664 = vcvt.s32.f32 %v4648
        %v4665 = vcvt.s32.f32 %v4649
        %v4666 = vcvt.s32.f32 %v4650
        %v4667 = vcvt.s32.f32 %v4651
        %v4668 = vcvt.s32.f32 %v4652
        %4669 = vmatprep.subr.mxu0 0.0
        %4670 = vmatpush1.msra.mxu0 %v4668
        %4671 = vmatprep.subr.mxu0 0.0
        %4672 = vmatpush1.msra.mxu0 %v4667
        %4673 = vmatprep.subr.mxu0 0.0
        %4674 = vmatpush1.msra.mxu0 %v4666
        %4675 = vmatprep.subr.mxu0 0.0
        %4676 = vmatpush1.msra.mxu0 %v4665
        %4677 = vmatprep.subr.mxu0 0.0
        %4678 = vmatpush1.msra.mxu0 %v4664
        %4679 = vmatprep.subr.mxu0 0.0
        %4680 = vmatpush1.msra.mxu0 %v4663
        %4681 = vmatprep.subr.mxu0 0.0
        %4682 = vmatpush1.msra.mxu0 %v4662
        %4683 = vmatprep.subr.mxu0 0.0
        %4684 = vmatpush1.msra.mxu0 %v4661
        %4685 = vmatprep.subr.mxu0 0.0
        %4686 = vmatpush1.msra.mxu0 %v4660
        %4687 = vmatprep.subr.mxu0 0.0
        %4688 = vmatpush1.msra.mxu0 %v4659
        %4689 = vmatprep.subr.mxu0 0.0
        %4690 = vmatpush1.msra.mxu0 %v4658
        %4691 = vmatprep.subr.mxu0 0.0
        %4692 = vmatpush1.msra.mxu0 %v4657
        %4693 = vmatprep.subr.mxu0 0.0
        %4694 = vmatpush1.msra.mxu0 %v4656
        %4695 = vmatprep.subr.mxu0 0.0
        %4696 = vmatpush1.msra.mxu0 %v4655
        %4697 = vmatprep.subr.mxu0 0.0
        %4698 = vmatpush1.msra.mxu0 %v4654
        %4699 = vmatprep.subr.mxu0 0.0
        %4700 = vmatpush1.msra.mxu0 %v4653
        %4701 = vmatprep.subr.mxu0 0.0
        %4702 = vmatpush2.msra.mxu0 0.0
        %4703 = vmatprep.subr.mxu0 0.0
        %4704 = vmatpush2.msra.mxu0 0.0
        %4705 = vmatprep.subr.mxu0 0.0
        %4706 = vmatpush2.msra.mxu0 0.0
        %4707 = vmatprep.subr.mxu0 0.0
        %4708 = vmatpush2.msra.mxu0 0.0
        %4709 = vmatprep.subr.mxu0 0.0
        %4710 = vmatpush2.msra.mxu0 0.0
        %4711 = vmatprep.subr.mxu0 0.0
        %4712 = vmatpush2.msra.mxu0 0.0
        %4713 = vmatprep.subr.mxu0 0.0
        %4714 = vmatpush2.msra.mxu0 0.0
        %4715 = vmatprep.subr.mxu0 0.0
        %4716 = vmatpush2.msra.mxu0 0.0
        %4717 = vmatprep.subr.mxu0 0.0
        %4718 = vmatpush2.msra.mxu0 0.0
        %4719 = vmatprep.subr.mxu0 0.0
        %4720 = vmatpush2.msra.mxu0 0.0
        %4721 = vmatprep.subr.mxu0 0.0
        %4722 = vmatpush2.msra.mxu0 0.0
        %4723 = vmatprep.subr.mxu0 0.0
        %4724 = vmatpush2.msra.mxu0 0.0
        %4725 = vmatprep.subr.mxu0 0.0
        %4726 = vmatpush2.msra.mxu0 0.0
        %4727 = vmatprep.subr.mxu0 0.0
        %4728 = vmatpush2.msra.mxu0 0.0
        %4729 = vmatprep.subr.mxu0 0.0
        %4730 = vmatpush2.msra.mxu0 0.0
        %4731 = vmatprep.subr.mxu0 0.0
        %4732 = vmatpush2.msra.mxu0 0.0
        %4733 = vmatprep.mubr.f32.mxu0 0.0
        %4734 = vmatmul.mubr.f32.gmra.mxu0 %v4041
        %v4735 = vpop.f32.mrf.mxu0
        %v4736 = vadd.f32 0.0, %v4735
        %v4737 = vpop.f32.mrf.mxu0
        %4738 = vmatprep.mubr.f32.mxu0 0.0
        %4739 = vmatmul.mubr.f32.gmra.mxu0 %v4061
        %v4740 = vpop.f32.mrf.mxu0
        %v4741 = vadd.f32 0.0, %v4740
        %v4742 = vpop.f32.mrf.mxu0
        %4743 = vdwg.mxu0
        %v4744 = vadd.s32 %v4066, 16
        %v4745 = vadd.s32 %v4067, 16
        %v4746 = vadd.s32 %v4068, 16
        %v4747 = vadd.s32 %v4069, 16
        %v4748 = vadd.s32 %v4070, 16
        %v4749 = vadd.s32 %v4071, 16
        %v4750 = vadd.s32 %v4072, 16
        %v4751 = vadd.s32 %v4073, 16
        %v4752 = vadd.s32 %v4074, 16
        %v4753 = vadd.s32 %v4075, 16
        %v4754 = vadd.s32 %v4076, 16
        %v4755 = vadd.s32 %v4077, 16
        %v4756 = vadd.s32 %v4078, 16
        %v4757 = vadd.s32 %v4079, 16
        %v4758 = vadd.s32 %v4080, 16
        %vm4759 = vcmp.lt.s32.totalorder %v4067, 0
        %v4760 = vsub.s32 0, %v4067
        %v4761 = vsel %vm4759, %v4760, %v4067
        %v4762 = vshrl.u32 %v4761, 7
        %v4763 = vand.u32 %v4761, 127
        %v4764 = vsub.s32 0, %v4763
        %v4765 = vsel %vm4759, %v4764, %v4763
        %vm4766 = vcmp.lt.s32.totalorder %v4744, 0
        %v4767 = vsub.s32 0, %v4744
        %v4768 = vsel %vm4766, %v4767, %v4744
        %v4769 = vshrl.u32 %v4768, 7
        %v4770 = vand.u32 %v4768, 127
        %v4771 = vsub.s32 0, %v4770
        %v4772 = vsel %vm4766, %v4771, %v4770
        %vm4773 = vcmp.lt.s32.totalorder %v4745, 0
        %v4774 = vsub.s32 0, %v4745
        %v4775 = vsel %vm4773, %v4774, %v4745
        %v4776 = vshrl.u32 %v4775, 7
        %v4777 = vand.u32 %v4775, 127
        %v4778 = vsub.s32 0, %v4777
        %v4779 = vsel %vm4773, %v4778, %v4777
        %vm4780 = vcmp.lt.s32.totalorder %v4746, 0
        %v4781 = vsub.s32 0, %v4746
        %v4782 = vsel %vm4780, %v4781, %v4746
        %v4783 = vshrl.u32 %v4782, 7
        %v4784 = vand.u32 %v4782, 127
        %v4785 = vsub.s32 0, %v4784
        %v4786 = vsel %vm4780, %v4785, %v4784
        %vm4787 = vcmp.lt.s32.totalorder %v4747, 0
        %v4788 = vsub.s32 0, %v4747
        %v4789 = vsel %vm4787, %v4788, %v4747
        %v4790 = vshrl.u32 %v4789, 7
        %v4791 = vand.u32 %v4789, 127
        %v4792 = vsub.s32 0, %v4791
        %v4793 = vsel %vm4787, %v4792, %v4791
        %vm4794 = vcmp.lt.s32.totalorder %v4748, 0
        %v4795 = vsub.s32 0, %v4748
        %v4796 = vsel %vm4794, %v4795, %v4748
        %v4797 = vshrl.u32 %v4796, 7
        %v4798 = vand.u32 %v4796, 127
        %v4799 = vsub.s32 0, %v4798
        %v4800 = vsel %vm4794, %v4799, %v4798
        %vm4801 = vcmp.lt.s32.totalorder %v4749, 0
        %v4802 = vsub.s32 0, %v4749
        %v4803 = vsel %vm4801, %v4802, %v4749
        %v4804 = vshrl.u32 %v4803, 7
        %v4805 = vand.u32 %v4803, 127
        %v4806 = vsub.s32 0, %v4805
        %v4807 = vsel %vm4801, %v4806, %v4805
        %vm4808 = vcmp.lt.s32.totalorder %v4750, 0
        %v4809 = vsub.s32 0, %v4750
        %v4810 = vsel %vm4808, %v4809, %v4750
        %v4811 = vshrl.u32 %v4810, 7
        %v4812 = vand.u32 %v4810, 127
        %v4813 = vsub.s32 0, %v4812
        %v4814 = vsel %vm4808, %v4813, %v4812
        %vm4815 = vcmp.lt.s32.totalorder %v4751, 0
        %v4816 = vsub.s32 0, %v4751
        %v4817 = vsel %vm4815, %v4816, %v4751
        %v4818 = vshrl.u32 %v4817, 7
        %v4819 = vand.u32 %v4817, 127
        %v4820 = vsub.s32 0, %v4819
        %v4821 = vsel %vm4815, %v4820, %v4819
        %vm4822 = vcmp.lt.s32.totalorder %v4752, 0
        %v4823 = vsub.s32 0, %v4752
        %v4824 = vsel %vm4822, %v4823, %v4752
        %v4825 = vshrl.u32 %v4824, 7
        %v4826 = vand.u32 %v4824, 127
        %v4827 = vsub.s32 0, %v4826
        %v4828 = vsel %vm4822, %v4827, %v4826
        %vm4829 = vcmp.lt.s32.totalorder %v4753, 0
        %v4830 = vsub.s32 0, %v4753
        %v4831 = vsel %vm4829, %v4830, %v4753
        %v4832 = vshrl.u32 %v4831, 7
        %v4833 = vand.u32 %v4831, 127
        %v4834 = vsub.s32 0, %v4833
        %v4835 = vsel %vm4829, %v4834, %v4833
        %vm4836 = vcmp.lt.s32.totalorder %v4754, 0
        %v4837 = vsub.s32 0, %v4754
        %v4838 = vsel %vm4836, %v4837, %v4754
        %v4839 = vshrl.u32 %v4838, 7
        %v4840 = vand.u32 %v4838, 127
        %v4841 = vsub.s32 0, %v4840
        %v4842 = vsel %vm4836, %v4841, %v4840
        %vm4843 = vcmp.lt.s32.totalorder %v4755, 0
        %v4844 = vsub.s32 0, %v4755
        %v4845 = vsel %vm4843, %v4844, %v4755
        %v4846 = vshrl.u32 %v4845, 7
        %v4847 = vand.u32 %v4845, 127
        %v4848 = vsub.s32 0, %v4847
        %v4849 = vsel %vm4843, %v4848, %v4847
        %vm4850 = vcmp.lt.s32.totalorder %v4756, 0
        %v4851 = vsub.s32 0, %v4756
        %v4852 = vsel %vm4850, %v4851, %v4756
        %v4853 = vshrl.u32 %v4852, 7
        %v4854 = vand.u32 %v4852, 127
        %v4855 = vsub.s32 0, %v4854
        %v4856 = vsel %vm4850, %v4855, %v4854
        %vm4857 = vcmp.lt.s32.totalorder %v4757, 0
        %v4858 = vsub.s32 0, %v4757
        %v4859 = vsel %vm4857, %v4858, %v4757
        %v4860 = vshrl.u32 %v4859, 7
        %v4861 = vand.u32 %v4859, 127
        %v4862 = vsub.s32 0, %v4861
        %v4863 = vsel %vm4857, %v4862, %v4861
        %vm4864 = vcmp.lt.s32.totalorder %v4758, 0
        %v4865 = vsub.s32 0, %v4758
        %v4866 = vsel %vm4864, %v4865, %v4758
        %v4867 = vshrl.u32 %v4866, 7
        %v4868 = vand.u32 %v4866, 127
        %v4869 = vsub.s32 0, %v4868
        %v4870 = vsel %vm4864, %v4869, %v4868
        %vm4871 = vcmp.ne.s32.totalorder %v4765, 0
        %vm4872 = vcmp.ne.s32.totalorder %v4772, 0
        %vm4873 = vcmp.ne.s32.totalorder %v4779, 0
        %vm4874 = vcmp.ne.s32.totalorder %v4786, 0
        %vm4875 = vcmp.ne.s32.totalorder %v4793, 0
        %vm4876 = vcmp.ne.s32.totalorder %v4800, 0
        %vm4877 = vcmp.ne.s32.totalorder %v4807, 0
        %vm4878 = vcmp.ne.s32.totalorder %v4814, 0
        %vm4879 = vcmp.ne.s32.totalorder %v4821, 0
        %vm4880 = vcmp.ne.s32.totalorder %v4828, 0
        %vm4881 = vcmp.ne.s32.totalorder %v4835, 0
        %vm4882 = vcmp.ne.s32.totalorder %v4842, 0
        %vm4883 = vcmp.ne.s32.totalorder %v4849, 0
        %vm4884 = vcmp.ne.s32.totalorder %v4856, 0
        %vm4885 = vcmp.ne.s32.totalorder %v4863, 0
        %vm4886 = vcmp.ne.s32.totalorder %v4870, 0
        %vm4887 = vcmp.lt.s32.totalorder %v4765, 0
        %vm4888 = vcmp.lt.s32.totalorder %v4772, 0
        %vm4889 = vcmp.lt.s32.totalorder %v4779, 0
        %vm4890 = vcmp.lt.s32.totalorder %v4786, 0
        %vm4891 = vcmp.lt.s32.totalorder %v4793, 0
        %vm4892 = vcmp.lt.s32.totalorder %v4800, 0
        %vm4893 = vcmp.lt.s32.totalorder %v4807, 0
        %vm4894 = vcmp.lt.s32.totalorder %v4814, 0
        %vm4895 = vcmp.lt.s32.totalorder %v4821, 0
        %vm4896 = vcmp.lt.s32.totalorder %v4828, 0
        %vm4897 = vcmp.lt.s32.totalorder %v4835, 0
        %vm4898 = vcmp.lt.s32.totalorder %v4842, 0
        %vm4899 = vcmp.lt.s32.totalorder %v4849, 0
        %vm4900 = vcmp.lt.s32.totalorder %v4856, 0
        %vm4901 = vcmp.lt.s32.totalorder %v4863, 0
        %vm4902 = vcmp.lt.s32.totalorder %v4870, 0
        %vm4903 = vmand %vm4887, %vm4871
        %vm4904 = vmand %vm4888, %vm4872
        %vm4905 = vmand %vm4889, %vm4873
        %vm4906 = vmand %vm4890, %vm4874
        %vm4907 = vmand %vm4891, %vm4875
        %vm4908 = vmand %vm4892, %vm4876
        %vm4909 = vmand %vm4893, %vm4877
        %vm4910 = vmand %vm4894, %vm4878
        %vm4911 = vmand %vm4895, %vm4879
        %vm4912 = vmand %vm4896, %vm4880
        %vm4913 = vmand %vm4897, %vm4881
        %vm4914 = vmand %vm4898, %vm4882
        %vm4915 = vmand %vm4899, %vm4883
        %vm4916 = vmand %vm4900, %vm4884
        %vm4917 = vmand %vm4901, %vm4885
        %vm4918 = vmand %vm4902, %vm4886
        %v4919 = vadd.s32 %v4765, 128
        %v4920 = vadd.s32 %v4772, 128
        %v4921 = vadd.s32 %v4779, 128
        %v4922 = vadd.s32 %v4786, 128
        %v4923 = vadd.s32 %v4793, 128
        %v4924 = vadd.s32 %v4800, 128
        %v4925 = vadd.s32 %v4807, 128
        %v4926 = vadd.s32 %v4814, 128
        %v4927 = vadd.s32 %v4821, 128
        %v4928 = vadd.s32 %v4828, 128
        %v4929 = vadd.s32 %v4835, 128
        %v4930 = vadd.s32 %v4842, 128
        %v4931 = vadd.s32 %v4849, 128
        %v4932 = vadd.s32 %v4856, 128
        %v4933 = vadd.s32 %v4863, 128
        %v4934 = vadd.s32 %v4870, 128
        %v4935 = vsel %vm4903, %v4919, %v4765
        %v4936 = vsel %vm4904, %v4920, %v4772
        %v4937 = vsel %vm4905, %v4921, %v4779
        %v4938 = vsel %vm4906, %v4922, %v4786
        %v4939 = vsel %vm4907, %v4923, %v4793
        %v4940 = vsel %vm4908, %v4924, %v4800
        %v4941 = vsel %vm4909, %v4925, %v4807
        %v4942 = vsel %vm4910, %v4926, %v4814
        %v4943 = vsel %vm4911, %v4927, %v4821
        %v4944 = vsel %vm4912, %v4928, %v4828
        %v4945 = vsel %vm4913, %v4929, %v4835
        %v4946 = vsel %vm4914, %v4930, %v4842
        %v4947 = vsel %vm4915, %v4931, %v4849
        %v4948 = vsel %vm4916, %v4932, %v4856
        %v4949 = vsel %vm4917, %v4933, %v4863
        %v4950 = vsel %vm4918, %v4934, %v4870
        %vm4951 = vcmp.eq.s32.totalorder %v4082, %v4935
        %vm4952 = vcmp.eq.s32.totalorder %v4082, %v4936
        %vm4953 = vcmp.eq.s32.totalorder %v4082, %v4937
        %vm4954 = vcmp.eq.s32.totalorder %v4082, %v4938
        %vm4955 = vcmp.eq.s32.totalorder %v4082, %v4939
        %vm4956 = vcmp.eq.s32.totalorder %v4082, %v4940
        %vm4957 = vcmp.eq.s32.totalorder %v4082, %v4941
        %vm4958 = vcmp.eq.s32.totalorder %v4082, %v4942
        %vm4959 = vcmp.eq.s32.totalorder %v4082, %v4943
        %vm4960 = vcmp.eq.s32.totalorder %v4082, %v4944
        %vm4961 = vcmp.eq.s32.totalorder %v4082, %v4945
        %vm4962 = vcmp.eq.s32.totalorder %v4082, %v4946
        %vm4963 = vcmp.eq.s32.totalorder %v4082, %v4947
        %vm4964 = vcmp.eq.s32.totalorder %v4082, %v4948
        %vm4965 = vcmp.eq.s32.totalorder %v4082, %v4949
        %vm4966 = vcmp.eq.s32.totalorder %v4082, %v4950
        %v4967 = vsel %vm4951, 1, 0
        %v4968 = vsel %vm4952, 1, 0
        %v4969 = vsel %vm4953, 1, 0
        %v4970 = vsel %vm4954, 1, 0
        %v4971 = vsel %vm4955, 1, 0
        %v4972 = vsel %vm4956, 1, 0
        %v4973 = vsel %vm4957, 1, 0
        %v4974 = vsel %vm4958, 1, 0
        %v4975 = vsel %vm4959, 1, 0
        %v4976 = vsel %vm4960, 1, 0
        %v4977 = vsel %vm4961, 1, 0
        %v4978 = vsel %vm4962, 1, 0
        %v4979 = vsel %vm4963, 1, 0
        %v4980 = vsel %vm4964, 1, 0
        %v4981 = vsel %vm4965, 1, 0
        %v4982 = vsel %vm4966, 1, 0
        %v4983 = vcvt.s32.f32 %v4967
        %v4984 = vcvt.s32.f32 %v4968
        %v4985 = vcvt.s32.f32 %v4969
        %v4986 = vcvt.s32.f32 %v4970
        %v4987 = vcvt.s32.f32 %v4971
        %v4988 = vcvt.s32.f32 %v4972
        %v4989 = vcvt.s32.f32 %v4973
        %v4990 = vcvt.s32.f32 %v4974
        %v4991 = vcvt.s32.f32 %v4975
        %v4992 = vcvt.s32.f32 %v4976
        %v4993 = vcvt.s32.f32 %v4977
        %v4994 = vcvt.s32.f32 %v4978
        %v4995 = vcvt.s32.f32 %v4979
        %v4996 = vcvt.s32.f32 %v4980
        %v4997 = vcvt.s32.f32 %v4981
        %v4998 = vcvt.s32.f32 %v4982
        %v5011 = vrot.slane %v4026, 7
        %vm5012 = vcmask 1041409
        %v5013 = vsel %vm5012, %v5011, %v4405
        %v5014 = vrot.slane %v4031, 6
        %vm5015 = vcmask 1042434
        %v5016 = vsel %vm5015, %v5014, %v5013
        %v5017 = vrot.slane %v4036, 5
        %vm5018 = vcmask 1043459
        %v5019 = vsel %vm5018, %v5017, %v5016
        %v5020 = vrot.slane %v4041, 4
        %vm5021 = vcmask 1044484
        %v5022 = vsel %vm5021, %v5020, %v5019
        %v5023 = vrot.slane %v4736, 3
        %vm5024 = vcmask 1045509
        %v5025 = vsel %vm5024, %v5023, %v5022
        %v5026 = vrot.slane %v4410, 2
        %vm5027 = vcmask 1046534
        %v5028 = vsel %vm5027, %v5026, %v5025
        %v5029 = vrot.slane %v4046, 1
        %vm5030 = vcmask 1047559
        %v5031 = vsel %vm5030, %v5029, %v5028
        %v5032 = vrot.slane %v4056, 7
        %v5033 = vsel %vm5012, %v5032, %v4051
        %v5034 = vrot.slane %v4061, 6
        %v5035 = vsel %vm5015, %v5034, %v5033
        %v5036 = vrot.slane %v4741, 5
        %v5037 = vsel %vm5018, %v5036, %v5035
        %5040 = vmatprep.subr.mxu0 0.0
        %5041 = vmatpush1.msra.mxu0 %v4998
        %5042 = vmatprep.subr.mxu0 0.0
        %5043 = vmatpush1.msra.mxu0 %v4997
        %5044 = vmatprep.subr.mxu0 0.0
        %5045 = vmatpush1.msra.mxu0 %v4996
        %5046 = vmatprep.subr.mxu0 0.0
        %5047 = vmatpush1.msra.mxu0 %v4995
        %5048 = vmatprep.subr.mxu0 0.0
        %5049 = vmatpush1.msra.mxu0 %v4994
        %5050 = vmatprep.subr.mxu0 0.0
        %5051 = vmatpush1.msra.mxu0 %v4993
        %5052 = vmatprep.subr.mxu0 0.0
        %5053 = vmatpush1.msra.mxu0 %v4992
        %5054 = vmatprep.subr.mxu0 0.0
        %5055 = vmatpush1.msra.mxu0 %v4991
        %5056 = vmatprep.subr.mxu0 0.0
        %5057 = vmatpush1.msra.mxu0 %v4990
        %5058 = vmatprep.subr.mxu0 0.0
        %5059 = vmatpush1.msra.mxu0 %v4989
        %5060 = vmatprep.subr.mxu0 0.0
        %5061 = vmatpush1.msra.mxu0 %v4988
        %5062 = vmatprep.subr.mxu0 0.0
        %5063 = vmatpush1.msra.mxu0 %v4987
        %5064 = vmatprep.subr.mxu0 0.0
        %5065 = vmatpush1.msra.mxu0 %v4986
        %5066 = vmatprep.subr.mxu0 0.0
        %5067 = vmatpush1.msra.mxu0 %v4985
        %5068 = vmatprep.subr.mxu0 0.0
        %5069 = vmatpush1.msra.mxu0 %v4984
        %5070 = vmatprep.subr.mxu0 0.0
        %5071 = vmatpush1.msra.mxu0 %v4983
        %5072 = vmatprep.subr.mxu0 0.0
        %5073 = vmatpush2.msra.mxu0 0.0
        %5074 = vmatprep.subr.mxu0 0.0
        %5075 = vmatpush2.msra.mxu0 0.0
        %5076 = vmatprep.subr.mxu0 0.0
        %5077 = vmatpush2.msra.mxu0 0.0
        %5078 = vmatprep.subr.mxu0 0.0
        %5079 = vmatpush2.msra.mxu0 0.0
        %5080 = vmatprep.subr.mxu0 0.0
        %5081 = vmatpush2.msra.mxu0 0.0
        %5082 = vmatprep.subr.mxu0 0.0
        %5083 = vmatpush2.msra.mxu0 0.0
        %5084 = vmatprep.subr.mxu0 0.0
        %5085 = vmatpush2.msra.mxu0 0.0
        %5086 = vmatprep.subr.mxu0 0.0
        %5087 = vmatpush2.msra.mxu0 0.0
        %5088 = vmatprep.subr.mxu0 0.0
        %5089 = vmatpush2.msra.mxu0 0.0
        %5090 = vmatprep.subr.mxu0 0.0
        %5091 = vmatpush2.msra.mxu0 0.0
        %5092 = vmatprep.subr.mxu0 0.0
        %5093 = vmatpush2.msra.mxu0 0.0
        %5094 = vmatprep.subr.mxu0 0.0
        %5095 = vmatpush2.msra.mxu0 0.0
        %5096 = vmatprep.subr.mxu0 0.0
        %5097 = vmatpush2.msra.mxu0 0.0
        %5098 = vmatprep.subr.mxu0 0.0
        %5099 = vmatpush2.msra.mxu0 0.0
        %5100 = vmatprep.subr.mxu0 0.0
        %5101 = vmatpush2.msra.mxu0 0.0
        %5102 = vmatprep.subr.mxu0 0.0
        %5103 = vmatpush2.msra.mxu0 0.0
        %5104 = vmatprep.mubr.f32.mxu0 0.0
        %5105 = vmatmul.mubr.f32.gmra.mxu0 %v5031
        %v5106 = vpop.f32.mrf.mxu0
        %v5107 = vadd.f32 0.0, %v5106
        %v5108 = vpop.f32.mrf.mxu0
        %5109 = vmatprep.mubr.f32.mxu0 0.0
        %5110 = vmatmul.mubr.f32.gmra.mxu0 %v5037
        %v5111 = vpop.f32.mrf.mxu0
        %v5112 = vadd.f32 0.0, %v5111
        %v5113 = vpop.f32.mrf.mxu0
        %5114 = vdwg.mxu0
        %v5117 = vcombine.high %v5107, %v5107
        %v5119 = vunpack.c.l.s4 1966171168
        %v5120 = vunpack.c.0.s8 %v5119
        %v5121 = vlaneseq
        %v5122 = vshrl.u32 %v5121, 7
        %v5123 = vsub.s32 %v5120, %v5122
        %v5124 = vrot.slane %v5107, %v5123
        %v5126 = vunpack.c.l.s4 1966171168
        %v5127 = vunpack.c.0.s8 %v5126
        %v5128 = vlaneseq
        %v5129 = vshrl.u32 %v5128, 7
        %v5130 = vsub.s32 %v5127, %v5129
        %v5131 = vrot.slane %v5117, %v5130
        %v5132 = vcombine.high %v5124, %v5124
        %v5133 = vcombine.high %v5131, %v5131
        %v5135 = vunpack.c.l.s4 1966171168
        %v5136 = vunpack.c.0.s8 %v5135
        %v5137 = vlaneseq
        %v5138 = vshrl.u32 %v5137, 7
        %v5139 = vsub.s32 %v5136, %v5138
        %v5140 = vrot.slane %v5124, %v5139
        %v5142 = vunpack.c.l.s4 1966171168
        %v5143 = vunpack.c.0.s8 %v5142
        %v5144 = vlaneseq
        %v5145 = vshrl.u32 %v5144, 7
        %v5146 = vsub.s32 %v5143, %v5145
        %v5147 = vrot.slane %v5131, %v5146
        %v5149 = vunpack.c.l.s4 1966171168
        %v5150 = vunpack.c.0.s8 %v5149
        %v5151 = vlaneseq
        %v5152 = vshrl.u32 %v5151, 7
        %v5153 = vsub.s32 %v5150, %v5152
        %v5154 = vrot.slane %v5132, %v5153
        %v5156 = vunpack.c.l.s4 1966171168
        %v5157 = vunpack.c.0.s8 %v5156
        %v5158 = vlaneseq
        %v5159 = vshrl.u32 %v5158, 7
        %v5160 = vsub.s32 %v5157, %v5159
        %v5161 = vrot.slane %v5133, %v5160
        %v5162 = vcombine.high %v5140, %v5140
        %v5163 = vcombine.high %v5147, %v5147
        %v5164 = vcombine.high %v5154, %v5154
        %v5165 = vcombine.high %v5161, %v5161
        %v5167 = vunpack.c.l.s4 1966171168
        %v5168 = vunpack.c.0.s8 %v5167
        %v5169 = vlaneseq
        %v5170 = vshrl.u32 %v5169, 7
        %v5171 = vsub.s32 %v5168, %v5170
        %v5172 = vrot.slane %v5112, %v5171
        %v5173 = vcombine.high %v5172, %v5172
        %v5175 = vunpack.c.l.s4 1966171168
        %v5176 = vunpack.c.0.s8 %v5175
        %v5177 = vlaneseq
        %v5178 = vshrl.u32 %v5177, 7
        %v5179 = vsub.s32 %v5176, %v5178
        %v5180 = vrot.slane %v5172, %v5179
        %v5182 = vunpack.c.l.s4 1966171168
        %v5183 = vunpack.c.0.s8 %v5182
        %v5184 = vlaneseq
        %v5185 = vshrl.u32 %v5184, 7
        %v5186 = vsub.s32 %v5183, %v5185
        %v5187 = vrot.slane %v5173, %v5186
        %v5188 = vcombine.high %v5180, %v5180
        %v5189 = vcombine.high %v5187, %v5187
        %v5202 = vadd.s32 %v4065, 4294967280
        %v5203 = vadd.s32 %v4066, 4294967280
        %v5204 = vadd.s32 %v4067, 4294967280
        %v5205 = vadd.s32 %v4068, 4294967280
        %v5206 = vadd.s32 %v4069, 4294967280
        %v5207 = vadd.s32 %v4070, 4294967280
        %v5208 = vadd.s32 %v4071, 4294967280
        %v5209 = vadd.s32 %v4072, 4294967280
        %v5210 = vadd.s32 %v4073, 4294967280
        %v5211 = vadd.s32 %v4074, 4294967280
        %v5212 = vadd.s32 %v4075, 4294967280
        %v5213 = vadd.s32 %v4076, 4294967280
        %v5214 = vadd.s32 %v4077, 4294967280
        %v5215 = vadd.s32 %v4078, 4294967280
        %v5216 = vadd.s32 %v4079, 4294967280
        %v5217 = vadd.s32 %v4080, 4294967280
        %vm5218 = vcmp.lt.s32.totalorder %v5202, 0
        %v5219 = vsub.s32 0, %v5202
        %v5220 = vsel %vm5218, %v5219, %v5202
        %v5221 = vshrl.u32 %v5220, 7
        %v5222 = vand.u32 %v5220, 127
        %v5223 = vsub.s32 0, %v5222
        %v5224 = vsel %vm5218, %v5223, %v5222
        %vm5225 = vcmp.lt.s32.totalorder %v5203, 0
        %v5226 = vsub.s32 0, %v5203
        %v5227 = vsel %vm5225, %v5226, %v5203
        %v5228 = vshrl.u32 %v5227, 7
        %v5229 = vand.u32 %v5227, 127
        %v5230 = vsub.s32 0, %v5229
        %v5231 = vsel %vm5225, %v5230, %v5229
        %vm5232 = vcmp.lt.s32.totalorder %v5204, 0
        %v5233 = vsub.s32 0, %v5204
        %v5234 = vsel %vm5232, %v5233, %v5204
        %v5235 = vshrl.u32 %v5234, 7
        %v5236 = vand.u32 %v5234, 127
        %v5237 = vsub.s32 0, %v5236
        %v5238 = vsel %vm5232, %v5237, %v5236
        %vm5239 = vcmp.lt.s32.totalorder %v5205, 0
        %v5240 = vsub.s32 0, %v5205
        %v5241 = vsel %vm5239, %v5240, %v5205
        %v5242 = vshrl.u32 %v5241, 7
        %v5243 = vand.u32 %v5241, 127
        %v5244 = vsub.s32 0, %v5243
        %v5245 = vsel %vm5239, %v5244, %v5243
        %vm5246 = vcmp.lt.s32.totalorder %v5206, 0
        %v5247 = vsub.s32 0, %v5206
        %v5248 = vsel %vm5246, %v5247, %v5206
        %v5249 = vshrl.u32 %v5248, 7
        %v5250 = vand.u32 %v5248, 127
        %v5251 = vsub.s32 0, %v5250
        %v5252 = vsel %vm5246, %v5251, %v5250
        %vm5253 = vcmp.lt.s32.totalorder %v5207, 0
        %v5254 = vsub.s32 0, %v5207
        %v5255 = vsel %vm5253, %v5254, %v5207
        %v5256 = vshrl.u32 %v5255, 7
        %v5257 = vand.u32 %v5255, 127
        %v5258 = vsub.s32 0, %v5257
        %v5259 = vsel %vm5253, %v5258, %v5257
        %vm5260 = vcmp.lt.s32.totalorder %v5208, 0
        %v5261 = vsub.s32 0, %v5208
        %v5262 = vsel %vm5260, %v5261, %v5208
        %v5263 = vshrl.u32 %v5262, 7
        %v5264 = vand.u32 %v5262, 127
        %v5265 = vsub.s32 0, %v5264
        %v5266 = vsel %vm5260, %v5265, %v5264
        %vm5267 = vcmp.lt.s32.totalorder %v5209, 0
        %v5268 = vsub.s32 0, %v5209
        %v5269 = vsel %vm5267, %v5268, %v5209
        %v5270 = vshrl.u32 %v5269, 7
        %v5271 = vand.u32 %v5269, 127
        %v5272 = vsub.s32 0, %v5271
        %v5273 = vsel %vm5267, %v5272, %v5271
        %vm5274 = vcmp.lt.s32.totalorder %v5210, 0
        %v5275 = vsub.s32 0, %v5210
        %v5276 = vsel %vm5274, %v5275, %v5210
        %v5277 = vshrl.u32 %v5276, 7
        %v5278 = vand.u32 %v5276, 127
        %v5279 = vsub.s32 0, %v5278
        %v5280 = vsel %vm5274, %v5279, %v5278
        %vm5281 = vcmp.lt.s32.totalorder %v5211, 0
        %v5282 = vsub.s32 0, %v5211
        %v5283 = vsel %vm5281, %v5282, %v5211
        %v5284 = vshrl.u32 %v5283, 7
        %v5285 = vand.u32 %v5283, 127
        %v5286 = vsub.s32 0, %v5285
        %v5287 = vsel %vm5281, %v5286, %v5285
        %vm5288 = vcmp.lt.s32.totalorder %v5212, 0
        %v5289 = vsub.s32 0, %v5212
        %v5290 = vsel %vm5288, %v5289, %v5212
        %v5291 = vshrl.u32 %v5290, 7
        %v5292 = vand.u32 %v5290, 127
        %v5293 = vsub.s32 0, %v5292
        %v5294 = vsel %vm5288, %v5293, %v5292
        %vm5295 = vcmp.lt.s32.totalorder %v5213, 0
        %v5296 = vsub.s32 0, %v5213
        %v5297 = vsel %vm5295, %v5296, %v5213
        %v5298 = vshrl.u32 %v5297, 7
        %v5299 = vand.u32 %v5297, 127
        %v5300 = vsub.s32 0, %v5299
        %v5301 = vsel %vm5295, %v5300, %v5299
        %vm5302 = vcmp.lt.s32.totalorder %v5214, 0
        %v5303 = vsub.s32 0, %v5214
        %v5304 = vsel %vm5302, %v5303, %v5214
        %v5305 = vshrl.u32 %v5304, 7
        %v5306 = vand.u32 %v5304, 127
        %v5307 = vsub.s32 0, %v5306
        %v5308 = vsel %vm5302, %v5307, %v5306
        %vm5309 = vcmp.lt.s32.totalorder %v5215, 0
        %v5310 = vsub.s32 0, %v5215
        %v5311 = vsel %vm5309, %v5310, %v5215
        %v5312 = vshrl.u32 %v5311, 7
        %v5313 = vand.u32 %v5311, 127
        %v5314 = vsub.s32 0, %v5313
        %v5315 = vsel %vm5309, %v5314, %v5313
        %vm5316 = vcmp.lt.s32.totalorder %v5216, 0
        %v5317 = vsub.s32 0, %v5216
        %v5318 = vsel %vm5316, %v5317, %v5216
        %v5319 = vshrl.u32 %v5318, 7
        %v5320 = vand.u32 %v5318, 127
        %v5321 = vsub.s32 0, %v5320
        %v5322 = vsel %vm5316, %v5321, %v5320
        %vm5323 = vcmp.lt.s32.totalorder %v5217, 0
        %v5324 = vsub.s32 0, %v5217
        %v5325 = vsel %vm5323, %v5324, %v5217
        %v5326 = vshrl.u32 %v5325, 7
        %v5327 = vand.u32 %v5325, 127
        %v5328 = vsub.s32 0, %v5327
        %v5329 = vsel %vm5323, %v5328, %v5327
        %vm5330 = vcmp.ne.s32.totalorder %v5224, 0
        %vm5331 = vcmp.ne.s32.totalorder %v5231, 0
        %vm5332 = vcmp.ne.s32.totalorder %v5238, 0
        %vm5333 = vcmp.ne.s32.totalorder %v5245, 0
        %vm5334 = vcmp.ne.s32.totalorder %v5252, 0
        %vm5335 = vcmp.ne.s32.totalorder %v5259, 0
        %vm5336 = vcmp.ne.s32.totalorder %v5266, 0
        %vm5337 = vcmp.ne.s32.totalorder %v5273, 0
        %vm5338 = vcmp.ne.s32.totalorder %v5280, 0
        %vm5339 = vcmp.ne.s32.totalorder %v5287, 0
        %vm5340 = vcmp.ne.s32.totalorder %v5294, 0
        %vm5341 = vcmp.ne.s32.totalorder %v5301, 0
        %vm5342 = vcmp.ne.s32.totalorder %v5308, 0
        %vm5343 = vcmp.ne.s32.totalorder %v5315, 0
        %vm5344 = vcmp.ne.s32.totalorder %v5322, 0
        %vm5345 = vcmp.ne.s32.totalorder %v5329, 0
        %vm5346 = vcmp.lt.s32.totalorder %v5224, 0
        %vm5347 = vcmp.lt.s32.totalorder %v5231, 0
        %vm5348 = vcmp.lt.s32.totalorder %v5238, 0
        %vm5349 = vcmp.lt.s32.totalorder %v5245, 0
        %vm5350 = vcmp.lt.s32.totalorder %v5252, 0
        %vm5351 = vcmp.lt.s32.totalorder %v5259, 0
        %vm5352 = vcmp.lt.s32.totalorder %v5266, 0
        %vm5353 = vcmp.lt.s32.totalorder %v5273, 0
        %vm5354 = vcmp.lt.s32.totalorder %v5280, 0
        %vm5355 = vcmp.lt.s32.totalorder %v5287, 0
        %vm5356 = vcmp.lt.s32.totalorder %v5294, 0
        %vm5357 = vcmp.lt.s32.totalorder %v5301, 0
        %vm5358 = vcmp.lt.s32.totalorder %v5308, 0
        %vm5359 = vcmp.lt.s32.totalorder %v5315, 0
        %vm5360 = vcmp.lt.s32.totalorder %v5322, 0
        %vm5361 = vcmp.lt.s32.totalorder %v5329, 0
        %vm5362 = vmand %vm5346, %vm5330
        %vm5363 = vmand %vm5347, %vm5331
        %vm5364 = vmand %vm5348, %vm5332
        %vm5365 = vmand %vm5349, %vm5333
        %vm5366 = vmand %vm5350, %vm5334
        %vm5367 = vmand %vm5351, %vm5335
        %vm5368 = vmand %vm5352, %vm5336
        %vm5369 = vmand %vm5353, %vm5337
        %vm5370 = vmand %vm5354, %vm5338
        %vm5371 = vmand %vm5355, %vm5339
        %vm5372 = vmand %vm5356, %vm5340
        %vm5373 = vmand %vm5357, %vm5341
        %vm5374 = vmand %vm5358, %vm5342
        %vm5375 = vmand %vm5359, %vm5343
        %vm5376 = vmand %vm5360, %vm5344
        %vm5377 = vmand %vm5361, %vm5345
        %v5378 = vadd.s32 %v5224, 128
        %v5379 = vadd.s32 %v5231, 128
        %v5380 = vadd.s32 %v5238, 128
        %v5381 = vadd.s32 %v5245, 128
        %v5382 = vadd.s32 %v5252, 128
        %v5383 = vadd.s32 %v5259, 128
        %v5384 = vadd.s32 %v5266, 128
        %v5385 = vadd.s32 %v5273, 128
        %v5386 = vadd.s32 %v5280, 128
        %v5387 = vadd.s32 %v5287, 128
        %v5388 = vadd.s32 %v5294, 128
        %v5389 = vadd.s32 %v5301, 128
        %v5390 = vadd.s32 %v5308, 128
        %v5391 = vadd.s32 %v5315, 128
        %v5392 = vadd.s32 %v5322, 128
        %v5393 = vadd.s32 %v5329, 128
        %v5394 = vsel %vm5362, %v5378, %v5224
        %v5395 = vsel %vm5363, %v5379, %v5231
        %v5396 = vsel %vm5364, %v5380, %v5238
        %v5397 = vsel %vm5365, %v5381, %v5245
        %v5398 = vsel %vm5366, %v5382, %v5252
        %v5399 = vsel %vm5367, %v5383, %v5259
        %v5400 = vsel %vm5368, %v5384, %v5266
        %v5401 = vsel %vm5369, %v5385, %v5273
        %v5402 = vsel %vm5370, %v5386, %v5280
        %v5403 = vsel %vm5371, %v5387, %v5287
        %v5404 = vsel %vm5372, %v5388, %v5294
        %v5405 = vsel %vm5373, %v5389, %v5301
        %v5406 = vsel %vm5374, %v5390, %v5308
        %v5407 = vsel %vm5375, %v5391, %v5315
        %v5408 = vsel %vm5376, %v5392, %v5322
        %v5409 = vsel %vm5377, %v5393, %v5329
        %vm5410 = vcmp.eq.s32.totalorder %v4082, %v5394
        %vm5411 = vcmp.eq.s32.totalorder %v4082, %v5395
        %vm5412 = vcmp.eq.s32.totalorder %v4082, %v5396
        %vm5413 = vcmp.eq.s32.totalorder %v4082, %v5397
        %vm5414 = vcmp.eq.s32.totalorder %v4082, %v5398
        %vm5415 = vcmp.eq.s32.totalorder %v4082, %v5399
        %vm5416 = vcmp.eq.s32.totalorder %v4082, %v5400
        %vm5417 = vcmp.eq.s32.totalorder %v4082, %v5401
        %vm5418 = vcmp.eq.s32.totalorder %v4082, %v5402
        %vm5419 = vcmp.eq.s32.totalorder %v4082, %v5403
        %vm5420 = vcmp.eq.s32.totalorder %v4082, %v5404
        %vm5421 = vcmp.eq.s32.totalorder %v4082, %v5405
        %vm5422 = vcmp.eq.s32.totalorder %v4082, %v5406
        %vm5423 = vcmp.eq.s32.totalorder %v4082, %v5407
        %vm5424 = vcmp.eq.s32.totalorder %v4082, %v5408
        %vm5425 = vcmp.eq.s32.totalorder %v4082, %v5409
        %v5426 = vsel %vm5410, 1, 0
        %v5427 = vsel %vm5411, 1, 0
        %v5428 = vsel %vm5412, 1, 0
        %v5429 = vsel %vm5413, 1, 0
        %v5430 = vsel %vm5414, 1, 0
        %v5431 = vsel %vm5415, 1, 0
        %v5432 = vsel %vm5416, 1, 0
        %v5433 = vsel %vm5417, 1, 0
        %v5434 = vsel %vm5418, 1, 0
        %v5435 = vsel %vm5419, 1, 0
        %v5436 = vsel %vm5420, 1, 0
        %v5437 = vsel %vm5421, 1, 0
        %v5438 = vsel %vm5422, 1, 0
        %v5439 = vsel %vm5423, 1, 0
        %v5440 = vsel %vm5424, 1, 0
        %v5441 = vsel %vm5425, 1, 0
        %v5442 = vcvt.s32.f32 %v5426
        %v5443 = vcvt.s32.f32 %v5427
        %v5444 = vcvt.s32.f32 %v5428
        %v5445 = vcvt.s32.f32 %v5429
        %v5446 = vcvt.s32.f32 %v5430
        %v5447 = vcvt.s32.f32 %v5431
        %v5448 = vcvt.s32.f32 %v5432
        %v5449 = vcvt.s32.f32 %v5433
        %v5450 = vcvt.s32.f32 %v5434
        %v5451 = vcvt.s32.f32 %v5435
        %v5452 = vcvt.s32.f32 %v5436
        %v5453 = vcvt.s32.f32 %v5437
        %v5454 = vcvt.s32.f32 %v5438
        %v5455 = vcvt.s32.f32 %v5439
        %v5456 = vcvt.s32.f32 %v5440
        %v5457 = vcvt.s32.f32 %v5441
        %v5458 = vrot.slane %v4405, 7
        %v5459 = vrot.slane %v4026, 6
        %v5460 = vsel %vm5012, %v5459, %v5458
        %v5461 = vrot.slane %v4031, 5
        %v5462 = vsel %vm5015, %v5461, %v5460
        %v5463 = vrot.slane %v4036, 4
        %v5464 = vsel %vm5018, %v5463, %v5462
        %v5465 = vrot.slane %v4041, 3
        %v5466 = vsel %vm5021, %v5465, %v5464
        %v5467 = vrot.slane %v4736, 2
        %v5468 = vsel %vm5024, %v5467, %v5466
        %v5469 = vrot.slane %v4410, 1
        %v5470 = vsel %vm5027, %v5469, %v5468
        %v5471 = vsel %vm5030, %v4046, %v5470
        %v5472 = vrot.slane %v4051, 7
        %v5473 = vrot.slane %v4056, 6
        %v5474 = vsel %vm5012, %v5473, %v5472
        %v5475 = vrot.slane %v4061, 5
        %v5476 = vsel %vm5015, %v5475, %v5474
        %v5477 = vrot.slane %v4741, 4
        %v5478 = vsel %vm5018, %v5477, %v5476
        %5481 = vmatprep.subr.mxu0 0.0
        %5482 = vmatpush1.msra.mxu0 %v5457
        %5483 = vmatprep.subr.mxu0 0.0
        %5484 = vmatpush1.msra.mxu0 %v5456
        %5485 = vmatprep.subr.mxu0 0.0
        %5486 = vmatpush1.msra.mxu0 %v5455
        %5487 = vmatprep.subr.mxu0 0.0
        %5488 = vmatpush1.msra.mxu0 %v5454
        %5489 = vmatprep.subr.mxu0 0.0
        %5490 = vmatpush1.msra.mxu0 %v5453
        %5491 = vmatprep.subr.mxu0 0.0
        %5492 = vmatpush1.msra.mxu0 %v5452
        %5493 = vmatprep.subr.mxu0 0.0
        %5494 = vmatpush1.msra.mxu0 %v5451
        %5495 = vmatprep.subr.mxu0 0.0
        %5496 = vmatpush1.msra.mxu0 %v5450
        %5497 = vmatprep.subr.mxu0 0.0
        %5498 = vmatpush1.msra.mxu0 %v5449
        %5499 = vmatprep.subr.mxu0 0.0
        %5500 = vmatpush1.msra.mxu0 %v5448
        %5501 = vmatprep.subr.mxu0 0.0
        %5502 = vmatpush1.msra.mxu0 %v5447
        %5503 = vmatprep.subr.mxu0 0.0
        %5504 = vmatpush1.msra.mxu0 %v5446
        %5505 = vmatprep.subr.mxu0 0.0
        %5506 = vmatpush1.msra.mxu0 %v5445
        %5507 = vmatprep.subr.mxu0 0.0
        %5508 = vmatpush1.msra.mxu0 %v5444
        %5509 = vmatprep.subr.mxu0 0.0
        %5510 = vmatpush1.msra.mxu0 %v5443
        %5511 = vmatprep.subr.mxu0 0.0
        %5512 = vmatpush1.msra.mxu0 %v5442
        %5513 = vmatprep.subr.mxu0 0.0
        %5514 = vmatpush2.msra.mxu0 0.0
        %5515 = vmatprep.subr.mxu0 0.0
        %5516 = vmatpush2.msra.mxu0 0.0
        %5517 = vmatprep.subr.mxu0 0.0
        %5518 = vmatpush2.msra.mxu0 0.0
        %5519 = vmatprep.subr.mxu0 0.0
        %5520 = vmatpush2.msra.mxu0 0.0
        %5521 = vmatprep.subr.mxu0 0.0
        %5522 = vmatpush2.msra.mxu0 0.0
        %5523 = vmatprep.subr.mxu0 0.0
        %5524 = vmatpush2.msra.mxu0 0.0
        %5525 = vmatprep.subr.mxu0 0.0
        %5526 = vmatpush2.msra.mxu0 0.0
        %5527 = vmatprep.subr.mxu0 0.0
        %5528 = vmatpush2.msra.mxu0 0.0
        %5529 = vmatprep.subr.mxu0 0.0
        %5530 = vmatpush2.msra.mxu0 0.0
        %5531 = vmatprep.subr.mxu0 0.0
        %5532 = vmatpush2.msra.mxu0 0.0
        %5533 = vmatprep.subr.mxu0 0.0
        %5534 = vmatpush2.msra.mxu0 0.0
        %5535 = vmatprep.subr.mxu0 0.0
        %5536 = vmatpush2.msra.mxu0 0.0
        %5537 = vmatprep.subr.mxu0 0.0
        %5538 = vmatpush2.msra.mxu0 0.0
        %5539 = vmatprep.subr.mxu0 0.0
        %5540 = vmatpush2.msra.mxu0 0.0
        %5541 = vmatprep.subr.mxu0 0.0
        %5542 = vmatpush2.msra.mxu0 0.0
        %5543 = vmatprep.subr.mxu0 0.0
        %5544 = vmatpush2.msra.mxu0 0.0
        %5545 = vmatprep.mubr.f32.mxu0 0.0
        %5546 = vmatmul.mubr.f32.gmra.mxu0 %v5471
        %v5547 = vpop.f32.mrf.mxu0
        %v5548 = vadd.f32 0.0, %v5547
        %v5549 = vpop.f32.mrf.mxu0
        %5550 = vmatprep.mubr.f32.mxu0 0.0
        %5551 = vmatmul.mubr.f32.gmra.mxu0 %v5478
        %v5552 = vpop.f32.mrf.mxu0
        %v5553 = vadd.f32 0.0, %v5552
        %v5554 = vpop.f32.mrf.mxu0
        %5555 = vdwg.mxu0
        %v5558 = vcombine.high %v5548, %v5548
        %v5560 = vunpack.c.l.s4 1966171168
        %v5561 = vunpack.c.0.s8 %v5560
        %v5562 = vlaneseq
        %v5563 = vshrl.u32 %v5562, 7
        %v5564 = vsub.s32 %v5561, %v5563
        %v5565 = vrot.slane %v5548, %v5564
        %v5567 = vunpack.c.l.s4 1966171168
        %v5568 = vunpack.c.0.s8 %v5567
        %v5569 = vlaneseq
        %v5570 = vshrl.u32 %v5569, 7
        %v5571 = vsub.s32 %v5568, %v5570
        %v5572 = vrot.slane %v5558, %v5571
        %v5573 = vcombine.high %v5565, %v5565
        %v5574 = vcombine.high %v5572, %v5572
        %v5576 = vunpack.c.l.s4 1966171168
        %v5577 = vunpack.c.0.s8 %v5576
        %v5578 = vlaneseq
        %v5579 = vshrl.u32 %v5578, 7
        %v5580 = vsub.s32 %v5577, %v5579
        %v5581 = vrot.slane %v5565, %v5580
        %v5583 = vunpack.c.l.s4 1966171168
        %v5584 = vunpack.c.0.s8 %v5583
        %v5585 = vlaneseq
        %v5586 = vshrl.u32 %v5585, 7
        %v5587 = vsub.s32 %v5584, %v5586
        %v5588 = vrot.slane %v5572, %v5587
        %v5590 = vunpack.c.l.s4 1966171168
        %v5591 = vunpack.c.0.s8 %v5590
        %v5592 = vlaneseq
        %v5593 = vshrl.u32 %v5592, 7
        %v5594 = vsub.s32 %v5591, %v5593
        %v5595 = vrot.slane %v5573, %v5594
        %v5597 = vunpack.c.l.s4 1966171168
        %v5598 = vunpack.c.0.s8 %v5597
        %v5599 = vlaneseq
        %v5600 = vshrl.u32 %v5599, 7
        %v5601 = vsub.s32 %v5598, %v5600
        %v5602 = vrot.slane %v5574, %v5601
        %v5603 = vcombine.high %v5581, %v5581
        %v5604 = vcombine.high %v5588, %v5588
        %v5605 = vcombine.high %v5595, %v5595
        %v5606 = vcombine.high %v5602, %v5602
        %v5608 = vunpack.c.l.s4 1966171168
        %v5609 = vunpack.c.0.s8 %v5608
        %v5610 = vlaneseq
        %v5611 = vshrl.u32 %v5610, 7
        %v5612 = vsub.s32 %v5609, %v5611
        %v5613 = vrot.slane %v5553, %v5612
        %v5614 = vcombine.high %v5613, %v5613
        %v5616 = vunpack.c.l.s4 1966171168
        %v5617 = vunpack.c.0.s8 %v5616
        %v5618 = vlaneseq
        %v5619 = vshrl.u32 %v5618, 7
        %v5620 = vsub.s32 %v5617, %v5619
        %v5621 = vrot.slane %v5613, %v5620
        %v5623 = vunpack.c.l.s4 1966171168
        %v5624 = vunpack.c.0.s8 %v5623
        %v5625 = vlaneseq
        %v5626 = vshrl.u32 %v5625, 7
        %v5627 = vsub.s32 %v5624, %v5626
        %v5628 = vrot.slane %v5614, %v5627
        %v5629 = vcombine.high %v5621, %v5621
        %v5630 = vcombine.high %v5628, %v5628
        %5643 = vst [vmem:[#allocation2 + $0x1] sm:$0xff] %v4405
        %5644 = vst [vmem:[#allocation2 + $0x11] sm:$0xff] %v4026
        %5645 = vst [vmem:[#allocation2 + $0x21] sm:$0xff] %v4031
        %5646 = vst [vmem:[#allocation2 + $0x31] sm:$0xff] %v4036
        %5647 = vst [vmem:[#allocation2 + $0x41] sm:$0xff] %v4041
        %5648 = vst [vmem:[#allocation2 + $0x51] sm:$0xff] %v4736
        %5649 = vst [vmem:[#allocation2 + $0x61] sm:$0xff] %v4410
        %5650 = vst [vmem:[#allocation2 + $0x71] sm:$0xff] %v4046
        %5651 = vst [vmem:[#allocation2 + $0x81] sm:$0xff] %v4051
        %5652 = vst [vmem:[#allocation2 + $0x91] sm:$0xff] %v4056
        %5653 = vst [vmem:[#allocation2 + $0xa1] sm:$0xff] %v4061
        %5654 = vst [vmem:[#allocation2 + $0xb1] sm:$0xff] %v4741
        %5655 = vst [vmem:[#allocation2] sm:$0x1] %v5140
        %5656 = vst [vmem:[#allocation2 + $0x10] sm:$0x1] %v5154
        %5657 = vst [vmem:[#allocation2 + $0x20] sm:$0x1] %v5162
        %5658 = vst [vmem:[#allocation2 + $0x30] sm:$0x1] %v5164
        %5659 = vst [vmem:[#allocation2 + $0x40] sm:$0x1] %v5147
        %5660 = vst [vmem:[#allocation2 + $0x50] sm:$0x1] %v5161
        %5661 = vst [vmem:[#allocation2 + $0x60] sm:$0x1] %v5163
        %5662 = vst [vmem:[#allocation2 + $0x70] sm:$0x1] %v5165
        %5663 = vst [vmem:[#allocation2 + $0x80] sm:$0x1] %v5180
        %5664 = vst [vmem:[#allocation2 + $0x90] sm:$0x1] %v5187
        %5665 = vst [vmem:[#allocation2 + $0xa0] sm:$0x1] %v5188
        %5666 = vst [vmem:[#allocation2 + $0xb0] sm:$0x1] %v5189
        %5667 = vst [vmem:[#allocation2 + $0x9] sm:$0x1] %v5581
        %5668 = vst [vmem:[#allocation2 + $0x19] sm:$0x1] %v5595
        %5669 = vst [vmem:[#allocation2 + $0x29] sm:$0x1] %v5603
        %5670 = vst [vmem:[#allocation2 + $0x39] sm:$0x1] %v5605
        %5671 = vst [vmem:[#allocation2 + $0x49] sm:$0x1] %v5588
        %5672 = vst [vmem:[#allocation2 + $0x59] sm:$0x1] %v5602
        %5673 = vst [vmem:[#allocation2 + $0x69] sm:$0x1] %v5604
        %5674 = vst [vmem:[#allocation2 + $0x79] sm:$0x1] %v5606
        %5675 = vst [vmem:[#allocation2 + $0x89] sm:$0x1] %v5621
        %5676 = vst [vmem:[#allocation2 + $0x99] sm:$0x1] %v5628
        %5677 = vst [vmem:[#allocation2 + $0xa9] sm:$0x1] %v5629
        %5678 = vst [vmem:[#allocation2 + $0xb9] sm:$0x1] %v5630
        %v5679 = vld [vmem:[#allocation2] sm:$0xff]
        %v5680 = vld [vmem:[#allocation2 + $0x10] sm:$0xff]
        %v5681 = vld [vmem:[#allocation2 + $0x20] sm:$0xff]
        %v5682 = vld [vmem:[#allocation2 + $0x30] sm:$0xff]
        %v5683 = vld [vmem:[#allocation2 + $0x60] sm:$0xff]
        %v5684 = vld [vmem:[#allocation2 + $0x70] sm:$0xff]
        %v5685 = vld [vmem:[#allocation2 + $0x80] sm:$0xff]
        %v5686 = vld [vmem:[#allocation2 + $0x90] sm:$0xff]
        %v5687 = vld [vmem:[%s803] sm:$0xff]
        %v5688 = vld [vmem:[%s803 + $0x8] sm:$0xff]
        %v5689 = vld [vmem:[%s803 + $0x10] sm:$0xff]
        %v5690 = vld [vmem:[%s803 + $0x18] sm:$0xff]
        %v5691 = vld [vmem:[%s803 + $0x20] sm:$0xff]
        %v5692 = vld [vmem:[%s803 + $0x28] sm:$0xff]
        %v5693 = vld [vmem:[%s803 + $0x30] sm:$0xff]
        %v5694 = vld [vmem:[%s803 + $0x38] sm:$0xff]
        %v5695 = vld [vmem:[%s803 + $0x40] sm:$0xff]
        %v5696 = vld [vmem:[%s803 + $0x48] sm:$0xff]
        %v5697 = vld [vmem:[%s803 + $0x50] sm:$0xff]
        %v5698 = vld [vmem:[%s803 + $0x58] sm:$0xff]
        %v5699 = vld [vmem:[%s803 + $0x60] sm:$0xff]
        %v5700 = vld [vmem:[%s803 + $0x68] sm:$0xff]
        %v5701 = vld [vmem:[%s803 + $0x70] sm:$0xff]
        %v5702 = vld [vmem:[%s803 + $0x78] sm:$0xff]
        %v5703 = vld [vmem:[#allocation2 + $0x1] sm:$0xff]
        %v5704 = vld [vmem:[#allocation2 + $0x11] sm:$0xff]
        %v5705 = vld [vmem:[#allocation2 + $0x21] sm:$0xff]
        %v5706 = vld [vmem:[#allocation2 + $0x31] sm:$0xff]
        %v5707 = vld [vmem:[#allocation2 + $0x61] sm:$0xff]
        %v5708 = vld [vmem:[#allocation2 + $0x71] sm:$0xff]
        %v5709 = vld [vmem:[#allocation2 + $0x81] sm:$0xff]
        %v5710 = vld [vmem:[#allocation2 + $0x91] sm:$0xff]
        %s5711 = scalar_lea.vmem %s803, 128 [#allocation16]
        %v5712 = vld [vmem:[%s5711] sm:$0xff]
        %v5713 = vld [vmem:[%s5711 + $0x8] sm:$0xff]
        %v5714 = vld [vmem:[%s5711 + $0x10] sm:$0xff]
        %v5715 = vld [vmem:[%s5711 + $0x18] sm:$0xff]
        %v5716 = vld [vmem:[%s5711 + $0x20] sm:$0xff]
        %v5717 = vld [vmem:[%s5711 + $0x28] sm:$0xff]
        %v5718 = vld [vmem:[%s5711 + $0x30] sm:$0xff]
        %v5719 = vld [vmem:[%s5711 + $0x38] sm:$0xff]
        %v5720 = vld [vmem:[%s5711 + $0x40] sm:$0xff]
        %v5721 = vld [vmem:[%s5711 + $0x48] sm:$0xff]
        %v5722 = vld [vmem:[%s5711 + $0x50] sm:$0xff]
        %v5723 = vld [vmem:[%s5711 + $0x58] sm:$0xff]
        %v5724 = vld [vmem:[%s5711 + $0x60] sm:$0xff]
        %v5725 = vld [vmem:[%s5711 + $0x68] sm:$0xff]
        %v5726 = vld [vmem:[%s5711 + $0x70] sm:$0xff]
        %v5727 = vld [vmem:[%s5711 + $0x78] sm:$0xff]
        %5728 = vmatprep.subr.mxu0 0.0
        %5729 = vmatpush1.msra.mxu0 %v5727
        %5730 = vmatprep.subr.mxu0 0.0
        %5731 = vmatpush1.msra.mxu0 %v5726
        %5732 = vmatprep.subr.mxu0 0.0
        %5733 = vmatpush1.msra.mxu0 %v5725
        %5734 = vmatprep.subr.mxu0 0.0
        %5735 = vmatpush1.msra.mxu0 %v5724
        %5736 = vmatprep.subr.mxu0 0.0
        %5737 = vmatpush1.msra.mxu0 %v5723
        %5738 = vmatprep.subr.mxu0 0.0
        %5739 = vmatpush1.msra.mxu0 %v5722
        %5740 = vmatprep.subr.mxu0 0.0
        %5741 = vmatpush1.msra.mxu0 %v5721
        %5742 = vmatprep.subr.mxu0 0.0
        %5743 = vmatpush1.msra.mxu0 %v5720
        %5744 = vmatprep.subr.mxu0 0.0
        %5745 = vmatpush1.msra.mxu0 %v5719
        %5746 = vmatprep.subr.mxu0 0.0
        %5747 = vmatpush1.msra.mxu0 %v5718
        %5748 = vmatprep.subr.mxu0 0.0
        %5749 = vmatpush1.msra.mxu0 %v5717
        %5750 = vmatprep.subr.mxu0 0.0
        %5751 = vmatpush1.msra.mxu0 %v5716
        %5752 = vmatprep.subr.mxu0 0.0
        %5753 = vmatpush1.msra.mxu0 %v5715
        %5754 = vmatprep.subr.mxu0 0.0
        %5755 = vmatpush1.msra.mxu0 %v5714
        %5756 = vmatprep.subr.mxu0 0.0
        %5757 = vmatpush1.msra.mxu0 %v5713
        %5758 = vmatprep.subr.mxu0 0.0
        %5759 = vmatpush1.msra.mxu0 %v5712
        %5760 = vmatprep.subr.mxu0 0.0
        %5761 = vmatpush2.msra.mxu0 0.0
        %5762 = vmatprep.subr.mxu0 0.0
        %5763 = vmatpush2.msra.mxu0 0.0
        %5764 = vmatprep.subr.mxu0 0.0
        %5765 = vmatpush2.msra.mxu0 0.0
        %5766 = vmatprep.subr.mxu0 0.0
        %5767 = vmatpush2.msra.mxu0 0.0
        %5768 = vmatprep.subr.mxu0 0.0
        %5769 = vmatpush2.msra.mxu0 0.0
        %5770 = vmatprep.subr.mxu0 0.0
        %5771 = vmatpush2.msra.mxu0 0.0
        %5772 = vmatprep.subr.mxu0 0.0
        %5773 = vmatpush2.msra.mxu0 0.0
        %5774 = vmatprep.subr.mxu0 0.0
        %5775 = vmatpush2.msra.mxu0 0.0
        %5776 = vmatprep.subr.mxu0 0.0
        %5777 = vmatpush2.msra.mxu0 0.0
        %5778 = vmatprep.subr.mxu0 0.0
        %5779 = vmatpush2.msra.mxu0 0.0
        %5780 = vmatprep.subr.mxu0 0.0
        %5781 = vmatpush2.msra.mxu0 0.0
        %5782 = vmatprep.subr.mxu0 0.0
        %5783 = vmatpush2.msra.mxu0 0.0
        %5784 = vmatprep.subr.mxu0 0.0
        %5785 = vmatpush2.msra.mxu0 0.0
        %5786 = vmatprep.subr.mxu0 0.0
        %5787 = vmatpush2.msra.mxu0 0.0
        %5788 = vmatprep.subr.mxu0 0.0
        %5789 = vmatpush2.msra.mxu0 0.0
        %5790 = vmatprep.subr.mxu0 0.0
        %5791 = vmatpush2.msra.mxu0 0.0
        %5792 = vmatprep.mubr.f32.mxu0 0.0
        %5793 = vmatmul.mubr.f32.gmra.mxu0 %v5703
        %v5794 = vpop.f32.mrf.mxu0
        %v5795 = vadd.f32 0.0, %v5794
        %v5796 = vpop.f32.mrf.mxu0
        %5797 = vmatprep.mubr.f32.mxu0 0.0
        %5798 = vmatmul.mubr.f32.gmra.mxu0 %v5704
        %v5799 = vpop.f32.mrf.mxu0
        %v5800 = vadd.f32 0.0, %v5799
        %v5801 = vpop.f32.mrf.mxu0
        %5802 = vmatprep.mubr.f32.mxu0 0.0
        %5803 = vmatmul.mubr.f32.gmra.mxu0 %v5705
        %v5804 = vpop.f32.mrf.mxu0
        %v5805 = vadd.f32 0.0, %v5804
        %v5806 = vpop.f32.mrf.mxu0
        %5807 = vmatprep.mubr.f32.mxu0 0.0
        %5808 = vmatmul.mubr.f32.gmra.mxu0 %v5706
        %v5809 = vpop.f32.mrf.mxu0
        %v5810 = vadd.f32 0.0, %v5809
        %v5811 = vpop.f32.mrf.mxu0
        %5812 = vmatprep.mubr.f32.mxu0 0.0
        %5813 = vmatmul.mubr.f32.gmra.mxu0 %v5707
        %v5814 = vpop.f32.mrf.mxu0
        %v5815 = vadd.f32 0.0, %v5814
        %v5816 = vpop.f32.mrf.mxu0
        %5817 = vmatprep.mubr.f32.mxu0 0.0
        %5818 = vmatmul.mubr.f32.gmra.mxu0 %v5708
        %v5819 = vpop.f32.mrf.mxu0
        %v5820 = vadd.f32 0.0, %v5819
        %v5821 = vpop.f32.mrf.mxu0
        %5822 = vmatprep.mubr.f32.mxu0 0.0
        %5823 = vmatmul.mubr.f32.gmra.mxu0 %v5709
        %v5824 = vpop.f32.mrf.mxu0
        %v5825 = vadd.f32 0.0, %v5824
        %v5826 = vpop.f32.mrf.mxu0
        %5827 = vmatprep.mubr.f32.mxu0 0.0
        %5828 = vmatmul.mubr.f32.gmra.mxu0 %v5710
        %v5829 = vpop.f32.mrf.mxu0
        %v5830 = vadd.f32 0.0, %v5829
        %v5831 = vpop.f32.mrf.mxu0
        %5832 = vdwg.mxu0
        %5833 = vmatprep.subr.mxu0 0.0
        %5834 = vmatpush1.msra.mxu0 %v5702
        %5835 = vmatprep.subr.mxu0 0.0
        %5836 = vmatpush1.msra.mxu0 %v5701
        %5837 = vmatprep.subr.mxu0 0.0
        %5838 = vmatpush1.msra.mxu0 %v5700
        %5839 = vmatprep.subr.mxu0 0.0
        %5840 = vmatpush1.msra.mxu0 %v5699
        %5841 = vmatprep.subr.mxu0 0.0
        %5842 = vmatpush1.msra.mxu0 %v5698
        %5843 = vmatprep.subr.mxu0 0.0
        %5844 = vmatpush1.msra.mxu0 %v5697
        %5845 = vmatprep.subr.mxu0 0.0
        %5846 = vmatpush1.msra.mxu0 %v5696
        %5847 = vmatprep.subr.mxu0 0.0
        %5848 = vmatpush1.msra.mxu0 %v5695
        %5849 = vmatprep.subr.mxu0 0.0
        %5850 = vmatpush1.msra.mxu0 %v5694
        %5851 = vmatprep.subr.mxu0 0.0
        %5852 = vmatpush1.msra.mxu0 %v5693
        %5853 = vmatprep.subr.mxu0 0.0
        %5854 = vmatpush1.msra.mxu0 %v5692
        %5855 = vmatprep.subr.mxu0 0.0
        %5856 = vmatpush1.msra.mxu0 %v5691
        %5857 = vmatprep.subr.mxu0 0.0
        %5858 = vmatpush1.msra.mxu0 %v5690
        %5859 = vmatprep.subr.mxu0 0.0
        %5860 = vmatpush1.msra.mxu0 %v5689
        %5861 = vmatprep.subr.mxu0 0.0
        %5862 = vmatpush1.msra.mxu0 %v5688
        %5863 = vmatprep.subr.mxu0 0.0
        %5864 = vmatpush1.msra.mxu0 %v5687
        %5865 = vmatprep.subr.mxu0 0.0
        %5866 = vmatpush2.msra.mxu0 0.0
        %5867 = vmatprep.subr.mxu0 0.0
        %5868 = vmatpush2.msra.mxu0 0.0
        %5869 = vmatprep.subr.mxu0 0.0
        %5870 = vmatpush2.msra.mxu0 0.0
        %5871 = vmatprep.subr.mxu0 0.0
        %5872 = vmatpush2.msra.mxu0 0.0
        %5873 = vmatprep.subr.mxu0 0.0
        %5874 = vmatpush2.msra.mxu0 0.0
        %5875 = vmatprep.subr.mxu0 0.0
        %5876 = vmatpush2.msra.mxu0 0.0
        %5877 = vmatprep.subr.mxu0 0.0
        %5878 = vmatpush2.msra.mxu0 0.0
        %5879 = vmatprep.subr.mxu0 0.0
        %5880 = vmatpush2.msra.mxu0 0.0
        %5881 = vmatprep.subr.mxu0 0.0
        %5882 = vmatpush2.msra.mxu0 0.0
        %5883 = vmatprep.subr.mxu0 0.0
        %5884 = vmatpush2.msra.mxu0 0.0
        %5885 = vmatprep.subr.mxu0 0.0
        %5886 = vmatpush2.msra.mxu0 0.0
        %5887 = vmatprep.subr.mxu0 0.0
        %5888 = vmatpush2.msra.mxu0 0.0
        %5889 = vmatprep.subr.mxu0 0.0
        %5890 = vmatpush2.msra.mxu0 0.0
        %5891 = vmatprep.subr.mxu0 0.0
        %5892 = vmatpush2.msra.mxu0 0.0
        %5893 = vmatprep.subr.mxu0 0.0
        %5894 = vmatpush2.msra.mxu0 0.0
        %5895 = vmatprep.subr.mxu0 0.0
        %5896 = vmatpush2.msra.mxu0 0.0
        %5897 = vmatprep.mubr.f32.mxu0 0.0
        %5898 = vmatmul.mubr.f32.gmra.mxu0 %v5679
        %v5899 = vpop.f32.mrf.mxu0
        %v5900 = vadd.f32 %v5795, %v5899
        %v5901 = vpop.f32.mrf.mxu0
        %5902 = vmatprep.mubr.f32.mxu0 0.0
        %5903 = vmatmul.mubr.f32.gmra.mxu0 %v5680
        %v5904 = vpop.f32.mrf.mxu0
        %v5905 = vadd.f32 %v5800, %v5904
        %v5906 = vpop.f32.mrf.mxu0
        %5907 = vmatprep.mubr.f32.mxu0 0.0
        %5908 = vmatmul.mubr.f32.gmra.mxu0 %v5681
        %v5909 = vpop.f32.mrf.mxu0
        %v5910 = vadd.f32 %v5805, %v5909
        %v5911 = vpop.f32.mrf.mxu0
        %5912 = vmatprep.mubr.f32.mxu0 0.0
        %5913 = vmatmul.mubr.f32.gmra.mxu0 %v5682
        %v5914 = vpop.f32.mrf.mxu0
        %v5915 = vadd.f32 %v5810, %v5914
        %v5916 = vpop.f32.mrf.mxu0
        %5917 = vmatprep.mubr.f32.mxu0 0.0
        %5918 = vmatmul.mubr.f32.gmra.mxu0 %v5683
        %v5919 = vpop.f32.mrf.mxu0
        %v5920 = vadd.f32 %v5815, %v5919
        %v5921 = vpop.f32.mrf.mxu0
        %5922 = vmatprep.mubr.f32.mxu0 0.0
        %5923 = vmatmul.mubr.f32.gmra.mxu0 %v5684
        %v5924 = vpop.f32.mrf.mxu0
        %v5925 = vadd.f32 %v5820, %v5924
        %v5926 = vpop.f32.mrf.mxu0
        %5927 = vmatprep.mubr.f32.mxu0 0.0
        %5928 = vmatmul.mubr.f32.gmra.mxu0 %v5685
        %v5929 = vpop.f32.mrf.mxu0
        %v5930 = vadd.f32 %v5825, %v5929
        %v5931 = vpop.f32.mrf.mxu0
        %5932 = vmatprep.mubr.f32.mxu0 0.0
        %5933 = vmatmul.mubr.f32.gmra.mxu0 %v5686
        %v5934 = vpop.f32.mrf.mxu0
        %v5935 = vadd.f32 %v5830, %v5934
        %v5936 = vpop.f32.mrf.mxu0
        %5937 = vdwg.mxu0
        %v5938 = vld [vmem:[#allocation2 + $0x2] sm:$0xff]
        %v5939 = vld [vmem:[#allocation2 + $0x12] sm:$0xff]
        %v5940 = vld [vmem:[#allocation2 + $0x22] sm:$0xff]
        %v5941 = vld [vmem:[#allocation2 + $0x32] sm:$0xff]
        %v5942 = vld [vmem:[#allocation2 + $0x62] sm:$0xff]
        %v5943 = vld [vmem:[#allocation2 + $0x72] sm:$0xff]
        %v5944 = vld [vmem:[#allocation2 + $0x82] sm:$0xff]
        %v5945 = vld [vmem:[#allocation2 + $0x92] sm:$0xff]
        %s5946 = scalar_lea.vmem %s803, 256 [#allocation16]
        %v5947 = vld [vmem:[%s5946] sm:$0xff]
        %v5948 = vld [vmem:[%s5946 + $0x8] sm:$0xff]
        %v5949 = vld [vmem:[%s5946 + $0x10] sm:$0xff]
        %v5950 = vld [vmem:[%s5946 + $0x18] sm:$0xff]
        %v5951 = vld [vmem:[%s5946 + $0x20] sm:$0xff]
        %v5952 = vld [vmem:[%s5946 + $0x28] sm:$0xff]
        %v5953 = vld [vmem:[%s5946 + $0x30] sm:$0xff]
        %v5954 = vld [vmem:[%s5946 + $0x38] sm:$0xff]
        %v5955 = vld [vmem:[%s5946 + $0x40] sm:$0xff]
        %v5956 = vld [vmem:[%s5946 + $0x48] sm:$0xff]
        %v5957 = vld [vmem:[%s5946 + $0x50] sm:$0xff]
        %v5958 = vld [vmem:[%s5946 + $0x58] sm:$0xff]
        %v5959 = vld [vmem:[%s5946 + $0x60] sm:$0xff]
        %v5960 = vld [vmem:[%s5946 + $0x68] sm:$0xff]
        %v5961 = vld [vmem:[%s5946 + $0x70] sm:$0xff]
        %v5962 = vld [vmem:[%s5946 + $0x78] sm:$0xff]
        %5963 = vmatprep.subr.mxu0 0.0
        %5964 = vmatpush1.msra.mxu0 %v5962
        %5965 = vmatprep.subr.mxu0 0.0
        %5966 = vmatpush1.msra.mxu0 %v5961
        %5967 = vmatprep.subr.mxu0 0.0
        %5968 = vmatpush1.msra.mxu0 %v5960
        %5969 = vmatprep.subr.mxu0 0.0
        %5970 = vmatpush1.msra.mxu0 %v5959
        %5971 = vmatprep.subr.mxu0 0.0
        %5972 = vmatpush1.msra.mxu0 %v5958
        %5973 = vmatprep.subr.mxu0 0.0
        %5974 = vmatpush1.msra.mxu0 %v5957
        %5975 = vmatprep.subr.mxu0 0.0
        %5976 = vmatpush1.msra.mxu0 %v5956
        %5977 = vmatprep.subr.mxu0 0.0
        %5978 = vmatpush1.msra.mxu0 %v5955
        %5979 = vmatprep.subr.mxu0 0.0
        %5980 = vmatpush1.msra.mxu0 %v5954
        %5981 = vmatprep.subr.mxu0 0.0
        %5982 = vmatpush1.msra.mxu0 %v5953
        %5983 = vmatprep.subr.mxu0 0.0
        %5984 = vmatpush1.msra.mxu0 %v5952
        %5985 = vmatprep.subr.mxu0 0.0
        %5986 = vmatpush1.msra.mxu0 %v5951
        %5987 = vmatprep.subr.mxu0 0.0
        %5988 = vmatpush1.msra.mxu0 %v5950
        %5989 = vmatprep.subr.mxu0 0.0
        %5990 = vmatpush1.msra.mxu0 %v5949
        %5991 = vmatprep.subr.mxu0 0.0
        %5992 = vmatpush1.msra.mxu0 %v5948
        %5993 = vmatprep.subr.mxu0 0.0
        %5994 = vmatpush1.msra.mxu0 %v5947
        %5995 = vmatprep.subr.mxu0 0.0
        %5996 = vmatpush2.msra.mxu0 0.0
        %5997 = vmatprep.subr.mxu0 0.0
        %5998 = vmatpush2.msra.mxu0 0.0
        %5999 = vmatprep.subr.mxu0 0.0
        %6000 = vmatpush2.msra.mxu0 0.0
        %6001 = vmatprep.subr.mxu0 0.0
        %6002 = vmatpush2.msra.mxu0 0.0
        %6003 = vmatprep.subr.mxu0 0.0
        %6004 = vmatpush2.msra.mxu0 0.0
        %6005 = vmatprep.subr.mxu0 0.0
        %6006 = vmatpush2.msra.mxu0 0.0
        %6007 = vmatprep.subr.mxu0 0.0
        %6008 = vmatpush2.msra.mxu0 0.0
        %6009 = vmatprep.subr.mxu0 0.0
        %6010 = vmatpush2.msra.mxu0 0.0
        %6011 = vmatprep.subr.mxu0 0.0
        %6012 = vmatpush2.msra.mxu0 0.0
        %6013 = vmatprep.subr.mxu0 0.0
        %6014 = vmatpush2.msra.mxu0 0.0
        %6015 = vmatprep.subr.mxu0 0.0
        %6016 = vmatpush2.msra.mxu0 0.0
        %6017 = vmatprep.subr.mxu0 0.0
        %6018 = vmatpush2.msra.mxu0 0.0
        %6019 = vmatprep.subr.mxu0 0.0
        %6020 = vmatpush2.msra.mxu0 0.0
        %6021 = vmatprep.subr.mxu0 0.0
        %6022 = vmatpush2.msra.mxu0 0.0
        %6023 = vmatprep.subr.mxu0 0.0
        %6024 = vmatpush2.msra.mxu0 0.0
        %6025 = vmatprep.subr.mxu0 0.0
        %6026 = vmatpush2.msra.mxu0 0.0
        %6027 = vmatprep.mubr.f32.mxu0 0.0
        %6028 = vmatmul.mubr.f32.gmra.mxu0 %v5938
        %v6029 = vpop.f32.mrf.mxu0
        %v6030 = vadd.f32 0.0, %v6029
        %v6031 = vpop.f32.mrf.mxu0
        %6032 = vmatprep.mubr.f32.mxu0 0.0
        %6033 = vmatmul.mubr.f32.gmra.mxu0 %v5939
        %v6034 = vpop.f32.mrf.mxu0
        %v6035 = vadd.f32 0.0, %v6034
        %v6036 = vpop.f32.mrf.mxu0
        %6037 = vmatprep.mubr.f32.mxu0 0.0
        %6038 = vmatmul.mubr.f32.gmra.mxu0 %v5940
        %v6039 = vpop.f32.mrf.mxu0
        %v6040 = vadd.f32 0.0, %v6039
        %v6041 = vpop.f32.mrf.mxu0
        %6042 = vmatprep.mubr.f32.mxu0 0.0
        %6043 = vmatmul.mubr.f32.gmra.mxu0 %v5941
        %v6044 = vpop.f32.mrf.mxu0
        %v6045 = vadd.f32 0.0, %v6044
        %v6046 = vpop.f32.mrf.mxu0
        %6047 = vmatprep.mubr.f32.mxu0 0.0
        %6048 = vmatmul.mubr.f32.gmra.mxu0 %v5942
        %v6049 = vpop.f32.mrf.mxu0
        %v6050 = vadd.f32 0.0, %v6049
        %v6051 = vpop.f32.mrf.mxu0
        %6052 = vmatprep.mubr.f32.mxu0 0.0
        %6053 = vmatmul.mubr.f32.gmra.mxu0 %v5943
        %v6054 = vpop.f32.mrf.mxu0
        %v6055 = vadd.f32 0.0, %v6054
        %v6056 = vpop.f32.mrf.mxu0
        %6057 = vmatprep.mubr.f32.mxu0 0.0
        %6058 = vmatmul.mubr.f32.gmra.mxu0 %v5944
        %v6059 = vpop.f32.mrf.mxu0
        %v6060 = vadd.f32 0.0, %v6059
        %v6061 = vpop.f32.mrf.mxu0
        %6062 = vmatprep.mubr.f32.mxu0 0.0
        %6063 = vmatmul.mubr.f32.gmra.mxu0 %v5945
        %v6064 = vpop.f32.mrf.mxu0
        %v6065 = vadd.f32 0.0, %v6064
        %v6066 = vpop.f32.mrf.mxu0
        %6067 = vdwg.mxu0
        %v6068 = vadd.f32 %v5900, %v6030
        %v6069 = vadd.f32 %v5905, %v6035
        %v6070 = vadd.f32 %v5910, %v6040
        %v6071 = vadd.f32 %v5915, %v6045
        %v6072 = vadd.f32 %v5920, %v6050
        %v6073 = vadd.f32 %v5925, %v6055
        %v6074 = vadd.f32 %v5930, %v6060
        %v6075 = vadd.f32 %v5935, %v6065
        %v6076 = vld [vmem:[%s1575] sm:$0xff]
        %v6077 = vld [vmem:[%s1575 + $0x10] sm:$0xff]
        %v6078 = vld [vmem:[%s1575 + $0x20] sm:$0xff]
        %v6079 = vld [vmem:[%s1575 + $0x30] sm:$0xff]
        %v6080 = vld [vmem:[%s1575 + $0x60] sm:$0xff]
        %v6081 = vld [vmem:[%s1575 + $0x70] sm:$0xff]
        %v6082 = vld [vmem:[%s1575 + $0x80] sm:$0xff]
        %v6083 = vld [vmem:[%s1575 + $0x90] sm:$0xff]
        %s6084 = scalar_lea.vmem %s803, 384 [#allocation16]
        %v6085 = vld [vmem:[%s6084] sm:$0xff]
        %v6086 = vld [vmem:[%s6084 + $0x8] sm:$0xff]
        %v6087 = vld [vmem:[%s6084 + $0x10] sm:$0xff]
        %v6088 = vld [vmem:[%s6084 + $0x18] sm:$0xff]
        %v6089 = vld [vmem:[%s6084 + $0x20] sm:$0xff]
        %v6090 = vld [vmem:[%s6084 + $0x28] sm:$0xff]
        %v6091 = vld [vmem:[%s6084 + $0x30] sm:$0xff]
        %v6092 = vld [vmem:[%s6084 + $0x38] sm:$0xff]
        %v6093 = vld [vmem:[%s6084 + $0x40] sm:$0xff]
        %v6094 = vld [vmem:[%s6084 + $0x48] sm:$0xff]
        %v6095 = vld [vmem:[%s6084 + $0x50] sm:$0xff]
        %v6096 = vld [vmem:[%s6084 + $0x58] sm:$0xff]
        %v6097 = vld [vmem:[%s6084 + $0x60] sm:$0xff]
        %v6098 = vld [vmem:[%s6084 + $0x68] sm:$0xff]
        %v6099 = vld [vmem:[%s6084 + $0x70] sm:$0xff]
        %v6100 = vld [vmem:[%s6084 + $0x78] sm:$0xff]
        %6101 = vmatprep.subr.mxu0 0.0
        %6102 = vmatpush1.msra.mxu0 %v6100
        %6103 = vmatprep.subr.mxu0 0.0
        %6104 = vmatpush1.msra.mxu0 %v6099
        %6105 = vmatprep.subr.mxu0 0.0
        %6106 = vmatpush1.msra.mxu0 %v6098
        %6107 = vmatprep.subr.mxu0 0.0
        %6108 = vmatpush1.msra.mxu0 %v6097
        %6109 = vmatprep.subr.mxu0 0.0
        %6110 = vmatpush1.msra.mxu0 %v6096
        %6111 = vmatprep.subr.mxu0 0.0
        %6112 = vmatpush1.msra.mxu0 %v6095
        %6113 = vmatprep.subr.mxu0 0.0
        %6114 = vmatpush1.msra.mxu0 %v6094
        %6115 = vmatprep.subr.mxu0 0.0
        %6116 = vmatpush1.msra.mxu0 %v6093
        %6117 = vmatprep.subr.mxu0 0.0
        %6118 = vmatpush1.msra.mxu0 %v6092
        %6119 = vmatprep.subr.mxu0 0.0
        %6120 = vmatpush1.msra.mxu0 %v6091
        %6121 = vmatprep.subr.mxu0 0.0
        %6122 = vmatpush1.msra.mxu0 %v6090
        %6123 = vmatprep.subr.mxu0 0.0
        %6124 = vmatpush1.msra.mxu0 %v6089
        %6125 = vmatprep.subr.mxu0 0.0
        %6126 = vmatpush1.msra.mxu0 %v6088
        %6127 = vmatprep.subr.mxu0 0.0
        %6128 = vmatpush1.msra.mxu0 %v6087
        %6129 = vmatprep.subr.mxu0 0.0
        %6130 = vmatpush1.msra.mxu0 %v6086
        %6131 = vmatprep.subr.mxu0 0.0
        %6132 = vmatpush1.msra.mxu0 %v6085
        %6133 = vmatprep.subr.mxu0 0.0
        %6134 = vmatpush2.msra.mxu0 0.0
        %6135 = vmatprep.subr.mxu0 0.0
        %6136 = vmatpush2.msra.mxu0 0.0
        %6137 = vmatprep.subr.mxu0 0.0
        %6138 = vmatpush2.msra.mxu0 0.0
        %6139 = vmatprep.subr.mxu0 0.0
        %6140 = vmatpush2.msra.mxu0 0.0
        %6141 = vmatprep.subr.mxu0 0.0
        %6142 = vmatpush2.msra.mxu0 0.0
        %6143 = vmatprep.subr.mxu0 0.0
        %6144 = vmatpush2.msra.mxu0 0.0
        %6145 = vmatprep.subr.mxu0 0.0
        %6146 = vmatpush2.msra.mxu0 0.0
        %6147 = vmatprep.subr.mxu0 0.0
        %6148 = vmatpush2.msra.mxu0 0.0
        %6149 = vmatprep.subr.mxu0 0.0
        %6150 = vmatpush2.msra.mxu0 0.0
        %6151 = vmatprep.subr.mxu0 0.0
        %6152 = vmatpush2.msra.mxu0 0.0
        %6153 = vmatprep.subr.mxu0 0.0
        %6154 = vmatpush2.msra.mxu0 0.0
        %6155 = vmatprep.subr.mxu0 0.0
        %6156 = vmatpush2.msra.mxu0 0.0
        %6157 = vmatprep.subr.mxu0 0.0
        %6158 = vmatpush2.msra.mxu0 0.0
        %6159 = vmatprep.subr.mxu0 0.0
        %6160 = vmatpush2.msra.mxu0 0.0
        %6161 = vmatprep.subr.mxu0 0.0
        %6162 = vmatpush2.msra.mxu0 0.0
        %6163 = vmatprep.subr.mxu0 0.0
        %6164 = vmatpush2.msra.mxu0 0.0
        %6165 = vmatprep.mubr.f32.mxu0 0.0
        %6166 = vmatmul.mubr.f32.gmra.mxu0 %v6076
        %v6167 = vpop.f32.mrf.mxu0
        %v6168 = vadd.f32 0.0, %v6167
        %v6169 = vpop.f32.mrf.mxu0
        %6170 = vmatprep.mubr.f32.mxu0 0.0
        %6171 = vmatmul.mubr.f32.gmra.mxu0 %v6077
        %v6172 = vpop.f32.mrf.mxu0
        %v6173 = vadd.f32 0.0, %v6172
        %v6174 = vpop.f32.mrf.mxu0
        %6175 = vmatprep.mubr.f32.mxu0 0.0
        %6176 = vmatmul.mubr.f32.gmra.mxu0 %v6078
        %v6177 = vpop.f32.mrf.mxu0
        %v6178 = vadd.f32 0.0, %v6177
        %v6179 = vpop.f32.mrf.mxu0
        %6180 = vmatprep.mubr.f32.mxu0 0.0
        %6181 = vmatmul.mubr.f32.gmra.mxu0 %v6079
        %v6182 = vpop.f32.mrf.mxu0
        %v6183 = vadd.f32 0.0, %v6182
        %v6184 = vpop.f32.mrf.mxu0
        %6185 = vmatprep.mubr.f32.mxu0 0.0
        %6186 = vmatmul.mubr.f32.gmra.mxu0 %v6080
        %v6187 = vpop.f32.mrf.mxu0
        %v6188 = vadd.f32 0.0, %v6187
        %v6189 = vpop.f32.mrf.mxu0
        %6190 = vmatprep.mubr.f32.mxu0 0.0
        %6191 = vmatmul.mubr.f32.gmra.mxu0 %v6081
        %v6192 = vpop.f32.mrf.mxu0
        %v6193 = vadd.f32 0.0, %v6192
        %v6194 = vpop.f32.mrf.mxu0
        %6195 = vmatprep.mubr.f32.mxu0 0.0
        %6196 = vmatmul.mubr.f32.gmra.mxu0 %v6082
        %v6197 = vpop.f32.mrf.mxu0
        %v6198 = vadd.f32 0.0, %v6197
        %v6199 = vpop.f32.mrf.mxu0
        %6200 = vmatprep.mubr.f32.mxu0 0.0
        %6201 = vmatmul.mubr.f32.gmra.mxu0 %v6083
        %v6202 = vpop.f32.mrf.mxu0
        %v6203 = vadd.f32 0.0, %v6202
        %v6204 = vpop.f32.mrf.mxu0
        %6205 = vdwg.mxu0
        %v6206 = vadd.f32 %v6068, %v6168
        %v6207 = vadd.f32 %v6069, %v6173
        %v6208 = vadd.f32 %v6070, %v6178
        %v6209 = vadd.f32 %v6071, %v6183
        %v6210 = vadd.f32 %v6072, %v6188
        %v6211 = vadd.f32 %v6073, %v6193
        %v6212 = vadd.f32 %v6074, %v6198
        %v6213 = vadd.f32 %v6075, %v6203
        %v6214 = vld [vmem:[%s1575 + $0x1] sm:$0xff]
        %v6215 = vld [vmem:[%s1575 + $0x11] sm:$0xff]
        %v6216 = vld [vmem:[%s1575 + $0x21] sm:$0xff]
        %v6217 = vld [vmem:[%s1575 + $0x31] sm:$0xff]
        %v6218 = vld [vmem:[%s1575 + $0x61] sm:$0xff]
        %v6219 = vld [vmem:[%s1575 + $0x71] sm:$0xff]
        %v6220 = vld [vmem:[%s1575 + $0x81] sm:$0xff]
        %v6221 = vld [vmem:[%s1575 + $0x91] sm:$0xff]
        %s6222 = scalar_lea.vmem %s803, 512 [#allocation16]
        %v6223 = vld [vmem:[%s6222] sm:$0xff]
        %v6224 = vld [vmem:[%s6222 + $0x8] sm:$0xff]
        %v6225 = vld [vmem:[%s6222 + $0x10] sm:$0xff]
        %v6226 = vld [vmem:[%s6222 + $0x18] sm:$0xff]
        %v6227 = vld [vmem:[%s6222 + $0x20] sm:$0xff]
        %v6228 = vld [vmem:[%s6222 + $0x28] sm:$0xff]
        %v6229 = vld [vmem:[%s6222 + $0x30] sm:$0xff]
        %v6230 = vld [vmem:[%s6222 + $0x38] sm:$0xff]
        %v6231 = vld [vmem:[%s6222 + $0x40] sm:$0xff]
        %v6232 = vld [vmem:[%s6222 + $0x48] sm:$0xff]
        %v6233 = vld [vmem:[%s6222 + $0x50] sm:$0xff]
        %v6234 = vld [vmem:[%s6222 + $0x58] sm:$0xff]
        %v6235 = vld [vmem:[%s6222 + $0x60] sm:$0xff]
        %v6236 = vld [vmem:[%s6222 + $0x68] sm:$0xff]
        %v6237 = vld [vmem:[%s6222 + $0x70] sm:$0xff]
        %v6238 = vld [vmem:[%s6222 + $0x78] sm:$0xff]
        %6239 = vmatprep.subr.mxu0 0.0
        %6240 = vmatpush1.msra.mxu0 %v6238
        %6241 = vmatprep.subr.mxu0 0.0
        %6242 = vmatpush1.msra.mxu0 %v6237
        %6243 = vmatprep.subr.mxu0 0.0
        %6244 = vmatpush1.msra.mxu0 %v6236
        %6245 = vmatprep.subr.mxu0 0.0
        %6246 = vmatpush1.msra.mxu0 %v6235
        %6247 = vmatprep.subr.mxu0 0.0
        %6248 = vmatpush1.msra.mxu0 %v6234
        %6249 = vmatprep.subr.mxu0 0.0
        %6250 = vmatpush1.msra.mxu0 %v6233
        %6251 = vmatprep.subr.mxu0 0.0
        %6252 = vmatpush1.msra.mxu0 %v6232
        %6253 = vmatprep.subr.mxu0 0.0
        %6254 = vmatpush1.msra.mxu0 %v6231
        %6255 = vmatprep.subr.mxu0 0.0
        %6256 = vmatpush1.msra.mxu0 %v6230
        %6257 = vmatprep.subr.mxu0 0.0
        %6258 = vmatpush1.msra.mxu0 %v6229
        %6259 = vmatprep.subr.mxu0 0.0
        %6260 = vmatpush1.msra.mxu0 %v6228
        %6261 = vmatprep.subr.mxu0 0.0
        %6262 = vmatpush1.msra.mxu0 %v6227
        %6263 = vmatprep.subr.mxu0 0.0
        %6264 = vmatpush1.msra.mxu0 %v6226
        %6265 = vmatprep.subr.mxu0 0.0
        %6266 = vmatpush1.msra.mxu0 %v6225
        %6267 = vmatprep.subr.mxu0 0.0
        %6268 = vmatpush1.msra.mxu0 %v6224
        %6269 = vmatprep.subr.mxu0 0.0
        %6270 = vmatpush1.msra.mxu0 %v6223
        %6271 = vmatprep.subr.mxu0 0.0
        %6272 = vmatpush2.msra.mxu0 0.0
        %6273 = vmatprep.subr.mxu0 0.0
        %6274 = vmatpush2.msra.mxu0 0.0
        %6275 = vmatprep.subr.mxu0 0.0
        %6276 = vmatpush2.msra.mxu0 0.0
        %6277 = vmatprep.subr.mxu0 0.0
        %6278 = vmatpush2.msra.mxu0 0.0
        %6279 = vmatprep.subr.mxu0 0.0
        %6280 = vmatpush2.msra.mxu0 0.0
        %6281 = vmatprep.subr.mxu0 0.0
        %6282 = vmatpush2.msra.mxu0 0.0
        %6283 = vmatprep.subr.mxu0 0.0
        %6284 = vmatpush2.msra.mxu0 0.0
        %6285 = vmatprep.subr.mxu0 0.0
        %6286 = vmatpush2.msra.mxu0 0.0
        %6287 = vmatprep.subr.mxu0 0.0
        %6288 = vmatpush2.msra.mxu0 0.0
        %6289 = vmatprep.subr.mxu0 0.0
        %6290 = vmatpush2.msra.mxu0 0.0
        %6291 = vmatprep.subr.mxu0 0.0
        %6292 = vmatpush2.msra.mxu0 0.0
        %6293 = vmatprep.subr.mxu0 0.0
        %6294 = vmatpush2.msra.mxu0 0.0
        %6295 = vmatprep.subr.mxu0 0.0
        %6296 = vmatpush2.msra.mxu0 0.0
        %6297 = vmatprep.subr.mxu0 0.0
        %6298 = vmatpush2.msra.mxu0 0.0
        %6299 = vmatprep.subr.mxu0 0.0
        %6300 = vmatpush2.msra.mxu0 0.0
        %6301 = vmatprep.subr.mxu0 0.0
        %6302 = vmatpush2.msra.mxu0 0.0
        %6303 = vmatprep.mubr.f32.mxu0 0.0
        %6304 = vmatmul.mubr.f32.gmra.mxu0 %v6214
        %v6305 = vpop.f32.mrf.mxu0
        %v6306 = vadd.f32 0.0, %v6305
        %v6307 = vpop.f32.mrf.mxu0
        %6308 = vmatprep.mubr.f32.mxu0 0.0
        %6309 = vmatmul.mubr.f32.gmra.mxu0 %v6215
        %v6310 = vpop.f32.mrf.mxu0
        %v6311 = vadd.f32 0.0, %v6310
        %v6312 = vpop.f32.mrf.mxu0
        %6313 = vmatprep.mubr.f32.mxu0 0.0
        %6314 = vmatmul.mubr.f32.gmra.mxu0 %v6216
        %v6315 = vpop.f32.mrf.mxu0
        %v6316 = vadd.f32 0.0, %v6315
        %v6317 = vpop.f32.mrf.mxu0
        %6318 = vmatprep.mubr.f32.mxu0 0.0
        %6319 = vmatmul.mubr.f32.gmra.mxu0 %v6217
        %v6320 = vpop.f32.mrf.mxu0
        %v6321 = vadd.f32 0.0, %v6320
        %v6322 = vpop.f32.mrf.mxu0
        %6323 = vmatprep.mubr.f32.mxu0 0.0
        %6324 = vmatmul.mubr.f32.gmra.mxu0 %v6218
        %v6325 = vpop.f32.mrf.mxu0
        %v6326 = vadd.f32 0.0, %v6325
        %v6327 = vpop.f32.mrf.mxu0
        %6328 = vmatprep.mubr.f32.mxu0 0.0
        %6329 = vmatmul.mubr.f32.gmra.mxu0 %v6219
        %v6330 = vpop.f32.mrf.mxu0
        %v6331 = vadd.f32 0.0, %v6330
        %v6332 = vpop.f32.mrf.mxu0
        %6333 = vmatprep.mubr.f32.mxu0 0.0
        %6334 = vmatmul.mubr.f32.gmra.mxu0 %v6220
        %v6335 = vpop.f32.mrf.mxu0
        %v6336 = vadd.f32 0.0, %v6335
        %v6337 = vpop.f32.mrf.mxu0
        %6338 = vmatprep.mubr.f32.mxu0 0.0
        %6339 = vmatmul.mubr.f32.gmra.mxu0 %v6221
        %v6340 = vpop.f32.mrf.mxu0
        %v6341 = vadd.f32 0.0, %v6340
        %v6342 = vpop.f32.mrf.mxu0
        %6343 = vdwg.mxu0
        %v6344 = vadd.f32 %v6206, %v6306
        %v6345 = vadd.f32 %v6207, %v6311
        %v6346 = vadd.f32 %v6208, %v6316
        %v6347 = vadd.f32 %v6209, %v6321
        %v6348 = vadd.f32 %v6210, %v6326
        %v6349 = vadd.f32 %v6211, %v6331
        %v6350 = vadd.f32 %v6212, %v6336
        %v6351 = vadd.f32 %v6213, %v6341
        %v6352 = vld [vmem:[%s1575 + $0x2] sm:$0xff]
        %v6353 = vld [vmem:[%s1575 + $0x12] sm:$0xff]
        %v6354 = vld [vmem:[%s1575 + $0x22] sm:$0xff]
        %v6355 = vld [vmem:[%s1575 + $0x32] sm:$0xff]
        %v6356 = vld [vmem:[%s1575 + $0x62] sm:$0xff]
        %v6357 = vld [vmem:[%s1575 + $0x72] sm:$0xff]
        %v6358 = vld [vmem:[%s1575 + $0x82] sm:$0xff]
        %v6359 = vld [vmem:[%s1575 + $0x92] sm:$0xff]
        %s6360 = scalar_lea.vmem %s803, 640 [#allocation16]
        %v6361 = vld [vmem:[%s6360] sm:$0xff]
        %v6362 = vld [vmem:[%s6360 + $0x8] sm:$0xff]
        %v6363 = vld [vmem:[%s6360 + $0x10] sm:$0xff]
        %v6364 = vld [vmem:[%s6360 + $0x18] sm:$0xff]
        %v6365 = vld [vmem:[%s6360 + $0x20] sm:$0xff]
        %v6366 = vld [vmem:[%s6360 + $0x28] sm:$0xff]
        %v6367 = vld [vmem:[%s6360 + $0x30] sm:$0xff]
        %v6368 = vld [vmem:[%s6360 + $0x38] sm:$0xff]
        %v6369 = vld [vmem:[%s6360 + $0x40] sm:$0xff]
        %v6370 = vld [vmem:[%s6360 + $0x48] sm:$0xff]
        %v6371 = vld [vmem:[%s6360 + $0x50] sm:$0xff]
        %v6372 = vld [vmem:[%s6360 + $0x58] sm:$0xff]
        %v6373 = vld [vmem:[%s6360 + $0x60] sm:$0xff]
        %v6374 = vld [vmem:[%s6360 + $0x68] sm:$0xff]
        %v6375 = vld [vmem:[%s6360 + $0x70] sm:$0xff]
        %v6376 = vld [vmem:[%s6360 + $0x78] sm:$0xff]
        %6377 = vmatprep.subr.mxu0 0.0
        %6378 = vmatpush1.msra.mxu0 %v6376
        %6379 = vmatprep.subr.mxu0 0.0
        %6380 = vmatpush1.msra.mxu0 %v6375
        %6381 = vmatprep.subr.mxu0 0.0
        %6382 = vmatpush1.msra.mxu0 %v6374
        %6383 = vmatprep.subr.mxu0 0.0
        %6384 = vmatpush1.msra.mxu0 %v6373
        %6385 = vmatprep.subr.mxu0 0.0
        %6386 = vmatpush1.msra.mxu0 %v6372
        %6387 = vmatprep.subr.mxu0 0.0
        %6388 = vmatpush1.msra.mxu0 %v6371
        %6389 = vmatprep.subr.mxu0 0.0
        %6390 = vmatpush1.msra.mxu0 %v6370
        %6391 = vmatprep.subr.mxu0 0.0
        %6392 = vmatpush1.msra.mxu0 %v6369
        %6393 = vmatprep.subr.mxu0 0.0
        %6394 = vmatpush1.msra.mxu0 %v6368
        %6395 = vmatprep.subr.mxu0 0.0
        %6396 = vmatpush1.msra.mxu0 %v6367
        %6397 = vmatprep.subr.mxu0 0.0
        %6398 = vmatpush1.msra.mxu0 %v6366
        %6399 = vmatprep.subr.mxu0 0.0
        %6400 = vmatpush1.msra.mxu0 %v6365
        %6401 = vmatprep.subr.mxu0 0.0
        %6402 = vmatpush1.msra.mxu0 %v6364
        %6403 = vmatprep.subr.mxu0 0.0
        %6404 = vmatpush1.msra.mxu0 %v6363
        %6405 = vmatprep.subr.mxu0 0.0
        %6406 = vmatpush1.msra.mxu0 %v6362
        %6407 = vmatprep.subr.mxu0 0.0
        %6408 = vmatpush1.msra.mxu0 %v6361
        %6409 = vmatprep.subr.mxu0 0.0
        %6410 = vmatpush2.msra.mxu0 0.0
        %6411 = vmatprep.subr.mxu0 0.0
        %6412 = vmatpush2.msra.mxu0 0.0
        %6413 = vmatprep.subr.mxu0 0.0
        %6414 = vmatpush2.msra.mxu0 0.0
        %6415 = vmatprep.subr.mxu0 0.0
        %6416 = vmatpush2.msra.mxu0 0.0
        %6417 = vmatprep.subr.mxu0 0.0
        %6418 = vmatpush2.msra.mxu0 0.0
        %6419 = vmatprep.subr.mxu0 0.0
        %6420 = vmatpush2.msra.mxu0 0.0
        %6421 = vmatprep.subr.mxu0 0.0
        %6422 = vmatpush2.msra.mxu0 0.0
        %6423 = vmatprep.subr.mxu0 0.0
        %6424 = vmatpush2.msra.mxu0 0.0
        %6425 = vmatprep.subr.mxu0 0.0
        %6426 = vmatpush2.msra.mxu0 0.0
        %6427 = vmatprep.subr.mxu0 0.0
        %6428 = vmatpush2.msra.mxu0 0.0
        %6429 = vmatprep.subr.mxu0 0.0
        %6430 = vmatpush2.msra.mxu0 0.0
        %6431 = vmatprep.subr.mxu0 0.0
        %6432 = vmatpush2.msra.mxu0 0.0
        %6433 = vmatprep.subr.mxu0 0.0
        %6434 = vmatpush2.msra.mxu0 0.0
        %6435 = vmatprep.subr.mxu0 0.0
        %6436 = vmatpush2.msra.mxu0 0.0
        %6437 = vmatprep.subr.mxu0 0.0
        %6438 = vmatpush2.msra.mxu0 0.0
        %6439 = vmatprep.subr.mxu0 0.0
        %6440 = vmatpush2.msra.mxu0 0.0
        %6441 = vmatprep.mubr.f32.mxu0 0.0
        %6442 = vmatmul.mubr.f32.gmra.mxu0 %v6352
        %v6443 = vpop.f32.mrf.mxu0
        %v6444 = vadd.f32 0.0, %v6443
        %v6445 = vpop.f32.mrf.mxu0
        %6446 = vmatprep.mubr.f32.mxu0 0.0
        %6447 = vmatmul.mubr.f32.gmra.mxu0 %v6353
        %v6448 = vpop.f32.mrf.mxu0
        %v6449 = vadd.f32 0.0, %v6448
        %v6450 = vpop.f32.mrf.mxu0
        %6451 = vmatprep.mubr.f32.mxu0 0.0
        %6452 = vmatmul.mubr.f32.gmra.mxu0 %v6354
        %v6453 = vpop.f32.mrf.mxu0
        %v6454 = vadd.f32 0.0, %v6453
        %v6455 = vpop.f32.mrf.mxu0
        %6456 = vmatprep.mubr.f32.mxu0 0.0
        %6457 = vmatmul.mubr.f32.gmra.mxu0 %v6355
        %v6458 = vpop.f32.mrf.mxu0
        %v6459 = vadd.f32 0.0, %v6458
        %v6460 = vpop.f32.mrf.mxu0
        %6461 = vmatprep.mubr.f32.mxu0 0.0
        %6462 = vmatmul.mubr.f32.gmra.mxu0 %v6356
        %v6463 = vpop.f32.mrf.mxu0
        %v6464 = vadd.f32 0.0, %v6463
        %v6465 = vpop.f32.mrf.mxu0
        %6466 = vmatprep.mubr.f32.mxu0 0.0
        %6467 = vmatmul.mubr.f32.gmra.mxu0 %v6357
        %v6468 = vpop.f32.mrf.mxu0
        %v6469 = vadd.f32 0.0, %v6468
        %v6470 = vpop.f32.mrf.mxu0
        %6471 = vmatprep.mubr.f32.mxu0 0.0
        %6472 = vmatmul.mubr.f32.gmra.mxu0 %v6358
        %v6473 = vpop.f32.mrf.mxu0
        %v6474 = vadd.f32 0.0, %v6473
        %v6475 = vpop.f32.mrf.mxu0
        %6476 = vmatprep.mubr.f32.mxu0 0.0
        %6477 = vmatmul.mubr.f32.gmra.mxu0 %v6359
        %v6478 = vpop.f32.mrf.mxu0
        %v6479 = vadd.f32 0.0, %v6478
        %v6480 = vpop.f32.mrf.mxu0
        %6481 = vdwg.mxu0
        %v6482 = vadd.f32 %v6344, %v6444
        %v6483 = vadd.f32 %v6345, %v6449
        %v6484 = vadd.f32 %v6346, %v6454
        %v6485 = vadd.f32 %v6347, %v6459
        %v6486 = vadd.f32 %v6348, %v6464
        %v6487 = vadd.f32 %v6349, %v6469
        %v6488 = vadd.f32 %v6350, %v6474
        %v6489 = vadd.f32 %v6351, %v6479
        %v6490 = vld [vmem:[%s2026] sm:$0xff]
        %v6491 = vld [vmem:[%s2026 + $0x10] sm:$0xff]
        %v6492 = vld [vmem:[%s2026 + $0x20] sm:$0xff]
        %v6493 = vld [vmem:[%s2026 + $0x30] sm:$0xff]
        %v6494 = vld [vmem:[%s2026 + $0x60] sm:$0xff]
        %v6495 = vld [vmem:[%s2026 + $0x70] sm:$0xff]
        %v6496 = vld [vmem:[%s2026 + $0x80] sm:$0xff]
        %v6497 = vld [vmem:[%s2026 + $0x90] sm:$0xff]
        %s6498 = scalar_lea.vmem %s803, 768 [#allocation16]
        %v6499 = vld [vmem:[%s6498] sm:$0xff]
        %v6500 = vld [vmem:[%s6498 + $0x8] sm:$0xff]
        %v6501 = vld [vmem:[%s6498 + $0x10] sm:$0xff]
        %v6502 = vld [vmem:[%s6498 + $0x18] sm:$0xff]
        %v6503 = vld [vmem:[%s6498 + $0x20] sm:$0xff]
        %v6504 = vld [vmem:[%s6498 + $0x28] sm:$0xff]
        %v6505 = vld [vmem:[%s6498 + $0x30] sm:$0xff]
        %v6506 = vld [vmem:[%s6498 + $0x38] sm:$0xff]
        %v6507 = vld [vmem:[%s6498 + $0x40] sm:$0xff]
        %v6508 = vld [vmem:[%s6498 + $0x48] sm:$0xff]
        %v6509 = vld [vmem:[%s6498 + $0x50] sm:$0xff]
        %v6510 = vld [vmem:[%s6498 + $0x58] sm:$0xff]
        %v6511 = vld [vmem:[%s6498 + $0x60] sm:$0xff]
        %v6512 = vld [vmem:[%s6498 + $0x68] sm:$0xff]
        %v6513 = vld [vmem:[%s6498 + $0x70] sm:$0xff]
        %v6514 = vld [vmem:[%s6498 + $0x78] sm:$0xff]
        %6515 = vmatprep.subr.mxu0 0.0
        %6516 = vmatpush1.msra.mxu0 %v6514
        %6517 = vmatprep.subr.mxu0 0.0
        %6518 = vmatpush1.msra.mxu0 %v6513
        %6519 = vmatprep.subr.mxu0 0.0
        %6520 = vmatpush1.msra.mxu0 %v6512
        %6521 = vmatprep.subr.mxu0 0.0
        %6522 = vmatpush1.msra.mxu0 %v6511
        %6523 = vmatprep.subr.mxu0 0.0
        %6524 = vmatpush1.msra.mxu0 %v6510
        %6525 = vmatprep.subr.mxu0 0.0
        %6526 = vmatpush1.msra.mxu0 %v6509
        %6527 = vmatprep.subr.mxu0 0.0
        %6528 = vmatpush1.msra.mxu0 %v6508
        %6529 = vmatprep.subr.mxu0 0.0
        %6530 = vmatpush1.msra.mxu0 %v6507
        %6531 = vmatprep.subr.mxu0 0.0
        %6532 = vmatpush1.msra.mxu0 %v6506
        %6533 = vmatprep.subr.mxu0 0.0
        %6534 = vmatpush1.msra.mxu0 %v6505
        %6535 = vmatprep.subr.mxu0 0.0
        %6536 = vmatpush1.msra.mxu0 %v6504
        %6537 = vmatprep.subr.mxu0 0.0
        %6538 = vmatpush1.msra.mxu0 %v6503
        %6539 = vmatprep.subr.mxu0 0.0
        %6540 = vmatpush1.msra.mxu0 %v6502
        %6541 = vmatprep.subr.mxu0 0.0
        %6542 = vmatpush1.msra.mxu0 %v6501
        %6543 = vmatprep.subr.mxu0 0.0
        %6544 = vmatpush1.msra.mxu0 %v6500
        %6545 = vmatprep.subr.mxu0 0.0
        %6546 = vmatpush1.msra.mxu0 %v6499
        %6547 = vmatprep.subr.mxu0 0.0
        %6548 = vmatpush2.msra.mxu0 0.0
        %6549 = vmatprep.subr.mxu0 0.0
        %6550 = vmatpush2.msra.mxu0 0.0
        %6551 = vmatprep.subr.mxu0 0.0
        %6552 = vmatpush2.msra.mxu0 0.0
        %6553 = vmatprep.subr.mxu0 0.0
        %6554 = vmatpush2.msra.mxu0 0.0
        %6555 = vmatprep.subr.mxu0 0.0
        %6556 = vmatpush2.msra.mxu0 0.0
        %6557 = vmatprep.subr.mxu0 0.0
        %6558 = vmatpush2.msra.mxu0 0.0
        %6559 = vmatprep.subr.mxu0 0.0
        %6560 = vmatpush2.msra.mxu0 0.0
        %6561 = vmatprep.subr.mxu0 0.0
        %6562 = vmatpush2.msra.mxu0 0.0
        %6563 = vmatprep.subr.mxu0 0.0
        %6564 = vmatpush2.msra.mxu0 0.0
        %6565 = vmatprep.subr.mxu0 0.0
        %6566 = vmatpush2.msra.mxu0 0.0
        %6567 = vmatprep.subr.mxu0 0.0
        %6568 = vmatpush2.msra.mxu0 0.0
        %6569 = vmatprep.subr.mxu0 0.0
        %6570 = vmatpush2.msra.mxu0 0.0
        %6571 = vmatprep.subr.mxu0 0.0
        %6572 = vmatpush2.msra.mxu0 0.0
        %6573 = vmatprep.subr.mxu0 0.0
        %6574 = vmatpush2.msra.mxu0 0.0
        %6575 = vmatprep.subr.mxu0 0.0
        %6576 = vmatpush2.msra.mxu0 0.0
        %6577 = vmatprep.subr.mxu0 0.0
        %6578 = vmatpush2.msra.mxu0 0.0
        %6579 = vmatprep.mubr.f32.mxu0 0.0
        %6580 = vmatmul.mubr.f32.gmra.mxu0 %v6490
        %v6581 = vpop.f32.mrf.mxu0
        %v6582 = vadd.f32 0.0, %v6581
        %v6583 = vpop.f32.mrf.mxu0
        %6584 = vmatprep.mubr.f32.mxu0 0.0
        %6585 = vmatmul.mubr.f32.gmra.mxu0 %v6491
        %v6586 = vpop.f32.mrf.mxu0
        %v6587 = vadd.f32 0.0, %v6586
        %v6588 = vpop.f32.mrf.mxu0
        %6589 = vmatprep.mubr.f32.mxu0 0.0
        %6590 = vmatmul.mubr.f32.gmra.mxu0 %v6492
        %v6591 = vpop.f32.mrf.mxu0
        %v6592 = vadd.f32 0.0, %v6591
        %v6593 = vpop.f32.mrf.mxu0
        %6594 = vmatprep.mubr.f32.mxu0 0.0
        %6595 = vmatmul.mubr.f32.gmra.mxu0 %v6493
        %v6596 = vpop.f32.mrf.mxu0
        %v6597 = vadd.f32 0.0, %v6596
        %v6598 = vpop.f32.mrf.mxu0
        %6599 = vmatprep.mubr.f32.mxu0 0.0
        %6600 = vmatmul.mubr.f32.gmra.mxu0 %v6494
        %v6601 = vpop.f32.mrf.mxu0
        %v6602 = vadd.f32 0.0, %v6601
        %v6603 = vpop.f32.mrf.mxu0
        %6604 = vmatprep.mubr.f32.mxu0 0.0
        %6605 = vmatmul.mubr.f32.gmra.mxu0 %v6495
        %v6606 = vpop.f32.mrf.mxu0
        %v6607 = vadd.f32 0.0, %v6606
        %v6608 = vpop.f32.mrf.mxu0
        %6609 = vmatprep.mubr.f32.mxu0 0.0
        %6610 = vmatmul.mubr.f32.gmra.mxu0 %v6496
        %v6611 = vpop.f32.mrf.mxu0
        %v6612 = vadd.f32 0.0, %v6611
        %v6613 = vpop.f32.mrf.mxu0
        %6614 = vmatprep.mubr.f32.mxu0 0.0
        %6615 = vmatmul.mubr.f32.gmra.mxu0 %v6497
        %v6616 = vpop.f32.mrf.mxu0
        %v6617 = vadd.f32 0.0, %v6616
        %v6618 = vpop.f32.mrf.mxu0
        %6619 = vdwg.mxu0
        %v6620 = vadd.f32 %v6482, %v6582
        %v6621 = vadd.f32 %v6483, %v6587
        %v6622 = vadd.f32 %v6484, %v6592
        %v6623 = vadd.f32 %v6485, %v6597
        %v6624 = vadd.f32 %v6486, %v6602
        %v6625 = vadd.f32 %v6487, %v6607
        %v6626 = vadd.f32 %v6488, %v6612
        %v6627 = vadd.f32 %v6489, %v6617
        %v6628 = vld [vmem:[%s2026 + $0x1] sm:$0xff]
        %v6629 = vld [vmem:[%s2026 + $0x11] sm:$0xff]
        %v6630 = vld [vmem:[%s2026 + $0x21] sm:$0xff]
        %v6631 = vld [vmem:[%s2026 + $0x31] sm:$0xff]
        %v6632 = vld [vmem:[%s2026 + $0x61] sm:$0xff]
        %v6633 = vld [vmem:[%s2026 + $0x71] sm:$0xff]
        %v6634 = vld [vmem:[%s2026 + $0x81] sm:$0xff]
        %v6635 = vld [vmem:[%s2026 + $0x91] sm:$0xff]
        %s6636 = scalar_lea.vmem %s803, 896 [#allocation16]
        %v6637 = vld [vmem:[%s6636] sm:$0xff]
        %v6638 = vld [vmem:[%s6636 + $0x8] sm:$0xff]
        %v6639 = vld [vmem:[%s6636 + $0x10] sm:$0xff]
        %v6640 = vld [vmem:[%s6636 + $0x18] sm:$0xff]
        %v6641 = vld [vmem:[%s6636 + $0x20] sm:$0xff]
        %v6642 = vld [vmem:[%s6636 + $0x28] sm:$0xff]
        %v6643 = vld [vmem:[%s6636 + $0x30] sm:$0xff]
        %v6644 = vld [vmem:[%s6636 + $0x38] sm:$0xff]
        %v6645 = vld [vmem:[%s6636 + $0x40] sm:$0xff]
        %v6646 = vld [vmem:[%s6636 + $0x48] sm:$0xff]
        %v6647 = vld [vmem:[%s6636 + $0x50] sm:$0xff]
        %v6648 = vld [vmem:[%s6636 + $0x58] sm:$0xff]
        %v6649 = vld [vmem:[%s6636 + $0x60] sm:$0xff]
        %v6650 = vld [vmem:[%s6636 + $0x68] sm:$0xff]
        %v6651 = vld [vmem:[%s6636 + $0x70] sm:$0xff]
        %v6652 = vld [vmem:[%s6636 + $0x78] sm:$0xff]
        %6653 = vmatprep.subr.mxu0 0.0
        %6654 = vmatpush1.msra.mxu0 %v6652
        %6655 = vmatprep.subr.mxu0 0.0
        %6656 = vmatpush1.msra.mxu0 %v6651
        %6657 = vmatprep.subr.mxu0 0.0
        %6658 = vmatpush1.msra.mxu0 %v6650
        %6659 = vmatprep.subr.mxu0 0.0
        %6660 = vmatpush1.msra.mxu0 %v6649
        %6661 = vmatprep.subr.mxu0 0.0
        %6662 = vmatpush1.msra.mxu0 %v6648
        %6663 = vmatprep.subr.mxu0 0.0
        %6664 = vmatpush1.msra.mxu0 %v6647
        %6665 = vmatprep.subr.mxu0 0.0
        %6666 = vmatpush1.msra.mxu0 %v6646
        %6667 = vmatprep.subr.mxu0 0.0
        %6668 = vmatpush1.msra.mxu0 %v6645
        %6669 = vmatprep.subr.mxu0 0.0
        %6670 = vmatpush1.msra.mxu0 %v6644
        %6671 = vmatprep.subr.mxu0 0.0
        %6672 = vmatpush1.msra.mxu0 %v6643
        %6673 = vmatprep.subr.mxu0 0.0
        %6674 = vmatpush1.msra.mxu0 %v6642
        %6675 = vmatprep.subr.mxu0 0.0
        %6676 = vmatpush1.msra.mxu0 %v6641
        %6677 = vmatprep.subr.mxu0 0.0
        %6678 = vmatpush1.msra.mxu0 %v6640
        %6679 = vmatprep.subr.mxu0 0.0
        %6680 = vmatpush1.msra.mxu0 %v6639
        %6681 = vmatprep.subr.mxu0 0.0
        %6682 = vmatpush1.msra.mxu0 %v6638
        %6683 = vmatprep.subr.mxu0 0.0
        %6684 = vmatpush1.msra.mxu0 %v6637
        %6685 = vmatprep.subr.mxu0 0.0
        %6686 = vmatpush2.msra.mxu0 0.0
        %6687 = vmatprep.subr.mxu0 0.0
        %6688 = vmatpush2.msra.mxu0 0.0
        %6689 = vmatprep.subr.mxu0 0.0
        %6690 = vmatpush2.msra.mxu0 0.0
        %6691 = vmatprep.subr.mxu0 0.0
        %6692 = vmatpush2.msra.mxu0 0.0
        %6693 = vmatprep.subr.mxu0 0.0
        %6694 = vmatpush2.msra.mxu0 0.0
        %6695 = vmatprep.subr.mxu0 0.0
        %6696 = vmatpush2.msra.mxu0 0.0
        %6697 = vmatprep.subr.mxu0 0.0
        %6698 = vmatpush2.msra.mxu0 0.0
        %6699 = vmatprep.subr.mxu0 0.0
        %6700 = vmatpush2.msra.mxu0 0.0
        %6701 = vmatprep.subr.mxu0 0.0
        %6702 = vmatpush2.msra.mxu0 0.0
        %6703 = vmatprep.subr.mxu0 0.0
        %6704 = vmatpush2.msra.mxu0 0.0
        %6705 = vmatprep.subr.mxu0 0.0
        %6706 = vmatpush2.msra.mxu0 0.0
        %6707 = vmatprep.subr.mxu0 0.0
        %6708 = vmatpush2.msra.mxu0 0.0
        %6709 = vmatprep.subr.mxu0 0.0
        %6710 = vmatpush2.msra.mxu0 0.0
        %6711 = vmatprep.subr.mxu0 0.0
        %6712 = vmatpush2.msra.mxu0 0.0
        %6713 = vmatprep.subr.mxu0 0.0
        %6714 = vmatpush2.msra.mxu0 0.0
        %6715 = vmatprep.subr.mxu0 0.0
        %6716 = vmatpush2.msra.mxu0 0.0
        %6717 = vmatprep.mubr.f32.mxu0 0.0
        %6718 = vmatmul.mubr.f32.gmra.mxu0 %v6628
        %v6719 = vpop.f32.mrf.mxu0
        %v6720 = vadd.f32 0.0, %v6719
        %v6721 = vpop.f32.mrf.mxu0
        %6722 = vmatprep.mubr.f32.mxu0 0.0
        %6723 = vmatmul.mubr.f32.gmra.mxu0 %v6629
        %v6724 = vpop.f32.mrf.mxu0
        %v6725 = vadd.f32 0.0, %v6724
        %v6726 = vpop.f32.mrf.mxu0
        %6727 = vmatprep.mubr.f32.mxu0 0.0
        %6728 = vmatmul.mubr.f32.gmra.mxu0 %v6630
        %v6729 = vpop.f32.mrf.mxu0
        %v6730 = vadd.f32 0.0, %v6729
        %v6731 = vpop.f32.mrf.mxu0
        %6732 = vmatprep.mubr.f32.mxu0 0.0
        %6733 = vmatmul.mubr.f32.gmra.mxu0 %v6631
        %v6734 = vpop.f32.mrf.mxu0
        %v6735 = vadd.f32 0.0, %v6734
        %v6736 = vpop.f32.mrf.mxu0
        %6737 = vmatprep.mubr.f32.mxu0 0.0
        %6738 = vmatmul.mubr.f32.gmra.mxu0 %v6632
        %v6739 = vpop.f32.mrf.mxu0
        %v6740 = vadd.f32 0.0, %v6739
        %v6741 = vpop.f32.mrf.mxu0
        %6742 = vmatprep.mubr.f32.mxu0 0.0
        %6743 = vmatmul.mubr.f32.gmra.mxu0 %v6633
        %v6744 = vpop.f32.mrf.mxu0
        %v6745 = vadd.f32 0.0, %v6744
        %v6746 = vpop.f32.mrf.mxu0
        %6747 = vmatprep.mubr.f32.mxu0 0.0
        %6748 = vmatmul.mubr.f32.gmra.mxu0 %v6634
        %v6749 = vpop.f32.mrf.mxu0
        %v6750 = vadd.f32 0.0, %v6749
        %v6751 = vpop.f32.mrf.mxu0
        %6752 = vmatprep.mubr.f32.mxu0 0.0
        %6753 = vmatmul.mubr.f32.gmra.mxu0 %v6635
        %v6754 = vpop.f32.mrf.mxu0
        %v6755 = vadd.f32 0.0, %v6754
        %v6756 = vpop.f32.mrf.mxu0
        %6757 = vdwg.mxu0
        %v6758 = vadd.f32 %v6620, %v6720
        %v6759 = vadd.f32 %v6621, %v6725
        %v6760 = vadd.f32 %v6622, %v6730
        %v6761 = vadd.f32 %v6623, %v6735
        %v6762 = vadd.f32 %v6624, %v6740
        %v6763 = vadd.f32 %v6625, %v6745
        %v6764 = vadd.f32 %v6626, %v6750
        %v6765 = vadd.f32 %v6627, %v6755
        %v6766 = vld [vmem:[%s2026 + $0x2] sm:$0xff]
        %v6767 = vld [vmem:[%s2026 + $0x12] sm:$0xff]
        %v6768 = vld [vmem:[%s2026 + $0x22] sm:$0xff]
        %v6769 = vld [vmem:[%s2026 + $0x32] sm:$0xff]
        %v6770 = vld [vmem:[%s2026 + $0x62] sm:$0xff]
        %v6771 = vld [vmem:[%s2026 + $0x72] sm:$0xff]
        %v6772 = vld [vmem:[%s2026 + $0x82] sm:$0xff]
        %v6773 = vld [vmem:[%s2026 + $0x92] sm:$0xff]
        %s6774 = scalar_lea.vmem %s803, 1024 [#allocation16]
        %v6775 = vld [vmem:[%s6774] sm:$0xff]
        %v6776 = vld [vmem:[%s6774 + $0x8] sm:$0xff]
        %v6777 = vld [vmem:[%s6774 + $0x10] sm:$0xff]
        %v6778 = vld [vmem:[%s6774 + $0x18] sm:$0xff]
        %v6779 = vld [vmem:[%s6774 + $0x20] sm:$0xff]
        %v6780 = vld [vmem:[%s6774 + $0x28] sm:$0xff]
        %v6781 = vld [vmem:[%s6774 + $0x30] sm:$0xff]
        %v6782 = vld [vmem:[%s6774 + $0x38] sm:$0xff]
        %v6783 = vld [vmem:[%s6774 + $0x40] sm:$0xff]
        %v6784 = vld [vmem:[%s6774 + $0x48] sm:$0xff]
        %v6785 = vld [vmem:[%s6774 + $0x50] sm:$0xff]
        %v6786 = vld [vmem:[%s6774 + $0x58] sm:$0xff]
        %v6787 = vld [vmem:[%s6774 + $0x60] sm:$0xff]
        %v6788 = vld [vmem:[%s6774 + $0x68] sm:$0xff]
        %v6789 = vld [vmem:[%s6774 + $0x70] sm:$0xff]
        %v6790 = vld [vmem:[%s6774 + $0x78] sm:$0xff]
        %6791 = vmatprep.subr.mxu0 0.0
        %6792 = vmatpush1.msra.mxu0 %v6790
        %6793 = vmatprep.subr.mxu0 0.0
        %6794 = vmatpush1.msra.mxu0 %v6789
        %6795 = vmatprep.subr.mxu0 0.0
        %6796 = vmatpush1.msra.mxu0 %v6788
        %6797 = vmatprep.subr.mxu0 0.0
        %6798 = vmatpush1.msra.mxu0 %v6787
        %6799 = vmatprep.subr.mxu0 0.0
        %6800 = vmatpush1.msra.mxu0 %v6786
        %6801 = vmatprep.subr.mxu0 0.0
        %6802 = vmatpush1.msra.mxu0 %v6785
        %6803 = vmatprep.subr.mxu0 0.0
        %6804 = vmatpush1.msra.mxu0 %v6784
        %6805 = vmatprep.subr.mxu0 0.0
        %6806 = vmatpush1.msra.mxu0 %v6783
        %6807 = vmatprep.subr.mxu0 0.0
        %6808 = vmatpush1.msra.mxu0 %v6782
        %6809 = vmatprep.subr.mxu0 0.0
        %6810 = vmatpush1.msra.mxu0 %v6781
        %6811 = vmatprep.subr.mxu0 0.0
        %6812 = vmatpush1.msra.mxu0 %v6780
        %6813 = vmatprep.subr.mxu0 0.0
        %6814 = vmatpush1.msra.mxu0 %v6779
        %6815 = vmatprep.subr.mxu0 0.0
        %6816 = vmatpush1.msra.mxu0 %v6778
        %6817 = vmatprep.subr.mxu0 0.0
        %6818 = vmatpush1.msra.mxu0 %v6777
        %6819 = vmatprep.subr.mxu0 0.0
        %6820 = vmatpush1.msra.mxu0 %v6776
        %6821 = vmatprep.subr.mxu0 0.0
        %6822 = vmatpush1.msra.mxu0 %v6775
        %6823 = vmatprep.subr.mxu0 0.0
        %6824 = vmatpush2.msra.mxu0 0.0
        %6825 = vmatprep.subr.mxu0 0.0
        %6826 = vmatpush2.msra.mxu0 0.0
        %6827 = vmatprep.subr.mxu0 0.0
        %6828 = vmatpush2.msra.mxu0 0.0
        %6829 = vmatprep.subr.mxu0 0.0
        %6830 = vmatpush2.msra.mxu0 0.0
        %6831 = vmatprep.subr.mxu0 0.0
        %6832 = vmatpush2.msra.mxu0 0.0
        %6833 = vmatprep.subr.mxu0 0.0
        %6834 = vmatpush2.msra.mxu0 0.0
        %6835 = vmatprep.subr.mxu0 0.0
        %6836 = vmatpush2.msra.mxu0 0.0
        %6837 = vmatprep.subr.mxu0 0.0
        %6838 = vmatpush2.msra.mxu0 0.0
        %6839 = vmatprep.subr.mxu0 0.0
        %6840 = vmatpush2.msra.mxu0 0.0
        %6841 = vmatprep.subr.mxu0 0.0
        %6842 = vmatpush2.msra.mxu0 0.0
        %6843 = vmatprep.subr.mxu0 0.0
        %6844 = vmatpush2.msra.mxu0 0.0
        %6845 = vmatprep.subr.mxu0 0.0
        %6846 = vmatpush2.msra.mxu0 0.0
        %6847 = vmatprep.subr.mxu0 0.0
        %6848 = vmatpush2.msra.mxu0 0.0
        %6849 = vmatprep.subr.mxu0 0.0
        %6850 = vmatpush2.msra.mxu0 0.0
        %6851 = vmatprep.subr.mxu0 0.0
        %6852 = vmatpush2.msra.mxu0 0.0
        %6853 = vmatprep.subr.mxu0 0.0
        %6854 = vmatpush2.msra.mxu0 0.0
        %6855 = vmatprep.mubr.f32.mxu0 0.0
        %6856 = vmatmul.mubr.f32.gmra.mxu0 %v6766
        %v6857 = vpop.f32.mrf.mxu0
        %v6858 = vadd.f32 0.0, %v6857
        %v6859 = vpop.f32.mrf.mxu0
        %6860 = vmatprep.mubr.f32.mxu0 0.0
        %6861 = vmatmul.mubr.f32.gmra.mxu0 %v6767
        %v6862 = vpop.f32.mrf.mxu0
        %v6863 = vadd.f32 0.0, %v6862
        %v6864 = vpop.f32.mrf.mxu0
        %6865 = vmatprep.mubr.f32.mxu0 0.0
        %6866 = vmatmul.mubr.f32.gmra.mxu0 %v6768
        %v6867 = vpop.f32.mrf.mxu0
        %v6868 = vadd.f32 0.0, %v6867
        %v6869 = vpop.f32.mrf.mxu0
        %6870 = vmatprep.mubr.f32.mxu0 0.0
        %6871 = vmatmul.mubr.f32.gmra.mxu0 %v6769
        %v6872 = vpop.f32.mrf.mxu0
        %v6873 = vadd.f32 0.0, %v6872
        %v6874 = vpop.f32.mrf.mxu0
        %6875 = vmatprep.mubr.f32.mxu0 0.0
        %6876 = vmatmul.mubr.f32.gmra.mxu0 %v6770
        %v6877 = vpop.f32.mrf.mxu0
        %v6878 = vadd.f32 0.0, %v6877
        %v6879 = vpop.f32.mrf.mxu0
        %6880 = vmatprep.mubr.f32.mxu0 0.0
        %6881 = vmatmul.mubr.f32.gmra.mxu0 %v6771
        %v6882 = vpop.f32.mrf.mxu0
        %v6883 = vadd.f32 0.0, %v6882
        %v6884 = vpop.f32.mrf.mxu0
        %6885 = vmatprep.mubr.f32.mxu0 0.0
        %6886 = vmatmul.mubr.f32.gmra.mxu0 %v6772
        %v6887 = vpop.f32.mrf.mxu0
        %v6888 = vadd.f32 0.0, %v6887
        %v6889 = vpop.f32.mrf.mxu0
        %6890 = vmatprep.mubr.f32.mxu0 0.0
        %6891 = vmatmul.mubr.f32.gmra.mxu0 %v6773
        %v6892 = vpop.f32.mrf.mxu0
        %v6893 = vadd.f32 0.0, %v6892
        %v6894 = vpop.f32.mrf.mxu0
        %6895 = vdwg.mxu0
        %v6896 = vadd.f32 %v6758, %v6858
        %v6897 = vadd.f32 %v6759, %v6863
        %v6898 = vadd.f32 %v6760, %v6868
        %v6899 = vadd.f32 %v6761, %v6873
        %v6900 = vadd.f32 %v6762, %v6878
        %v6901 = vadd.f32 %v6763, %v6883
        %v6902 = vadd.f32 %v6764, %v6888
        %v6903 = vadd.f32 %v6765, %v6893
        %v6904 = vld [vmem:[%s811] sm:$0x1]
        %v6906 = vlaneseq
        %v6907 = vshrl.u32 %v6906, 7
        %v6908 = vsub.s32 0, %v6907
        %v6909 = vrot.slane %v6904, %v6908
        %v6911 = vadd.f32 %v6896, %v6909
        %v6912 = vadd.f32 %v6897, %v6909
        %v6913 = vadd.f32 %v6898, %v6909
        %v6914 = vadd.f32 %v6899, %v6909
        %v6915 = vadd.f32 %v6900, %v6909
        %v6916 = vadd.f32 %v6901, %v6909
        %v6917 = vadd.f32 %v6902, %v6909
        %v6918 = vadd.f32 %v6903, %v6909
        %6919 = vmatprep.subr.mxu0 0.0
        %6920 = vmatpush1.msra.mxu0 %v4337
        %6921 = vmatprep.subr.mxu0 0.0
        %6922 = vmatpush1.msra.mxu0 %v4336
        %6923 = vmatprep.subr.mxu0 0.0
        %6924 = vmatpush1.msra.mxu0 %v4335
        %6925 = vmatprep.subr.mxu0 0.0
        %6926 = vmatpush1.msra.mxu0 %v4334
        %6927 = vmatprep.subr.mxu0 0.0
        %6928 = vmatpush1.msra.mxu0 %v4333
        %6929 = vmatprep.subr.mxu0 0.0
        %6930 = vmatpush1.msra.mxu0 %v4332
        %6931 = vmatprep.subr.mxu0 0.0
        %6932 = vmatpush1.msra.mxu0 %v4331
        %6933 = vmatprep.subr.mxu0 0.0
        %6934 = vmatpush1.msra.mxu0 %v4330
        %6935 = vmatprep.subr.mxu0 0.0
        %6936 = vmatpush1.msra.mxu0 %v4329
        %6937 = vmatprep.subr.mxu0 0.0
        %6938 = vmatpush1.msra.mxu0 %v4328
        %6939 = vmatprep.subr.mxu0 0.0
        %6940 = vmatpush1.msra.mxu0 %v4327
        %6941 = vmatprep.subr.mxu0 0.0
        %6942 = vmatpush1.msra.mxu0 %v4326
        %6943 = vmatprep.subr.mxu0 0.0
        %6944 = vmatpush1.msra.mxu0 %v4325
        %6945 = vmatprep.subr.mxu0 0.0
        %6946 = vmatpush1.msra.mxu0 %v4324
        %6947 = vmatprep.subr.mxu0 0.0
        %6948 = vmatpush1.msra.mxu0 %v4323
        %6949 = vmatprep.subr.mxu0 0.0
        %6950 = vmatpush1.msra.mxu0 %v4322
        %6951 = vmatprep.subr.mxu0 0.0
        %6952 = vmatpush2.msra.mxu0 0.0
        %6953 = vmatprep.subr.mxu0 0.0
        %6954 = vmatpush2.msra.mxu0 0.0
        %6955 = vmatprep.subr.mxu0 0.0
        %6956 = vmatpush2.msra.mxu0 0.0
        %6957 = vmatprep.subr.mxu0 0.0
        %6958 = vmatpush2.msra.mxu0 0.0
        %6959 = vmatprep.subr.mxu0 0.0
        %6960 = vmatpush2.msra.mxu0 0.0
        %6961 = vmatprep.subr.mxu0 0.0
        %6962 = vmatpush2.msra.mxu0 0.0
        %6963 = vmatprep.subr.mxu0 0.0
        %6964 = vmatpush2.msra.mxu0 0.0
        %6965 = vmatprep.subr.mxu0 0.0
        %6966 = vmatpush2.msra.mxu0 0.0
        %6967 = vmatprep.subr.mxu0 0.0
        %6968 = vmatpush2.msra.mxu0 0.0
        %6969 = vmatprep.subr.mxu0 0.0
        %6970 = vmatpush2.msra.mxu0 0.0
        %6971 = vmatprep.subr.mxu0 0.0
        %6972 = vmatpush2.msra.mxu0 0.0
        %6973 = vmatprep.subr.mxu0 0.0
        %6974 = vmatpush2.msra.mxu0 0.0
        %6975 = vmatprep.subr.mxu0 0.0
        %6976 = vmatpush2.msra.mxu0 0.0
        %6977 = vmatprep.subr.mxu0 0.0
        %6978 = vmatpush2.msra.mxu0 0.0
        %6979 = vmatprep.subr.mxu0 0.0
        %6980 = vmatpush2.msra.mxu0 0.0
        %6981 = vmatprep.subr.mxu0 0.0
        %6982 = vmatpush2.msra.mxu0 0.0
        %6983 = vmatprep.mubr.f32.mxu0 0.0
        %6984 = vmatmul.mubr.f32.gmra.mxu0 %v6911
        %v6985 = vpop.f32.mrf.mxu0
        %v6986 = vadd.f32 0.0, %v6985
        %v6987 = vpop.f32.mrf.mxu0
        %6988 = vmatprep.mubr.f32.mxu0 0.0
        %6989 = vmatmul.mubr.f32.gmra.mxu0 %v6915
        %v6990 = vpop.f32.mrf.mxu0
        %v6991 = vadd.f32 0.0, %v6990
        %v6992 = vpop.f32.mrf.mxu0
        %6993 = vdwg.mxu0
        %6994 = vmatprep.subr.mxu0 0.0
        %6995 = vmatpush1.msra.mxu0 %v4668
        %6996 = vmatprep.subr.mxu0 0.0
        %6997 = vmatpush1.msra.mxu0 %v4667
        %6998 = vmatprep.subr.mxu0 0.0
        %6999 = vmatpush1.msra.mxu0 %v4666
        %7000 = vmatprep.subr.mxu0 0.0
        %7001 = vmatpush1.msra.mxu0 %v4665
        %7002 = vmatprep.subr.mxu0 0.0
        %7003 = vmatpush1.msra.mxu0 %v4664
        %7004 = vmatprep.subr.mxu0 0.0
        %7005 = vmatpush1.msra.mxu0 %v4663
        %7006 = vmatprep.subr.mxu0 0.0
        %7007 = vmatpush1.msra.mxu0 %v4662
        %7008 = vmatprep.subr.mxu0 0.0
        %7009 = vmatpush1.msra.mxu0 %v4661
        %7010 = vmatprep.subr.mxu0 0.0
        %7011 = vmatpush1.msra.mxu0 %v4660
        %7012 = vmatprep.subr.mxu0 0.0
        %7013 = vmatpush1.msra.mxu0 %v4659
        %7014 = vmatprep.subr.mxu0 0.0
        %7015 = vmatpush1.msra.mxu0 %v4658
        %7016 = vmatprep.subr.mxu0 0.0
        %7017 = vmatpush1.msra.mxu0 %v4657
        %7018 = vmatprep.subr.mxu0 0.0
        %7019 = vmatpush1.msra.mxu0 %v4656
        %7020 = vmatprep.subr.mxu0 0.0
        %7021 = vmatpush1.msra.mxu0 %v4655
        %7022 = vmatprep.subr.mxu0 0.0
        %7023 = vmatpush1.msra.mxu0 %v4654
        %7024 = vmatprep.subr.mxu0 0.0
        %7025 = vmatpush1.msra.mxu0 %v4653
        %7026 = vmatprep.subr.mxu0 0.0
        %7027 = vmatpush2.msra.mxu0 0.0
        %7028 = vmatprep.subr.mxu0 0.0
        %7029 = vmatpush2.msra.mxu0 0.0
        %7030 = vmatprep.subr.mxu0 0.0
        %7031 = vmatpush2.msra.mxu0 0.0
        %7032 = vmatprep.subr.mxu0 0.0
        %7033 = vmatpush2.msra.mxu0 0.0
        %7034 = vmatprep.subr.mxu0 0.0
        %7035 = vmatpush2.msra.mxu0 0.0
        %7036 = vmatprep.subr.mxu0 0.0
        %7037 = vmatpush2.msra.mxu0 0.0
        %7038 = vmatprep.subr.mxu0 0.0
        %7039 = vmatpush2.msra.mxu0 0.0
        %7040 = vmatprep.subr.mxu0 0.0
        %7041 = vmatpush2.msra.mxu0 0.0
        %7042 = vmatprep.subr.mxu0 0.0
        %7043 = vmatpush2.msra.mxu0 0.0
        %7044 = vmatprep.subr.mxu0 0.0
        %7045 = vmatpush2.msra.mxu0 0.0
        %7046 = vmatprep.subr.mxu0 0.0
        %7047 = vmatpush2.msra.mxu0 0.0
        %7048 = vmatprep.subr.mxu0 0.0
        %7049 = vmatpush2.msra.mxu0 0.0
        %7050 = vmatprep.subr.mxu0 0.0
        %7051 = vmatpush2.msra.mxu0 0.0
        %7052 = vmatprep.subr.mxu0 0.0
        %7053 = vmatpush2.msra.mxu0 0.0
        %7054 = vmatprep.subr.mxu0 0.0
        %7055 = vmatpush2.msra.mxu0 0.0
        %7056 = vmatprep.subr.mxu0 0.0
        %7057 = vmatpush2.msra.mxu0 0.0
        %7058 = vmatprep.mubr.f32.mxu0 0.0
        %7059 = vmatmul.mubr.f32.gmra.mxu0 %v6914
        %v7060 = vpop.f32.mrf.mxu0
        %v7061 = vadd.f32 0.0, %v7060
        %v7062 = vpop.f32.mrf.mxu0
        %7063 = vmatprep.mubr.f32.mxu0 0.0
        %7064 = vmatmul.mubr.f32.gmra.mxu0 %v6918
        %v7065 = vpop.f32.mrf.mxu0
        %v7066 = vadd.f32 0.0, %v7065
        %v7067 = vpop.f32.mrf.mxu0
        %7068 = vdwg.mxu0
        %v7081 = vrot.slane %v6911, 7
        %v7082 = vsel %vm5012, %v7081, %v6986
        %v7083 = vrot.slane %v6912, 6
        %v7084 = vsel %vm5015, %v7083, %v7082
        %v7085 = vrot.slane %v6913, 5
        %v7086 = vsel %vm5018, %v7085, %v7084
        %v7087 = vrot.slane %v6914, 4
        %v7088 = vsel %vm5021, %v7087, %v7086
        %v7089 = vrot.slane %v7061, 3
        %v7090 = vsel %vm5024, %v7089, %v7088
        %v7091 = vrot.slane %v6991, 2
        %v7092 = vsel %vm5027, %v7091, %v7090
        %v7093 = vrot.slane %v6915, 1
        %v7094 = vsel %vm5030, %v7093, %v7092
        %v7095 = vrot.slane %v6917, 7
        %v7096 = vsel %vm5012, %v7095, %v6916
        %v7097 = vrot.slane %v6918, 6
        %v7098 = vsel %vm5015, %v7097, %v7096
        %v7099 = vrot.slane %v7066, 5
        %v7100 = vsel %vm5018, %v7099, %v7098
        %7103 = vmatprep.subr.mxu0 0.0
        %7104 = vmatpush1.msra.mxu0 %v4998
        %7105 = vmatprep.subr.mxu0 0.0
        %7106 = vmatpush1.msra.mxu0 %v4997
        %7107 = vmatprep.subr.mxu0 0.0
        %7108 = vmatpush1.msra.mxu0 %v4996
        %7109 = vmatprep.subr.mxu0 0.0
        %7110 = vmatpush1.msra.mxu0 %v4995
        %7111 = vmatprep.subr.mxu0 0.0
        %7112 = vmatpush1.msra.mxu0 %v4994
        %7113 = vmatprep.subr.mxu0 0.0
        %7114 = vmatpush1.msra.mxu0 %v4993
        %7115 = vmatprep.subr.mxu0 0.0
        %7116 = vmatpush1.msra.mxu0 %v4992
        %7117 = vmatprep.subr.mxu0 0.0
        %7118 = vmatpush1.msra.mxu0 %v4991
        %7119 = vmatprep.subr.mxu0 0.0
        %7120 = vmatpush1.msra.mxu0 %v4990
        %7121 = vmatprep.subr.mxu0 0.0
        %7122 = vmatpush1.msra.mxu0 %v4989
        %7123 = vmatprep.subr.mxu0 0.0
        %7124 = vmatpush1.msra.mxu0 %v4988
        %7125 = vmatprep.subr.mxu0 0.0
        %7126 = vmatpush1.msra.mxu0 %v4987
        %7127 = vmatprep.subr.mxu0 0.0
        %7128 = vmatpush1.msra.mxu0 %v4986
        %7129 = vmatprep.subr.mxu0 0.0
        %7130 = vmatpush1.msra.mxu0 %v4985
        %7131 = vmatprep.subr.mxu0 0.0
        %7132 = vmatpush1.msra.mxu0 %v4984
        %7133 = vmatprep.subr.mxu0 0.0
        %7134 = vmatpush1.msra.mxu0 %v4983
        %7135 = vmatprep.subr.mxu0 0.0
        %7136 = vmatpush2.msra.mxu0 0.0
        %7137 = vmatprep.subr.mxu0 0.0
        %7138 = vmatpush2.msra.mxu0 0.0
        %7139 = vmatprep.subr.mxu0 0.0
        %7140 = vmatpush2.msra.mxu0 0.0
        %7141 = vmatprep.subr.mxu0 0.0
        %7142 = vmatpush2.msra.mxu0 0.0
        %7143 = vmatprep.subr.mxu0 0.0
        %7144 = vmatpush2.msra.mxu0 0.0
        %7145 = vmatprep.subr.mxu0 0.0
        %7146 = vmatpush2.msra.mxu0 0.0
        %7147 = vmatprep.subr.mxu0 0.0
        %7148 = vmatpush2.msra.mxu0 0.0
        %7149 = vmatprep.subr.mxu0 0.0
        %7150 = vmatpush2.msra.mxu0 0.0
        %7151 = vmatprep.subr.mxu0 0.0
        %7152 = vmatpush2.msra.mxu0 0.0
        %7153 = vmatprep.subr.mxu0 0.0
        %7154 = vmatpush2.msra.mxu0 0.0
        %7155 = vmatprep.subr.mxu0 0.0
        %7156 = vmatpush2.msra.mxu0 0.0
        %7157 = vmatprep.subr.mxu0 0.0
        %7158 = vmatpush2.msra.mxu0 0.0
        %7159 = vmatprep.subr.mxu0 0.0
        %7160 = vmatpush2.msra.mxu0 0.0
        %7161 = vmatprep.subr.mxu0 0.0
        %7162 = vmatpush2.msra.mxu0 0.0
        %7163 = vmatprep.subr.mxu0 0.0
        %7164 = vmatpush2.msra.mxu0 0.0
        %7165 = vmatprep.subr.mxu0 0.0
        %7166 = vmatpush2.msra.mxu0 0.0
        %7167 = vmatprep.mubr.f32.mxu0 0.0
        %7168 = vmatmul.mubr.f32.gmra.mxu0 %v7094
        %v7169 = vpop.f32.mrf.mxu0
        %v7170 = vadd.f32 0.0, %v7169
        %v7171 = vpop.f32.mrf.mxu0
        %7172 = vmatprep.mubr.f32.mxu0 0.0
        %7173 = vmatmul.mubr.f32.gmra.mxu0 %v7100
        %v7174 = vpop.f32.mrf.mxu0
        %v7175 = vadd.f32 0.0, %v7174
        %v7176 = vpop.f32.mrf.mxu0
        %7177 = vdwg.mxu0
        %v7180 = vcombine.high %v7170, %v7170
        %v7182 = vunpack.c.l.s4 1966171168
        %v7183 = vunpack.c.0.s8 %v7182
        %v7184 = vlaneseq
        %v7185 = vshrl.u32 %v7184, 7
        %v7186 = vsub.s32 %v7183, %v7185
        %v7187 = vrot.slane %v7170, %v7186
        %v7189 = vunpack.c.l.s4 1966171168
        %v7190 = vunpack.c.0.s8 %v7189
        %v7191 = vlaneseq
        %v7192 = vshrl.u32 %v7191, 7
        %v7193 = vsub.s32 %v7190, %v7192
        %v7194 = vrot.slane %v7180, %v7193
        %v7195 = vcombine.high %v7187, %v7187
        %v7196 = vcombine.high %v7194, %v7194
        %v7198 = vunpack.c.l.s4 1966171168
        %v7199 = vunpack.c.0.s8 %v7198
        %v7200 = vlaneseq
        %v7201 = vshrl.u32 %v7200, 7
        %v7202 = vsub.s32 %v7199, %v7201
        %v7203 = vrot.slane %v7187, %v7202
        %v7205 = vunpack.c.l.s4 1966171168
        %v7206 = vunpack.c.0.s8 %v7205
        %v7207 = vlaneseq
        %v7208 = vshrl.u32 %v7207, 7
        %v7209 = vsub.s32 %v7206, %v7208
        %v7210 = vrot.slane %v7194, %v7209
        %v7212 = vunpack.c.l.s4 1966171168
        %v7213 = vunpack.c.0.s8 %v7212
        %v7214 = vlaneseq
        %v7215 = vshrl.u32 %v7214, 7
        %v7216 = vsub.s32 %v7213, %v7215
        %v7217 = vrot.slane %v7195, %v7216
        %v7219 = vunpack.c.l.s4 1966171168
        %v7220 = vunpack.c.0.s8 %v7219
        %v7221 = vlaneseq
        %v7222 = vshrl.u32 %v7221, 7
        %v7223 = vsub.s32 %v7220, %v7222
        %v7224 = vrot.slane %v7196, %v7223
        %v7225 = vcombine.high %v7203, %v7203
        %v7226 = vcombine.high %v7210, %v7210
        %v7227 = vcombine.high %v7217, %v7217
        %v7228 = vcombine.high %v7224, %v7224
        %v7230 = vunpack.c.l.s4 1966171168
        %v7231 = vunpack.c.0.s8 %v7230
        %v7232 = vlaneseq
        %v7233 = vshrl.u32 %v7232, 7
        %v7234 = vsub.s32 %v7231, %v7233
        %v7235 = vrot.slane %v7175, %v7234
        %v7236 = vcombine.high %v7235, %v7235
        %v7238 = vunpack.c.l.s4 1966171168
        %v7239 = vunpack.c.0.s8 %v7238
        %v7240 = vlaneseq
        %v7241 = vshrl.u32 %v7240, 7
        %v7242 = vsub.s32 %v7239, %v7241
        %v7243 = vrot.slane %v7235, %v7242
        %v7245 = vunpack.c.l.s4 1966171168
        %v7246 = vunpack.c.0.s8 %v7245
        %v7247 = vlaneseq
        %v7248 = vshrl.u32 %v7247, 7
        %v7249 = vsub.s32 %v7246, %v7248
        %v7250 = vrot.slane %v7236, %v7249
        %v7251 = vcombine.high %v7243, %v7243
        %v7252 = vcombine.high %v7250, %v7250
        %v7265 = vrot.slane %v6986, 7
        %v7266 = vrot.slane %v6911, 6
        %v7267 = vsel %vm5012, %v7266, %v7265
        %v7268 = vrot.slane %v6912, 5
        %v7269 = vsel %vm5015, %v7268, %v7267
        %v7270 = vrot.slane %v6913, 4
        %v7271 = vsel %vm5018, %v7270, %v7269
        %v7272 = vrot.slane %v6914, 3
        %v7273 = vsel %vm5021, %v7272, %v7271
        %v7274 = vrot.slane %v7061, 2
        %v7275 = vsel %vm5024, %v7274, %v7273
        %v7276 = vrot.slane %v6991, 1
        %v7277 = vsel %vm5027, %v7276, %v7275
        %v7278 = vsel %vm5030, %v6915, %v7277
        %v7279 = vrot.slane %v6916, 7
        %v7280 = vrot.slane %v6917, 6
        %v7281 = vsel %vm5012, %v7280, %v7279
        %v7282 = vrot.slane %v6918, 5
        %v7283 = vsel %vm5015, %v7282, %v7281
        %v7284 = vrot.slane %v7066, 4
        %v7285 = vsel %vm5018, %v7284, %v7283
        %7288 = vmatprep.subr.mxu0 0.0
        %7289 = vmatpush1.msra.mxu0 %v5457
        %7290 = vmatprep.subr.mxu0 0.0
        %7291 = vmatpush1.msra.mxu0 %v5456
        %7292 = vmatprep.subr.mxu0 0.0
        %7293 = vmatpush1.msra.mxu0 %v5455
        %7294 = vmatprep.subr.mxu0 0.0
        %7295 = vmatpush1.msra.mxu0 %v5454
        %7296 = vmatprep.subr.mxu0 0.0
        %7297 = vmatpush1.msra.mxu0 %v5453
        %7298 = vmatprep.subr.mxu0 0.0
        %7299 = vmatpush1.msra.mxu0 %v5452
        %7300 = vmatprep.subr.mxu0 0.0
        %7301 = vmatpush1.msra.mxu0 %v5451
        %7302 = vmatprep.subr.mxu0 0.0
        %7303 = vmatpush1.msra.mxu0 %v5450
        %7304 = vmatprep.subr.mxu0 0.0
        %7305 = vmatpush1.msra.mxu0 %v5449
        %7306 = vmatprep.subr.mxu0 0.0
        %7307 = vmatpush1.msra.mxu0 %v5448
        %7308 = vmatprep.subr.mxu0 0.0
        %7309 = vmatpush1.msra.mxu0 %v5447
        %7310 = vmatprep.subr.mxu0 0.0
        %7311 = vmatpush1.msra.mxu0 %v5446
        %7312 = vmatprep.subr.mxu0 0.0
        %7313 = vmatpush1.msra.mxu0 %v5445
        %7314 = vmatprep.subr.mxu0 0.0
        %7315 = vmatpush1.msra.mxu0 %v5444
        %7316 = vmatprep.subr.mxu0 0.0
        %7317 = vmatpush1.msra.mxu0 %v5443
        %7318 = vmatprep.subr.mxu0 0.0
        %7319 = vmatpush1.msra.mxu0 %v5442
        %7320 = vmatprep.subr.mxu0 0.0
        %7321 = vmatpush2.msra.mxu0 0.0
        %7322 = vmatprep.subr.mxu0 0.0
        %7323 = vmatpush2.msra.mxu0 0.0
        %7324 = vmatprep.subr.mxu0 0.0
        %7325 = vmatpush2.msra.mxu0 0.0
        %7326 = vmatprep.subr.mxu0 0.0
        %7327 = vmatpush2.msra.mxu0 0.0
        %7328 = vmatprep.subr.mxu0 0.0
        %7329 = vmatpush2.msra.mxu0 0.0
        %7330 = vmatprep.subr.mxu0 0.0
        %7331 = vmatpush2.msra.mxu0 0.0
        %7332 = vmatprep.subr.mxu0 0.0
        %7333 = vmatpush2.msra.mxu0 0.0
        %7334 = vmatprep.subr.mxu0 0.0
        %7335 = vmatpush2.msra.mxu0 0.0
        %7336 = vmatprep.subr.mxu0 0.0
        %7337 = vmatpush2.msra.mxu0 0.0
        %7338 = vmatprep.subr.mxu0 0.0
        %7339 = vmatpush2.msra.mxu0 0.0
        %7340 = vmatprep.subr.mxu0 0.0
        %7341 = vmatpush2.msra.mxu0 0.0
        %7342 = vmatprep.subr.mxu0 0.0
        %7343 = vmatpush2.msra.mxu0 0.0
        %7344 = vmatprep.subr.mxu0 0.0
        %7345 = vmatpush2.msra.mxu0 0.0
        %7346 = vmatprep.subr.mxu0 0.0
        %7347 = vmatpush2.msra.mxu0 0.0
        %7348 = vmatprep.subr.mxu0 0.0
        %7349 = vmatpush2.msra.mxu0 0.0
        %7350 = vmatprep.subr.mxu0 0.0
        %7351 = vmatpush2.msra.mxu0 0.0
        %7352 = vmatprep.mubr.f32.mxu0 0.0
        %7353 = vmatmul.mubr.f32.gmra.mxu0 %v7278
        %v7354 = vpop.f32.mrf.mxu0
        %v7355 = vadd.f32 0.0, %v7354
        %v7356 = vpop.f32.mrf.mxu0
        %7357 = vmatprep.mubr.f32.mxu0 0.0
        %7358 = vmatmul.mubr.f32.gmra.mxu0 %v7285
        %v7359 = vpop.f32.mrf.mxu0
        %v7360 = vadd.f32 0.0, %v7359
        %v7361 = vpop.f32.mrf.mxu0
        %7362 = vdwg.mxu0
        %v7365 = vcombine.high %v7355, %v7355
        %v7367 = vunpack.c.l.s4 1966171168
        %v7368 = vunpack.c.0.s8 %v7367
        %v7369 = vlaneseq
        %v7370 = vshrl.u32 %v7369, 7
        %v7371 = vsub.s32 %v7368, %v7370
        %v7372 = vrot.slane %v7355, %v7371
        %v7374 = vunpack.c.l.s4 1966171168
        %v7375 = vunpack.c.0.s8 %v7374
        %v7376 = vlaneseq
        %v7377 = vshrl.u32 %v7376, 7
        %v7378 = vsub.s32 %v7375, %v7377
        %v7379 = vrot.slane %v7365, %v7378
        %v7380 = vcombine.high %v7372, %v7372
        %v7381 = vcombine.high %v7379, %v7379
        %v7383 = vunpack.c.l.s4 1966171168
        %v7384 = vunpack.c.0.s8 %v7383
        %v7385 = vlaneseq
        %v7386 = vshrl.u32 %v7385, 7
        %v7387 = vsub.s32 %v7384, %v7386
        %v7388 = vrot.slane %v7372, %v7387
        %v7390 = vunpack.c.l.s4 1966171168
        %v7391 = vunpack.c.0.s8 %v7390
        %v7392 = vlaneseq
        %v7393 = vshrl.u32 %v7392, 7
        %v7394 = vsub.s32 %v7391, %v7393
        %v7395 = vrot.slane %v7379, %v7394
        %v7397 = vunpack.c.l.s4 1966171168
        %v7398 = vunpack.c.0.s8 %v7397
        %v7399 = vlaneseq
        %v7400 = vshrl.u32 %v7399, 7
        %v7401 = vsub.s32 %v7398, %v7400
        %v7402 = vrot.slane %v7380, %v7401
        %v7404 = vunpack.c.l.s4 1966171168
        %v7405 = vunpack.c.0.s8 %v7404
        %v7406 = vlaneseq
        %v7407 = vshrl.u32 %v7406, 7
        %v7408 = vsub.s32 %v7405, %v7407
        %v7409 = vrot.slane %v7381, %v7408
        %v7410 = vcombine.high %v7388, %v7388
        %v7411 = vcombine.high %v7395, %v7395
        %v7412 = vcombine.high %v7402, %v7402
        %v7413 = vcombine.high %v7409, %v7409
        %v7415 = vunpack.c.l.s4 1966171168
        %v7416 = vunpack.c.0.s8 %v7415
        %v7417 = vlaneseq
        %v7418 = vshrl.u32 %v7417, 7
        %v7419 = vsub.s32 %v7416, %v7418
        %v7420 = vrot.slane %v7360, %v7419
        %v7421 = vcombine.high %v7420, %v7420
        %v7423 = vunpack.c.l.s4 1966171168
        %v7424 = vunpack.c.0.s8 %v7423
        %v7425 = vlaneseq
        %v7426 = vshrl.u32 %v7425, 7
        %v7427 = vsub.s32 %v7424, %v7426
        %v7428 = vrot.slane %v7420, %v7427
        %v7430 = vunpack.c.l.s4 1966171168
        %v7431 = vunpack.c.0.s8 %v7430
        %v7432 = vlaneseq
        %v7433 = vshrl.u32 %v7432, 7
        %v7434 = vsub.s32 %v7431, %v7433
        %v7435 = vrot.slane %v7421, %v7434
        %v7436 = vcombine.high %v7428, %v7428
        %v7437 = vcombine.high %v7435, %v7435
        %7450 = vst [vmem:[#allocation2 + $0x1] sm:$0xff] %v6986
        %7451 = vst [vmem:[#allocation2 + $0x11] sm:$0xff] %v6911
        %7452 = vst [vmem:[#allocation2 + $0x21] sm:$0xff] %v6912
        %7453 = vst [vmem:[#allocation2 + $0x31] sm:$0xff] %v6913
        %7454 = vst [vmem:[#allocation2 + $0x41] sm:$0xff] %v6914
        %7455 = vst [vmem:[#allocation2 + $0x51] sm:$0xff] %v7061
        %7456 = vst [vmem:[#allocation2 + $0x61] sm:$0xff] %v6991
        %7457 = vst [vmem:[#allocation2 + $0x71] sm:$0xff] %v6915
        %7458 = vst [vmem:[#allocation2 + $0x81] sm:$0xff] %v6916
        %7459 = vst [vmem:[#allocation2 + $0x91] sm:$0xff] %v6917
        %7460 = vst [vmem:[#allocation2 + $0xa1] sm:$0xff] %v6918
        %7461 = vst [vmem:[#allocation2 + $0xb1] sm:$0xff] %v7066
        %7462 = vst [vmem:[#allocation2] sm:$0x1] %v7203
        %7463 = vst [vmem:[#allocation2 + $0x10] sm:$0x1] %v7217
        %7464 = vst [vmem:[#allocation2 + $0x20] sm:$0x1] %v7225
        %7465 = vst [vmem:[#allocation2 + $0x30] sm:$0x1] %v7227
        %7466 = vst [vmem:[#allocation2 + $0x40] sm:$0x1] %v7210
        %7467 = vst [vmem:[#allocation2 + $0x50] sm:$0x1] %v7224
        %7468 = vst [vmem:[#allocation2 + $0x60] sm:$0x1] %v7226
        %7469 = vst [vmem:[#allocation2 + $0x70] sm:$0x1] %v7228
        %7470 = vst [vmem:[#allocation2 + $0x80] sm:$0x1] %v7243
        %7471 = vst [vmem:[#allocation2 + $0x90] sm:$0x1] %v7250
        %7472 = vst [vmem:[#allocation2 + $0xa0] sm:$0x1] %v7251
        %7473 = vst [vmem:[#allocation2 + $0xb0] sm:$0x1] %v7252
        %7474 = vst [vmem:[#allocation2 + $0x9] sm:$0x1] %v7388
        %7475 = vst [vmem:[#allocation2 + $0x19] sm:$0x1] %v7402
        %7476 = vst [vmem:[#allocation2 + $0x29] sm:$0x1] %v7410
        %7477 = vst [vmem:[#allocation2 + $0x39] sm:$0x1] %v7412
        %7478 = vst [vmem:[#allocation2 + $0x49] sm:$0x1] %v7395
        %7479 = vst [vmem:[#allocation2 + $0x59] sm:$0x1] %v7409
        %7480 = vst [vmem:[#allocation2 + $0x69] sm:$0x1] %v7411
        %7481 = vst [vmem:[#allocation2 + $0x79] sm:$0x1] %v7413
        %7482 = vst [vmem:[#allocation2 + $0x89] sm:$0x1] %v7428
        %7483 = vst [vmem:[#allocation2 + $0x99] sm:$0x1] %v7435
        %7484 = vst [vmem:[#allocation2 + $0xa9] sm:$0x1] %v7436
        %7485 = vst [vmem:[#allocation2 + $0xb9] sm:$0x1] %v7437
        %v7486 = vld [vmem:[#allocation2] sm:$0xff]
        %v7487 = vld [vmem:[#allocation2 + $0x10] sm:$0xff]
        %v7488 = vld [vmem:[#allocation2 + $0x20] sm:$0xff]
        %v7489 = vld [vmem:[#allocation2 + $0x30] sm:$0xff]
        %v7490 = vld [vmem:[#allocation2 + $0x60] sm:$0xff]
        %v7491 = vld [vmem:[#allocation2 + $0x70] sm:$0xff]
        %v7492 = vld [vmem:[#allocation2 + $0x80] sm:$0xff]
        %v7493 = vld [vmem:[#allocation2 + $0x90] sm:$0xff]
        %v7494 = vld [vmem:[%s820] sm:$0xff]
        %v7495 = vld [vmem:[%s820 + $0x8] sm:$0xff]
        %v7496 = vld [vmem:[%s820 + $0x10] sm:$0xff]
        %v7497 = vld [vmem:[%s820 + $0x18] sm:$0xff]
        %v7498 = vld [vmem:[%s820 + $0x20] sm:$0xff]
        %v7499 = vld [vmem:[%s820 + $0x28] sm:$0xff]
        %v7500 = vld [vmem:[%s820 + $0x30] sm:$0xff]
        %v7501 = vld [vmem:[%s820 + $0x38] sm:$0xff]
        %v7502 = vld [vmem:[%s820 + $0x40] sm:$0xff]
        %v7503 = vld [vmem:[%s820 + $0x48] sm:$0xff]
        %v7504 = vld [vmem:[%s820 + $0x50] sm:$0xff]
        %v7505 = vld [vmem:[%s820 + $0x58] sm:$0xff]
        %v7506 = vld [vmem:[%s820 + $0x60] sm:$0xff]
        %v7507 = vld [vmem:[%s820 + $0x68] sm:$0xff]
        %v7508 = vld [vmem:[%s820 + $0x70] sm:$0xff]
        %v7509 = vld [vmem:[%s820 + $0x78] sm:$0xff]
        %v7510 = vld [vmem:[#allocation2 + $0x1] sm:$0xff]
        %v7511 = vld [vmem:[#allocation2 + $0x11] sm:$0xff]
        %v7512 = vld [vmem:[#allocation2 + $0x21] sm:$0xff]
        %v7513 = vld [vmem:[#allocation2 + $0x31] sm:$0xff]
        %v7514 = vld [vmem:[#allocation2 + $0x61] sm:$0xff]
        %v7515 = vld [vmem:[#allocation2 + $0x71] sm:$0xff]
        %v7516 = vld [vmem:[#allocation2 + $0x81] sm:$0xff]
        %v7517 = vld [vmem:[#allocation2 + $0x91] sm:$0xff]
        %s7518 = scalar_lea.vmem %s820, 128 [#allocation19]
        %v7519 = vld [vmem:[%s7518] sm:$0xff]
        %v7520 = vld [vmem:[%s7518 + $0x8] sm:$0xff]
        %v7521 = vld [vmem:[%s7518 + $0x10] sm:$0xff]
        %v7522 = vld [vmem:[%s7518 + $0x18] sm:$0xff]
        %v7523 = vld [vmem:[%s7518 + $0x20] sm:$0xff]
        %v7524 = vld [vmem:[%s7518 + $0x28] sm:$0xff]
        %v7525 = vld [vmem:[%s7518 + $0x30] sm:$0xff]
        %v7526 = vld [vmem:[%s7518 + $0x38] sm:$0xff]
        %v7527 = vld [vmem:[%s7518 + $0x40] sm:$0xff]
        %v7528 = vld [vmem:[%s7518 + $0x48] sm:$0xff]
        %v7529 = vld [vmem:[%s7518 + $0x50] sm:$0xff]
        %v7530 = vld [vmem:[%s7518 + $0x58] sm:$0xff]
        %v7531 = vld [vmem:[%s7518 + $0x60] sm:$0xff]
        %v7532 = vld [vmem:[%s7518 + $0x68] sm:$0xff]
        %v7533 = vld [vmem:[%s7518 + $0x70] sm:$0xff]
        %v7534 = vld [vmem:[%s7518 + $0x78] sm:$0xff]
        %7535 = vmatprep.subr.mxu0 0.0
        %7536 = vmatpush1.msra.mxu0 %v7534
        %7537 = vmatprep.subr.mxu0 0.0
        %7538 = vmatpush1.msra.mxu0 %v7533
        %7539 = vmatprep.subr.mxu0 0.0
        %7540 = vmatpush1.msra.mxu0 %v7532
        %7541 = vmatprep.subr.mxu0 0.0
        %7542 = vmatpush1.msra.mxu0 %v7531
        %7543 = vmatprep.subr.mxu0 0.0
        %7544 = vmatpush1.msra.mxu0 %v7530
        %7545 = vmatprep.subr.mxu0 0.0
        %7546 = vmatpush1.msra.mxu0 %v7529
        %7547 = vmatprep.subr.mxu0 0.0
        %7548 = vmatpush1.msra.mxu0 %v7528
        %7549 = vmatprep.subr.mxu0 0.0
        %7550 = vmatpush1.msra.mxu0 %v7527
        %7551 = vmatprep.subr.mxu0 0.0
        %7552 = vmatpush1.msra.mxu0 %v7526
        %7553 = vmatprep.subr.mxu0 0.0
        %7554 = vmatpush1.msra.mxu0 %v7525
        %7555 = vmatprep.subr.mxu0 0.0
        %7556 = vmatpush1.msra.mxu0 %v7524
        %7557 = vmatprep.subr.mxu0 0.0
        %7558 = vmatpush1.msra.mxu0 %v7523
        %7559 = vmatprep.subr.mxu0 0.0
        %7560 = vmatpush1.msra.mxu0 %v7522
        %7561 = vmatprep.subr.mxu0 0.0
        %7562 = vmatpush1.msra.mxu0 %v7521
        %7563 = vmatprep.subr.mxu0 0.0
        %7564 = vmatpush1.msra.mxu0 %v7520
        %7565 = vmatprep.subr.mxu0 0.0
        %7566 = vmatpush1.msra.mxu0 %v7519
        %7567 = vmatprep.subr.mxu0 0.0
        %7568 = vmatpush2.msra.mxu0 0.0
        %7569 = vmatprep.subr.mxu0 0.0
        %7570 = vmatpush2.msra.mxu0 0.0
        %7571 = vmatprep.subr.mxu0 0.0
        %7572 = vmatpush2.msra.mxu0 0.0
        %7573 = vmatprep.subr.mxu0 0.0
        %7574 = vmatpush2.msra.mxu0 0.0
        %7575 = vmatprep.subr.mxu0 0.0
        %7576 = vmatpush2.msra.mxu0 0.0
        %7577 = vmatprep.subr.mxu0 0.0
        %7578 = vmatpush2.msra.mxu0 0.0
        %7579 = vmatprep.subr.mxu0 0.0
        %7580 = vmatpush2.msra.mxu0 0.0
        %7581 = vmatprep.subr.mxu0 0.0
        %7582 = vmatpush2.msra.mxu0 0.0
        %7583 = vmatprep.subr.mxu0 0.0
        %7584 = vmatpush2.msra.mxu0 0.0
        %7585 = vmatprep.subr.mxu0 0.0
        %7586 = vmatpush2.msra.mxu0 0.0
        %7587 = vmatprep.subr.mxu0 0.0
        %7588 = vmatpush2.msra.mxu0 0.0
        %7589 = vmatprep.subr.mxu0 0.0
        %7590 = vmatpush2.msra.mxu0 0.0
        %7591 = vmatprep.subr.mxu0 0.0
        %7592 = vmatpush2.msra.mxu0 0.0
        %7593 = vmatprep.subr.mxu0 0.0
        %7594 = vmatpush2.msra.mxu0 0.0
        %7595 = vmatprep.subr.mxu0 0.0
        %7596 = vmatpush2.msra.mxu0 0.0
        %7597 = vmatprep.subr.mxu0 0.0
        %7598 = vmatpush2.msra.mxu0 0.0
        %7599 = vmatprep.mubr.f32.mxu0 0.0
        %7600 = vmatmul.mubr.f32.gmra.mxu0 %v7510
        %v7601 = vpop.f32.mrf.mxu0
        %v7602 = vadd.f32 0.0, %v7601
        %v7603 = vpop.f32.mrf.mxu0
        %7604 = vmatprep.mubr.f32.mxu0 0.0
        %7605 = vmatmul.mubr.f32.gmra.mxu0 %v7511
        %v7606 = vpop.f32.mrf.mxu0
        %v7607 = vadd.f32 0.0, %v7606
        %v7608 = vpop.f32.mrf.mxu0
        %7609 = vmatprep.mubr.f32.mxu0 0.0
        %7610 = vmatmul.mubr.f32.gmra.mxu0 %v7512
        %v7611 = vpop.f32.mrf.mxu0
        %v7612 = vadd.f32 0.0, %v7611
        %v7613 = vpop.f32.mrf.mxu0
        %7614 = vmatprep.mubr.f32.mxu0 0.0
        %7615 = vmatmul.mubr.f32.gmra.mxu0 %v7513
        %v7616 = vpop.f32.mrf.mxu0
        %v7617 = vadd.f32 0.0, %v7616
        %v7618 = vpop.f32.mrf.mxu0
        %7619 = vmatprep.mubr.f32.mxu0 0.0
        %7620 = vmatmul.mubr.f32.gmra.mxu0 %v7514
        %v7621 = vpop.f32.mrf.mxu0
        %v7622 = vadd.f32 0.0, %v7621
        %v7623 = vpop.f32.mrf.mxu0
        %7624 = vmatprep.mubr.f32.mxu0 0.0
        %7625 = vmatmul.mubr.f32.gmra.mxu0 %v7515
        %v7626 = vpop.f32.mrf.mxu0
        %v7627 = vadd.f32 0.0, %v7626
        %v7628 = vpop.f32.mrf.mxu0
        %7629 = vmatprep.mubr.f32.mxu0 0.0
        %7630 = vmatmul.mubr.f32.gmra.mxu0 %v7516
        %v7631 = vpop.f32.mrf.mxu0
        %v7632 = vadd.f32 0.0, %v7631
        %v7633 = vpop.f32.mrf.mxu0
        %7634 = vmatprep.mubr.f32.mxu0 0.0
        %7635 = vmatmul.mubr.f32.gmra.mxu0 %v7517
        %v7636 = vpop.f32.mrf.mxu0
        %v7637 = vadd.f32 0.0, %v7636
        %v7638 = vpop.f32.mrf.mxu0
        %7639 = vdwg.mxu0
        %7640 = vmatprep.subr.mxu0 0.0
        %7641 = vmatpush1.msra.mxu0 %v7509
        %7642 = vmatprep.subr.mxu0 0.0
        %7643 = vmatpush1.msra.mxu0 %v7508
        %7644 = vmatprep.subr.mxu0 0.0
        %7645 = vmatpush1.msra.mxu0 %v7507
        %7646 = vmatprep.subr.mxu0 0.0
        %7647 = vmatpush1.msra.mxu0 %v7506
        %7648 = vmatprep.subr.mxu0 0.0
        %7649 = vmatpush1.msra.mxu0 %v7505
        %7650 = vmatprep.subr.mxu0 0.0
        %7651 = vmatpush1.msra.mxu0 %v7504
        %7652 = vmatprep.subr.mxu0 0.0
        %7653 = vmatpush1.msra.mxu0 %v7503
        %7654 = vmatprep.subr.mxu0 0.0
        %7655 = vmatpush1.msra.mxu0 %v7502
        %7656 = vmatprep.subr.mxu0 0.0
        %7657 = vmatpush1.msra.mxu0 %v7501
        %7658 = vmatprep.subr.mxu0 0.0
        %7659 = vmatpush1.msra.mxu0 %v7500
        %7660 = vmatprep.subr.mxu0 0.0
        %7661 = vmatpush1.msra.mxu0 %v7499
        %7662 = vmatprep.subr.mxu0 0.0
        %7663 = vmatpush1.msra.mxu0 %v7498
        %7664 = vmatprep.subr.mxu0 0.0
        %7665 = vmatpush1.msra.mxu0 %v7497
        %7666 = vmatprep.subr.mxu0 0.0
        %7667 = vmatpush1.msra.mxu0 %v7496
        %7668 = vmatprep.subr.mxu0 0.0
        %7669 = vmatpush1.msra.mxu0 %v7495
        %7670 = vmatprep.subr.mxu0 0.0
        %7671 = vmatpush1.msra.mxu0 %v7494
        %7672 = vmatprep.subr.mxu0 0.0
        %7673 = vmatpush2.msra.mxu0 0.0
        %7674 = vmatprep.subr.mxu0 0.0
        %7675 = vmatpush2.msra.mxu0 0.0
        %7676 = vmatprep.subr.mxu0 0.0
        %7677 = vmatpush2.msra.mxu0 0.0
        %7678 = vmatprep.subr.mxu0 0.0
        %7679 = vmatpush2.msra.mxu0 0.0
        %7680 = vmatprep.subr.mxu0 0.0
        %7681 = vmatpush2.msra.mxu0 0.0
        %7682 = vmatprep.subr.mxu0 0.0
        %7683 = vmatpush2.msra.mxu0 0.0
        %7684 = vmatprep.subr.mxu0 0.0
        %7685 = vmatpush2.msra.mxu0 0.0
        %7686 = vmatprep.subr.mxu0 0.0
        %7687 = vmatpush2.msra.mxu0 0.0
        %7688 = vmatprep.subr.mxu0 0.0
        %7689 = vmatpush2.msra.mxu0 0.0
        %7690 = vmatprep.subr.mxu0 0.0
        %7691 = vmatpush2.msra.mxu0 0.0
        %7692 = vmatprep.subr.mxu0 0.0
        %7693 = vmatpush2.msra.mxu0 0.0
        %7694 = vmatprep.subr.mxu0 0.0
        %7695 = vmatpush2.msra.mxu0 0.0
        %7696 = vmatprep.subr.mxu0 0.0
        %7697 = vmatpush2.msra.mxu0 0.0
        %7698 = vmatprep.subr.mxu0 0.0
        %7699 = vmatpush2.msra.mxu0 0.0
        %7700 = vmatprep.subr.mxu0 0.0
        %7701 = vmatpush2.msra.mxu0 0.0
        %7702 = vmatprep.subr.mxu0 0.0
        %7703 = vmatpush2.msra.mxu0 0.0
        %7704 = vmatprep.mubr.f32.mxu0 0.0
        %7705 = vmatmul.mubr.f32.gmra.mxu0 %v7486
        %v7706 = vpop.f32.mrf.mxu0
        %v7707 = vadd.f32 %v7602, %v7706
        %v7708 = vpop.f32.mrf.mxu0
        %7709 = vmatprep.mubr.f32.mxu0 0.0
        %7710 = vmatmul.mubr.f32.gmra.mxu0 %v7487
        %v7711 = vpop.f32.mrf.mxu0
        %v7712 = vadd.f32 %v7607, %v7711
        %v7713 = vpop.f32.mrf.mxu0
        %7714 = vmatprep.mubr.f32.mxu0 0.0
        %7715 = vmatmul.mubr.f32.gmra.mxu0 %v7488
        %v7716 = vpop.f32.mrf.mxu0
        %v7717 = vadd.f32 %v7612, %v7716
        %v7718 = vpop.f32.mrf.mxu0
        %7719 = vmatprep.mubr.f32.mxu0 0.0
        %7720 = vmatmul.mubr.f32.gmra.mxu0 %v7489
        %v7721 = vpop.f32.mrf.mxu0
        %v7722 = vadd.f32 %v7617, %v7721
        %v7723 = vpop.f32.mrf.mxu0
        %7724 = vmatprep.mubr.f32.mxu0 0.0
        %7725 = vmatmul.mubr.f32.gmra.mxu0 %v7490
        %v7726 = vpop.f32.mrf.mxu0
        %v7727 = vadd.f32 %v7622, %v7726
        %v7728 = vpop.f32.mrf.mxu0
        %7729 = vmatprep.mubr.f32.mxu0 0.0
        %7730 = vmatmul.mubr.f32.gmra.mxu0 %v7491
        %v7731 = vpop.f32.mrf.mxu0
        %v7732 = vadd.f32 %v7627, %v7731
        %v7733 = vpop.f32.mrf.mxu0
        %7734 = vmatprep.mubr.f32.mxu0 0.0
        %7735 = vmatmul.mubr.f32.gmra.mxu0 %v7492
        %v7736 = vpop.f32.mrf.mxu0
        %v7737 = vadd.f32 %v7632, %v7736
        %v7738 = vpop.f32.mrf.mxu0
        %7739 = vmatprep.mubr.f32.mxu0 0.0
        %7740 = vmatmul.mubr.f32.gmra.mxu0 %v7493
        %v7741 = vpop.f32.mrf.mxu0
        %v7742 = vadd.f32 %v7637, %v7741
        %v7743 = vpop.f32.mrf.mxu0
        %7744 = vdwg.mxu0
        %v7745 = vld [vmem:[#allocation2 + $0x2] sm:$0xff]
        %v7746 = vld [vmem:[#allocation2 + $0x12] sm:$0xff]
        %v7747 = vld [vmem:[#allocation2 + $0x22] sm:$0xff]
        %v7748 = vld [vmem:[#allocation2 + $0x32] sm:$0xff]
        %v7749 = vld [vmem:[#allocation2 + $0x62] sm:$0xff]
        %v7750 = vld [vmem:[#allocation2 + $0x72] sm:$0xff]
        %v7751 = vld [vmem:[#allocation2 + $0x82] sm:$0xff]
        %v7752 = vld [vmem:[#allocation2 + $0x92] sm:$0xff]
        %s7753 = scalar_lea.vmem %s820, 256 [#allocation19]
        %v7754 = vld [vmem:[%s7753] sm:$0xff]
        %v7755 = vld [vmem:[%s7753 + $0x8] sm:$0xff]
        %v7756 = vld [vmem:[%s7753 + $0x10] sm:$0xff]
        %v7757 = vld [vmem:[%s7753 + $0x18] sm:$0xff]
        %v7758 = vld [vmem:[%s7753 + $0x20] sm:$0xff]
        %v7759 = vld [vmem:[%s7753 + $0x28] sm:$0xff]
        %v7760 = vld [vmem:[%s7753 + $0x30] sm:$0xff]
        %v7761 = vld [vmem:[%s7753 + $0x38] sm:$0xff]
        %v7762 = vld [vmem:[%s7753 + $0x40] sm:$0xff]
        %v7763 = vld [vmem:[%s7753 + $0x48] sm:$0xff]
        %v7764 = vld [vmem:[%s7753 + $0x50] sm:$0xff]
        %v7765 = vld [vmem:[%s7753 + $0x58] sm:$0xff]
        %v7766 = vld [vmem:[%s7753 + $0x60] sm:$0xff]
        %v7767 = vld [vmem:[%s7753 + $0x68] sm:$0xff]
        %v7768 = vld [vmem:[%s7753 + $0x70] sm:$0xff]
        %v7769 = vld [vmem:[%s7753 + $0x78] sm:$0xff]
        %7770 = vmatprep.subr.mxu0 0.0
        %7771 = vmatpush1.msra.mxu0 %v7769
        %7772 = vmatprep.subr.mxu0 0.0
        %7773 = vmatpush1.msra.mxu0 %v7768
        %7774 = vmatprep.subr.mxu0 0.0
        %7775 = vmatpush1.msra.mxu0 %v7767
        %7776 = vmatprep.subr.mxu0 0.0
        %7777 = vmatpush1.msra.mxu0 %v7766
        %7778 = vmatprep.subr.mxu0 0.0
        %7779 = vmatpush1.msra.mxu0 %v7765
        %7780 = vmatprep.subr.mxu0 0.0
        %7781 = vmatpush1.msra.mxu0 %v7764
        %7782 = vmatprep.subr.mxu0 0.0
        %7783 = vmatpush1.msra.mxu0 %v7763
        %7784 = vmatprep.subr.mxu0 0.0
        %7785 = vmatpush1.msra.mxu0 %v7762
        %7786 = vmatprep.subr.mxu0 0.0
        %7787 = vmatpush1.msra.mxu0 %v7761
        %7788 = vmatprep.subr.mxu0 0.0
        %7789 = vmatpush1.msra.mxu0 %v7760
        %7790 = vmatprep.subr.mxu0 0.0
        %7791 = vmatpush1.msra.mxu0 %v7759
        %7792 = vmatprep.subr.mxu0 0.0
        %7793 = vmatpush1.msra.mxu0 %v7758
        %7794 = vmatprep.subr.mxu0 0.0
        %7795 = vmatpush1.msra.mxu0 %v7757
        %7796 = vmatprep.subr.mxu0 0.0
        %7797 = vmatpush1.msra.mxu0 %v7756
        %7798 = vmatprep.subr.mxu0 0.0
        %7799 = vmatpush1.msra.mxu0 %v7755
        %7800 = vmatprep.subr.mxu0 0.0
        %7801 = vmatpush1.msra.mxu0 %v7754
        %7802 = vmatprep.subr.mxu0 0.0
        %7803 = vmatpush2.msra.mxu0 0.0
        %7804 = vmatprep.subr.mxu0 0.0
        %7805 = vmatpush2.msra.mxu0 0.0
        %7806 = vmatprep.subr.mxu0 0.0
        %7807 = vmatpush2.msra.mxu0 0.0
        %7808 = vmatprep.subr.mxu0 0.0
        %7809 = vmatpush2.msra.mxu0 0.0
        %7810 = vmatprep.subr.mxu0 0.0
        %7811 = vmatpush2.msra.mxu0 0.0
        %7812 = vmatprep.subr.mxu0 0.0
        %7813 = vmatpush2.msra.mxu0 0.0
        %7814 = vmatprep.subr.mxu0 0.0
        %7815 = vmatpush2.msra.mxu0 0.0
        %7816 = vmatprep.subr.mxu0 0.0
        %7817 = vmatpush2.msra.mxu0 0.0
        %7818 = vmatprep.subr.mxu0 0.0
        %7819 = vmatpush2.msra.mxu0 0.0
        %7820 = vmatprep.subr.mxu0 0.0
        %7821 = vmatpush2.msra.mxu0 0.0
        %7822 = vmatprep.subr.mxu0 0.0
        %7823 = vmatpush2.msra.mxu0 0.0
        %7824 = vmatprep.subr.mxu0 0.0
        %7825 = vmatpush2.msra.mxu0 0.0
        %7826 = vmatprep.subr.mxu0 0.0
        %7827 = vmatpush2.msra.mxu0 0.0
        %7828 = vmatprep.subr.mxu0 0.0
        %7829 = vmatpush2.msra.mxu0 0.0
        %7830 = vmatprep.subr.mxu0 0.0
        %7831 = vmatpush2.msra.mxu0 0.0
        %7832 = vmatprep.subr.mxu0 0.0
        %7833 = vmatpush2.msra.mxu0 0.0
        %7834 = vmatprep.mubr.f32.mxu0 0.0
        %7835 = vmatmul.mubr.f32.gmra.mxu0 %v7745
        %v7836 = vpop.f32.mrf.mxu0
        %v7837 = vadd.f32 0.0, %v7836
        %v7838 = vpop.f32.mrf.mxu0
        %7839 = vmatprep.mubr.f32.mxu0 0.0
        %7840 = vmatmul.mubr.f32.gmra.mxu0 %v7746
        %v7841 = vpop.f32.mrf.mxu0
        %v7842 = vadd.f32 0.0, %v7841
        %v7843 = vpop.f32.mrf.mxu0
        %7844 = vmatprep.mubr.f32.mxu0 0.0
        %7845 = vmatmul.mubr.f32.gmra.mxu0 %v7747
        %v7846 = vpop.f32.mrf.mxu0
        %v7847 = vadd.f32 0.0, %v7846
        %v7848 = vpop.f32.mrf.mxu0
        %7849 = vmatprep.mubr.f32.mxu0 0.0
        %7850 = vmatmul.mubr.f32.gmra.mxu0 %v7748
        %v7851 = vpop.f32.mrf.mxu0
        %v7852 = vadd.f32 0.0, %v7851
        %v7853 = vpop.f32.mrf.mxu0
        %7854 = vmatprep.mubr.f32.mxu0 0.0
        %7855 = vmatmul.mubr.f32.gmra.mxu0 %v7749
        %v7856 = vpop.f32.mrf.mxu0
        %v7857 = vadd.f32 0.0, %v7856
        %v7858 = vpop.f32.mrf.mxu0
        %7859 = vmatprep.mubr.f32.mxu0 0.0
        %7860 = vmatmul.mubr.f32.gmra.mxu0 %v7750
        %v7861 = vpop.f32.mrf.mxu0
        %v7862 = vadd.f32 0.0, %v7861
        %v7863 = vpop.f32.mrf.mxu0
        %7864 = vmatprep.mubr.f32.mxu0 0.0
        %7865 = vmatmul.mubr.f32.gmra.mxu0 %v7751
        %v7866 = vpop.f32.mrf.mxu0
        %v7867 = vadd.f32 0.0, %v7866
        %v7868 = vpop.f32.mrf.mxu0
        %7869 = vmatprep.mubr.f32.mxu0 0.0
        %7870 = vmatmul.mubr.f32.gmra.mxu0 %v7752
        %v7871 = vpop.f32.mrf.mxu0
        %v7872 = vadd.f32 0.0, %v7871
        %v7873 = vpop.f32.mrf.mxu0
        %7874 = vdwg.mxu0
        %v7875 = vadd.f32 %v7707, %v7837
        %v7876 = vadd.f32 %v7712, %v7842
        %v7877 = vadd.f32 %v7717, %v7847
        %v7878 = vadd.f32 %v7722, %v7852
        %v7879 = vadd.f32 %v7727, %v7857
        %v7880 = vadd.f32 %v7732, %v7862
        %v7881 = vadd.f32 %v7737, %v7867
        %v7882 = vadd.f32 %v7742, %v7872
        %v7883 = vld [vmem:[%s1575] sm:$0xff]
        %v7884 = vld [vmem:[%s1575 + $0x10] sm:$0xff]
        %v7885 = vld [vmem:[%s1575 + $0x20] sm:$0xff]
        %v7886 = vld [vmem:[%s1575 + $0x30] sm:$0xff]
        %v7887 = vld [vmem:[%s1575 + $0x60] sm:$0xff]
        %v7888 = vld [vmem:[%s1575 + $0x70] sm:$0xff]
        %v7889 = vld [vmem:[%s1575 + $0x80] sm:$0xff]
        %v7890 = vld [vmem:[%s1575 + $0x90] sm:$0xff]
        %s7891 = scalar_lea.vmem %s820, 384 [#allocation19]
        %v7892 = vld [vmem:[%s7891] sm:$0xff]
        %v7893 = vld [vmem:[%s7891 + $0x8] sm:$0xff]
        %v7894 = vld [vmem:[%s7891 + $0x10] sm:$0xff]
        %v7895 = vld [vmem:[%s7891 + $0x18] sm:$0xff]
        %v7896 = vld [vmem:[%s7891 + $0x20] sm:$0xff]
        %v7897 = vld [vmem:[%s7891 + $0x28] sm:$0xff]
        %v7898 = vld [vmem:[%s7891 + $0x30] sm:$0xff]
        %v7899 = vld [vmem:[%s7891 + $0x38] sm:$0xff]
        %v7900 = vld [vmem:[%s7891 + $0x40] sm:$0xff]
        %v7901 = vld [vmem:[%s7891 + $0x48] sm:$0xff]
        %v7902 = vld [vmem:[%s7891 + $0x50] sm:$0xff]
        %v7903 = vld [vmem:[%s7891 + $0x58] sm:$0xff]
        %v7904 = vld [vmem:[%s7891 + $0x60] sm:$0xff]
        %v7905 = vld [vmem:[%s7891 + $0x68] sm:$0xff]
        %v7906 = vld [vmem:[%s7891 + $0x70] sm:$0xff]
        %v7907 = vld [vmem:[%s7891 + $0x78] sm:$0xff]
        %7908 = vmatprep.subr.mxu0 0.0
        %7909 = vmatpush1.msra.mxu0 %v7907
        %7910 = vmatprep.subr.mxu0 0.0
        %7911 = vmatpush1.msra.mxu0 %v7906
        %7912 = vmatprep.subr.mxu0 0.0
        %7913 = vmatpush1.msra.mxu0 %v7905
        %7914 = vmatprep.subr.mxu0 0.0
        %7915 = vmatpush1.msra.mxu0 %v7904
        %7916 = vmatprep.subr.mxu0 0.0
        %7917 = vmatpush1.msra.mxu0 %v7903
        %7918 = vmatprep.subr.mxu0 0.0
        %7919 = vmatpush1.msra.mxu0 %v7902
        %7920 = vmatprep.subr.mxu0 0.0
        %7921 = vmatpush1.msra.mxu0 %v7901
        %7922 = vmatprep.subr.mxu0 0.0
        %7923 = vmatpush1.msra.mxu0 %v7900
        %7924 = vmatprep.subr.mxu0 0.0
        %7925 = vmatpush1.msra.mxu0 %v7899
        %7926 = vmatprep.subr.mxu0 0.0
        %7927 = vmatpush1.msra.mxu0 %v7898
        %7928 = vmatprep.subr.mxu0 0.0
        %7929 = vmatpush1.msra.mxu0 %v7897
        %7930 = vmatprep.subr.mxu0 0.0
        %7931 = vmatpush1.msra.mxu0 %v7896
        %7932 = vmatprep.subr.mxu0 0.0
        %7933 = vmatpush1.msra.mxu0 %v7895
        %7934 = vmatprep.subr.mxu0 0.0
        %7935 = vmatpush1.msra.mxu0 %v7894
        %7936 = vmatprep.subr.mxu0 0.0
        %7937 = vmatpush1.msra.mxu0 %v7893
        %7938 = vmatprep.subr.mxu0 0.0
        %7939 = vmatpush1.msra.mxu0 %v7892
        %7940 = vmatprep.subr.mxu0 0.0
        %7941 = vmatpush2.msra.mxu0 0.0
        %7942 = vmatprep.subr.mxu0 0.0
        %7943 = vmatpush2.msra.mxu0 0.0
        %7944 = vmatprep.subr.mxu0 0.0
        %7945 = vmatpush2.msra.mxu0 0.0
        %7946 = vmatprep.subr.mxu0 0.0
        %7947 = vmatpush2.msra.mxu0 0.0
        %7948 = vmatprep.subr.mxu0 0.0
        %7949 = vmatpush2.msra.mxu0 0.0
        %7950 = vmatprep.subr.mxu0 0.0
        %7951 = vmatpush2.msra.mxu0 0.0
        %7952 = vmatprep.subr.mxu0 0.0
        %7953 = vmatpush2.msra.mxu0 0.0
        %7954 = vmatprep.subr.mxu0 0.0
        %7955 = vmatpush2.msra.mxu0 0.0
        %7956 = vmatprep.subr.mxu0 0.0
        %7957 = vmatpush2.msra.mxu0 0.0
        %7958 = vmatprep.subr.mxu0 0.0
        %7959 = vmatpush2.msra.mxu0 0.0
        %7960 = vmatprep.subr.mxu0 0.0
        %7961 = vmatpush2.msra.mxu0 0.0
        %7962 = vmatprep.subr.mxu0 0.0
        %7963 = vmatpush2.msra.mxu0 0.0
        %7964 = vmatprep.subr.mxu0 0.0
        %7965 = vmatpush2.msra.mxu0 0.0
        %7966 = vmatprep.subr.mxu0 0.0
        %7967 = vmatpush2.msra.mxu0 0.0
        %7968 = vmatprep.subr.mxu0 0.0
        %7969 = vmatpush2.msra.mxu0 0.0
        %7970 = vmatprep.subr.mxu0 0.0
        %7971 = vmatpush2.msra.mxu0 0.0
        %7972 = vmatprep.mubr.f32.mxu0 0.0
        %7973 = vmatmul.mubr.f32.gmra.mxu0 %v7883
        %v7974 = vpop.f32.mrf.mxu0
        %v7975 = vadd.f32 0.0, %v7974
        %v7976 = vpop.f32.mrf.mxu0
        %7977 = vmatprep.mubr.f32.mxu0 0.0
        %7978 = vmatmul.mubr.f32.gmra.mxu0 %v7884
        %v7979 = vpop.f32.mrf.mxu0
        %v7980 = vadd.f32 0.0, %v7979
        %v7981 = vpop.f32.mrf.mxu0
        %7982 = vmatprep.mubr.f32.mxu0 0.0
        %7983 = vmatmul.mubr.f32.gmra.mxu0 %v7885
        %v7984 = vpop.f32.mrf.mxu0
        %v7985 = vadd.f32 0.0, %v7984
        %v7986 = vpop.f32.mrf.mxu0
        %7987 = vmatprep.mubr.f32.mxu0 0.0
        %7988 = vmatmul.mubr.f32.gmra.mxu0 %v7886
        %v7989 = vpop.f32.mrf.mxu0
        %v7990 = vadd.f32 0.0, %v7989
        %v7991 = vpop.f32.mrf.mxu0
        %7992 = vmatprep.mubr.f32.mxu0 0.0
        %7993 = vmatmul.mubr.f32.gmra.mxu0 %v7887
        %v7994 = vpop.f32.mrf.mxu0
        %v7995 = vadd.f32 0.0, %v7994
        %v7996 = vpop.f32.mrf.mxu0
        %7997 = vmatprep.mubr.f32.mxu0 0.0
        %7998 = vmatmul.mubr.f32.gmra.mxu0 %v7888
        %v7999 = vpop.f32.mrf.mxu0
        %v8000 = vadd.f32 0.0, %v7999
        %v8001 = vpop.f32.mrf.mxu0
        %8002 = vmatprep.mubr.f32.mxu0 0.0
        %8003 = vmatmul.mubr.f32.gmra.mxu0 %v7889
        %v8004 = vpop.f32.mrf.mxu0
        %v8005 = vadd.f32 0.0, %v8004
        %v8006 = vpop.f32.mrf.mxu0
        %8007 = vmatprep.mubr.f32.mxu0 0.0
        %8008 = vmatmul.mubr.f32.gmra.mxu0 %v7890
        %v8009 = vpop.f32.mrf.mxu0
        %v8010 = vadd.f32 0.0, %v8009
        %v8011 = vpop.f32.mrf.mxu0
        %8012 = vdwg.mxu0
        %v8013 = vadd.f32 %v7875, %v7975
        %v8014 = vadd.f32 %v7876, %v7980
        %v8015 = vadd.f32 %v7877, %v7985
        %v8016 = vadd.f32 %v7878, %v7990
        %v8017 = vadd.f32 %v7879, %v7995
        %v8018 = vadd.f32 %v7880, %v8000
        %v8019 = vadd.f32 %v7881, %v8005
        %v8020 = vadd.f32 %v7882, %v8010
        %v8021 = vld [vmem:[%s1575 + $0x1] sm:$0xff]
        %v8022 = vld [vmem:[%s1575 + $0x11] sm:$0xff]
        %v8023 = vld [vmem:[%s1575 + $0x21] sm:$0xff]
        %v8024 = vld [vmem:[%s1575 + $0x31] sm:$0xff]
        %v8025 = vld [vmem:[%s1575 + $0x61] sm:$0xff]
        %v8026 = vld [vmem:[%s1575 + $0x71] sm:$0xff]
        %v8027 = vld [vmem:[%s1575 + $0x81] sm:$0xff]
        %v8028 = vld [vmem:[%s1575 + $0x91] sm:$0xff]
        %s8029 = scalar_lea.vmem %s820, 512 [#allocation19]
        %v8030 = vld [vmem:[%s8029] sm:$0xff]
        %v8031 = vld [vmem:[%s8029 + $0x8] sm:$0xff]
        %v8032 = vld [vmem:[%s8029 + $0x10] sm:$0xff]
        %v8033 = vld [vmem:[%s8029 + $0x18] sm:$0xff]
        %v8034 = vld [vmem:[%s8029 + $0x20] sm:$0xff]
        %v8035 = vld [vmem:[%s8029 + $0x28] sm:$0xff]
        %v8036 = vld [vmem:[%s8029 + $0x30] sm:$0xff]
        %v8037 = vld [vmem:[%s8029 + $0x38] sm:$0xff]
        %v8038 = vld [vmem:[%s8029 + $0x40] sm:$0xff]
        %v8039 = vld [vmem:[%s8029 + $0x48] sm:$0xff]
        %v8040 = vld [vmem:[%s8029 + $0x50] sm:$0xff]
        %v8041 = vld [vmem:[%s8029 + $0x58] sm:$0xff]
        %v8042 = vld [vmem:[%s8029 + $0x60] sm:$0xff]
        %v8043 = vld [vmem:[%s8029 + $0x68] sm:$0xff]
        %v8044 = vld [vmem:[%s8029 + $0x70] sm:$0xff]
        %v8045 = vld [vmem:[%s8029 + $0x78] sm:$0xff]
        %8046 = vmatprep.subr.mxu0 0.0
        %8047 = vmatpush1.msra.mxu0 %v8045
        %8048 = vmatprep.subr.mxu0 0.0
        %8049 = vmatpush1.msra.mxu0 %v8044
        %8050 = vmatprep.subr.mxu0 0.0
        %8051 = vmatpush1.msra.mxu0 %v8043
        %8052 = vmatprep.subr.mxu0 0.0
        %8053 = vmatpush1.msra.mxu0 %v8042
        %8054 = vmatprep.subr.mxu0 0.0
        %8055 = vmatpush1.msra.mxu0 %v8041
        %8056 = vmatprep.subr.mxu0 0.0
        %8057 = vmatpush1.msra.mxu0 %v8040
        %8058 = vmatprep.subr.mxu0 0.0
        %8059 = vmatpush1.msra.mxu0 %v8039
        %8060 = vmatprep.subr.mxu0 0.0
        %8061 = vmatpush1.msra.mxu0 %v8038
        %8062 = vmatprep.subr.mxu0 0.0
        %8063 = vmatpush1.msra.mxu0 %v8037
        %8064 = vmatprep.subr.mxu0 0.0
        %8065 = vmatpush1.msra.mxu0 %v8036
        %8066 = vmatprep.subr.mxu0 0.0
        %8067 = vmatpush1.msra.mxu0 %v8035
        %8068 = vmatprep.subr.mxu0 0.0
        %8069 = vmatpush1.msra.mxu0 %v8034
        %8070 = vmatprep.subr.mxu0 0.0
        %8071 = vmatpush1.msra.mxu0 %v8033
        %8072 = vmatprep.subr.mxu0 0.0
        %8073 = vmatpush1.msra.mxu0 %v8032
        %8074 = vmatprep.subr.mxu0 0.0
        %8075 = vmatpush1.msra.mxu0 %v8031
        %8076 = vmatprep.subr.mxu0 0.0
        %8077 = vmatpush1.msra.mxu0 %v8030
        %8078 = vmatprep.subr.mxu0 0.0
        %8079 = vmatpush2.msra.mxu0 0.0
        %8080 = vmatprep.subr.mxu0 0.0
        %8081 = vmatpush2.msra.mxu0 0.0
        %8082 = vmatprep.subr.mxu0 0.0
        %8083 = vmatpush2.msra.mxu0 0.0
        %8084 = vmatprep.subr.mxu0 0.0
        %8085 = vmatpush2.msra.mxu0 0.0
        %8086 = vmatprep.subr.mxu0 0.0
        %8087 = vmatpush2.msra.mxu0 0.0
        %8088 = vmatprep.subr.mxu0 0.0
        %8089 = vmatpush2.msra.mxu0 0.0
        %8090 = vmatprep.subr.mxu0 0.0
        %8091 = vmatpush2.msra.mxu0 0.0
        %8092 = vmatprep.subr.mxu0 0.0
        %8093 = vmatpush2.msra.mxu0 0.0
        %8094 = vmatprep.subr.mxu0 0.0
        %8095 = vmatpush2.msra.mxu0 0.0
        %8096 = vmatprep.subr.mxu0 0.0
        %8097 = vmatpush2.msra.mxu0 0.0
        %8098 = vmatprep.subr.mxu0 0.0
        %8099 = vmatpush2.msra.mxu0 0.0
        %8100 = vmatprep.subr.mxu0 0.0
        %8101 = vmatpush2.msra.mxu0 0.0
        %8102 = vmatprep.subr.mxu0 0.0
        %8103 = vmatpush2.msra.mxu0 0.0
        %8104 = vmatprep.subr.mxu0 0.0
        %8105 = vmatpush2.msra.mxu0 0.0
        %8106 = vmatprep.subr.mxu0 0.0
        %8107 = vmatpush2.msra.mxu0 0.0
        %8108 = vmatprep.subr.mxu0 0.0
        %8109 = vmatpush2.msra.mxu0 0.0
        %8110 = vmatprep.mubr.f32.mxu0 0.0
        %8111 = vmatmul.mubr.f32.gmra.mxu0 %v8021
        %v8112 = vpop.f32.mrf.mxu0
        %v8113 = vadd.f32 0.0, %v8112
        %v8114 = vpop.f32.mrf.mxu0
        %8115 = vmatprep.mubr.f32.mxu0 0.0
        %8116 = vmatmul.mubr.f32.gmra.mxu0 %v8022
        %v8117 = vpop.f32.mrf.mxu0
        %v8118 = vadd.f32 0.0, %v8117
        %v8119 = vpop.f32.mrf.mxu0
        %8120 = vmatprep.mubr.f32.mxu0 0.0
        %8121 = vmatmul.mubr.f32.gmra.mxu0 %v8023
        %v8122 = vpop.f32.mrf.mxu0
        %v8123 = vadd.f32 0.0, %v8122
        %v8124 = vpop.f32.mrf.mxu0
        %8125 = vmatprep.mubr.f32.mxu0 0.0
        %8126 = vmatmul.mubr.f32.gmra.mxu0 %v8024
        %v8127 = vpop.f32.mrf.mxu0
        %v8128 = vadd.f32 0.0, %v8127
        %v8129 = vpop.f32.mrf.mxu0
        %8130 = vmatprep.mubr.f32.mxu0 0.0
        %8131 = vmatmul.mubr.f32.gmra.mxu0 %v8025
        %v8132 = vpop.f32.mrf.mxu0
        %v8133 = vadd.f32 0.0, %v8132
        %v8134 = vpop.f32.mrf.mxu0
        %8135 = vmatprep.mubr.f32.mxu0 0.0
        %8136 = vmatmul.mubr.f32.gmra.mxu0 %v8026
        %v8137 = vpop.f32.mrf.mxu0
        %v8138 = vadd.f32 0.0, %v8137
        %v8139 = vpop.f32.mrf.mxu0
        %8140 = vmatprep.mubr.f32.mxu0 0.0
        %8141 = vmatmul.mubr.f32.gmra.mxu0 %v8027
        %v8142 = vpop.f32.mrf.mxu0
        %v8143 = vadd.f32 0.0, %v8142
        %v8144 = vpop.f32.mrf.mxu0
        %8145 = vmatprep.mubr.f32.mxu0 0.0
        %8146 = vmatmul.mubr.f32.gmra.mxu0 %v8028
        %v8147 = vpop.f32.mrf.mxu0
        %v8148 = vadd.f32 0.0, %v8147
        %v8149 = vpop.f32.mrf.mxu0
        %8150 = vdwg.mxu0
        %v8151 = vadd.f32 %v8013, %v8113
        %v8152 = vadd.f32 %v8014, %v8118
        %v8153 = vadd.f32 %v8015, %v8123
        %v8154 = vadd.f32 %v8016, %v8128
        %v8155 = vadd.f32 %v8017, %v8133
        %v8156 = vadd.f32 %v8018, %v8138
        %v8157 = vadd.f32 %v8019, %v8143
        %v8158 = vadd.f32 %v8020, %v8148
        %v8159 = vld [vmem:[%s1575 + $0x2] sm:$0xff]
        %v8160 = vld [vmem:[%s1575 + $0x12] sm:$0xff]
        %v8161 = vld [vmem:[%s1575 + $0x22] sm:$0xff]
        %v8162 = vld [vmem:[%s1575 + $0x32] sm:$0xff]
        %v8163 = vld [vmem:[%s1575 + $0x62] sm:$0xff]
        %v8164 = vld [vmem:[%s1575 + $0x72] sm:$0xff]
        %v8165 = vld [vmem:[%s1575 + $0x82] sm:$0xff]
        %v8166 = vld [vmem:[%s1575 + $0x92] sm:$0xff]
        %s8167 = scalar_lea.vmem %s820, 640 [#allocation19]
        %v8168 = vld [vmem:[%s8167] sm:$0xff]
        %v8169 = vld [vmem:[%s8167 + $0x8] sm:$0xff]
        %v8170 = vld [vmem:[%s8167 + $0x10] sm:$0xff]
        %v8171 = vld [vmem:[%s8167 + $0x18] sm:$0xff]
        %v8172 = vld [vmem:[%s8167 + $0x20] sm:$0xff]
        %v8173 = vld [vmem:[%s8167 + $0x28] sm:$0xff]
        %v8174 = vld [vmem:[%s8167 + $0x30] sm:$0xff]
        %v8175 = vld [vmem:[%s8167 + $0x38] sm:$0xff]
        %v8176 = vld [vmem:[%s8167 + $0x40] sm:$0xff]
        %v8177 = vld [vmem:[%s8167 + $0x48] sm:$0xff]
        %v8178 = vld [vmem:[%s8167 + $0x50] sm:$0xff]
        %v8179 = vld [vmem:[%s8167 + $0x58] sm:$0xff]
        %v8180 = vld [vmem:[%s8167 + $0x60] sm:$0xff]
        %v8181 = vld [vmem:[%s8167 + $0x68] sm:$0xff]
        %v8182 = vld [vmem:[%s8167 + $0x70] sm:$0xff]
        %v8183 = vld [vmem:[%s8167 + $0x78] sm:$0xff]
        %8184 = vmatprep.subr.mxu0 0.0
        %8185 = vmatpush1.msra.mxu0 %v8183
        %8186 = vmatprep.subr.mxu0 0.0
        %8187 = vmatpush1.msra.mxu0 %v8182
        %8188 = vmatprep.subr.mxu0 0.0
        %8189 = vmatpush1.msra.mxu0 %v8181
        %8190 = vmatprep.subr.mxu0 0.0
        %8191 = vmatpush1.msra.mxu0 %v8180
        %8192 = vmatprep.subr.mxu0 0.0
        %8193 = vmatpush1.msra.mxu0 %v8179
        %8194 = vmatprep.subr.mxu0 0.0
        %8195 = vmatpush1.msra.mxu0 %v8178
        %8196 = vmatprep.subr.mxu0 0.0
        %8197 = vmatpush1.msra.mxu0 %v8177
        %8198 = vmatprep.subr.mxu0 0.0
        %8199 = vmatpush1.msra.mxu0 %v8176
        %8200 = vmatprep.subr.mxu0 0.0
        %8201 = vmatpush1.msra.mxu0 %v8175
        %8202 = vmatprep.subr.mxu0 0.0
        %8203 = vmatpush1.msra.mxu0 %v8174
        %8204 = vmatprep.subr.mxu0 0.0
        %8205 = vmatpush1.msra.mxu0 %v8173
        %8206 = vmatprep.subr.mxu0 0.0
        %8207 = vmatpush1.msra.mxu0 %v8172
        %8208 = vmatprep.subr.mxu0 0.0
        %8209 = vmatpush1.msra.mxu0 %v8171
        %8210 = vmatprep.subr.mxu0 0.0
        %8211 = vmatpush1.msra.mxu0 %v8170
        %8212 = vmatprep.subr.mxu0 0.0
        %8213 = vmatpush1.msra.mxu0 %v8169
        %8214 = vmatprep.subr.mxu0 0.0
        %8215 = vmatpush1.msra.mxu0 %v8168
        %8216 = vmatprep.subr.mxu0 0.0
        %8217 = vmatpush2.msra.mxu0 0.0
        %8218 = vmatprep.subr.mxu0 0.0
        %8219 = vmatpush2.msra.mxu0 0.0
        %8220 = vmatprep.subr.mxu0 0.0
        %8221 = vmatpush2.msra.mxu0 0.0
        %8222 = vmatprep.subr.mxu0 0.0
        %8223 = vmatpush2.msra.mxu0 0.0
        %8224 = vmatprep.subr.mxu0 0.0
        %8225 = vmatpush2.msra.mxu0 0.0
        %8226 = vmatprep.subr.mxu0 0.0
        %8227 = vmatpush2.msra.mxu0 0.0
        %8228 = vmatprep.subr.mxu0 0.0
        %8229 = vmatpush2.msra.mxu0 0.0
        %8230 = vmatprep.subr.mxu0 0.0
        %8231 = vmatpush2.msra.mxu0 0.0
        %8232 = vmatprep.subr.mxu0 0.0
        %8233 = vmatpush2.msra.mxu0 0.0
        %8234 = vmatprep.subr.mxu0 0.0
        %8235 = vmatpush2.msra.mxu0 0.0
        %8236 = vmatprep.subr.mxu0 0.0
        %8237 = vmatpush2.msra.mxu0 0.0
        %8238 = vmatprep.subr.mxu0 0.0
        %8239 = vmatpush2.msra.mxu0 0.0
        %8240 = vmatprep.subr.mxu0 0.0
        %8241 = vmatpush2.msra.mxu0 0.0
        %8242 = vmatprep.subr.mxu0 0.0
        %8243 = vmatpush2.msra.mxu0 0.0
        %8244 = vmatprep.subr.mxu0 0.0
        %8245 = vmatpush2.msra.mxu0 0.0
        %8246 = vmatprep.subr.mxu0 0.0
        %8247 = vmatpush2.msra.mxu0 0.0
        %8248 = vmatprep.mubr.f32.mxu0 0.0
        %8249 = vmatmul.mubr.f32.gmra.mxu0 %v8159
        %v8250 = vpop.f32.mrf.mxu0
        %v8251 = vadd.f32 0.0, %v8250
        %v8252 = vpop.f32.mrf.mxu0
        %8253 = vmatprep.mubr.f32.mxu0 0.0
        %8254 = vmatmul.mubr.f32.gmra.mxu0 %v8160
        %v8255 = vpop.f32.mrf.mxu0
        %v8256 = vadd.f32 0.0, %v8255
        %v8257 = vpop.f32.mrf.mxu0
        %8258 = vmatprep.mubr.f32.mxu0 0.0
        %8259 = vmatmul.mubr.f32.gmra.mxu0 %v8161
        %v8260 = vpop.f32.mrf.mxu0
        %v8261 = vadd.f32 0.0, %v8260
        %v8262 = vpop.f32.mrf.mxu0
        %8263 = vmatprep.mubr.f32.mxu0 0.0
        %8264 = vmatmul.mubr.f32.gmra.mxu0 %v8162
        %v8265 = vpop.f32.mrf.mxu0
        %v8266 = vadd.f32 0.0, %v8265
        %v8267 = vpop.f32.mrf.mxu0
        %8268 = vmatprep.mubr.f32.mxu0 0.0
        %8269 = vmatmul.mubr.f32.gmra.mxu0 %v8163
        %v8270 = vpop.f32.mrf.mxu0
        %v8271 = vadd.f32 0.0, %v8270
        %v8272 = vpop.f32.mrf.mxu0
        %8273 = vmatprep.mubr.f32.mxu0 0.0
        %8274 = vmatmul.mubr.f32.gmra.mxu0 %v8164
        %v8275 = vpop.f32.mrf.mxu0
        %v8276 = vadd.f32 0.0, %v8275
        %v8277 = vpop.f32.mrf.mxu0
        %8278 = vmatprep.mubr.f32.mxu0 0.0
        %8279 = vmatmul.mubr.f32.gmra.mxu0 %v8165
        %v8280 = vpop.f32.mrf.mxu0
        %v8281 = vadd.f32 0.0, %v8280
        %v8282 = vpop.f32.mrf.mxu0
        %8283 = vmatprep.mubr.f32.mxu0 0.0
        %8284 = vmatmul.mubr.f32.gmra.mxu0 %v8166
        %v8285 = vpop.f32.mrf.mxu0
        %v8286 = vadd.f32 0.0, %v8285
        %v8287 = vpop.f32.mrf.mxu0
        %8288 = vdwg.mxu0
        %v8289 = vadd.f32 %v8151, %v8251
        %v8290 = vadd.f32 %v8152, %v8256
        %v8291 = vadd.f32 %v8153, %v8261
        %v8292 = vadd.f32 %v8154, %v8266
        %v8293 = vadd.f32 %v8155, %v8271
        %v8294 = vadd.f32 %v8156, %v8276
        %v8295 = vadd.f32 %v8157, %v8281
        %v8296 = vadd.f32 %v8158, %v8286
        %v8297 = vld [vmem:[%s2026] sm:$0xff]
        %v8298 = vld [vmem:[%s2026 + $0x10] sm:$0xff]
        %v8299 = vld [vmem:[%s2026 + $0x20] sm:$0xff]
        %v8300 = vld [vmem:[%s2026 + $0x30] sm:$0xff]
        %v8301 = vld [vmem:[%s2026 + $0x60] sm:$0xff]
        %v8302 = vld [vmem:[%s2026 + $0x70] sm:$0xff]
        %v8303 = vld [vmem:[%s2026 + $0x80] sm:$0xff]
        %v8304 = vld [vmem:[%s2026 + $0x90] sm:$0xff]
        %s8305 = scalar_lea.vmem %s820, 768 [#allocation19]
        %v8306 = vld [vmem:[%s8305] sm:$0xff]
        %v8307 = vld [vmem:[%s8305 + $0x8] sm:$0xff]
        %v8308 = vld [vmem:[%s8305 + $0x10] sm:$0xff]
        %v8309 = vld [vmem:[%s8305 + $0x18] sm:$0xff]
        %v8310 = vld [vmem:[%s8305 + $0x20] sm:$0xff]
        %v8311 = vld [vmem:[%s8305 + $0x28] sm:$0xff]
        %v8312 = vld [vmem:[%s8305 + $0x30] sm:$0xff]
        %v8313 = vld [vmem:[%s8305 + $0x38] sm:$0xff]
        %v8314 = vld [vmem:[%s8305 + $0x40] sm:$0xff]
        %v8315 = vld [vmem:[%s8305 + $0x48] sm:$0xff]
        %v8316 = vld [vmem:[%s8305 + $0x50] sm:$0xff]
        %v8317 = vld [vmem:[%s8305 + $0x58] sm:$0xff]
        %v8318 = vld [vmem:[%s8305 + $0x60] sm:$0xff]
        %v8319 = vld [vmem:[%s8305 + $0x68] sm:$0xff]
        %v8320 = vld [vmem:[%s8305 + $0x70] sm:$0xff]
        %v8321 = vld [vmem:[%s8305 + $0x78] sm:$0xff]
        %8322 = vmatprep.subr.mxu0 0.0
        %8323 = vmatpush1.msra.mxu0 %v8321
        %8324 = vmatprep.subr.mxu0 0.0
        %8325 = vmatpush1.msra.mxu0 %v8320
        %8326 = vmatprep.subr.mxu0 0.0
        %8327 = vmatpush1.msra.mxu0 %v8319
        %8328 = vmatprep.subr.mxu0 0.0
        %8329 = vmatpush1.msra.mxu0 %v8318
        %8330 = vmatprep.subr.mxu0 0.0
        %8331 = vmatpush1.msra.mxu0 %v8317
        %8332 = vmatprep.subr.mxu0 0.0
        %8333 = vmatpush1.msra.mxu0 %v8316
        %8334 = vmatprep.subr.mxu0 0.0
        %8335 = vmatpush1.msra.mxu0 %v8315
        %8336 = vmatprep.subr.mxu0 0.0
        %8337 = vmatpush1.msra.mxu0 %v8314
        %8338 = vmatprep.subr.mxu0 0.0
        %8339 = vmatpush1.msra.mxu0 %v8313
        %8340 = vmatprep.subr.mxu0 0.0
        %8341 = vmatpush1.msra.mxu0 %v8312
        %8342 = vmatprep.subr.mxu0 0.0
        %8343 = vmatpush1.msra.mxu0 %v8311
        %8344 = vmatprep.subr.mxu0 0.0
        %8345 = vmatpush1.msra.mxu0 %v8310
        %8346 = vmatprep.subr.mxu0 0.0
        %8347 = vmatpush1.msra.mxu0 %v8309
        %8348 = vmatprep.subr.mxu0 0.0
        %8349 = vmatpush1.msra.mxu0 %v8308
        %8350 = vmatprep.subr.mxu0 0.0
        %8351 = vmatpush1.msra.mxu0 %v8307
        %8352 = vmatprep.subr.mxu0 0.0
        %8353 = vmatpush1.msra.mxu0 %v8306
        %8354 = vmatprep.subr.mxu0 0.0
        %8355 = vmatpush2.msra.mxu0 0.0
        %8356 = vmatprep.subr.mxu0 0.0
        %8357 = vmatpush2.msra.mxu0 0.0
        %8358 = vmatprep.subr.mxu0 0.0
        %8359 = vmatpush2.msra.mxu0 0.0
        %8360 = vmatprep.subr.mxu0 0.0
        %8361 = vmatpush2.msra.mxu0 0.0
        %8362 = vmatprep.subr.mxu0 0.0
        %8363 = vmatpush2.msra.mxu0 0.0
        %8364 = vmatprep.subr.mxu0 0.0
        %8365 = vmatpush2.msra.mxu0 0.0
        %8366 = vmatprep.subr.mxu0 0.0
        %8367 = vmatpush2.msra.mxu0 0.0
        %8368 = vmatprep.subr.mxu0 0.0
        %8369 = vmatpush2.msra.mxu0 0.0
        %8370 = vmatprep.subr.mxu0 0.0
        %8371 = vmatpush2.msra.mxu0 0.0
        %8372 = vmatprep.subr.mxu0 0.0
        %8373 = vmatpush2.msra.mxu0 0.0
        %8374 = vmatprep.subr.mxu0 0.0
        %8375 = vmatpush2.msra.mxu0 0.0
        %8376 = vmatprep.subr.mxu0 0.0
        %8377 = vmatpush2.msra.mxu0 0.0
        %8378 = vmatprep.subr.mxu0 0.0
        %8379 = vmatpush2.msra.mxu0 0.0
        %8380 = vmatprep.subr.mxu0 0.0
        %8381 = vmatpush2.msra.mxu0 0.0
        %8382 = vmatprep.subr.mxu0 0.0
        %8383 = vmatpush2.msra.mxu0 0.0
        %8384 = vmatprep.subr.mxu0 0.0
        %8385 = vmatpush2.msra.mxu0 0.0
        %8386 = vmatprep.mubr.f32.mxu0 0.0
        %8387 = vmatmul.mubr.f32.gmra.mxu0 %v8297
        %v8388 = vpop.f32.mrf.mxu0
        %v8389 = vadd.f32 0.0, %v8388
        %v8390 = vpop.f32.mrf.mxu0
        %8391 = vmatprep.mubr.f32.mxu0 0.0
        %8392 = vmatmul.mubr.f32.gmra.mxu0 %v8298
        %v8393 = vpop.f32.mrf.mxu0
        %v8394 = vadd.f32 0.0, %v8393
        %v8395 = vpop.f32.mrf.mxu0
        %8396 = vmatprep.mubr.f32.mxu0 0.0
        %8397 = vmatmul.mubr.f32.gmra.mxu0 %v8299
        %v8398 = vpop.f32.mrf.mxu0
        %v8399 = vadd.f32 0.0, %v8398
        %v8400 = vpop.f32.mrf.mxu0
        %8401 = vmatprep.mubr.f32.mxu0 0.0
        %8402 = vmatmul.mubr.f32.gmra.mxu0 %v8300
        %v8403 = vpop.f32.mrf.mxu0
        %v8404 = vadd.f32 0.0, %v8403
        %v8405 = vpop.f32.mrf.mxu0
        %8406 = vmatprep.mubr.f32.mxu0 0.0
        %8407 = vmatmul.mubr.f32.gmra.mxu0 %v8301
        %v8408 = vpop.f32.mrf.mxu0
        %v8409 = vadd.f32 0.0, %v8408
        %v8410 = vpop.f32.mrf.mxu0
        %8411 = vmatprep.mubr.f32.mxu0 0.0
        %8412 = vmatmul.mubr.f32.gmra.mxu0 %v8302
        %v8413 = vpop.f32.mrf.mxu0
        %v8414 = vadd.f32 0.0, %v8413
        %v8415 = vpop.f32.mrf.mxu0
        %8416 = vmatprep.mubr.f32.mxu0 0.0
        %8417 = vmatmul.mubr.f32.gmra.mxu0 %v8303
        %v8418 = vpop.f32.mrf.mxu0
        %v8419 = vadd.f32 0.0, %v8418
        %v8420 = vpop.f32.mrf.mxu0
        %8421 = vmatprep.mubr.f32.mxu0 0.0
        %8422 = vmatmul.mubr.f32.gmra.mxu0 %v8304
        %v8423 = vpop.f32.mrf.mxu0
        %v8424 = vadd.f32 0.0, %v8423
        %v8425 = vpop.f32.mrf.mxu0
        %8426 = vdwg.mxu0
        %v8427 = vadd.f32 %v8289, %v8389
        %v8428 = vadd.f32 %v8290, %v8394
        %v8429 = vadd.f32 %v8291, %v8399
        %v8430 = vadd.f32 %v8292, %v8404
        %v8431 = vadd.f32 %v8293, %v8409
        %v8432 = vadd.f32 %v8294, %v8414
        %v8433 = vadd.f32 %v8295, %v8419
        %v8434 = vadd.f32 %v8296, %v8424
        %v8435 = vld [vmem:[%s2026 + $0x1] sm:$0xff]
        %v8436 = vld [vmem:[%s2026 + $0x11] sm:$0xff]
        %v8437 = vld [vmem:[%s2026 + $0x21] sm:$0xff]
        %v8438 = vld [vmem:[%s2026 + $0x31] sm:$0xff]
        %v8439 = vld [vmem:[%s2026 + $0x61] sm:$0xff]
        %v8440 = vld [vmem:[%s2026 + $0x71] sm:$0xff]
        %v8441 = vld [vmem:[%s2026 + $0x81] sm:$0xff]
        %v8442 = vld [vmem:[%s2026 + $0x91] sm:$0xff]
        %s8443 = scalar_lea.vmem %s820, 896 [#allocation19]
        %v8444 = vld [vmem:[%s8443] sm:$0xff]
        %v8445 = vld [vmem:[%s8443 + $0x8] sm:$0xff]
        %v8446 = vld [vmem:[%s8443 + $0x10] sm:$0xff]
        %v8447 = vld [vmem:[%s8443 + $0x18] sm:$0xff]
        %v8448 = vld [vmem:[%s8443 + $0x20] sm:$0xff]
        %v8449 = vld [vmem:[%s8443 + $0x28] sm:$0xff]
        %v8450 = vld [vmem:[%s8443 + $0x30] sm:$0xff]
        %v8451 = vld [vmem:[%s8443 + $0x38] sm:$0xff]
        %v8452 = vld [vmem:[%s8443 + $0x40] sm:$0xff]
        %v8453 = vld [vmem:[%s8443 + $0x48] sm:$0xff]
        %v8454 = vld [vmem:[%s8443 + $0x50] sm:$0xff]
        %v8455 = vld [vmem:[%s8443 + $0x58] sm:$0xff]
        %v8456 = vld [vmem:[%s8443 + $0x60] sm:$0xff]
        %v8457 = vld [vmem:[%s8443 + $0x68] sm:$0xff]
        %v8458 = vld [vmem:[%s8443 + $0x70] sm:$0xff]
        %v8459 = vld [vmem:[%s8443 + $0x78] sm:$0xff]
        %8460 = vmatprep.subr.mxu0 0.0
        %8461 = vmatpush1.msra.mxu0 %v8459
        %8462 = vmatprep.subr.mxu0 0.0
        %8463 = vmatpush1.msra.mxu0 %v8458
        %8464 = vmatprep.subr.mxu0 0.0
        %8465 = vmatpush1.msra.mxu0 %v8457
        %8466 = vmatprep.subr.mxu0 0.0
        %8467 = vmatpush1.msra.mxu0 %v8456
        %8468 = vmatprep.subr.mxu0 0.0
        %8469 = vmatpush1.msra.mxu0 %v8455
        %8470 = vmatprep.subr.mxu0 0.0
        %8471 = vmatpush1.msra.mxu0 %v8454
        %8472 = vmatprep.subr.mxu0 0.0
        %8473 = vmatpush1.msra.mxu0 %v8453
        %8474 = vmatprep.subr.mxu0 0.0
        %8475 = vmatpush1.msra.mxu0 %v8452
        %8476 = vmatprep.subr.mxu0 0.0
        %8477 = vmatpush1.msra.mxu0 %v8451
        %8478 = vmatprep.subr.mxu0 0.0
        %8479 = vmatpush1.msra.mxu0 %v8450
        %8480 = vmatprep.subr.mxu0 0.0
        %8481 = vmatpush1.msra.mxu0 %v8449
        %8482 = vmatprep.subr.mxu0 0.0
        %8483 = vmatpush1.msra.mxu0 %v8448
        %8484 = vmatprep.subr.mxu0 0.0
        %8485 = vmatpush1.msra.mxu0 %v8447
        %8486 = vmatprep.subr.mxu0 0.0
        %8487 = vmatpush1.msra.mxu0 %v8446
        %8488 = vmatprep.subr.mxu0 0.0
        %8489 = vmatpush1.msra.mxu0 %v8445
        %8490 = vmatprep.subr.mxu0 0.0
        %8491 = vmatpush1.msra.mxu0 %v8444
        %8492 = vmatprep.subr.mxu0 0.0
        %8493 = vmatpush2.msra.mxu0 0.0
        %8494 = vmatprep.subr.mxu0 0.0
        %8495 = vmatpush2.msra.mxu0 0.0
        %8496 = vmatprep.subr.mxu0 0.0
        %8497 = vmatpush2.msra.mxu0 0.0
        %8498 = vmatprep.subr.mxu0 0.0
        %8499 = vmatpush2.msra.mxu0 0.0
        %8500 = vmatprep.subr.mxu0 0.0
        %8501 = vmatpush2.msra.mxu0 0.0
        %8502 = vmatprep.subr.mxu0 0.0
        %8503 = vmatpush2.msra.mxu0 0.0
        %8504 = vmatprep.subr.mxu0 0.0
        %8505 = vmatpush2.msra.mxu0 0.0
        %8506 = vmatprep.subr.mxu0 0.0
        %8507 = vmatpush2.msra.mxu0 0.0
        %8508 = vmatprep.subr.mxu0 0.0
        %8509 = vmatpush2.msra.mxu0 0.0
        %8510 = vmatprep.subr.mxu0 0.0
        %8511 = vmatpush2.msra.mxu0 0.0
        %8512 = vmatprep.subr.mxu0 0.0
        %8513 = vmatpush2.msra.mxu0 0.0
        %8514 = vmatprep.subr.mxu0 0.0
        %8515 = vmatpush2.msra.mxu0 0.0
        %8516 = vmatprep.subr.mxu0 0.0
        %8517 = vmatpush2.msra.mxu0 0.0
        %8518 = vmatprep.subr.mxu0 0.0
        %8519 = vmatpush2.msra.mxu0 0.0
        %8520 = vmatprep.subr.mxu0 0.0
        %8521 = vmatpush2.msra.mxu0 0.0
        %8522 = vmatprep.subr.mxu0 0.0
        %8523 = vmatpush2.msra.mxu0 0.0
        %8524 = vmatprep.mubr.f32.mxu0 0.0
        %8525 = vmatmul.mubr.f32.gmra.mxu0 %v8435
        %v8526 = vpop.f32.mrf.mxu0
        %v8527 = vadd.f32 0.0, %v8526
        %v8528 = vpop.f32.mrf.mxu0
        %8529 = vmatprep.mubr.f32.mxu0 0.0
        %8530 = vmatmul.mubr.f32.gmra.mxu0 %v8436
        %v8531 = vpop.f32.mrf.mxu0
        %v8532 = vadd.f32 0.0, %v8531
        %v8533 = vpop.f32.mrf.mxu0
        %8534 = vmatprep.mubr.f32.mxu0 0.0
        %8535 = vmatmul.mubr.f32.gmra.mxu0 %v8437
        %v8536 = vpop.f32.mrf.mxu0
        %v8537 = vadd.f32 0.0, %v8536
        %v8538 = vpop.f32.mrf.mxu0
        %8539 = vmatprep.mubr.f32.mxu0 0.0
        %8540 = vmatmul.mubr.f32.gmra.mxu0 %v8438
        %v8541 = vpop.f32.mrf.mxu0
        %v8542 = vadd.f32 0.0, %v8541
        %v8543 = vpop.f32.mrf.mxu0
        %8544 = vmatprep.mubr.f32.mxu0 0.0
        %8545 = vmatmul.mubr.f32.gmra.mxu0 %v8439
        %v8546 = vpop.f32.mrf.mxu0
        %v8547 = vadd.f32 0.0, %v8546
        %v8548 = vpop.f32.mrf.mxu0
        %8549 = vmatprep.mubr.f32.mxu0 0.0
        %8550 = vmatmul.mubr.f32.gmra.mxu0 %v8440
        %v8551 = vpop.f32.mrf.mxu0
        %v8552 = vadd.f32 0.0, %v8551
        %v8553 = vpop.f32.mrf.mxu0
        %8554 = vmatprep.mubr.f32.mxu0 0.0
        %8555 = vmatmul.mubr.f32.gmra.mxu0 %v8441
        %v8556 = vpop.f32.mrf.mxu0
        %v8557 = vadd.f32 0.0, %v8556
        %v8558 = vpop.f32.mrf.mxu0
        %8559 = vmatprep.mubr.f32.mxu0 0.0
        %8560 = vmatmul.mubr.f32.gmra.mxu0 %v8442
        %v8561 = vpop.f32.mrf.mxu0
        %v8562 = vadd.f32 0.0, %v8561
        %v8563 = vpop.f32.mrf.mxu0
        %8564 = vdwg.mxu0
        %v8565 = vadd.f32 %v8427, %v8527
        %v8566 = vadd.f32 %v8428, %v8532
        %v8567 = vadd.f32 %v8429, %v8537
        %v8568 = vadd.f32 %v8430, %v8542
        %v8569 = vadd.f32 %v8431, %v8547
        %v8570 = vadd.f32 %v8432, %v8552
        %v8571 = vadd.f32 %v8433, %v8557
        %v8572 = vadd.f32 %v8434, %v8562
        %v8573 = vld [vmem:[%s2026 + $0x2] sm:$0xff]
        %v8574 = vld [vmem:[%s2026 + $0x12] sm:$0xff]
        %v8575 = vld [vmem:[%s2026 + $0x22] sm:$0xff]
        %v8576 = vld [vmem:[%s2026 + $0x32] sm:$0xff]
        %v8577 = vld [vmem:[%s2026 + $0x62] sm:$0xff]
        %v8578 = vld [vmem:[%s2026 + $0x72] sm:$0xff]
        %v8579 = vld [vmem:[%s2026 + $0x82] sm:$0xff]
        %v8580 = vld [vmem:[%s2026 + $0x92] sm:$0xff]
        %s8581 = scalar_lea.vmem %s820, 1024 [#allocation19]
        %v8582 = vld [vmem:[%s8581] sm:$0xff]
        %v8583 = vld [vmem:[%s8581 + $0x8] sm:$0xff]
        %v8584 = vld [vmem:[%s8581 + $0x10] sm:$0xff]
        %v8585 = vld [vmem:[%s8581 + $0x18] sm:$0xff]
        %v8586 = vld [vmem:[%s8581 + $0x20] sm:$0xff]
        %v8587 = vld [vmem:[%s8581 + $0x28] sm:$0xff]
        %v8588 = vld [vmem:[%s8581 + $0x30] sm:$0xff]
        %v8589 = vld [vmem:[%s8581 + $0x38] sm:$0xff]
        %v8590 = vld [vmem:[%s8581 + $0x40] sm:$0xff]
        %v8591 = vld [vmem:[%s8581 + $0x48] sm:$0xff]
        %v8592 = vld [vmem:[%s8581 + $0x50] sm:$0xff]
        %v8593 = vld [vmem:[%s8581 + $0x58] sm:$0xff]
        %v8594 = vld [vmem:[%s8581 + $0x60] sm:$0xff]
        %v8595 = vld [vmem:[%s8581 + $0x68] sm:$0xff]
        %v8596 = vld [vmem:[%s8581 + $0x70] sm:$0xff]
        %v8597 = vld [vmem:[%s8581 + $0x78] sm:$0xff]
        %8598 = vmatprep.subr.mxu0 0.0
        %8599 = vmatpush1.msra.mxu0 %v8597
        %8600 = vmatprep.subr.mxu0 0.0
        %8601 = vmatpush1.msra.mxu0 %v8596
        %8602 = vmatprep.subr.mxu0 0.0
        %8603 = vmatpush1.msra.mxu0 %v8595
        %8604 = vmatprep.subr.mxu0 0.0
        %8605 = vmatpush1.msra.mxu0 %v8594
        %8606 = vmatprep.subr.mxu0 0.0
        %8607 = vmatpush1.msra.mxu0 %v8593
        %8608 = vmatprep.subr.mxu0 0.0
        %8609 = vmatpush1.msra.mxu0 %v8592
        %8610 = vmatprep.subr.mxu0 0.0
        %8611 = vmatpush1.msra.mxu0 %v8591
        %8612 = vmatprep.subr.mxu0 0.0
        %8613 = vmatpush1.msra.mxu0 %v8590
        %8614 = vmatprep.subr.mxu0 0.0
        %8615 = vmatpush1.msra.mxu0 %v8589
        %8616 = vmatprep.subr.mxu0 0.0
        %8617 = vmatpush1.msra.mxu0 %v8588
        %8618 = vmatprep.subr.mxu0 0.0
        %8619 = vmatpush1.msra.mxu0 %v8587
        %8620 = vmatprep.subr.mxu0 0.0
        %8621 = vmatpush1.msra.mxu0 %v8586
        %8622 = vmatprep.subr.mxu0 0.0
        %8623 = vmatpush1.msra.mxu0 %v8585
        %8624 = vmatprep.subr.mxu0 0.0
        %8625 = vmatpush1.msra.mxu0 %v8584
        %8626 = vmatprep.subr.mxu0 0.0
        %8627 = vmatpush1.msra.mxu0 %v8583
        %8628 = vmatprep.subr.mxu0 0.0
        %8629 = vmatpush1.msra.mxu0 %v8582
        %8630 = vmatprep.subr.mxu0 0.0
        %8631 = vmatpush2.msra.mxu0 0.0
        %8632 = vmatprep.subr.mxu0 0.0
        %8633 = vmatpush2.msra.mxu0 0.0
        %8634 = vmatprep.subr.mxu0 0.0
        %8635 = vmatpush2.msra.mxu0 0.0
        %8636 = vmatprep.subr.mxu0 0.0
        %8637 = vmatpush2.msra.mxu0 0.0
        %8638 = vmatprep.subr.mxu0 0.0
        %8639 = vmatpush2.msra.mxu0 0.0
        %8640 = vmatprep.subr.mxu0 0.0
        %8641 = vmatpush2.msra.mxu0 0.0
        %8642 = vmatprep.subr.mxu0 0.0
        %8643 = vmatpush2.msra.mxu0 0.0
        %8644 = vmatprep.subr.mxu0 0.0
        %8645 = vmatpush2.msra.mxu0 0.0
        %8646 = vmatprep.subr.mxu0 0.0
        %8647 = vmatpush2.msra.mxu0 0.0
        %8648 = vmatprep.subr.mxu0 0.0
        %8649 = vmatpush2.msra.mxu0 0.0
        %8650 = vmatprep.subr.mxu0 0.0
        %8651 = vmatpush2.msra.mxu0 0.0
        %8652 = vmatprep.subr.mxu0 0.0
        %8653 = vmatpush2.msra.mxu0 0.0
        %8654 = vmatprep.subr.mxu0 0.0
        %8655 = vmatpush2.msra.mxu0 0.0
        %8656 = vmatprep.subr.mxu0 0.0
        %8657 = vmatpush2.msra.mxu0 0.0
        %8658 = vmatprep.subr.mxu0 0.0
        %8659 = vmatpush2.msra.mxu0 0.0
        %8660 = vmatprep.subr.mxu0 0.0
        %8661 = vmatpush2.msra.mxu0 0.0
        %8662 = vmatprep.mubr.f32.mxu0 0.0
        %8663 = vmatmul.mubr.f32.gmra.mxu0 %v8573
        %v8664 = vpop.f32.mrf.mxu0
        %v8665 = vadd.f32 0.0, %v8664
        %v8666 = vpop.f32.mrf.mxu0
        %8667 = vmatprep.mubr.f32.mxu0 0.0
        %8668 = vmatmul.mubr.f32.gmra.mxu0 %v8574
        %v8669 = vpop.f32.mrf.mxu0
        %v8670 = vadd.f32 0.0, %v8669
        %v8671 = vpop.f32.mrf.mxu0
        %8672 = vmatprep.mubr.f32.mxu0 0.0
        %8673 = vmatmul.mubr.f32.gmra.mxu0 %v8575
        %v8674 = vpop.f32.mrf.mxu0
        %v8675 = vadd.f32 0.0, %v8674
        %v8676 = vpop.f32.mrf.mxu0
        %8677 = vmatprep.mubr.f32.mxu0 0.0
        %8678 = vmatmul.mubr.f32.gmra.mxu0 %v8576
        %v8679 = vpop.f32.mrf.mxu0
        %v8680 = vadd.f32 0.0, %v8679
        %v8681 = vpop.f32.mrf.mxu0
        %8682 = vmatprep.mubr.f32.mxu0 0.0
        %8683 = vmatmul.mubr.f32.gmra.mxu0 %v8577
        %v8684 = vpop.f32.mrf.mxu0
        %v8685 = vadd.f32 0.0, %v8684
        %v8686 = vpop.f32.mrf.mxu0
        %8687 = vmatprep.mubr.f32.mxu0 0.0
        %8688 = vmatmul.mubr.f32.gmra.mxu0 %v8578
        %v8689 = vpop.f32.mrf.mxu0
        %v8690 = vadd.f32 0.0, %v8689
        %v8691 = vpop.f32.mrf.mxu0
        %8692 = vmatprep.mubr.f32.mxu0 0.0
        %8693 = vmatmul.mubr.f32.gmra.mxu0 %v8579
        %v8694 = vpop.f32.mrf.mxu0
        %v8695 = vadd.f32 0.0, %v8694
        %v8696 = vpop.f32.mrf.mxu0
        %8697 = vmatprep.mubr.f32.mxu0 0.0
        %8698 = vmatmul.mubr.f32.gmra.mxu0 %v8580
        %v8699 = vpop.f32.mrf.mxu0
        %v8700 = vadd.f32 0.0, %v8699
        %v8701 = vpop.f32.mrf.mxu0
        %8702 = vdwg.mxu0
        %v8703 = vadd.f32 %v8565, %v8665
        %v8704 = vadd.f32 %v8566, %v8670
        %v8705 = vadd.f32 %v8567, %v8675
        %v8706 = vadd.f32 %v8568, %v8680
        %v8707 = vadd.f32 %v8569, %v8685
        %v8708 = vadd.f32 %v8570, %v8690
        %v8709 = vadd.f32 %v8571, %v8695
        %v8710 = vadd.f32 %v8572, %v8700
        %v8711 = vld [vmem:[%s828] sm:$0x1]
        %v8713 = vlaneseq
        %v8714 = vshrl.u32 %v8713, 7
        %v8715 = vsub.s32 0, %v8714
        %v8716 = vrot.slane %v8711, %v8715
        %v8718 = vadd.f32 %v8703, %v8716
        %v8719 = vadd.f32 %v8704, %v8716
        %v8720 = vadd.f32 %v8705, %v8716
        %v8721 = vadd.f32 %v8706, %v8716
        %v8722 = vadd.f32 %v8707, %v8716
        %v8723 = vadd.f32 %v8708, %v8716
        %v8724 = vadd.f32 %v8709, %v8716
        %v8725 = vadd.f32 %v8710, %v8716
        %v8726 = vadd.f32 %v8718, %v8719
        %v8727 = vadd.f32 %v8726, %v8720
        %v8728 = vadd.f32 %v8727, %v8721
        %v8729 = vrot.slane %v8728, 4
        %v8730 = vadd.f32 %v8728, %v8729
        %v8731 = vrot.slane %v8730, 2
        %v8732 = vadd.f32 %v8730, %v8731
        %v8733 = vrot.slane %v8732, 1
        %v8734 = vadd.f32 %v8732, %v8733
        %v8735 = vadd.f32 %v8722, %v8723
        %v8736 = vadd.f32 %v8735, %v8724
        %v8737 = vadd.f32 %v8736, %v8725
        %v8738 = vrot.slane %v8737, 4
        %v8739 = vadd.f32 %v8737, %v8738
        %v8740 = vrot.slane %v8739, 2
        %v8741 = vadd.f32 %v8739, %v8740
        %v8742 = vrot.slane %v8741, 1
        %v8743 = vadd.f32 %v8741, %v8742
        %v8744 = vrcp.pop 32.0
        %v8745 = vmul.f32 %v8734, %v8744
        %v8746 = vmul.f32 %v8743, %v8744
        %v8747 = vld [vmem:[%s945] sm:$0xff]
        %v8748 = vld [vmem:[%s945 + $0x8] sm:$0xff]
        %v8749 = vld [vmem:[%s945 + $0x10] sm:$0xff]
        %v8750 = vld [vmem:[%s945 + $0x18] sm:$0xff]
        %v8751 = vld [vmem:[%s945 + $0x20] sm:$0xff]
        %v8752 = vld [vmem:[%s945 + $0x28] sm:$0xff]
        %v8753 = vld [vmem:[%s945 + $0x30] sm:$0xff]
        %v8754 = vld [vmem:[%s945 + $0x38] sm:$0xff]
        %v8755 = vld [vmem:[%s945 + $0x40] sm:$0xff]
        %v8756 = vld [vmem:[%s945 + $0x48] sm:$0xff]
        %v8757 = vld [vmem:[%s945 + $0x50] sm:$0xff]
        %v8758 = vld [vmem:[%s945 + $0x58] sm:$0xff]
        %v8759 = vld [vmem:[%s945 + $0x60] sm:$0xff]
        %v8760 = vld [vmem:[%s945 + $0x68] sm:$0xff]
        %v8761 = vld [vmem:[%s945 + $0x70] sm:$0xff]
        %v8762 = vld [vmem:[%s945 + $0x78] sm:$0xff]
        %v8763 = vld [vmem:[%s948] sm:$0x1]
        %v8765 = vlaneseq
        %v8766 = vshrl.u32 %v8765, 7
        %v8767 = vsub.s32 0, %v8766
        %v8768 = vrot.slane %v8763, %v8767
        %v8772 = vsel %vm5012, %v8746, %v8745
        %8774 = vmatprep.subr.mxu0 0.0
        %8775 = vmatpush1.msra.mxu0 %v8762
        %8776 = vmatprep.subr.mxu0 0.0
        %8777 = vmatpush1.msra.mxu0 %v8761
        %8778 = vmatprep.subr.mxu0 0.0
        %8779 = vmatpush1.msra.mxu0 %v8760
        %8780 = vmatprep.subr.mxu0 0.0
        %8781 = vmatpush1.msra.mxu0 %v8759
        %8782 = vmatprep.subr.mxu0 0.0
        %8783 = vmatpush1.msra.mxu0 %v8758
        %8784 = vmatprep.subr.mxu0 0.0
        %8785 = vmatpush1.msra.mxu0 %v8757
        %8786 = vmatprep.subr.mxu0 0.0
        %8787 = vmatpush1.msra.mxu0 %v8756
        %8788 = vmatprep.subr.mxu0 0.0
        %8789 = vmatpush1.msra.mxu0 %v8755
        %8790 = vmatprep.subr.mxu0 0.0
        %8791 = vmatpush1.msra.mxu0 %v8754
        %8792 = vmatprep.subr.mxu0 0.0
        %8793 = vmatpush1.msra.mxu0 %v8753
        %8794 = vmatprep.subr.mxu0 0.0
        %8795 = vmatpush1.msra.mxu0 %v8752
        %8796 = vmatprep.subr.mxu0 0.0
        %8797 = vmatpush1.msra.mxu0 %v8751
        %8798 = vmatprep.subr.mxu0 0.0
        %8799 = vmatpush1.msra.mxu0 %v8750
        %8800 = vmatprep.subr.mxu0 0.0
        %8801 = vmatpush1.msra.mxu0 %v8749
        %8802 = vmatprep.subr.mxu0 0.0
        %8803 = vmatpush1.msra.mxu0 %v8748
        %8804 = vmatprep.subr.mxu0 0.0
        %8805 = vmatpush1.msra.mxu0 %v8747
        %8806 = vmatprep.subr.mxu0 0.0
        %8807 = vmatpush2.msra.mxu0 0.0
        %8808 = vmatprep.subr.mxu0 0.0
        %8809 = vmatpush2.msra.mxu0 0.0
        %8810 = vmatprep.subr.mxu0 0.0
        %8811 = vmatpush2.msra.mxu0 0.0
        %8812 = vmatprep.subr.mxu0 0.0
        %8813 = vmatpush2.msra.mxu0 0.0
        %8814 = vmatprep.subr.mxu0 0.0
        %8815 = vmatpush2.msra.mxu0 0.0
        %8816 = vmatprep.subr.mxu0 0.0
        %8817 = vmatpush2.msra.mxu0 0.0
        %8818 = vmatprep.subr.mxu0 0.0
        %8819 = vmatpush2.msra.mxu0 0.0
        %8820 = vmatprep.subr.mxu0 0.0
        %8821 = vmatpush2.msra.mxu0 0.0
        %8822 = vmatprep.subr.mxu0 0.0
        %8823 = vmatpush2.msra.mxu0 0.0
        %8824 = vmatprep.subr.mxu0 0.0
        %8825 = vmatpush2.msra.mxu0 0.0
        %8826 = vmatprep.subr.mxu0 0.0
        %8827 = vmatpush2.msra.mxu0 0.0
        %8828 = vmatprep.subr.mxu0 0.0
        %8829 = vmatpush2.msra.mxu0 0.0
        %8830 = vmatprep.subr.mxu0 0.0
        %8831 = vmatpush2.msra.mxu0 0.0
        %8832 = vmatprep.subr.mxu0 0.0
        %8833 = vmatpush2.msra.mxu0 0.0
        %8834 = vmatprep.subr.mxu0 0.0
        %8835 = vmatpush2.msra.mxu0 0.0
        %8836 = vmatprep.subr.mxu0 0.0
        %8837 = vmatpush2.msra.mxu0 0.0
        %8838 = vmatprep.mubr.f32.mxu0 0.0
        %8839 = vmatmul.mubr.f32.gmra.mxu0 %v8772
        %v8840 = vpop.f32.mrf.mxu0
        %v8841 = vadd.f32 %v8768, %v8840
        %v8842 = vpop.f32.mrf.mxu0
        %8843 = vdwg.mxu0
        %vm8844 = vcmask 1024
        %8845 = vst.msk [vmem:[%s952] sm:$0x3] %vm8844, %v8841
        %p8846 = scmp.lt.s32.totalorder %s47, 1
        %s8847 = scalar_select %p8846, %s47, 1
        %s8848 = smul.addr %s8847, 2
        %s8849 = scalar_lea.vmem %s15, %s8848
        // Predicated region
        $region129: #{synthesizer_pair_forward.1} parent=79 // pred_check
          %p8850 = pneg %p455
        $region130: #{synthesizer_pair_forward.1} parent=79 // pred_check_branch
          %8852 = sbr.rel (%p8850) target = $region132
        $region131: #{synthesizer_pair_forward.1} parent=79 // pred_region
          _
        $region132: #{synthesizer_pair_forward.1} parent=79 // pred_fallthru
          _
      $region80: #{synthesizer_pair_forward.1} parent=5 // pred_fallthru
        _
      %p8853 = scmp.le.s32.totalorder 2, %s42
      // Predicated region
      $region133: #{synthesizer_pair_forward.1} parent=5 // pred_check
        %p8854 = pneg %p8853
      $region134: #{synthesizer_pair_forward.1} parent=5 // pred_check_branch
        %8856 = sbr.rel (%p8854) target = $region136
      $region135: #{synthesizer_pair_forward.1} parent=5 // pred_region
        %s8857 = ssub.s32 %s42, 2
        // Predicated region
        $region137: #{synthesizer_pair_forward.1} parent=135 // pred_check
          %p8858 = pneg %p461
        $region138: #{synthesizer_pair_forward.1} parent=135 // pred_check_branch
          %8860 = sbr.rel (%p8858) target = $region140
        $region139: #{synthesizer_pair_forward.1} parent=135 // pred_region
          %p8861 = scmp.lt.s32.totalorder %s48, 1
          %s8862 = scalar_select %p8861, %s48, 1
          %s8863 = smul.addr %s8862, 2
          %s8864 = scalar_lea.vmem %s15, %s8863
        $region140: #{synthesizer_pair_forward.1} parent=135 // pred_fallthru
          _
      $region136: #{synthesizer_pair_forward.1} parent=5 // pred_fallthru
        _
    $region6: #{synthesizer_pair_forward.1} parent=1 // loop_footer
      %s46 = sadd.s32 1, %s42
    $region7: #{synthesizer_pair_forward.1} parent=1 // loop_footer_branch
      %41 = sbr.rel target = $region3
    $region8: #{synthesizer_pair_forward.1} parent=1 // loop_exit
      _
    %8865 = vsyncpa [#allocation4], 1
    %s8866 = scalar_lea.sflag [#allocation4], 1
    %8867 = vsyncpa %s8866, 1
    %8868 = vsyncpa [#allocation6], 1
    %s8869 = scalar_lea.sflag [#allocation6], 1
    %8870 = vsyncpa %s8869, 1
    %8871 = vsyncpa [#allocation9], 1
    %s8872 = scalar_lea.sflag [#allocation9], 1
    %8873 = vsyncpa %s8872, 1
    %8874 = vsyncpa [#allocation12], 1
    %s8875 = scalar_lea.sflag [#allocation12], 1
    %8876 = vsyncpa %s8875, 1
    %8877 = vsyncpa [#allocation15], 1
    %s8878 = scalar_lea.sflag [#allocation15], 1
    %8879 = vsyncpa %s8878, 1
    %8880 = vsyncpa [#allocation18], 1
    %s8881 = scalar_lea.sflag [#allocation18], 1
    %8882 = vsyncpa %s8881, 1
    %8883 = vsyncpa [#allocation21], 1
    %s8884 = scalar_lea.sflag [#allocation21], 1
    %8885 = vsyncpa %s8884, 1

</llo_original>
